<compile_context>
chip_gen: v6e
topology: v6e:2x2x1
jax: 0.10.0
libtpu: 0.0.40
codegen_flags: <defaults>
</compile_context>

<pallas_src>
import math

import jax
import jax.numpy as jnp
from jax.experimental import pallas as pl
from jax.experimental.pallas import tpu as pltpu

# ----------------------------- configuration ------------------------------
VOCAB = 11          # synthetic vocabulary (token 0 is PAD)
EMB_DIM = 16        # args['embeddingDim']
HID_DIM = 32        # args['hidDim']
N_HEADS = 4         # args['n_heads']  -> d_k = 8
D_FF = 64           # args['d_ff']
NUM_LAYERS = 2      # args['num_layers']
SAMPLE_LEN = 10     # args['sampleLen']
NUM_K = 3           # args['num_k']
SEQ_LEN = SAMPLE_LEN - NUM_K + 1   # 8
NUM_LINEAR = 2      # args['num_linear']
OUTPUT_SIZE = 1     # args['outputSize']
BATCH = 2
D_K = HID_DIM // N_HEADS           # 8
LIN_SIZE = HID_DIM * SEQ_LEN       # 256
LIN_HALF = LIN_SIZE // 2           # 128
# args['dropProb'] dropouts are identity at inference; args['norm'] == 'LayerNorm'.


# ------------------------------ fused kernel ------------------------------

def _fused_transformer_kernel(
        x_ref,                      # (B, S)        int32 token ids (pad mask)
        xcol_ref,                   # (B*S, 1)      int32 token ids (one-hot gather)
        tbl_ref,                    # (VOCAB, D)    embedding @ proj_W + proj_b (fused)
        pe_ref,                     # (S, D)        positional-encoding slice
        wqkv_ref, bqkv_ref,         # (L, D, 3D), (L, 1, 3D)   fused QKV projection
        wo_ref, bo_ref,             # (L, D, D),  (L, 1, D)
        ln1g_ref, ln1b_ref,         # (L, 1, D)
        ln2g_ref, ln2b_ref,         # (L, 1, D)
        w1_ref, b1_ref,             # (L, D, F),  (L, 1, F)
        w2_ref, b2_ref,             # (L, F, D),  (L, 1, D)
        dw1_ref, db1_ref,           # (S, D, LIN_HALF), (1, LIN_HALF)
        dw2_ref, db2_ref,           # (LIN_HALF, 1), (1, 1)
        out_ref,                    # (B, 1)                  output
        attn_ref,                   # (L*B*H, S, S)           output (attention weights)
        ctx_ref):                   # (B*S, D) VMEM scratch   per-head attention contexts
    B, S = x_ref.shape
    BS = B * S
    D, H, Dk = HID_DIM, N_HEADS, D_K
    scale = 1.0 / math.sqrt(Dk)
    neg_inf = jnp.float32(-1.0e9)

    # --- pad mask, replicating the PyTorch get_attn_pad_mask expand()-aliasing:
    #     mask[b, q, k] = (token[b, k] == 0) OR (any pad token anywhere in batch b)
    padf = (x_ref[...] == 0).astype(jnp.float32)        # (B, S)
    anyf = jnp.max(padf, axis=1, keepdims=True)         # (B, 1)
    maskf = jnp.maximum(padf, anyf)                     # (B, S)  1.0 -> masked key

    # --- fused embedding gather + input projection: one-hot @ (embedding @ W + b)
    ids = xcol_ref[...]                                  # (BS, 1) int32
    iota = jax.lax.broadcasted_iota(jnp.int32, (BS, VOCAB), 1)
    onehot = (iota == ids).astype(jnp.float32)           # (BS, VOCAB)
    pe = pe_ref[...]                                     # (S, D)
    pe_bs = jnp.concatenate([pe] * B, axis=0)            # (BS, D)
    # initDropout = identity at inference
    h = jnp.dot(onehot, tbl_ref[...], preferred_element_type=jnp.float32) + pe_bs

    def layer_norm(z, g, b):                             # LayerNorm(eps=1e-5), affine
        mean = jnp.mean(z, axis=-1, keepdims=True)
        var = jnp.mean((z - mean) ** 2, axis=-1, keepdims=True)
        return (z - mean) * jax.lax.rsqrt(var + 1e-5) * g + b

    for l in range(NUM_LAYERS):                          # static unroll (L = 2)
        # ---- QKV projection for the whole (B*S, D) activation in one matmul ----
        qkv = jnp.dot(h, wqkv_ref[l], preferred_element_type=jnp.float32) + bqkv_ref[l]
        # ---- per-(batch, head) attention (tiny 8x8 matmuls, statically unrolled) ----
        for b in range(B):
            mrow = maskf[b:b + 1, :]                     # (1, S) key mask for this batch
            r0 = b * S
            for hd in range(H):
                c0 = hd * Dk
                q = qkv[r0:r0 + S, c0:c0 + Dk]                   # (S, Dk)
                k = qkv[r0:r0 + S, D + c0:D + c0 + Dk]           # (S, Dk)
                v = qkv[r0:r0 + S, 2 * D + c0:2 * D + c0 + Dk]   # (S, Dk)
                s = jnp.dot(q, k.T, preferred_element_type=jnp.float32) * scale
                s = jnp.where(mrow > 0.5, neg_inf, s)            # masked_fill_(-1e9)
                s = s - jnp.max(s, axis=-1, keepdims=True)
                e = jnp.exp(s)
                a = e * pl.reciprocal(jnp.sum(e, axis=-1, keepdims=True), approx=True)
                attn_ref[(l * B + b) * H + hd] = a               # attention weights out
                ctx_ref[r0:r0 + S, c0:c0 + Dk] = jnp.dot(
                    a, v, preferred_element_type=jnp.float32)    # context into scratch
        # ---- single output projection over the whole (B*S, D) context ----
        att = jnp.dot(ctx_ref[...], wo_ref[l],
                      preferred_element_type=jnp.float32) + bo_ref[l]
        # ---- residual + attNorm ----
        h1 = layer_norm(h + att, ln1g_ref[l], ln1b_ref[l])
        # ---- position-wise FFN + residual + ffnNorm ----
        ff = jnp.dot(h1, w1_ref[l], preferred_element_type=jnp.float32) + b1_ref[l]
        ff = jnp.maximum(ff, 0.0)
        ff = jnp.dot(ff, w2_ref[l], preferred_element_type=jnp.float32) + b2_ref[l]
        h = layer_norm(h1 + ff, ln2g_ref[l], ln2b_ref[l])

    # ---- decoder MLP: flatten(S*D) @ dec_w1 as a sum over positions (both batches) ----
    y1 = jnp.zeros((B, LIN_HALF), jnp.float32)
    for s_i in range(S):                                  # static unroll (S = 8)
        hs = jnp.concatenate([h[b * S + s_i:b * S + s_i + 1, :] for b in range(B)],
                             axis=0)                      # (B, D) rows for position s_i
        y1 = y1 + jnp.dot(hs, dw1_ref[s_i], preferred_element_type=jnp.float32)
    y1 = y1 + db1_ref[...]
    y1 = jnp.where(y1 >= 0.0, y1, 0.01 * y1)              # LeakyReLU (slope 0.01)
    out_ref[...] = (jnp.dot(y1, dw2_ref[...], preferred_element_type=jnp.float32)
                    + db2_ref[...])


# ------------------------------ forward wrapper ----------------------------

def transformer_forward(params, X):
    B, S = X.shape
    X = X.astype(jnp.int32)
    xcol = X.reshape(B * S, 1)                            # tiny glue reshape

    out2d, attn_flat = pl.pallas_call(
        _fused_transformer_kernel,
        out_shape=(jax.ShapeDtypeStruct((B, OUTPUT_SIZE), jnp.float32),
                   jax.ShapeDtypeStruct((NUM_LAYERS * B * N_HEADS, S, S), jnp.float32)),
        scratch_shapes=[pltpu.VMEM((B * S, HID_DIM), jnp.float32)],
    )(X, xcol,
      params["emb_proj"], params["pe_s"],
      params["wqkv"], params["bqkv"], params["wo"], params["bo"],
      params["ln1_g"], params["ln1_b"], params["ln2_g"], params["ln2_b"],
      params["w1"], params["b1"], params["w2"], params["b2"],
      params["dec_w1"], params["dec_b1"], params["dec_w2"], params["dec_b2"])

    output = jnp.squeeze(out2d)                           # torch.squeeze
    attns = attn_flat.reshape(NUM_LAYERS, B, N_HEADS, S, S)
    enc_self_attns = [attns[l] for l in range(NUM_LAYERS)]
    return output, {"enc_self_attns": enc_self_attns}


# ---------------------------- parameter creation ---------------------------

def positional_encoding_table(max_len, d_model):
    position = jnp.arange(max_len, dtype=jnp.float32)[:, None]
    div_term = jnp.exp(jnp.arange(0, d_model, 2, dtype=jnp.float32)
                       * (-math.log(10000.0) / d_model))
    pe = jnp.zeros((max_len, d_model), dtype=jnp.float32)
    pe = pe.at[:, 0::2].set(jnp.sin(position * div_term))
    pe = pe.at[:, 1::2].set(jnp.cos(position * div_term))
    return pe


def init_linear(key, fan_in, fan_out):
    k1, k2 = jax.random.split(key)
    bound = 1.0 / math.sqrt(fan_in)
    w = jax.random.uniform(k1, (fan_in, fan_out), jnp.float32, -bound, bound)
    b = jax.random.uniform(k2, (fan_out,), jnp.float32, -bound, bound)
    return w, b


def make_params(key):
    keys = iter(jax.random.split(key, 64))
    params = {}
    # TODO(synk): original code loads '../Data/embedding_matrix.npy'; we init it synthetically.
    params["embedding"] = 0.1 * jax.random.normal(next(keys), (VOCAB, EMB_DIM), jnp.float32)
    pw, pb = init_linear(next(keys), EMB_DIM, HID_DIM)
    params["proj_w"], params["proj_b"] = pw, pb.reshape(1, HID_DIM)
    params["pe_s"] = positional_encoding_table(1000, HID_DIM)[:SEQ_LEN]
    # fused gather+projection table used by the kernel (one-time preprocessing):
    params["emb_proj"] = params["embedding"] @ params["proj_w"] + params["proj_b"]

    wqkv, bqkv, wo, bo = [], [], [], []
    w1, b1, w2, b2 = [], [], [], []
    ln1g, ln1b, ln2g, ln2b = [], [], [], []
    for _ in range(NUM_LAYERS):
        wq, bq = init_linear(next(keys), HID_DIM, HID_DIM)
        wk, bk = init_linear(next(keys), HID_DIM, HID_DIM)
        wv, bv = init_linear(next(keys), HID_DIM, HID_DIM)
        wo_, bo_ = init_linear(next(keys), HID_DIM, HID_DIM)
        w1_, b1_ = init_linear(next(keys), HID_DIM, D_FF)
        w2_, b2_ = init_linear(next(keys), D_FF, HID_DIM)
        wqkv.append(jnp.concatenate([wq, wk, wv], axis=1))          # (D, 3D)
        bqkv.append(jnp.concatenate([bq, bk, bv]).reshape(1, 3 * HID_DIM))
        wo.append(wo_)
        bo.append(bo_.reshape(1, HID_DIM))
        w1.append(w1_)
        b1.append(b1_.reshape(1, D_FF))
        w2.append(w2_)
        b2.append(b2_.reshape(1, HID_DIM))
        ln1g.append(jnp.ones((1, HID_DIM), jnp.float32))
        ln1b.append(jnp.zeros((1, HID_DIM), jnp.float32))
        ln2g.append(jnp.ones((1, HID_DIM), jnp.float32))
        ln2b.append(jnp.zeros((1, HID_DIM), jnp.float32))
    params["wqkv"] = jnp.stack(wqkv)
    params["bqkv"] = jnp.stack(bqkv)
    params["wo"] = jnp.stack(wo)
    params["bo"] = jnp.stack(bo)
    params["w1"] = jnp.stack(w1)
    params["b1"] = jnp.stack(b1)
    params["w2"] = jnp.stack(w2)
    params["b2"] = jnp.stack(b2)
    params["ln1_g"] = jnp.stack(ln1g)
    params["ln1_b"] = jnp.stack(ln1b)
    params["ln2_g"] = jnp.stack(ln2g)
    params["ln2_b"] = jnp.stack(ln2b)

    # Decoder: num_linear=2 -> Linear(S*D -> S*D/2) + LeakyReLU + Linear(S*D/2 -> outputSize)
    dw1, db1 = init_linear(next(keys), LIN_SIZE, LIN_HALF)
    dw2, db2 = init_linear(next(keys), LIN_HALF, OUTPUT_SIZE)
    params["dec_w1"] = dw1.reshape(SEQ_LEN, HID_DIM, LIN_HALF)      # row index = s*D + d
    params["dec_b1"] = db1.reshape(1, LIN_HALF)
    params["dec_w2"] = dw2
    params["dec_b2"] = db2.reshape(1, OUTPUT_SIZE)
    return params


# --------------------------- pure-JAX reference ----------------------------

def _layer_norm_ref(z, g, b):
    mean = jnp.mean(z, axis=-1, keepdims=True)
    var = jnp.mean((z - mean) ** 2, axis=-1, keepdims=True)
    return (z - mean) * jax.lax.rsqrt(var + 1e-5) * g + b


def reference_forward(params, X):
    B, S = X.shape
    D, H, Dk = HID_DIM, N_HEADS, D_K
    emb = params["embedding"][X]
    h = jnp.einsum("bse,ed->bsd", emb, params["proj_w"]) + params["proj_b"][0]
    h = h + params["pe_s"][None]
    pad = (X == 0)
    anyp = jnp.any(pad, axis=1)[:, None]
    mask_k = jnp.logical_or(pad, anyp)                              # (B, S)
    attns = []
    for l in range(NUM_LAYERS):
        qkv = jnp.einsum("bsd,de->bse", h, params["wqkv"][l]) + params["bqkv"][l][0]
        q = qkv[..., :D].reshape(B, S, H, Dk).transpose(0, 2, 1, 3)
        k = qkv[..., D:2 * D].reshape(B, S, H, Dk).transpose(0, 2, 1, 3)
        v = qkv[..., 2 * D:].reshape(B, S, H, Dk).transpose(0, 2, 1, 3)
        s = jnp.einsum("bhqd,bhkd->bhqk", q, k) / math.sqrt(Dk)
        s = jnp.where(mask_k[:, None, None, :], -1.0e9, s)
        a = jax.nn.softmax(s, axis=-1)
        attns.append(a)
        ctx = jnp.einsum("bhqk,bhkd->bhqd", a, v).transpose(0, 2, 1, 3).reshape(B, S, D)
        att_out = jnp.einsum("bsd,de->bse", ctx, params["wo"][l]) + params["bo"][l][0]
        h1 = _layer_norm_ref(h + att_out, params["ln1_g"][l][0], params["ln1_b"][l][0])
        ff = jax.nn.relu(jnp.einsum("bsd,df->bsf", h1, params["w1"][l]) + params["b1"][l][0])
        ff = jnp.einsum("bsf,fd->bsd", ff, params["w2"][l]) + params["b2"][l][0]
        h = _layer_norm_ref(h1 + ff, params["ln2_g"][l][0], params["ln2_b"][l][0])
    flat = h.reshape(B, S * D)
    y = flat @ params["dec_w1"].reshape(S * D, LIN_HALF) + params["dec_b1"][0]
    y = jnp.where(y >= 0.0, y, 0.01 * y)
    y = y @ params["dec_w2"] + params["dec_b2"][0]
    return jnp.squeeze(y), attns


# ----------------------------------- main ----------------------------------

if __name__ == "__main__":
    key = jax.random.PRNGKey(0)
    k_params, k_x = jax.random.split(key)
    params = make_params(k_params)

    # token ids in [1, VOCAB); batch 0 gets trailing PAD (0) tokens, batch 1 has none.
    X = jax.random.randint(k_x, (BATCH, SEQ_LEN), 1, VOCAB, dtype=jnp.int32)
    X = X.at[0, -2:].set(0)

    fwd = jax.jit(transformer_forward)
    output, other = fwd(params, X)
    output = jax.block_until_ready(output)
    for a in other["enc_self_attns"]:
        jax.block_until_ready(a)

    assert output.shape == (BATCH,)
    assert other["enc_self_attns"][0].shape == (BATCH, N_HEADS, SEQ_LEN, SEQ_LEN)

    # sanity check against a pure-JAX reference of the same module (loose tol: MXU f32 path)
    ref_out, ref_attns = reference_forward(params, X)
    assert jnp.allclose(output, ref_out, atol=5e-2, rtol=5e-2)
    for a_k, a_r in zip(other["enc_self_attns"], ref_attns):
        assert jnp.allclose(a_k, a_r, atol=5e-2, rtol=5e-2)

    print("KERNEL_OK")
</pallas_src>

<mosaic_0001>
module attributes {stable_mosaic.version = 11 : i64} {
  func.func @_fused_transformer_kernel(%arg0: memref<2x8xi32, #tpu.memory_space<vmem>>, %arg1: memref<16x1xi32, #tpu.memory_space<vmem>>, %arg2: memref<11x32xf32, #tpu.memory_space<vmem>>, %arg3: memref<8x32xf32, #tpu.memory_space<vmem>>, %arg4: memref<2x32x96xf32, #tpu.memory_space<vmem>>, %arg5: memref<2x1x96xf32, #tpu.memory_space<vmem>>, %arg6: memref<2x32x32xf32, #tpu.memory_space<vmem>>, %arg7: memref<2x1x32xf32, #tpu.memory_space<vmem>>, %arg8: memref<2x1x32xf32, #tpu.memory_space<vmem>>, %arg9: memref<2x1x32xf32, #tpu.memory_space<vmem>>, %arg10: memref<2x1x32xf32, #tpu.memory_space<vmem>>, %arg11: memref<2x1x32xf32, #tpu.memory_space<vmem>>, %arg12: memref<2x32x64xf32, #tpu.memory_space<vmem>>, %arg13: memref<2x1x64xf32, #tpu.memory_space<vmem>>, %arg14: memref<2x64x32xf32, #tpu.memory_space<vmem>>, %arg15: memref<2x1x32xf32, #tpu.memory_space<vmem>>, %arg16: memref<8x32x128xf32, #tpu.memory_space<vmem>>, %arg17: memref<1x128xf32, #tpu.memory_space<vmem>>, %arg18: memref<128x1xf32, #tpu.memory_space<vmem>>, %arg19: memref<1x1xf32, #tpu.memory_space<vmem>>, %arg20: memref<2x1xf32, #tpu.memory_space<vmem>>, %arg21: memref<16x8x8xf32, #tpu.memory_space<vmem>>, %arg22: memref<16x32xf32, #tpu.memory_space<vmem>>) attributes {dimension_semantics = [], scalar_prefetch = 0 : i64, scratch_operands = 1 : i64, tpu.core_type = #tpu.core_type<tc>} {
    %c0 = arith.constant 0 : index
    %c0_0 = arith.constant 0 : index
    %0 = vector.load %arg0[%c0, %c0_0] : memref<2x8xi32, #tpu.memory_space<vmem>>, vector<2x8xi32>
    %c0_i32 = arith.constant 0 : i32
    %1 = vector.broadcast %c0_i32 : i32 to vector<2x8xi32>
    %2 = arith.cmpi eq, %0, %1 : vector<2x8xi32>
    %3 = arith.extui %2 : vector<2x8xi1> to vector<2x8xi32>
    %4 = arith.sitofp %3 : vector<2x8xi32> to vector<2x8xf32>
    %cst = arith.constant dense<0xFF800000> : vector<2xf32>
    %5 = vector.multi_reduction <maximumf>, %4, %cst [1] : vector<2x8xf32> to vector<2xf32>
    %6 = vector.shape_cast %5 : vector<2xf32> to vector<2x1xf32>
    %7 = vector.broadcast %6 : vector<2x1xf32> to vector<2x8xf32>
    %8 = arith.maximumf %4, %7 : vector<2x8xf32>
    %c0_1 = arith.constant 0 : index
    %c0_2 = arith.constant 0 : index
    %9 = vector.load %arg1[%c0_1, %c0_2] : memref<16x1xi32, #tpu.memory_space<vmem>>, vector<16x1xi32>
    %10 = tpu.iota {dimensions = array<i32: 1>} : vector<16x11xi32>
    %11 = vector.broadcast %9 : vector<16x1xi32> to vector<16x11xi32>
    %12 = arith.cmpi eq, %10, %11 : vector<16x11xi32>
    %13 = arith.extui %12 : vector<16x11xi1> to vector<16x11xi32>
    %14 = arith.sitofp %13 : vector<16x11xi32> to vector<16x11xf32>
    %c0_3 = arith.constant 0 : index
    %c0_4 = arith.constant 0 : index
    %15 = vector.load %arg3[%c0_3, %c0_4] : memref<8x32xf32, #tpu.memory_space<vmem>>, vector<8x32xf32>
    %16 = tpu.concatenate %15, %15 in 0 : vector<8x32xf32>, vector<8x32xf32> -> vector<16x32xf32>
    %c0_5 = arith.constant 0 : index
    %c0_6 = arith.constant 0 : index
    %17 = vector.load %arg2[%c0_5, %c0_6] : memref<11x32xf32, #tpu.memory_space<vmem>>, vector<11x32xf32>
    %cst_7 = arith.constant dense<0.000000e+00> : vector<16x32xf32>
    %18 = tpu.matmul %14, %17, %cst_7 {dimension_numbers = #tpu.dot_dimension_numbers<[1], [0], [0], [1], [0, 0, 1, 1], [], []>} : vector<16x11xf32>, vector<11x32xf32>, vector<16x32xf32> -> vector<16x32xf32>
    %19 = arith.addf %18, %16 : vector<16x32xf32>
    %c0_8 = arith.constant 0 : index
    %c0_9 = arith.constant 0 : index
    %c0_10 = arith.constant 0 : index
    %20 = vector.load %arg4[%c0_8, %c0_9, %c0_10] : memref<2x32x96xf32, #tpu.memory_space<vmem>>, vector<1x32x96xf32>
    %21 = vector.shape_cast %20 : vector<1x32x96xf32> to vector<32x96xf32>
    %cst_11 = arith.constant dense<0.000000e+00> : vector<16x96xf32>
    %22 = tpu.matmul %19, %21, %cst_11 {dimension_numbers = #tpu.dot_dimension_numbers<[1], [0], [0], [1], [0, 0, 1, 1], [], []>} : vector<16x32xf32>, vector<32x96xf32>, vector<16x96xf32> -> vector<16x96xf32>
    %c0_12 = arith.constant 0 : index
    %c0_13 = arith.constant 0 : index
    %c0_14 = arith.constant 0 : index
    %23 = vector.load %arg5[%c0_12, %c0_13, %c0_14] : memref<2x1x96xf32, #tpu.memory_space<vmem>>, vector<1x1x96xf32>
    %24 = vector.shape_cast %23 : vector<1x1x96xf32> to vector<1x96xf32>
    %25 = vector.broadcast %24 : vector<1x96xf32> to vector<16x96xf32>
    %26 = arith.addf %22, %25 : vector<16x96xf32>
    %27 = vector.extract_strided_slice %8 {offsets = [0, 0], sizes = [1, 8], strides = [1, 1]} : vector<2x8xf32> to vector<1x8xf32>
    %28 = vector.extract_strided_slice %26 {offsets = [0, 0], sizes = [8, 8], strides = [1, 1]} : vector<16x96xf32> to vector<8x8xf32>
    %29 = vector.extract_strided_slice %26 {offsets = [0, 32], sizes = [8, 8], strides = [1, 1]} : vector<16x96xf32> to vector<8x8xf32>
    %30 = vector.extract_strided_slice %26 {offsets = [0, 64], sizes = [8, 8], strides = [1, 1]} : vector<16x96xf32> to vector<8x8xf32>
    %31 = tpu.transpose %29, [1, 0] : vector<8x8xf32> -> vector<8x8xf32>
    %cst_15 = arith.constant dense<0.000000e+00> : vector<8x8xf32>
    %32 = tpu.matmul %28, %31, %cst_15 {dimension_numbers = #tpu.dot_dimension_numbers<[1], [0], [0], [1], [0, 0, 1, 1], [], []>} : vector<8x8xf32>, vector<8x8xf32>, vector<8x8xf32> -> vector<8x8xf32>
    %cst_16 = arith.constant 0.353553385 : f32
    %33 = vector.broadcast %cst_16 : f32 to vector<8x8xf32>
    %34 = arith.mulf %32, %33 : vector<8x8xf32>
    %cst_17 = arith.constant 5.000000e-01 : f32
    %35 = vector.broadcast %cst_17 : f32 to vector<1x8xf32>
    %36 = arith.cmpf ogt, %27, %35 : vector<1x8xf32>
    %cst_18 = arith.constant -1.000000e+09 : f32
    %37 = vector.shape_cast %36 : vector<1x8xi1> to vector<1x8xi1>
    %38 = vector.broadcast %37 : vector<1x8xi1> to vector<8x8xi1>
    %39 = vector.broadcast %cst_18 : f32 to vector<8x8xf32>
    %40 = arith.select %38, %39, %34 : vector<8x8xi1>, vector<8x8xf32>
    %cst_19 = arith.constant dense<0xFF800000> : vector<8xf32>
    %41 = vector.multi_reduction <maximumf>, %40, %cst_19 [1] : vector<8x8xf32> to vector<8xf32>
    %42 = vector.shape_cast %41 : vector<8xf32> to vector<8x1xf32>
    %43 = vector.broadcast %42 : vector<8x1xf32> to vector<8x8xf32>
    %44 = arith.subf %40, %43 : vector<8x8xf32>
    %45 = math.exp %44 : vector<8x8xf32>
    %cst_20 = arith.constant dense<0.000000e+00> : vector<8xf32>
    %46 = vector.multi_reduction <add>, %45, %cst_20 [1] : vector<8x8xf32> to vector<8xf32>
    %47 = vector.shape_cast %46 : vector<8xf32> to vector<8x1xf32>
    %48 = tpu.reciprocal %47 {approx = true} : vector<8x1xf32> -> vector<8x1xf32>
    %49 = vector.broadcast %48 : vector<8x1xf32> to vector<8x8xf32>
    %50 = arith.mulf %45, %49 : vector<8x8xf32>
    %c0_21 = arith.constant 0 : index
    %c0_22 = arith.constant 0 : index
    %c0_23 = arith.constant 0 : index
    %51 = vector.load %arg21[%c0_21, %c0_22, %c0_23] : memref<16x8x8xf32, #tpu.memory_space<vmem>>, vector<1x8x8xf32>
    %52 = vector.shape_cast %51 : vector<1x8x8xf32> to vector<8x8xf32>
    %53 = vector.shape_cast %50 : vector<8x8xf32> to vector<1x8x8xf32>
    tpu.vector_store %arg21[%c0_21, %c0_22, %c0_23], %53 {strides = array<i32>} : memref<16x8x8xf32, #tpu.memory_space<vmem>>, vector<1x8x8xf32>,
    %cst_24 = arith.constant dense<0.000000e+00> : vector<8x8xf32>
    %54 = tpu.matmul %50, %30, %cst_24 {dimension_numbers = #tpu.dot_dimension_numbers<[1], [0], [0], [1], [0, 0, 1, 1], [], []>} : vector<8x8xf32>, vector<8x8xf32>, vector<8x8xf32> -> vector<8x8xf32>
    %c0_25 = arith.constant 0 : index
    %c0_26 = arith.constant 0 : index
    %55 = vector.load %arg22[%c0_25, %c0_26] : memref<16x32xf32, #tpu.memory_space<vmem>>, vector<8x8xf32>
    tpu.vector_store %arg22[%c0_25, %c0_26], %54 {strides = array<i32>} : memref<16x32xf32, #tpu.memory_space<vmem>>, vector<8x8xf32>,
    %56 = vector.extract_strided_slice %26 {offsets = [0, 8], sizes = [8, 8], strides = [1, 1]} : vector<16x96xf32> to vector<8x8xf32>
    %57 = vector.extract_strided_slice %26 {offsets = [0, 40], sizes = [8, 8], strides = [1, 1]} : vector<16x96xf32> to vector<8x8xf32>
    %58 = vector.extract_strided_slice %26 {offsets = [0, 72], sizes = [8, 8], strides = [1, 1]} : vector<16x96xf32> to vector<8x8xf32>
    %59 = tpu.transpose %57, [1, 0] : vector<8x8xf32> -> vector<8x8xf32>
    %cst_27 = arith.constant dense<0.000000e+00> : vector<8x8xf32>
    %60 = tpu.matmul %56, %59, %cst_27 {dimension_numbers = #tpu.dot_dimension_numbers<[1], [0], [0], [1], [0, 0, 1, 1], [], []>} : vector<8x8xf32>, vector<8x8xf32>, vector<8x8xf32> -> vector<8x8xf32>
    %cst_28 = arith.constant 0.353553385 : f32
    %61 = vector.broadcast %cst_28 : f32 to vector<8x8xf32>
    %62 = arith.mulf %60, %61 : vector<8x8xf32>
    %cst_29 = arith.constant 5.000000e-01 : f32
    %63 = vector.broadcast %cst_29 : f32 to vector<1x8xf32>
    %64 = arith.cmpf ogt, %27, %63 : vector<1x8xf32>
    %cst_30 = arith.constant -1.000000e+09 : f32
    %65 = vector.shape_cast %64 : vector<1x8xi1> to vector<1x8xi1>
    %66 = vector.broadcast %65 : vector<1x8xi1> to vector<8x8xi1>
    %67 = vector.broadcast %cst_30 : f32 to vector<8x8xf32>
    %68 = arith.select %66, %67, %62 : vector<8x8xi1>, vector<8x8xf32>
    %cst_31 = arith.constant dense<0xFF800000> : vector<8xf32>
    %69 = vector.multi_reduction <maximumf>, %68, %cst_31 [1] : vector<8x8xf32> to vector<8xf32>
    %70 = vector.shape_cast %69 : vector<8xf32> to vector<8x1xf32>
    %71 = vector.broadcast %70 : vector<8x1xf32> to vector<8x8xf32>
    %72 = arith.subf %68, %71 : vector<8x8xf32>
    %73 = math.exp %72 : vector<8x8xf32>
    %cst_32 = arith.constant dense<0.000000e+00> : vector<8xf32>
    %74 = vector.multi_reduction <add>, %73, %cst_32 [1] : vector<8x8xf32> to vector<8xf32>
    %75 = vector.shape_cast %74 : vector<8xf32> to vector<8x1xf32>
    %76 = tpu.reciprocal %75 {approx = true} : vector<8x1xf32> -> vector<8x1xf32>
    %77 = vector.broadcast %76 : vector<8x1xf32> to vector<8x8xf32>
    %78 = arith.mulf %73, %77 : vector<8x8xf32>
    %c1 = arith.constant 1 : index
    %c0_33 = arith.constant 0 : index
    %c0_34 = arith.constant 0 : index
    %79 = vector.load %arg21[%c1, %c0_33, %c0_34] : memref<16x8x8xf32, #tpu.memory_space<vmem>>, vector<1x8x8xf32>
    %80 = vector.shape_cast %79 : vector<1x8x8xf32> to vector<8x8xf32>
    %81 = vector.shape_cast %78 : vector<8x8xf32> to vector<1x8x8xf32>
    tpu.vector_store %arg21[%c1, %c0_33, %c0_34], %81 {strides = array<i32>} : memref<16x8x8xf32, #tpu.memory_space<vmem>>, vector<1x8x8xf32>,
    %cst_35 = arith.constant dense<0.000000e+00> : vector<8x8xf32>
    %82 = tpu.matmul %78, %58, %cst_35 {dimension_numbers = #tpu.dot_dimension_numbers<[1], [0], [0], [1], [0, 0, 1, 1], [], []>} : vector<8x8xf32>, vector<8x8xf32>, vector<8x8xf32> -> vector<8x8xf32>
    %c0_36 = arith.constant 0 : index
    %c8 = arith.constant 8 : index
    %83 = vector.load %arg22[%c0_36, %c8] : memref<16x32xf32, #tpu.memory_space<vmem>>, vector<8x8xf32>
    tpu.vector_store %arg22[%c0_36, %c8], %82 {strides = array<i32>} : memref<16x32xf32, #tpu.memory_space<vmem>>, vector<8x8xf32>,
    %84 = vector.extract_strided_slice %26 {offsets = [0, 16], sizes = [8, 8], strides = [1, 1]} : vector<16x96xf32> to vector<8x8xf32>
    %85 = vector.extract_strided_slice %26 {offsets = [0, 48], sizes = [8, 8], strides = [1, 1]} : vector<16x96xf32> to vector<8x8xf32>
    %86 = vector.extract_strided_slice %26 {offsets = [0, 80], sizes = [8, 8], strides = [1, 1]} : vector<16x96xf32> to vector<8x8xf32>
    %87 = tpu.transpose %85, [1, 0] : vector<8x8xf32> -> vector<8x8xf32>
    %cst_37 = arith.constant dense<0.000000e+00> : vector<8x8xf32>
    %88 = tpu.matmul %84, %87, %cst_37 {dimension_numbers = #tpu.dot_dimension_numbers<[1], [0], [0], [1], [0, 0, 1, 1], [], []>} : vector<8x8xf32>, vector<8x8xf32>, vector<8x8xf32> -> vector<8x8xf32>
    %cst_38 = arith.constant 0.353553385 : f32
    %89 = vector.broadcast %cst_38 : f32 to vector<8x8xf32>
    %90 = arith.mulf %88, %89 : vector<8x8xf32>
    %cst_39 = arith.constant 5.000000e-01 : f32
    %91 = vector.broadcast %cst_39 : f32 to vector<1x8xf32>
    %92 = arith.cmpf ogt, %27, %91 : vector<1x8xf32>
    %cst_40 = arith.constant -1.000000e+09 : f32
    %93 = vector.shape_cast %92 : vector<1x8xi1> to vector<1x8xi1>
    %94 = vector.broadcast %93 : vector<1x8xi1> to vector<8x8xi1>
    %95 = vector.broadcast %cst_40 : f32 to vector<8x8xf32>
    %96 = arith.select %94, %95, %90 : vector<8x8xi1>, vector<8x8xf32>
    %cst_41 = arith.constant dense<0xFF800000> : vector<8xf32>
    %97 = vector.multi_reduction <maximumf>, %96, %cst_41 [1] : vector<8x8xf32> to vector<8xf32>
    %98 = vector.shape_cast %97 : vector<8xf32> to vector<8x1xf32>
    %99 = vector.broadcast %98 : vector<8x1xf32> to vector<8x8xf32>
    %100 = arith.subf %96, %99 : vector<8x8xf32>
    %101 = math.exp %100 : vector<8x8xf32>
    %cst_42 = arith.constant dense<0.000000e+00> : vector<8xf32>
    %102 = vector.multi_reduction <add>, %101, %cst_42 [1] : vector<8x8xf32> to vector<8xf32>
    %103 = vector.shape_cast %102 : vector<8xf32> to vector<8x1xf32>
    %104 = tpu.reciprocal %103 {approx = true} : vector<8x1xf32> -> vector<8x1xf32>
    %105 = vector.broadcast %104 : vector<8x1xf32> to vector<8x8xf32>
    %106 = arith.mulf %101, %105 : vector<8x8xf32>
    %c2 = arith.constant 2 : index
    %c0_43 = arith.constant 0 : index
    %c0_44 = arith.constant 0 : index
    %107 = vector.load %arg21[%c2, %c0_43, %c0_44] : memref<16x8x8xf32, #tpu.memory_space<vmem>>, vector<1x8x8xf32>
    %108 = vector.shape_cast %107 : vector<1x8x8xf32> to vector<8x8xf32>
    %109 = vector.shape_cast %106 : vector<8x8xf32> to vector<1x8x8xf32>
    tpu.vector_store %arg21[%c2, %c0_43, %c0_44], %109 {strides = array<i32>} : memref<16x8x8xf32, #tpu.memory_space<vmem>>, vector<1x8x8xf32>,
    %cst_45 = arith.constant dense<0.000000e+00> : vector<8x8xf32>
    %110 = tpu.matmul %106, %86, %cst_45 {dimension_numbers = #tpu.dot_dimension_numbers<[1], [0], [0], [1], [0, 0, 1, 1], [], []>} : vector<8x8xf32>, vector<8x8xf32>, vector<8x8xf32> -> vector<8x8xf32>
    %c0_46 = arith.constant 0 : index
    %c16 = arith.constant 16 : index
    %111 = vector.load %arg22[%c0_46, %c16] : memref<16x32xf32, #tpu.memory_space<vmem>>, vector<8x8xf32>
    tpu.vector_store %arg22[%c0_46, %c16], %110 {strides = array<i32>} : memref<16x32xf32, #tpu.memory_space<vmem>>, vector<8x8xf32>,
    %112 = vector.extract_strided_slice %26 {offsets = [0, 24], sizes = [8, 8], strides = [1, 1]} : vector<16x96xf32> to vector<8x8xf32>
    %113 = vector.extract_strided_slice %26 {offsets = [0, 56], sizes = [8, 8], strides = [1, 1]} : vector<16x96xf32> to vector<8x8xf32>
    %114 = vector.extract_strided_slice %26 {offsets = [0, 88], sizes = [8, 8], strides = [1, 1]} : vector<16x96xf32> to vector<8x8xf32>
    %115 = tpu.transpose %113, [1, 0] : vector<8x8xf32> -> vector<8x8xf32>
    %cst_47 = arith.constant dense<0.000000e+00> : vector<8x8xf32>
    %116 = tpu.matmul %112, %115, %cst_47 {dimension_numbers = #tpu.dot_dimension_numbers<[1], [0], [0], [1], [0, 0, 1, 1], [], []>} : vector<8x8xf32>, vector<8x8xf32>, vector<8x8xf32> -> vector<8x8xf32>
    %cst_48 = arith.constant 0.353553385 : f32
    %117 = vector.broadcast %cst_48 : f32 to vector<8x8xf32>
    %118 = arith.mulf %116, %117 : vector<8x8xf32>
    %cst_49 = arith.constant 5.000000e-01 : f32
    %119 = vector.broadcast %cst_49 : f32 to vector<1x8xf32>
    %120 = arith.cmpf ogt, %27, %119 : vector<1x8xf32>
    %cst_50 = arith.constant -1.000000e+09 : f32
    %121 = vector.shape_cast %120 : vector<1x8xi1> to vector<1x8xi1>
    %122 = vector.broadcast %121 : vector<1x8xi1> to vector<8x8xi1>
    %123 = vector.broadcast %cst_50 : f32 to vector<8x8xf32>
    %124 = arith.select %122, %123, %118 : vector<8x8xi1>, vector<8x8xf32>
    %cst_51 = arith.constant dense<0xFF800000> : vector<8xf32>
    %125 = vector.multi_reduction <maximumf>, %124, %cst_51 [1] : vector<8x8xf32> to vector<8xf32>
    %126 = vector.shape_cast %125 : vector<8xf32> to vector<8x1xf32>
    %127 = vector.broadcast %126 : vector<8x1xf32> to vector<8x8xf32>
    %128 = arith.subf %124, %127 : vector<8x8xf32>
    %129 = math.exp %128 : vector<8x8xf32>
    %cst_52 = arith.constant dense<0.000000e+00> : vector<8xf32>
    %130 = vector.multi_reduction <add>, %129, %cst_52 [1] : vector<8x8xf32> to vector<8xf32>
    %131 = vector.shape_cast %130 : vector<8xf32> to vector<8x1xf32>
    %132 = tpu.reciprocal %131 {approx = true} : vector<8x1xf32> -> vector<8x1xf32>
    %133 = vector.broadcast %132 : vector<8x1xf32> to vector<8x8xf32>
    %134 = arith.mulf %129, %133 : vector<8x8xf32>
    %c3 = arith.constant 3 : index
    %c0_53 = arith.constant 0 : index
    %c0_54 = arith.constant 0 : index
    %135 = vector.load %arg21[%c3, %c0_53, %c0_54] : memref<16x8x8xf32, #tpu.memory_space<vmem>>, vector<1x8x8xf32>
    %136 = vector.shape_cast %135 : vector<1x8x8xf32> to vector<8x8xf32>
    %137 = vector.shape_cast %134 : vector<8x8xf32> to vector<1x8x8xf32>
    tpu.vector_store %arg21[%c3, %c0_53, %c0_54], %137 {strides = array<i32>} : memref<16x8x8xf32, #tpu.memory_space<vmem>>, vector<1x8x8xf32>,
    %cst_55 = arith.constant dense<0.000000e+00> : vector<8x8xf32>
    %138 = tpu.matmul %134, %114, %cst_55 {dimension_numbers = #tpu.dot_dimension_numbers<[1], [0], [0], [1], [0, 0, 1, 1], [], []>} : vector<8x8xf32>, vector<8x8xf32>, vector<8x8xf32> -> vector<8x8xf32>
    %c0_56 = arith.constant 0 : index
    %c24 = arith.constant 24 : index
    %139 = vector.load %arg22[%c0_56, %c24] : memref<16x32xf32, #tpu.memory_space<vmem>>, vector<8x8xf32>
    tpu.vector_store %arg22[%c0_56, %c24], %138 {strides = array<i32>} : memref<16x32xf32, #tpu.memory_space<vmem>>, vector<8x8xf32>,
    %140 = vector.extract_strided_slice %8 {offsets = [1, 0], sizes = [1, 8], strides = [1, 1]} : vector<2x8xf32> to vector<1x8xf32>
    %141 = vector.extract_strided_slice %26 {offsets = [8, 0], sizes = [8, 8], strides = [1, 1]} : vector<16x96xf32> to vector<8x8xf32>
    %142 = vector.extract_strided_slice %26 {offsets = [8, 32], sizes = [8, 8], strides = [1, 1]} : vector<16x96xf32> to vector<8x8xf32>
    %143 = vector.extract_strided_slice %26 {offsets = [8, 64], sizes = [8, 8], strides = [1, 1]} : vector<16x96xf32> to vector<8x8xf32>
    %144 = tpu.transpose %142, [1, 0] : vector<8x8xf32> -> vector<8x8xf32>
    %cst_57 = arith.constant dense<0.000000e+00> : vector<8x8xf32>
    %145 = tpu.matmul %141, %144, %cst_57 {dimension_numbers = #tpu.dot_dimension_numbers<[1], [0], [0], [1], [0, 0, 1, 1], [], []>} : vector<8x8xf32>, vector<8x8xf32>, vector<8x8xf32> -> vector<8x8xf32>
    %cst_58 = arith.constant 0.353553385 : f32
    %146 = vector.broadcast %cst_58 : f32 to vector<8x8xf32>
    %147 = arith.mulf %145, %146 : vector<8x8xf32>
    %cst_59 = arith.constant 5.000000e-01 : f32
    %148 = vector.broadcast %cst_59 : f32 to vector<1x8xf32>
    %149 = arith.cmpf ogt, %140, %148 : vector<1x8xf32>
    %cst_60 = arith.constant -1.000000e+09 : f32
    %150 = vector.shape_cast %149 : vector<1x8xi1> to vector<1x8xi1>
    %151 = vector.broadcast %150 : vector<1x8xi1> to vector<8x8xi1>
    %152 = vector.broadcast %cst_60 : f32 to vector<8x8xf32>
    %153 = arith.select %151, %152, %147 : vector<8x8xi1>, vector<8x8xf32>
    %cst_61 = arith.constant dense<0xFF800000> : vector<8xf32>
    %154 = vector.multi_reduction <maximumf>, %153, %cst_61 [1] : vector<8x8xf32> to vector<8xf32>
    %155 = vector.shape_cast %154 : vector<8xf32> to vector<8x1xf32>
    %156 = vector.broadcast %155 : vector<8x1xf32> to vector<8x8xf32>
    %157 = arith.subf %153, %156 : vector<8x8xf32>
    %158 = math.exp %157 : vector<8x8xf32>
    %cst_62 = arith.constant dense<0.000000e+00> : vector<8xf32>
    %159 = vector.multi_reduction <add>, %158, %cst_62 [1] : vector<8x8xf32> to vector<8xf32>
    %160 = vector.shape_cast %159 : vector<8xf32> to vector<8x1xf32>
    %161 = tpu.reciprocal %160 {approx = true} : vector<8x1xf32> -> vector<8x1xf32>
    %162 = vector.broadcast %161 : vector<8x1xf32> to vector<8x8xf32>
    %163 = arith.mulf %158, %162 : vector<8x8xf32>
    %c4 = arith.constant 4 : index
    %c0_63 = arith.constant 0 : index
    %c0_64 = arith.constant 0 : index
    %164 = vector.load %arg21[%c4, %c0_63, %c0_64] : memref<16x8x8xf32, #tpu.memory_space<vmem>>, vector<1x8x8xf32>
    %165 = vector.shape_cast %164 : vector<1x8x8xf32> to vector<8x8xf32>
    %166 = vector.shape_cast %163 : vector<8x8xf32> to vector<1x8x8xf32>
    tpu.vector_store %arg21[%c4, %c0_63, %c0_64], %166 {strides = array<i32>} : memref<16x8x8xf32, #tpu.memory_space<vmem>>, vector<1x8x8xf32>,
    %cst_65 = arith.constant dense<0.000000e+00> : vector<8x8xf32>
    %167 = tpu.matmul %163, %143, %cst_65 {dimension_numbers = #tpu.dot_dimension_numbers<[1], [0], [0], [1], [0, 0, 1, 1], [], []>} : vector<8x8xf32>, vector<8x8xf32>, vector<8x8xf32> -> vector<8x8xf32>
    %c8_66 = arith.constant 8 : index
    %c0_67 = arith.constant 0 : index
    %168 = vector.load %arg22[%c8_66, %c0_67] : memref<16x32xf32, #tpu.memory_space<vmem>>, vector<8x8xf32>
    tpu.vector_store %arg22[%c8_66, %c0_67], %167 {strides = array<i32>} : memref<16x32xf32, #tpu.memory_space<vmem>>, vector<8x8xf32>,
    %169 = vector.extract_strided_slice %26 {offsets = [8, 8], sizes = [8, 8], strides = [1, 1]} : vector<16x96xf32> to vector<8x8xf32>
    %170 = vector.extract_strided_slice %26 {offsets = [8, 40], sizes = [8, 8], strides = [1, 1]} : vector<16x96xf32> to vector<8x8xf32>
    %171 = vector.extract_strided_slice %26 {offsets = [8, 72], sizes = [8, 8], strides = [1, 1]} : vector<16x96xf32> to vector<8x8xf32>
    %172 = tpu.transpose %170, [1, 0] : vector<8x8xf32> -> vector<8x8xf32>
    %cst_68 = arith.constant dense<0.000000e+00> : vector<8x8xf32>
    %173 = tpu.matmul %169, %172, %cst_68 {dimension_numbers = #tpu.dot_dimension_numbers<[1], [0], [0], [1], [0, 0, 1, 1], [], []>} : vector<8x8xf32>, vector<8x8xf32>, vector<8x8xf32> -> vector<8x8xf32>
    %cst_69 = arith.constant 0.353553385 : f32
    %174 = vector.broadcast %cst_69 : f32 to vector<8x8xf32>
    %175 = arith.mulf %173, %174 : vector<8x8xf32>
    %cst_70 = arith.constant 5.000000e-01 : f32
    %176 = vector.broadcast %cst_70 : f32 to vector<1x8xf32>
    %177 = arith.cmpf ogt, %140, %176 : vector<1x8xf32>
    %cst_71 = arith.constant -1.000000e+09 : f32
    %178 = vector.shape_cast %177 : vector<1x8xi1> to vector<1x8xi1>
    %179 = vector.broadcast %178 : vector<1x8xi1> to vector<8x8xi1>
    %180 = vector.broadcast %cst_71 : f32 to vector<8x8xf32>
    %181 = arith.select %179, %180, %175 : vector<8x8xi1>, vector<8x8xf32>
    %cst_72 = arith.constant dense<0xFF800000> : vector<8xf32>
    %182 = vector.multi_reduction <maximumf>, %181, %cst_72 [1] : vector<8x8xf32> to vector<8xf32>
    %183 = vector.shape_cast %182 : vector<8xf32> to vector<8x1xf32>
    %184 = vector.broadcast %183 : vector<8x1xf32> to vector<8x8xf32>
    %185 = arith.subf %181, %184 : vector<8x8xf32>
    %186 = math.exp %185 : vector<8x8xf32>
    %cst_73 = arith.constant dense<0.000000e+00> : vector<8xf32>
    %187 = vector.multi_reduction <add>, %186, %cst_73 [1] : vector<8x8xf32> to vector<8xf32>
    %188 = vector.shape_cast %187 : vector<8xf32> to vector<8x1xf32>
    %189 = tpu.reciprocal %188 {approx = true} : vector<8x1xf32> -> vector<8x1xf32>
    %190 = vector.broadcast %189 : vector<8x1xf32> to vector<8x8xf32>
    %191 = arith.mulf %186, %190 : vector<8x8xf32>
    %c5 = arith.constant 5 : index
    %c0_74 = arith.constant 0 : index
    %c0_75 = arith.constant 0 : index
    %192 = vector.load %arg21[%c5, %c0_74, %c0_75] : memref<16x8x8xf32, #tpu.memory_space<vmem>>, vector<1x8x8xf32>
    %193 = vector.shape_cast %192 : vector<1x8x8xf32> to vector<8x8xf32>
    %194 = vector.shape_cast %191 : vector<8x8xf32> to vector<1x8x8xf32>
    tpu.vector_store %arg21[%c5, %c0_74, %c0_75], %194 {strides = array<i32>} : memref<16x8x8xf32, #tpu.memory_space<vmem>>, vector<1x8x8xf32>,
    %cst_76 = arith.constant dense<0.000000e+00> : vector<8x8xf32>
    %195 = tpu.matmul %191, %171, %cst_76 {dimension_numbers = #tpu.dot_dimension_numbers<[1], [0], [0], [1], [0, 0, 1, 1], [], []>} : vector<8x8xf32>, vector<8x8xf32>, vector<8x8xf32> -> vector<8x8xf32>
    %c8_77 = arith.constant 8 : index
    %c8_78 = arith.constant 8 : index
    %196 = vector.load %arg22[%c8_77, %c8_78] : memref<16x32xf32, #tpu.memory_space<vmem>>, vector<8x8xf32>
    tpu.vector_store %arg22[%c8_77, %c8_78], %195 {strides = array<i32>} : memref<16x32xf32, #tpu.memory_space<vmem>>, vector<8x8xf32>,
    %197 = vector.extract_strided_slice %26 {offsets = [8, 16], sizes = [8, 8], strides = [1, 1]} : vector<16x96xf32> to vector<8x8xf32>
    %198 = vector.extract_strided_slice %26 {offsets = [8, 48], sizes = [8, 8], strides = [1, 1]} : vector<16x96xf32> to vector<8x8xf32>
    %199 = vector.extract_strided_slice %26 {offsets = [8, 80], sizes = [8, 8], strides = [1, 1]} : vector<16x96xf32> to vector<8x8xf32>
    %200 = tpu.transpose %198, [1, 0] : vector<8x8xf32> -> vector<8x8xf32>
    %cst_79 = arith.constant dense<0.000000e+00> : vector<8x8xf32>
    %201 = tpu.matmul %197, %200, %cst_79 {dimension_numbers = #tpu.dot_dimension_numbers<[1], [0], [0], [1], [0, 0, 1, 1], [], []>} : vector<8x8xf32>, vector<8x8xf32>, vector<8x8xf32> -> vector<8x8xf32>
    %cst_80 = arith.constant 0.353553385 : f32
    %202 = vector.broadcast %cst_80 : f32 to vector<8x8xf32>
    %203 = arith.mulf %201, %202 : vector<8x8xf32>
    %cst_81 = arith.constant 5.000000e-01 : f32
    %204 = vector.broadcast %cst_81 : f32 to vector<1x8xf32>
    %205 = arith.cmpf ogt, %140, %204 : vector<1x8xf32>
    %cst_82 = arith.constant -1.000000e+09 : f32
    %206 = vector.shape_cast %205 : vector<1x8xi1> to vector<1x8xi1>
    %207 = vector.broadcast %206 : vector<1x8xi1> to vector<8x8xi1>
    %208 = vector.broadcast %cst_82 : f32 to vector<8x8xf32>
    %209 = arith.select %207, %208, %203 : vector<8x8xi1>, vector<8x8xf32>
    %cst_83 = arith.constant dense<0xFF800000> : vector<8xf32>
    %210 = vector.multi_reduction <maximumf>, %209, %cst_83 [1] : vector<8x8xf32> to vector<8xf32>
    %211 = vector.shape_cast %210 : vector<8xf32> to vector<8x1xf32>
    %212 = vector.broadcast %211 : vector<8x1xf32> to vector<8x8xf32>
    %213 = arith.subf %209, %212 : vector<8x8xf32>
    %214 = math.exp %213 : vector<8x8xf32>
    %cst_84 = arith.constant dense<0.000000e+00> : vector<8xf32>
    %215 = vector.multi_reduction <add>, %214, %cst_84 [1] : vector<8x8xf32> to vector<8xf32>
    %216 = vector.shape_cast %215 : vector<8xf32> to vector<8x1xf32>
    %217 = tpu.reciprocal %216 {approx = true} : vector<8x1xf32> -> vector<8x1xf32>
    %218 = vector.broadcast %217 : vector<8x1xf32> to vector<8x8xf32>
    %219 = arith.mulf %214, %218 : vector<8x8xf32>
    %c6 = arith.constant 6 : index
    %c0_85 = arith.constant 0 : index
    %c0_86 = arith.constant 0 : index
    %220 = vector.load %arg21[%c6, %c0_85, %c0_86] : memref<16x8x8xf32, #tpu.memory_space<vmem>>, vector<1x8x8xf32>
    %221 = vector.shape_cast %220 : vector<1x8x8xf32> to vector<8x8xf32>
    %222 = vector.shape_cast %219 : vector<8x8xf32> to vector<1x8x8xf32>
    tpu.vector_store %arg21[%c6, %c0_85, %c0_86], %222 {strides = array<i32>} : memref<16x8x8xf32, #tpu.memory_space<vmem>>, vector<1x8x8xf32>,
    %cst_87 = arith.constant dense<0.000000e+00> : vector<8x8xf32>
    %223 = tpu.matmul %219, %199, %cst_87 {dimension_numbers = #tpu.dot_dimension_numbers<[1], [0], [0], [1], [0, 0, 1, 1], [], []>} : vector<8x8xf32>, vector<8x8xf32>, vector<8x8xf32> -> vector<8x8xf32>
    %c8_88 = arith.constant 8 : index
    %c16_89 = arith.constant 16 : index
    %224 = vector.load %arg22[%c8_88, %c16_89] : memref<16x32xf32, #tpu.memory_space<vmem>>, vector<8x8xf32>
    tpu.vector_store %arg22[%c8_88, %c16_89], %223 {strides = array<i32>} : memref<16x32xf32, #tpu.memory_space<vmem>>, vector<8x8xf32>,
    %225 = vector.extract_strided_slice %26 {offsets = [8, 24], sizes = [8, 8], strides = [1, 1]} : vector<16x96xf32> to vector<8x8xf32>
    %226 = vector.extract_strided_slice %26 {offsets = [8, 56], sizes = [8, 8], strides = [1, 1]} : vector<16x96xf32> to vector<8x8xf32>
    %227 = vector.extract_strided_slice %26 {offsets = [8, 88], sizes = [8, 8], strides = [1, 1]} : vector<16x96xf32> to vector<8x8xf32>
    %228 = tpu.transpose %226, [1, 0] : vector<8x8xf32> -> vector<8x8xf32>
    %cst_90 = arith.constant dense<0.000000e+00> : vector<8x8xf32>
    %229 = tpu.matmul %225, %228, %cst_90 {dimension_numbers = #tpu.dot_dimension_numbers<[1], [0], [0], [1], [0, 0, 1, 1], [], []>} : vector<8x8xf32>, vector<8x8xf32>, vector<8x8xf32> -> vector<8x8xf32>
    %cst_91 = arith.constant 0.353553385 : f32
    %230 = vector.broadcast %cst_91 : f32 to vector<8x8xf32>
    %231 = arith.mulf %229, %230 : vector<8x8xf32>
    %cst_92 = arith.constant 5.000000e-01 : f32
    %232 = vector.broadcast %cst_92 : f32 to vector<1x8xf32>
    %233 = arith.cmpf ogt, %140, %232 : vector<1x8xf32>
    %cst_93 = arith.constant -1.000000e+09 : f32
    %234 = vector.shape_cast %233 : vector<1x8xi1> to vector<1x8xi1>
    %235 = vector.broadcast %234 : vector<1x8xi1> to vector<8x8xi1>
    %236 = vector.broadcast %cst_93 : f32 to vector<8x8xf32>
    %237 = arith.select %235, %236, %231 : vector<8x8xi1>, vector<8x8xf32>
    %cst_94 = arith.constant dense<0xFF800000> : vector<8xf32>
    %238 = vector.multi_reduction <maximumf>, %237, %cst_94 [1] : vector<8x8xf32> to vector<8xf32>
    %239 = vector.shape_cast %238 : vector<8xf32> to vector<8x1xf32>
    %240 = vector.broadcast %239 : vector<8x1xf32> to vector<8x8xf32>
    %241 = arith.subf %237, %240 : vector<8x8xf32>
    %242 = math.exp %241 : vector<8x8xf32>
    %cst_95 = arith.constant dense<0.000000e+00> : vector<8xf32>
    %243 = vector.multi_reduction <add>, %242, %cst_95 [1] : vector<8x8xf32> to vector<8xf32>
    %244 = vector.shape_cast %243 : vector<8xf32> to vector<8x1xf32>
    %245 = tpu.reciprocal %244 {approx = true} : vector<8x1xf32> -> vector<8x1xf32>
    %246 = vector.broadcast %245 : vector<8x1xf32> to vector<8x8xf32>
    %247 = arith.mulf %242, %246 : vector<8x8xf32>
    %c7 = arith.constant 7 : index
    %c0_96 = arith.constant 0 : index
    %c0_97 = arith.constant 0 : index
    %248 = vector.load %arg21[%c7, %c0_96, %c0_97] : memref<16x8x8xf32, #tpu.memory_space<vmem>>, vector<1x8x8xf32>
    %249 = vector.shape_cast %248 : vector<1x8x8xf32> to vector<8x8xf32>
    %250 = vector.shape_cast %247 : vector<8x8xf32> to vector<1x8x8xf32>
    tpu.vector_store %arg21[%c7, %c0_96, %c0_97], %250 {strides = array<i32>} : memref<16x8x8xf32, #tpu.memory_space<vmem>>, vector<1x8x8xf32>,
    %cst_98 = arith.constant dense<0.000000e+00> : vector<8x8xf32>
    %251 = tpu.matmul %247, %227, %cst_98 {dimension_numbers = #tpu.dot_dimension_numbers<[1], [0], [0], [1], [0, 0, 1, 1], [], []>} : vector<8x8xf32>, vector<8x8xf32>, vector<8x8xf32> -> vector<8x8xf32>
    %c8_99 = arith.constant 8 : index
    %c24_100 = arith.constant 24 : index
    %252 = vector.load %arg22[%c8_99, %c24_100] : memref<16x32xf32, #tpu.memory_space<vmem>>, vector<8x8xf32>
    tpu.vector_store %arg22[%c8_99, %c24_100], %251 {strides = array<i32>} : memref<16x32xf32, #tpu.memory_space<vmem>>, vector<8x8xf32>,
    %c0_101 = arith.constant 0 : index
    %c0_102 = arith.constant 0 : index
    %253 = vector.load %arg22[%c0_101, %c0_102] : memref<16x32xf32, #tpu.memory_space<vmem>>, vector<16x32xf32>
    %c0_103 = arith.constant 0 : index
    %c0_104 = arith.constant 0 : index
    %c0_105 = arith.constant 0 : index
    %254 = vector.load %arg6[%c0_103, %c0_104, %c0_105] : memref<2x32x32xf32, #tpu.memory_space<vmem>>, vector<1x32x32xf32>
    %255 = vector.shape_cast %254 : vector<1x32x32xf32> to vector<32x32xf32>
    %cst_106 = arith.constant dense<0.000000e+00> : vector<16x32xf32>
    %256 = tpu.matmul %253, %255, %cst_106 {dimension_numbers = #tpu.dot_dimension_numbers<[1], [0], [0], [1], [0, 0, 1, 1], [], []>} : vector<16x32xf32>, vector<32x32xf32>, vector<16x32xf32> -> vector<16x32xf32>
    %c0_107 = arith.constant 0 : index
    %c0_108 = arith.constant 0 : index
    %c0_109 = arith.constant 0 : index
    %257 = vector.load %arg7[%c0_107, %c0_108, %c0_109] : memref<2x1x32xf32, #tpu.memory_space<vmem>>, vector<1x1x32xf32>
    %258 = vector.shape_cast %257 : vector<1x1x32xf32> to vector<1x32xf32>
    %259 = vector.broadcast %258 : vector<1x32xf32> to vector<16x32xf32>
    %260 = arith.addf %256, %259 : vector<16x32xf32>
    %261 = arith.addf %19, %260 : vector<16x32xf32>
    %c0_110 = arith.constant 0 : index
    %c0_111 = arith.constant 0 : index
    %c0_112 = arith.constant 0 : index
    %262 = vector.load %arg8[%c0_110, %c0_111, %c0_112] : memref<2x1x32xf32, #tpu.memory_space<vmem>>, vector<1x1x32xf32>
    %263 = vector.shape_cast %262 : vector<1x1x32xf32> to vector<1x32xf32>
    %c0_113 = arith.constant 0 : index
    %c0_114 = arith.constant 0 : index
    %c0_115 = arith.constant 0 : index
    %264 = vector.load %arg9[%c0_113, %c0_114, %c0_115] : memref<2x1x32xf32, #tpu.memory_space<vmem>>, vector<1x1x32xf32>
    %265 = vector.shape_cast %264 : vector<1x1x32xf32> to vector<1x32xf32>
    %cst_116 = arith.constant dense<0.000000e+00> : vector<16xf32>
    %266 = vector.multi_reduction <add>, %261, %cst_116 [1] : vector<16x32xf32> to vector<16xf32>
    %267 = vector.shape_cast %266 : vector<16xf32> to vector<16x1xf32>
    %cst_117 = arith.constant 3.200000e+01 : f32
    %268 = vector.broadcast %cst_117 : f32 to vector<16x1xf32>
    %269 = arith.divf %267, %268 : vector<16x1xf32>
    %270 = vector.broadcast %269 : vector<16x1xf32> to vector<16x32xf32>
    %271 = arith.subf %261, %270 : vector<16x32xf32>
    %272 = arith.mulf %271, %271 : vector<16x32xf32>
    %cst_118 = arith.constant dense<0.000000e+00> : vector<16xf32>
    %273 = vector.multi_reduction <add>, %272, %cst_118 [1] : vector<16x32xf32> to vector<16xf32>
    %274 = vector.shape_cast %273 : vector<16xf32> to vector<16x1xf32>
    %cst_119 = arith.constant 3.200000e+01 : f32
    %275 = vector.broadcast %cst_119 : f32 to vector<16x1xf32>
    %276 = arith.divf %274, %275 : vector<16x1xf32>
    %277 = vector.broadcast %269 : vector<16x1xf32> to vector<16x32xf32>
    %278 = arith.subf %261, %277 : vector<16x32xf32>
    %cst_120 = arith.constant 9.99999974E-6 : f32
    %279 = vector.broadcast %cst_120 : f32 to vector<16x1xf32>
    %280 = arith.addf %276, %279 : vector<16x1xf32>
    %281 = math.rsqrt %280 : vector<16x1xf32>
    %282 = vector.broadcast %281 : vector<16x1xf32> to vector<16x32xf32>
    %283 = arith.mulf %278, %282 : vector<16x32xf32>
    %284 = vector.broadcast %263 : vector<1x32xf32> to vector<16x32xf32>
    %285 = arith.mulf %283, %284 : vector<16x32xf32>
    %286 = vector.broadcast %265 : vector<1x32xf32> to vector<16x32xf32>
    %287 = arith.addf %285, %286 : vector<16x32xf32>
    %c0_121 = arith.constant 0 : index
    %c0_122 = arith.constant 0 : index
    %c0_123 = arith.constant 0 : index
    %288 = vector.load %arg12[%c0_121, %c0_122, %c0_123] : memref<2x32x64xf32, #tpu.memory_space<vmem>>, vector<1x32x64xf32>
    %289 = vector.shape_cast %288 : vector<1x32x64xf32> to vector<32x64xf32>
    %cst_124 = arith.constant dense<0.000000e+00> : vector<16x64xf32>
    %290 = tpu.matmul %287, %289, %cst_124 {dimension_numbers = #tpu.dot_dimension_numbers<[1], [0], [0], [1], [0, 0, 1, 1], [], []>} : vector<16x32xf32>, vector<32x64xf32>, vector<16x64xf32> -> vector<16x64xf32>
    %c0_125 = arith.constant 0 : index
    %c0_126 = arith.constant 0 : index
    %c0_127 = arith.constant 0 : index
    %291 = vector.load %arg13[%c0_125, %c0_126, %c0_127] : memref<2x1x64xf32, #tpu.memory_space<vmem>>, vector<1x1x64xf32>
    %292 = vector.shape_cast %291 : vector<1x1x64xf32> to vector<1x64xf32>
    %293 = vector.broadcast %292 : vector<1x64xf32> to vector<16x64xf32>
    %294 = arith.addf %290, %293 : vector<16x64xf32>
    %cst_128 = arith.constant 0.000000e+00 : f32
    %295 = vector.broadcast %cst_128 : f32 to vector<16x64xf32>
    %296 = arith.maximumf %294, %295 : vector<16x64xf32>
    %c0_129 = arith.constant 0 : index
    %c0_130 = arith.constant 0 : index
    %c0_131 = arith.constant 0 : index
    %297 = vector.load %arg14[%c0_129, %c0_130, %c0_131] : memref<2x64x32xf32, #tpu.memory_space<vmem>>, vector<1x64x32xf32>
    %298 = vector.shape_cast %297 : vector<1x64x32xf32> to vector<64x32xf32>
    %cst_132 = arith.constant dense<0.000000e+00> : vector<16x32xf32>
    %299 = tpu.matmul %296, %298, %cst_132 {dimension_numbers = #tpu.dot_dimension_numbers<[1], [0], [0], [1], [0, 0, 1, 1], [], []>} : vector<16x64xf32>, vector<64x32xf32>, vector<16x32xf32> -> vector<16x32xf32>
    %c0_133 = arith.constant 0 : index
    %c0_134 = arith.constant 0 : index
    %c0_135 = arith.constant 0 : index
    %300 = vector.load %arg15[%c0_133, %c0_134, %c0_135] : memref<2x1x32xf32, #tpu.memory_space<vmem>>, vector<1x1x32xf32>
    %301 = vector.shape_cast %300 : vector<1x1x32xf32> to vector<1x32xf32>
    %302 = vector.broadcast %301 : vector<1x32xf32> to vector<16x32xf32>
    %303 = arith.addf %299, %302 : vector<16x32xf32>
    %304 = arith.addf %287, %303 : vector<16x32xf32>
    %c0_136 = arith.constant 0 : index
    %c0_137 = arith.constant 0 : index
    %c0_138 = arith.constant 0 : index
    %305 = vector.load %arg10[%c0_136, %c0_137, %c0_138] : memref<2x1x32xf32, #tpu.memory_space<vmem>>, vector<1x1x32xf32>
    %306 = vector.shape_cast %305 : vector<1x1x32xf32> to vector<1x32xf32>
    %c0_139 = arith.constant 0 : index
    %c0_140 = arith.constant 0 : index
    %c0_141 = arith.constant 0 : index
    %307 = vector.load %arg11[%c0_139, %c0_140, %c0_141] : memref<2x1x32xf32, #tpu.memory_space<vmem>>, vector<1x1x32xf32>
    %308 = vector.shape_cast %307 : vector<1x1x32xf32> to vector<1x32xf32>
    %cst_142 = arith.constant dense<0.000000e+00> : vector<16xf32>
    %309 = vector.multi_reduction <add>, %304, %cst_142 [1] : vector<16x32xf32> to vector<16xf32>
    %310 = vector.shape_cast %309 : vector<16xf32> to vector<16x1xf32>
    %cst_143 = arith.constant 3.200000e+01 : f32
    %311 = vector.broadcast %cst_143 : f32 to vector<16x1xf32>
    %312 = arith.divf %310, %311 : vector<16x1xf32>
    %313 = vector.broadcast %312 : vector<16x1xf32> to vector<16x32xf32>
    %314 = arith.subf %304, %313 : vector<16x32xf32>
    %315 = arith.mulf %314, %314 : vector<16x32xf32>
    %cst_144 = arith.constant dense<0.000000e+00> : vector<16xf32>
    %316 = vector.multi_reduction <add>, %315, %cst_144 [1] : vector<16x32xf32> to vector<16xf32>
    %317 = vector.shape_cast %316 : vector<16xf32> to vector<16x1xf32>
    %cst_145 = arith.constant 3.200000e+01 : f32
    %318 = vector.broadcast %cst_145 : f32 to vector<16x1xf32>
    %319 = arith.divf %317, %318 : vector<16x1xf32>
    %320 = vector.broadcast %312 : vector<16x1xf32> to vector<16x32xf32>
    %321 = arith.subf %304, %320 : vector<16x32xf32>
    %cst_146 = arith.constant 9.99999974E-6 : f32
    %322 = vector.broadcast %cst_146 : f32 to vector<16x1xf32>
    %323 = arith.addf %319, %322 : vector<16x1xf32>
    %324 = math.rsqrt %323 : vector<16x1xf32>
    %325 = vector.broadcast %324 : vector<16x1xf32> to vector<16x32xf32>
    %326 = arith.mulf %321, %325 : vector<16x32xf32>
    %327 = vector.broadcast %306 : vector<1x32xf32> to vector<16x32xf32>
    %328 = arith.mulf %326, %327 : vector<16x32xf32>
    %329 = vector.broadcast %308 : vector<1x32xf32> to vector<16x32xf32>
    %330 = arith.addf %328, %329 : vector<16x32xf32>
    %c1_147 = arith.constant 1 : index
    %c0_148 = arith.constant 0 : index
    %c0_149 = arith.constant 0 : index
    %331 = vector.load %arg4[%c1_147, %c0_148, %c0_149] : memref<2x32x96xf32, #tpu.memory_space<vmem>>, vector<1x32x96xf32>
    %332 = vector.shape_cast %331 : vector<1x32x96xf32> to vector<32x96xf32>
    %cst_150 = arith.constant dense<0.000000e+00> : vector<16x96xf32>
    %333 = tpu.matmul %330, %332, %cst_150 {dimension_numbers = #tpu.dot_dimension_numbers<[1], [0], [0], [1], [0, 0, 1, 1], [], []>} : vector<16x32xf32>, vector<32x96xf32>, vector<16x96xf32> -> vector<16x96xf32>
    %c1_151 = arith.constant 1 : index
    %c0_152 = arith.constant 0 : index
    %c0_153 = arith.constant 0 : index
    %334 = vector.load %arg5[%c1_151, %c0_152, %c0_153] : memref<2x1x96xf32, #tpu.memory_space<vmem>>, vector<1x1x96xf32>
    %335 = vector.shape_cast %334 : vector<1x1x96xf32> to vector<1x96xf32>
    %336 = vector.broadcast %335 : vector<1x96xf32> to vector<16x96xf32>
    %337 = arith.addf %333, %336 : vector<16x96xf32>
    %338 = vector.extract_strided_slice %8 {offsets = [0, 0], sizes = [1, 8], strides = [1, 1]} : vector<2x8xf32> to vector<1x8xf32>
    %339 = vector.extract_strided_slice %337 {offsets = [0, 0], sizes = [8, 8], strides = [1, 1]} : vector<16x96xf32> to vector<8x8xf32>
    %340 = vector.extract_strided_slice %337 {offsets = [0, 32], sizes = [8, 8], strides = [1, 1]} : vector<16x96xf32> to vector<8x8xf32>
    %341 = vector.extract_strided_slice %337 {offsets = [0, 64], sizes = [8, 8], strides = [1, 1]} : vector<16x96xf32> to vector<8x8xf32>
    %342 = tpu.transpose %340, [1, 0] : vector<8x8xf32> -> vector<8x8xf32>
    %cst_154 = arith.constant dense<0.000000e+00> : vector<8x8xf32>
    %343 = tpu.matmul %339, %342, %cst_154 {dimension_numbers = #tpu.dot_dimension_numbers<[1], [0], [0], [1], [0, 0, 1, 1], [], []>} : vector<8x8xf32>, vector<8x8xf32>, vector<8x8xf32> -> vector<8x8xf32>
    %cst_155 = arith.constant 0.353553385 : f32
    %344 = vector.broadcast %cst_155 : f32 to vector<8x8xf32>
    %345 = arith.mulf %343, %344 : vector<8x8xf32>
    %cst_156 = arith.constant 5.000000e-01 : f32
    %346 = vector.broadcast %cst_156 : f32 to vector<1x8xf32>
    %347 = arith.cmpf ogt, %338, %346 : vector<1x8xf32>
    %cst_157 = arith.constant -1.000000e+09 : f32
    %348 = vector.shape_cast %347 : vector<1x8xi1> to vector<1x8xi1>
    %349 = vector.broadcast %348 : vector<1x8xi1> to vector<8x8xi1>
    %350 = vector.broadcast %cst_157 : f32 to vector<8x8xf32>
    %351 = arith.select %349, %350, %345 : vector<8x8xi1>, vector<8x8xf32>
    %cst_158 = arith.constant dense<0xFF800000> : vector<8xf32>
    %352 = vector.multi_reduction <maximumf>, %351, %cst_158 [1] : vector<8x8xf32> to vector<8xf32>
    %353 = vector.shape_cast %352 : vector<8xf32> to vector<8x1xf32>
    %354 = vector.broadcast %353 : vector<8x1xf32> to vector<8x8xf32>
    %355 = arith.subf %351, %354 : vector<8x8xf32>
    %356 = math.exp %355 : vector<8x8xf32>
    %cst_159 = arith.constant dense<0.000000e+00> : vector<8xf32>
    %357 = vector.multi_reduction <add>, %356, %cst_159 [1] : vector<8x8xf32> to vector<8xf32>
    %358 = vector.shape_cast %357 : vector<8xf32> to vector<8x1xf32>
    %359 = tpu.reciprocal %358 {approx = true} : vector<8x1xf32> -> vector<8x1xf32>
    %360 = vector.broadcast %359 : vector<8x1xf32> to vector<8x8xf32>
    %361 = arith.mulf %356, %360 : vector<8x8xf32>
    %c8_160 = arith.constant 8 : index
    %c0_161 = arith.constant 0 : index
    %c0_162 = arith.constant 0 : index
    %362 = vector.load %arg21[%c8_160, %c0_161, %c0_162] : memref<16x8x8xf32, #tpu.memory_space<vmem>>, vector<1x8x8xf32>
    %363 = vector.shape_cast %362 : vector<1x8x8xf32> to vector<8x8xf32>
    %364 = vector.shape_cast %361 : vector<8x8xf32> to vector<1x8x8xf32>
    tpu.vector_store %arg21[%c8_160, %c0_161, %c0_162], %364 {strides = array<i32>} : memref<16x8x8xf32, #tpu.memory_space<vmem>>, vector<1x8x8xf32>,
    %cst_163 = arith.constant dense<0.000000e+00> : vector<8x8xf32>
    %365 = tpu.matmul %361, %341, %cst_163 {dimension_numbers = #tpu.dot_dimension_numbers<[1], [0], [0], [1], [0, 0, 1, 1], [], []>} : vector<8x8xf32>, vector<8x8xf32>, vector<8x8xf32> -> vector<8x8xf32>
    %c0_164 = arith.constant 0 : index
    %c0_165 = arith.constant 0 : index
    %366 = vector.load %arg22[%c0_164, %c0_165] : memref<16x32xf32, #tpu.memory_space<vmem>>, vector<8x8xf32>
    tpu.vector_store %arg22[%c0_164, %c0_165], %365 {strides = array<i32>} : memref<16x32xf32, #tpu.memory_space<vmem>>, vector<8x8xf32>,
    %367 = vector.extract_strided_slice %337 {offsets = [0, 8], sizes = [8, 8], strides = [1, 1]} : vector<16x96xf32> to vector<8x8xf32>
    %368 = vector.extract_strided_slice %337 {offsets = [0, 40], sizes = [8, 8], strides = [1, 1]} : vector<16x96xf32> to vector<8x8xf32>
    %369 = vector.extract_strided_slice %337 {offsets = [0, 72], sizes = [8, 8], strides = [1, 1]} : vector<16x96xf32> to vector<8x8xf32>
    %370 = tpu.transpose %368, [1, 0] : vector<8x8xf32> -> vector<8x8xf32>
    %cst_166 = arith.constant dense<0.000000e+00> : vector<8x8xf32>
    %371 = tpu.matmul %367, %370, %cst_166 {dimension_numbers = #tpu.dot_dimension_numbers<[1], [0], [0], [1], [0, 0, 1, 1], [], []>} : vector<8x8xf32>, vector<8x8xf32>, vector<8x8xf32> -> vector<8x8xf32>
    %cst_167 = arith.constant 0.353553385 : f32
    %372 = vector.broadcast %cst_167 : f32 to vector<8x8xf32>
    %373 = arith.mulf %371, %372 : vector<8x8xf32>
    %cst_168 = arith.constant 5.000000e-01 : f32
    %374 = vector.broadcast %cst_168 : f32 to vector<1x8xf32>
    %375 = arith.cmpf ogt, %338, %374 : vector<1x8xf32>
    %cst_169 = arith.constant -1.000000e+09 : f32
    %376 = vector.shape_cast %375 : vector<1x8xi1> to vector<1x8xi1>
    %377 = vector.broadcast %376 : vector<1x8xi1> to vector<8x8xi1>
    %378 = vector.broadcast %cst_169 : f32 to vector<8x8xf32>
    %379 = arith.select %377, %378, %373 : vector<8x8xi1>, vector<8x8xf32>
    %cst_170 = arith.constant dense<0xFF800000> : vector<8xf32>
    %380 = vector.multi_reduction <maximumf>, %379, %cst_170 [1] : vector<8x8xf32> to vector<8xf32>
    %381 = vector.shape_cast %380 : vector<8xf32> to vector<8x1xf32>
    %382 = vector.broadcast %381 : vector<8x1xf32> to vector<8x8xf32>
    %383 = arith.subf %379, %382 : vector<8x8xf32>
    %384 = math.exp %383 : vector<8x8xf32>
    %cst_171 = arith.constant dense<0.000000e+00> : vector<8xf32>
    %385 = vector.multi_reduction <add>, %384, %cst_171 [1] : vector<8x8xf32> to vector<8xf32>
    %386 = vector.shape_cast %385 : vector<8xf32> to vector<8x1xf32>
    %387 = tpu.reciprocal %386 {approx = true} : vector<8x1xf32> -> vector<8x1xf32>
    %388 = vector.broadcast %387 : vector<8x1xf32> to vector<8x8xf32>
    %389 = arith.mulf %384, %388 : vector<8x8xf32>
    %c9 = arith.constant 9 : index
    %c0_172 = arith.constant 0 : index
    %c0_173 = arith.constant 0 : index
    %390 = vector.load %arg21[%c9, %c0_172, %c0_173] : memref<16x8x8xf32, #tpu.memory_space<vmem>>, vector<1x8x8xf32>
    %391 = vector.shape_cast %390 : vector<1x8x8xf32> to vector<8x8xf32>
    %392 = vector.shape_cast %389 : vector<8x8xf32> to vector<1x8x8xf32>
    tpu.vector_store %arg21[%c9, %c0_172, %c0_173], %392 {strides = array<i32>} : memref<16x8x8xf32, #tpu.memory_space<vmem>>, vector<1x8x8xf32>,
    %cst_174 = arith.constant dense<0.000000e+00> : vector<8x8xf32>
    %393 = tpu.matmul %389, %369, %cst_174 {dimension_numbers = #tpu.dot_dimension_numbers<[1], [0], [0], [1], [0, 0, 1, 1], [], []>} : vector<8x8xf32>, vector<8x8xf32>, vector<8x8xf32> -> vector<8x8xf32>
    %c0_175 = arith.constant 0 : index
    %c8_176 = arith.constant 8 : index
    %394 = vector.load %arg22[%c0_175, %c8_176] : memref<16x32xf32, #tpu.memory_space<vmem>>, vector<8x8xf32>
    tpu.vector_store %arg22[%c0_175, %c8_176], %393 {strides = array<i32>} : memref<16x32xf32, #tpu.memory_space<vmem>>, vector<8x8xf32>,
    %395 = vector.extract_strided_slice %337 {offsets = [0, 16], sizes = [8, 8], strides = [1, 1]} : vector<16x96xf32> to vector<8x8xf32>
    %396 = vector.extract_strided_slice %337 {offsets = [0, 48], sizes = [8, 8], strides = [1, 1]} : vector<16x96xf32> to vector<8x8xf32>
    %397 = vector.extract_strided_slice %337 {offsets = [0, 80], sizes = [8, 8], strides = [1, 1]} : vector<16x96xf32> to vector<8x8xf32>
    %398 = tpu.transpose %396, [1, 0] : vector<8x8xf32> -> vector<8x8xf32>
    %cst_177 = arith.constant dense<0.000000e+00> : vector<8x8xf32>
    %399 = tpu.matmul %395, %398, %cst_177 {dimension_numbers = #tpu.dot_dimension_numbers<[1], [0], [0], [1], [0, 0, 1, 1], [], []>} : vector<8x8xf32>, vector<8x8xf32>, vector<8x8xf32> -> vector<8x8xf32>
    %cst_178 = arith.constant 0.353553385 : f32
    %400 = vector.broadcast %cst_178 : f32 to vector<8x8xf32>
    %401 = arith.mulf %399, %400 : vector<8x8xf32>
    %cst_179 = arith.constant 5.000000e-01 : f32
    %402 = vector.broadcast %cst_179 : f32 to vector<1x8xf32>
    %403 = arith.cmpf ogt, %338, %402 : vector<1x8xf32>
    %cst_180 = arith.constant -1.000000e+09 : f32
    %404 = vector.shape_cast %403 : vector<1x8xi1> to vector<1x8xi1>
    %405 = vector.broadcast %404 : vector<1x8xi1> to vector<8x8xi1>
    %406 = vector.broadcast %cst_180 : f32 to vector<8x8xf32>
    %407 = arith.select %405, %406, %401 : vector<8x8xi1>, vector<8x8xf32>
    %cst_181 = arith.constant dense<0xFF800000> : vector<8xf32>
    %408 = vector.multi_reduction <maximumf>, %407, %cst_181 [1] : vector<8x8xf32> to vector<8xf32>
    %409 = vector.shape_cast %408 : vector<8xf32> to vector<8x1xf32>
    %410 = vector.broadcast %409 : vector<8x1xf32> to vector<8x8xf32>
    %411 = arith.subf %407, %410 : vector<8x8xf32>
    %412 = math.exp %411 : vector<8x8xf32>
    %cst_182 = arith.constant dense<0.000000e+00> : vector<8xf32>
    %413 = vector.multi_reduction <add>, %412, %cst_182 [1] : vector<8x8xf32> to vector<8xf32>
    %414 = vector.shape_cast %413 : vector<8xf32> to vector<8x1xf32>
    %415 = tpu.reciprocal %414 {approx = true} : vector<8x1xf32> -> vector<8x1xf32>
    %416 = vector.broadcast %415 : vector<8x1xf32> to vector<8x8xf32>
    %417 = arith.mulf %412, %416 : vector<8x8xf32>
    %c10 = arith.constant 10 : index
    %c0_183 = arith.constant 0 : index
    %c0_184 = arith.constant 0 : index
    %418 = vector.load %arg21[%c10, %c0_183, %c0_184] : memref<16x8x8xf32, #tpu.memory_space<vmem>>, vector<1x8x8xf32>
    %419 = vector.shape_cast %418 : vector<1x8x8xf32> to vector<8x8xf32>
    %420 = vector.shape_cast %417 : vector<8x8xf32> to vector<1x8x8xf32>
    tpu.vector_store %arg21[%c10, %c0_183, %c0_184], %420 {strides = array<i32>} : memref<16x8x8xf32, #tpu.memory_space<vmem>>, vector<1x8x8xf32>,
    %cst_185 = arith.constant dense<0.000000e+00> : vector<8x8xf32>
    %421 = tpu.matmul %417, %397, %cst_185 {dimension_numbers = #tpu.dot_dimension_numbers<[1], [0], [0], [1], [0, 0, 1, 1], [], []>} : vector<8x8xf32>, vector<8x8xf32>, vector<8x8xf32> -> vector<8x8xf32>
    %c0_186 = arith.constant 0 : index
    %c16_187 = arith.constant 16 : index
    %422 = vector.load %arg22[%c0_186, %c16_187] : memref<16x32xf32, #tpu.memory_space<vmem>>, vector<8x8xf32>
    tpu.vector_store %arg22[%c0_186, %c16_187], %421 {strides = array<i32>} : memref<16x32xf32, #tpu.memory_space<vmem>>, vector<8x8xf32>,
    %423 = vector.extract_strided_slice %337 {offsets = [0, 24], sizes = [8, 8], strides = [1, 1]} : vector<16x96xf32> to vector<8x8xf32>
    %424 = vector.extract_strided_slice %337 {offsets = [0, 56], sizes = [8, 8], strides = [1, 1]} : vector<16x96xf32> to vector<8x8xf32>
    %425 = vector.extract_strided_slice %337 {offsets = [0, 88], sizes = [8, 8], strides = [1, 1]} : vector<16x96xf32> to vector<8x8xf32>
    %426 = tpu.transpose %424, [1, 0] : vector<8x8xf32> -> vector<8x8xf32>
    %cst_188 = arith.constant dense<0.000000e+00> : vector<8x8xf32>
    %427 = tpu.matmul %423, %426, %cst_188 {dimension_numbers = #tpu.dot_dimension_numbers<[1], [0], [0], [1], [0, 0, 1, 1], [], []>} : vector<8x8xf32>, vector<8x8xf32>, vector<8x8xf32> -> vector<8x8xf32>
    %cst_189 = arith.constant 0.353553385 : f32
    %428 = vector.broadcast %cst_189 : f32 to vector<8x8xf32>
    %429 = arith.mulf %427, %428 : vector<8x8xf32>
    %cst_190 = arith.constant 5.000000e-01 : f32
    %430 = vector.broadcast %cst_190 : f32 to vector<1x8xf32>
    %431 = arith.cmpf ogt, %338, %430 : vector<1x8xf32>
    %cst_191 = arith.constant -1.000000e+09 : f32
    %432 = vector.shape_cast %431 : vector<1x8xi1> to vector<1x8xi1>
    %433 = vector.broadcast %432 : vector<1x8xi1> to vector<8x8xi1>
    %434 = vector.broadcast %cst_191 : f32 to vector<8x8xf32>
    %435 = arith.select %433, %434, %429 : vector<8x8xi1>, vector<8x8xf32>
    %cst_192 = arith.constant dense<0xFF800000> : vector<8xf32>
    %436 = vector.multi_reduction <maximumf>, %435, %cst_192 [1] : vector<8x8xf32> to vector<8xf32>
    %437 = vector.shape_cast %436 : vector<8xf32> to vector<8x1xf32>
    %438 = vector.broadcast %437 : vector<8x1xf32> to vector<8x8xf32>
    %439 = arith.subf %435, %438 : vector<8x8xf32>
    %440 = math.exp %439 : vector<8x8xf32>
    %cst_193 = arith.constant dense<0.000000e+00> : vector<8xf32>
    %441 = vector.multi_reduction <add>, %440, %cst_193 [1] : vector<8x8xf32> to vector<8xf32>
    %442 = vector.shape_cast %441 : vector<8xf32> to vector<8x1xf32>
    %443 = tpu.reciprocal %442 {approx = true} : vector<8x1xf32> -> vector<8x1xf32>
    %444 = vector.broadcast %443 : vector<8x1xf32> to vector<8x8xf32>
    %445 = arith.mulf %440, %444 : vector<8x8xf32>
    %c11 = arith.constant 11 : index
    %c0_194 = arith.constant 0 : index
    %c0_195 = arith.constant 0 : index
    %446 = vector.load %arg21[%c11, %c0_194, %c0_195] : memref<16x8x8xf32, #tpu.memory_space<vmem>>, vector<1x8x8xf32>
    %447 = vector.shape_cast %446 : vector<1x8x8xf32> to vector<8x8xf32>
    %448 = vector.shape_cast %445 : vector<8x8xf32> to vector<1x8x8xf32>
    tpu.vector_store %arg21[%c11, %c0_194, %c0_195], %448 {strides = array<i32>} : memref<16x8x8xf32, #tpu.memory_space<vmem>>, vector<1x8x8xf32>,
    %cst_196 = arith.constant dense<0.000000e+00> : vector<8x8xf32>
    %449 = tpu.matmul %445, %425, %cst_196 {dimension_numbers = #tpu.dot_dimension_numbers<[1], [0], [0], [1], [0, 0, 1, 1], [], []>} : vector<8x8xf32>, vector<8x8xf32>, vector<8x8xf32> -> vector<8x8xf32>
    %c0_197 = arith.constant 0 : index
    %c24_198 = arith.constant 24 : index
    %450 = vector.load %arg22[%c0_197, %c24_198] : memref<16x32xf32, #tpu.memory_space<vmem>>, vector<8x8xf32>
    tpu.vector_store %arg22[%c0_197, %c24_198], %449 {strides = array<i32>} : memref<16x32xf32, #tpu.memory_space<vmem>>, vector<8x8xf32>,
    %451 = vector.extract_strided_slice %8 {offsets = [1, 0], sizes = [1, 8], strides = [1, 1]} : vector<2x8xf32> to vector<1x8xf32>
    %452 = vector.extract_strided_slice %337 {offsets = [8, 0], sizes = [8, 8], strides = [1, 1]} : vector<16x96xf32> to vector<8x8xf32>
    %453 = vector.extract_strided_slice %337 {offsets = [8, 32], sizes = [8, 8], strides = [1, 1]} : vector<16x96xf32> to vector<8x8xf32>
    %454 = vector.extract_strided_slice %337 {offsets = [8, 64], sizes = [8, 8], strides = [1, 1]} : vector<16x96xf32> to vector<8x8xf32>
    %455 = tpu.transpose %453, [1, 0] : vector<8x8xf32> -> vector<8x8xf32>
    %cst_199 = arith.constant dense<0.000000e+00> : vector<8x8xf32>
    %456 = tpu.matmul %452, %455, %cst_199 {dimension_numbers = #tpu.dot_dimension_numbers<[1], [0], [0], [1], [0, 0, 1, 1], [], []>} : vector<8x8xf32>, vector<8x8xf32>, vector<8x8xf32> -> vector<8x8xf32>
    %cst_200 = arith.constant 0.353553385 : f32
    %457 = vector.broadcast %cst_200 : f32 to vector<8x8xf32>
    %458 = arith.mulf %456, %457 : vector<8x8xf32>
    %cst_201 = arith.constant 5.000000e-01 : f32
    %459 = vector.broadcast %cst_201 : f32 to vector<1x8xf32>
    %460 = arith.cmpf ogt, %451, %459 : vector<1x8xf32>
    %cst_202 = arith.constant -1.000000e+09 : f32
    %461 = vector.shape_cast %460 : vector<1x8xi1> to vector<1x8xi1>
    %462 = vector.broadcast %461 : vector<1x8xi1> to vector<8x8xi1>
    %463 = vector.broadcast %cst_202 : f32 to vector<8x8xf32>
    %464 = arith.select %462, %463, %458 : vector<8x8xi1>, vector<8x8xf32>
    %cst_203 = arith.constant dense<0xFF800000> : vector<8xf32>
    %465 = vector.multi_reduction <maximumf>, %464, %cst_203 [1] : vector<8x8xf32> to vector<8xf32>
    %466 = vector.shape_cast %465 : vector<8xf32> to vector<8x1xf32>
    %467 = vector.broadcast %466 : vector<8x1xf32> to vector<8x8xf32>
    %468 = arith.subf %464, %467 : vector<8x8xf32>
    %469 = math.exp %468 : vector<8x8xf32>
    %cst_204 = arith.constant dense<0.000000e+00> : vector<8xf32>
    %470 = vector.multi_reduction <add>, %469, %cst_204 [1] : vector<8x8xf32> to vector<8xf32>
    %471 = vector.shape_cast %470 : vector<8xf32> to vector<8x1xf32>
    %472 = tpu.reciprocal %471 {approx = true} : vector<8x1xf32> -> vector<8x1xf32>
    %473 = vector.broadcast %472 : vector<8x1xf32> to vector<8x8xf32>
    %474 = arith.mulf %469, %473 : vector<8x8xf32>
    %c12 = arith.constant 12 : index
    %c0_205 = arith.constant 0 : index
    %c0_206 = arith.constant 0 : index
    %475 = vector.load %arg21[%c12, %c0_205, %c0_206] : memref<16x8x8xf32, #tpu.memory_space<vmem>>, vector<1x8x8xf32>
    %476 = vector.shape_cast %475 : vector<1x8x8xf32> to vector<8x8xf32>
    %477 = vector.shape_cast %474 : vector<8x8xf32> to vector<1x8x8xf32>
    tpu.vector_store %arg21[%c12, %c0_205, %c0_206], %477 {strides = array<i32>} : memref<16x8x8xf32, #tpu.memory_space<vmem>>, vector<1x8x8xf32>,
    %cst_207 = arith.constant dense<0.000000e+00> : vector<8x8xf32>
    %478 = tpu.matmul %474, %454, %cst_207 {dimension_numbers = #tpu.dot_dimension_numbers<[1], [0], [0], [1], [0, 0, 1, 1], [], []>} : vector<8x8xf32>, vector<8x8xf32>, vector<8x8xf32> -> vector<8x8xf32>
    %c8_208 = arith.constant 8 : index
    %c0_209 = arith.constant 0 : index
    %479 = vector.load %arg22[%c8_208, %c0_209] : memref<16x32xf32, #tpu.memory_space<vmem>>, vector<8x8xf32>
    tpu.vector_store %arg22[%c8_208, %c0_209], %478 {strides = array<i32>} : memref<16x32xf32, #tpu.memory_space<vmem>>, vector<8x8xf32>,
    %480 = vector.extract_strided_slice %337 {offsets = [8, 8], sizes = [8, 8], strides = [1, 1]} : vector<16x96xf32> to vector<8x8xf32>
    %481 = vector.extract_strided_slice %337 {offsets = [8, 40], sizes = [8, 8], strides = [1, 1]} : vector<16x96xf32> to vector<8x8xf32>
    %482 = vector.extract_strided_slice %337 {offsets = [8, 72], sizes = [8, 8], strides = [1, 1]} : vector<16x96xf32> to vector<8x8xf32>
    %483 = tpu.transpose %481, [1, 0] : vector<8x8xf32> -> vector<8x8xf32>
    %cst_210 = arith.constant dense<0.000000e+00> : vector<8x8xf32>
    %484 = tpu.matmul %480, %483, %cst_210 {dimension_numbers = #tpu.dot_dimension_numbers<[1], [0], [0], [1], [0, 0, 1, 1], [], []>} : vector<8x8xf32>, vector<8x8xf32>, vector<8x8xf32> -> vector<8x8xf32>
    %cst_211 = arith.constant 0.353553385 : f32
    %485 = vector.broadcast %cst_211 : f32 to vector<8x8xf32>
    %486 = arith.mulf %484, %485 : vector<8x8xf32>
    %cst_212 = arith.constant 5.000000e-01 : f32
    %487 = vector.broadcast %cst_212 : f32 to vector<1x8xf32>
    %488 = arith.cmpf ogt, %451, %487 : vector<1x8xf32>
    %cst_213 = arith.constant -1.000000e+09 : f32
    %489 = vector.shape_cast %488 : vector<1x8xi1> to vector<1x8xi1>
    %490 = vector.broadcast %489 : vector<1x8xi1> to vector<8x8xi1>
    %491 = vector.broadcast %cst_213 : f32 to vector<8x8xf32>
    %492 = arith.select %490, %491, %486 : vector<8x8xi1>, vector<8x8xf32>
    %cst_214 = arith.constant dense<0xFF800000> : vector<8xf32>
    %493 = vector.multi_reduction <maximumf>, %492, %cst_214 [1] : vector<8x8xf32> to vector<8xf32>
    %494 = vector.shape_cast %493 : vector<8xf32> to vector<8x1xf32>
    %495 = vector.broadcast %494 : vector<8x1xf32> to vector<8x8xf32>
    %496 = arith.subf %492, %495 : vector<8x8xf32>
    %497 = math.exp %496 : vector<8x8xf32>
    %cst_215 = arith.constant dense<0.000000e+00> : vector<8xf32>
    %498 = vector.multi_reduction <add>, %497, %cst_215 [1] : vector<8x8xf32> to vector<8xf32>
    %499 = vector.shape_cast %498 : vector<8xf32> to vector<8x1xf32>
    %500 = tpu.reciprocal %499 {approx = true} : vector<8x1xf32> -> vector<8x1xf32>
    %501 = vector.broadcast %500 : vector<8x1xf32> to vector<8x8xf32>
    %502 = arith.mulf %497, %501 : vector<8x8xf32>
    %c13 = arith.constant 13 : index
    %c0_216 = arith.constant 0 : index
    %c0_217 = arith.constant 0 : index
    %503 = vector.load %arg21[%c13, %c0_216, %c0_217] : memref<16x8x8xf32, #tpu.memory_space<vmem>>, vector<1x8x8xf32>
    %504 = vector.shape_cast %503 : vector<1x8x8xf32> to vector<8x8xf32>
    %505 = vector.shape_cast %502 : vector<8x8xf32> to vector<1x8x8xf32>
    tpu.vector_store %arg21[%c13, %c0_216, %c0_217], %505 {strides = array<i32>} : memref<16x8x8xf32, #tpu.memory_space<vmem>>, vector<1x8x8xf32>,
    %cst_218 = arith.constant dense<0.000000e+00> : vector<8x8xf32>
    %506 = tpu.matmul %502, %482, %cst_218 {dimension_numbers = #tpu.dot_dimension_numbers<[1], [0], [0], [1], [0, 0, 1, 1], [], []>} : vector<8x8xf32>, vector<8x8xf32>, vector<8x8xf32> -> vector<8x8xf32>
    %c8_219 = arith.constant 8 : index
    %c8_220 = arith.constant 8 : index
    %507 = vector.load %arg22[%c8_219, %c8_220] : memref<16x32xf32, #tpu.memory_space<vmem>>, vector<8x8xf32>
    tpu.vector_store %arg22[%c8_219, %c8_220], %506 {strides = array<i32>} : memref<16x32xf32, #tpu.memory_space<vmem>>, vector<8x8xf32>,
    %508 = vector.extract_strided_slice %337 {offsets = [8, 16], sizes = [8, 8], strides = [1, 1]} : vector<16x96xf32> to vector<8x8xf32>
    %509 = vector.extract_strided_slice %337 {offsets = [8, 48], sizes = [8, 8], strides = [1, 1]} : vector<16x96xf32> to vector<8x8xf32>
    %510 = vector.extract_strided_slice %337 {offsets = [8, 80], sizes = [8, 8], strides = [1, 1]} : vector<16x96xf32> to vector<8x8xf32>
    %511 = tpu.transpose %509, [1, 0] : vector<8x8xf32> -> vector<8x8xf32>
    %cst_221 = arith.constant dense<0.000000e+00> : vector<8x8xf32>
    %512 = tpu.matmul %508, %511, %cst_221 {dimension_numbers = #tpu.dot_dimension_numbers<[1], [0], [0], [1], [0, 0, 1, 1], [], []>} : vector<8x8xf32>, vector<8x8xf32>, vector<8x8xf32> -> vector<8x8xf32>
    %cst_222 = arith.constant 0.353553385 : f32
    %513 = vector.broadcast %cst_222 : f32 to vector<8x8xf32>
    %514 = arith.mulf %512, %513 : vector<8x8xf32>
    %cst_223 = arith.constant 5.000000e-01 : f32
    %515 = vector.broadcast %cst_223 : f32 to vector<1x8xf32>
    %516 = arith.cmpf ogt, %451, %515 : vector<1x8xf32>
    %cst_224 = arith.constant -1.000000e+09 : f32
    %517 = vector.shape_cast %516 : vector<1x8xi1> to vector<1x8xi1>
    %518 = vector.broadcast %517 : vector<1x8xi1> to vector<8x8xi1>
    %519 = vector.broadcast %cst_224 : f32 to vector<8x8xf32>
    %520 = arith.select %518, %519, %514 : vector<8x8xi1>, vector<8x8xf32>
    %cst_225 = arith.constant dense<0xFF800000> : vector<8xf32>
    %521 = vector.multi_reduction <maximumf>, %520, %cst_225 [1] : vector<8x8xf32> to vector<8xf32>
    %522 = vector.shape_cast %521 : vector<8xf32> to vector<8x1xf32>
    %523 = vector.broadcast %522 : vector<8x1xf32> to vector<8x8xf32>
    %524 = arith.subf %520, %523 : vector<8x8xf32>
    %525 = math.exp %524 : vector<8x8xf32>
    %cst_226 = arith.constant dense<0.000000e+00> : vector<8xf32>
    %526 = vector.multi_reduction <add>, %525, %cst_226 [1] : vector<8x8xf32> to vector<8xf32>
    %527 = vector.shape_cast %526 : vector<8xf32> to vector<8x1xf32>
    %528 = tpu.reciprocal %527 {approx = true} : vector<8x1xf32> -> vector<8x1xf32>
    %529 = vector.broadcast %528 : vector<8x1xf32> to vector<8x8xf32>
    %530 = arith.mulf %525, %529 : vector<8x8xf32>
    %c14 = arith.constant 14 : index
    %c0_227 = arith.constant 0 : index
    %c0_228 = arith.constant 0 : index
    %531 = vector.load %arg21[%c14, %c0_227, %c0_228] : memref<16x8x8xf32, #tpu.memory_space<vmem>>, vector<1x8x8xf32>
    %532 = vector.shape_cast %531 : vector<1x8x8xf32> to vector<8x8xf32>
    %533 = vector.shape_cast %530 : vector<8x8xf32> to vector<1x8x8xf32>
    tpu.vector_store %arg21[%c14, %c0_227, %c0_228], %533 {strides = array<i32>} : memref<16x8x8xf32, #tpu.memory_space<vmem>>, vector<1x8x8xf32>,
    %cst_229 = arith.constant dense<0.000000e+00> : vector<8x8xf32>
    %534 = tpu.matmul %530, %510, %cst_229 {dimension_numbers = #tpu.dot_dimension_numbers<[1], [0], [0], [1], [0, 0, 1, 1], [], []>} : vector<8x8xf32>, vector<8x8xf32>, vector<8x8xf32> -> vector<8x8xf32>
    %c8_230 = arith.constant 8 : index
    %c16_231 = arith.constant 16 : index
    %535 = vector.load %arg22[%c8_230, %c16_231] : memref<16x32xf32, #tpu.memory_space<vmem>>, vector<8x8xf32>
    tpu.vector_store %arg22[%c8_230, %c16_231], %534 {strides = array<i32>} : memref<16x32xf32, #tpu.memory_space<vmem>>, vector<8x8xf32>,
    %536 = vector.extract_strided_slice %337 {offsets = [8, 24], sizes = [8, 8], strides = [1, 1]} : vector<16x96xf32> to vector<8x8xf32>
    %537 = vector.extract_strided_slice %337 {offsets = [8, 56], sizes = [8, 8], strides = [1, 1]} : vector<16x96xf32> to vector<8x8xf32>
    %538 = vector.extract_strided_slice %337 {offsets = [8, 88], sizes = [8, 8], strides = [1, 1]} : vector<16x96xf32> to vector<8x8xf32>
    %539 = tpu.transpose %537, [1, 0] : vector<8x8xf32> -> vector<8x8xf32>
    %cst_232 = arith.constant dense<0.000000e+00> : vector<8x8xf32>
    %540 = tpu.matmul %536, %539, %cst_232 {dimension_numbers = #tpu.dot_dimension_numbers<[1], [0], [0], [1], [0, 0, 1, 1], [], []>} : vector<8x8xf32>, vector<8x8xf32>, vector<8x8xf32> -> vector<8x8xf32>
    %cst_233 = arith.constant 0.353553385 : f32
    %541 = vector.broadcast %cst_233 : f32 to vector<8x8xf32>
    %542 = arith.mulf %540, %541 : vector<8x8xf32>
    %cst_234 = arith.constant 5.000000e-01 : f32
    %543 = vector.broadcast %cst_234 : f32 to vector<1x8xf32>
    %544 = arith.cmpf ogt, %451, %543 : vector<1x8xf32>
    %cst_235 = arith.constant -1.000000e+09 : f32
    %545 = vector.shape_cast %544 : vector<1x8xi1> to vector<1x8xi1>
    %546 = vector.broadcast %545 : vector<1x8xi1> to vector<8x8xi1>
    %547 = vector.broadcast %cst_235 : f32 to vector<8x8xf32>
    %548 = arith.select %546, %547, %542 : vector<8x8xi1>, vector<8x8xf32>
    %cst_236 = arith.constant dense<0xFF800000> : vector<8xf32>
    %549 = vector.multi_reduction <maximumf>, %548, %cst_236 [1] : vector<8x8xf32> to vector<8xf32>
    %550 = vector.shape_cast %549 : vector<8xf32> to vector<8x1xf32>
    %551 = vector.broadcast %550 : vector<8x1xf32> to vector<8x8xf32>
    %552 = arith.subf %548, %551 : vector<8x8xf32>
    %553 = math.exp %552 : vector<8x8xf32>
    %cst_237 = arith.constant dense<0.000000e+00> : vector<8xf32>
    %554 = vector.multi_reduction <add>, %553, %cst_237 [1] : vector<8x8xf32> to vector<8xf32>
    %555 = vector.shape_cast %554 : vector<8xf32> to vector<8x1xf32>
    %556 = tpu.reciprocal %555 {approx = true} : vector<8x1xf32> -> vector<8x1xf32>
    %557 = vector.broadcast %556 : vector<8x1xf32> to vector<8x8xf32>
    %558 = arith.mulf %553, %557 : vector<8x8xf32>
    %c15 = arith.constant 15 : index
    %c0_238 = arith.constant 0 : index
    %c0_239 = arith.constant 0 : index
    %559 = vector.load %arg21[%c15, %c0_238, %c0_239] : memref<16x8x8xf32, #tpu.memory_space<vmem>>, vector<1x8x8xf32>
    %560 = vector.shape_cast %559 : vector<1x8x8xf32> to vector<8x8xf32>
    %561 = vector.shape_cast %558 : vector<8x8xf32> to vector<1x8x8xf32>
    tpu.vector_store %arg21[%c15, %c0_238, %c0_239], %561 {strides = array<i32>} : memref<16x8x8xf32, #tpu.memory_space<vmem>>, vector<1x8x8xf32>,
    %cst_240 = arith.constant dense<0.000000e+00> : vector<8x8xf32>
    %562 = tpu.matmul %558, %538, %cst_240 {dimension_numbers = #tpu.dot_dimension_numbers<[1], [0], [0], [1], [0, 0, 1, 1], [], []>} : vector<8x8xf32>, vector<8x8xf32>, vector<8x8xf32> -> vector<8x8xf32>
    %c8_241 = arith.constant 8 : index
    %c24_242 = arith.constant 24 : index
    %563 = vector.load %arg22[%c8_241, %c24_242] : memref<16x32xf32, #tpu.memory_space<vmem>>, vector<8x8xf32>
    tpu.vector_store %arg22[%c8_241, %c24_242], %562 {strides = array<i32>} : memref<16x32xf32, #tpu.memory_space<vmem>>, vector<8x8xf32>,
    %c0_243 = arith.constant 0 : index
    %c0_244 = arith.constant 0 : index
    %564 = vector.load %arg22[%c0_243, %c0_244] : memref<16x32xf32, #tpu.memory_space<vmem>>, vector<16x32xf32>
    %c1_245 = arith.constant 1 : index
    %c0_246 = arith.constant 0 : index
    %c0_247 = arith.constant 0 : index
    %565 = vector.load %arg6[%c1_245, %c0_246, %c0_247] : memref<2x32x32xf32, #tpu.memory_space<vmem>>, vector<1x32x32xf32>
    %566 = vector.shape_cast %565 : vector<1x32x32xf32> to vector<32x32xf32>
    %cst_248 = arith.constant dense<0.000000e+00> : vector<16x32xf32>
    %567 = tpu.matmul %564, %566, %cst_248 {dimension_numbers = #tpu.dot_dimension_numbers<[1], [0], [0], [1], [0, 0, 1, 1], [], []>} : vector<16x32xf32>, vector<32x32xf32>, vector<16x32xf32> -> vector<16x32xf32>
    %c1_249 = arith.constant 1 : index
    %c0_250 = arith.constant 0 : index
    %c0_251 = arith.constant 0 : index
    %568 = vector.load %arg7[%c1_249, %c0_250, %c0_251] : memref<2x1x32xf32, #tpu.memory_space<vmem>>, vector<1x1x32xf32>
    %569 = vector.shape_cast %568 : vector<1x1x32xf32> to vector<1x32xf32>
    %570 = vector.broadcast %569 : vector<1x32xf32> to vector<16x32xf32>
    %571 = arith.addf %567, %570 : vector<16x32xf32>
    %572 = arith.addf %330, %571 : vector<16x32xf32>
    %c1_252 = arith.constant 1 : index
    %c0_253 = arith.constant 0 : index
    %c0_254 = arith.constant 0 : index
    %573 = vector.load %arg8[%c1_252, %c0_253, %c0_254] : memref<2x1x32xf32, #tpu.memory_space<vmem>>, vector<1x1x32xf32>
    %574 = vector.shape_cast %573 : vector<1x1x32xf32> to vector<1x32xf32>
    %c1_255 = arith.constant 1 : index
    %c0_256 = arith.constant 0 : index
    %c0_257 = arith.constant 0 : index
    %575 = vector.load %arg9[%c1_255, %c0_256, %c0_257] : memref<2x1x32xf32, #tpu.memory_space<vmem>>, vector<1x1x32xf32>
    %576 = vector.shape_cast %575 : vector<1x1x32xf32> to vector<1x32xf32>
    %cst_258 = arith.constant dense<0.000000e+00> : vector<16xf32>
    %577 = vector.multi_reduction <add>, %572, %cst_258 [1] : vector<16x32xf32> to vector<16xf32>
    %578 = vector.shape_cast %577 : vector<16xf32> to vector<16x1xf32>
    %cst_259 = arith.constant 3.200000e+01 : f32
    %579 = vector.broadcast %cst_259 : f32 to vector<16x1xf32>
    %580 = arith.divf %578, %579 : vector<16x1xf32>
    %581 = vector.broadcast %580 : vector<16x1xf32> to vector<16x32xf32>
    %582 = arith.subf %572, %581 : vector<16x32xf32>
    %583 = arith.mulf %582, %582 : vector<16x32xf32>
    %cst_260 = arith.constant dense<0.000000e+00> : vector<16xf32>
    %584 = vector.multi_reduction <add>, %583, %cst_260 [1] : vector<16x32xf32> to vector<16xf32>
    %585 = vector.shape_cast %584 : vector<16xf32> to vector<16x1xf32>
    %cst_261 = arith.constant 3.200000e+01 : f32
    %586 = vector.broadcast %cst_261 : f32 to vector<16x1xf32>
    %587 = arith.divf %585, %586 : vector<16x1xf32>
    %588 = vector.broadcast %580 : vector<16x1xf32> to vector<16x32xf32>
    %589 = arith.subf %572, %588 : vector<16x32xf32>
    %cst_262 = arith.constant 9.99999974E-6 : f32
    %590 = vector.broadcast %cst_262 : f32 to vector<16x1xf32>
    %591 = arith.addf %587, %590 : vector<16x1xf32>
    %592 = math.rsqrt %591 : vector<16x1xf32>
    %593 = vector.broadcast %592 : vector<16x1xf32> to vector<16x32xf32>
    %594 = arith.mulf %589, %593 : vector<16x32xf32>
    %595 = vector.broadcast %574 : vector<1x32xf32> to vector<16x32xf32>
    %596 = arith.mulf %594, %595 : vector<16x32xf32>
    %597 = vector.broadcast %576 : vector<1x32xf32> to vector<16x32xf32>
    %598 = arith.addf %596, %597 : vector<16x32xf32>
    %c1_263 = arith.constant 1 : index
    %c0_264 = arith.constant 0 : index
    %c0_265 = arith.constant 0 : index
    %599 = vector.load %arg12[%c1_263, %c0_264, %c0_265] : memref<2x32x64xf32, #tpu.memory_space<vmem>>, vector<1x32x64xf32>
    %600 = vector.shape_cast %599 : vector<1x32x64xf32> to vector<32x64xf32>
    %cst_266 = arith.constant dense<0.000000e+00> : vector<16x64xf32>
    %601 = tpu.matmul %598, %600, %cst_266 {dimension_numbers = #tpu.dot_dimension_numbers<[1], [0], [0], [1], [0, 0, 1, 1], [], []>} : vector<16x32xf32>, vector<32x64xf32>, vector<16x64xf32> -> vector<16x64xf32>
    %c1_267 = arith.constant 1 : index
    %c0_268 = arith.constant 0 : index
    %c0_269 = arith.constant 0 : index
    %602 = vector.load %arg13[%c1_267, %c0_268, %c0_269] : memref<2x1x64xf32, #tpu.memory_space<vmem>>, vector<1x1x64xf32>
    %603 = vector.shape_cast %602 : vector<1x1x64xf32> to vector<1x64xf32>
    %604 = vector.broadcast %603 : vector<1x64xf32> to vector<16x64xf32>
    %605 = arith.addf %601, %604 : vector<16x64xf32>
    %cst_270 = arith.constant 0.000000e+00 : f32
    %606 = vector.broadcast %cst_270 : f32 to vector<16x64xf32>
    %607 = arith.maximumf %605, %606 : vector<16x64xf32>
    %c1_271 = arith.constant 1 : index
    %c0_272 = arith.constant 0 : index
    %c0_273 = arith.constant 0 : index
    %608 = vector.load %arg14[%c1_271, %c0_272, %c0_273] : memref<2x64x32xf32, #tpu.memory_space<vmem>>, vector<1x64x32xf32>
    %609 = vector.shape_cast %608 : vector<1x64x32xf32> to vector<64x32xf32>
    %cst_274 = arith.constant dense<0.000000e+00> : vector<16x32xf32>
    %610 = tpu.matmul %607, %609, %cst_274 {dimension_numbers = #tpu.dot_dimension_numbers<[1], [0], [0], [1], [0, 0, 1, 1], [], []>} : vector<16x64xf32>, vector<64x32xf32>, vector<16x32xf32> -> vector<16x32xf32>
    %c1_275 = arith.constant 1 : index
    %c0_276 = arith.constant 0 : index
    %c0_277 = arith.constant 0 : index
    %611 = vector.load %arg15[%c1_275, %c0_276, %c0_277] : memref<2x1x32xf32, #tpu.memory_space<vmem>>, vector<1x1x32xf32>
    %612 = vector.shape_cast %611 : vector<1x1x32xf32> to vector<1x32xf32>
    %613 = vector.broadcast %612 : vector<1x32xf32> to vector<16x32xf32>
    %614 = arith.addf %610, %613 : vector<16x32xf32>
    %615 = arith.addf %598, %614 : vector<16x32xf32>
    %c1_278 = arith.constant 1 : index
    %c0_279 = arith.constant 0 : index
    %c0_280 = arith.constant 0 : index
    %616 = vector.load %arg10[%c1_278, %c0_279, %c0_280] : memref<2x1x32xf32, #tpu.memory_space<vmem>>, vector<1x1x32xf32>
    %617 = vector.shape_cast %616 : vector<1x1x32xf32> to vector<1x32xf32>
    %c1_281 = arith.constant 1 : index
    %c0_282 = arith.constant 0 : index
    %c0_283 = arith.constant 0 : index
    %618 = vector.load %arg11[%c1_281, %c0_282, %c0_283] : memref<2x1x32xf32, #tpu.memory_space<vmem>>, vector<1x1x32xf32>
    %619 = vector.shape_cast %618 : vector<1x1x32xf32> to vector<1x32xf32>
    %cst_284 = arith.constant dense<0.000000e+00> : vector<16xf32>
    %620 = vector.multi_reduction <add>, %615, %cst_284 [1] : vector<16x32xf32> to vector<16xf32>
    %621 = vector.shape_cast %620 : vector<16xf32> to vector<16x1xf32>
    %cst_285 = arith.constant 3.200000e+01 : f32
    %622 = vector.broadcast %cst_285 : f32 to vector<16x1xf32>
    %623 = arith.divf %621, %622 : vector<16x1xf32>
    %624 = vector.broadcast %623 : vector<16x1xf32> to vector<16x32xf32>
    %625 = arith.subf %615, %624 : vector<16x32xf32>
    %626 = arith.mulf %625, %625 : vector<16x32xf32>
    %cst_286 = arith.constant dense<0.000000e+00> : vector<16xf32>
    %627 = vector.multi_reduction <add>, %626, %cst_286 [1] : vector<16x32xf32> to vector<16xf32>
    %628 = vector.shape_cast %627 : vector<16xf32> to vector<16x1xf32>
    %cst_287 = arith.constant 3.200000e+01 : f32
    %629 = vector.broadcast %cst_287 : f32 to vector<16x1xf32>
    %630 = arith.divf %628, %629 : vector<16x1xf32>
    %631 = vector.broadcast %623 : vector<16x1xf32> to vector<16x32xf32>
    %632 = arith.subf %615, %631 : vector<16x32xf32>
    %cst_288 = arith.constant 9.99999974E-6 : f32
    %633 = vector.broadcast %cst_288 : f32 to vector<16x1xf32>
    %634 = arith.addf %630, %633 : vector<16x1xf32>
    %635 = math.rsqrt %634 : vector<16x1xf32>
    %636 = vector.broadcast %635 : vector<16x1xf32> to vector<16x32xf32>
    %637 = arith.mulf %632, %636 : vector<16x32xf32>
    %638 = vector.broadcast %617 : vector<1x32xf32> to vector<16x32xf32>
    %639 = arith.mulf %637, %638 : vector<16x32xf32>
    %640 = vector.broadcast %619 : vector<1x32xf32> to vector<16x32xf32>
    %641 = arith.addf %639, %640 : vector<16x32xf32>
    %cst_289 = arith.constant 0.000000e+00 : f32
    %642 = vector.broadcast %cst_289 : f32 to vector<2x128xf32>
    %643 = vector.extract_strided_slice %641 {offsets = [0, 0], sizes = [1, 32], strides = [1, 1]} : vector<16x32xf32> to vector<1x32xf32>
    %644 = vector.extract_strided_slice %641 {offsets = [8, 0], sizes = [1, 32], strides = [1, 1]} : vector<16x32xf32> to vector<1x32xf32>
    %645 = tpu.concatenate %643, %644 in 0 : vector<1x32xf32>, vector<1x32xf32> -> vector<2x32xf32>
    %c0_290 = arith.constant 0 : index
    %c0_291 = arith.constant 0 : index
    %c0_292 = arith.constant 0 : index
    %646 = vector.load %arg16[%c0_290, %c0_291, %c0_292] : memref<8x32x128xf32, #tpu.memory_space<vmem>>, vector<1x32x128xf32>
    %647 = vector.shape_cast %646 : vector<1x32x128xf32> to vector<32x128xf32>
    %cst_293 = arith.constant dense<0.000000e+00> : vector<2x128xf32>
    %648 = tpu.matmul %645, %647, %cst_293 {dimension_numbers = #tpu.dot_dimension_numbers<[1], [0], [0], [1], [0, 0, 1, 1], [], []>} : vector<2x32xf32>, vector<32x128xf32>, vector<2x128xf32> -> vector<2x128xf32>
    %649 = arith.addf %642, %648 : vector<2x128xf32>
    %650 = vector.extract_strided_slice %641 {offsets = [1, 0], sizes = [1, 32], strides = [1, 1]} : vector<16x32xf32> to vector<1x32xf32>
    %651 = vector.extract_strided_slice %641 {offsets = [9, 0], sizes = [1, 32], strides = [1, 1]} : vector<16x32xf32> to vector<1x32xf32>
    %652 = tpu.concatenate %650, %651 in 0 : vector<1x32xf32>, vector<1x32xf32> -> vector<2x32xf32>
    %c1_294 = arith.constant 1 : index
    %c0_295 = arith.constant 0 : index
    %c0_296 = arith.constant 0 : index
    %653 = vector.load %arg16[%c1_294, %c0_295, %c0_296] : memref<8x32x128xf32, #tpu.memory_space<vmem>>, vector<1x32x128xf32>
    %654 = vector.shape_cast %653 : vector<1x32x128xf32> to vector<32x128xf32>
    %cst_297 = arith.constant dense<0.000000e+00> : vector<2x128xf32>
    %655 = tpu.matmul %652, %654, %cst_297 {dimension_numbers = #tpu.dot_dimension_numbers<[1], [0], [0], [1], [0, 0, 1, 1], [], []>} : vector<2x32xf32>, vector<32x128xf32>, vector<2x128xf32> -> vector<2x128xf32>
    %656 = arith.addf %649, %655 : vector<2x128xf32>
    %657 = vector.extract_strided_slice %641 {offsets = [2, 0], sizes = [1, 32], strides = [1, 1]} : vector<16x32xf32> to vector<1x32xf32>
    %658 = vector.extract_strided_slice %641 {offsets = [10, 0], sizes = [1, 32], strides = [1, 1]} : vector<16x32xf32> to vector<1x32xf32>
    %659 = tpu.concatenate %657, %658 in 0 : vector<1x32xf32>, vector<1x32xf32> -> vector<2x32xf32>
    %c2_298 = arith.constant 2 : index
    %c0_299 = arith.constant 0 : index
    %c0_300 = arith.constant 0 : index
    %660 = vector.load %arg16[%c2_298, %c0_299, %c0_300] : memref<8x32x128xf32, #tpu.memory_space<vmem>>, vector<1x32x128xf32>
    %661 = vector.shape_cast %660 : vector<1x32x128xf32> to vector<32x128xf32>
    %cst_301 = arith.constant dense<0.000000e+00> : vector<2x128xf32>
    %662 = tpu.matmul %659, %661, %cst_301 {dimension_numbers = #tpu.dot_dimension_numbers<[1], [0], [0], [1], [0, 0, 1, 1], [], []>} : vector<2x32xf32>, vector<32x128xf32>, vector<2x128xf32> -> vector<2x128xf32>
    %663 = arith.addf %656, %662 : vector<2x128xf32>
    %664 = vector.extract_strided_slice %641 {offsets = [3, 0], sizes = [1, 32], strides = [1, 1]} : vector<16x32xf32> to vector<1x32xf32>
    %665 = vector.extract_strided_slice %641 {offsets = [11, 0], sizes = [1, 32], strides = [1, 1]} : vector<16x32xf32> to vector<1x32xf32>
    %666 = tpu.concatenate %664, %665 in 0 : vector<1x32xf32>, vector<1x32xf32> -> vector<2x32xf32>
    %c3_302 = arith.constant 3 : index
    %c0_303 = arith.constant 0 : index
    %c0_304 = arith.constant 0 : index
    %667 = vector.load %arg16[%c3_302, %c0_303, %c0_304] : memref<8x32x128xf32, #tpu.memory_space<vmem>>, vector<1x32x128xf32>
    %668 = vector.shape_cast %667 : vector<1x32x128xf32> to vector<32x128xf32>
    %cst_305 = arith.constant dense<0.000000e+00> : vector<2x128xf32>
    %669 = tpu.matmul %666, %668, %cst_305 {dimension_numbers = #tpu.dot_dimension_numbers<[1], [0], [0], [1], [0, 0, 1, 1], [], []>} : vector<2x32xf32>, vector<32x128xf32>, vector<2x128xf32> -> vector<2x128xf32>
    %670 = arith.addf %663, %669 : vector<2x128xf32>
    %671 = vector.extract_strided_slice %641 {offsets = [4, 0], sizes = [1, 32], strides = [1, 1]} : vector<16x32xf32> to vector<1x32xf32>
    %672 = vector.extract_strided_slice %641 {offsets = [12, 0], sizes = [1, 32], strides = [1, 1]} : vector<16x32xf32> to vector<1x32xf32>
    %673 = tpu.concatenate %671, %672 in 0 : vector<1x32xf32>, vector<1x32xf32> -> vector<2x32xf32>
    %c4_306 = arith.constant 4 : index
    %c0_307 = arith.constant 0 : index
    %c0_308 = arith.constant 0 : index
    %674 = vector.load %arg16[%c4_306, %c0_307, %c0_308] : memref<8x32x128xf32, #tpu.memory_space<vmem>>, vector<1x32x128xf32>
    %675 = vector.shape_cast %674 : vector<1x32x128xf32> to vector<32x128xf32>
    %cst_309 = arith.constant dense<0.000000e+00> : vector<2x128xf32>
    %676 = tpu.matmul %673, %675, %cst_309 {dimension_numbers = #tpu.dot_dimension_numbers<[1], [0], [0], [1], [0, 0, 1, 1], [], []>} : vector<2x32xf32>, vector<32x128xf32>, vector<2x128xf32> -> vector<2x128xf32>
    %677 = arith.addf %670, %676 : vector<2x128xf32>
    %678 = vector.extract_strided_slice %641 {offsets = [5, 0], sizes = [1, 32], strides = [1, 1]} : vector<16x32xf32> to vector<1x32xf32>
    %679 = vector.extract_strided_slice %641 {offsets = [13, 0], sizes = [1, 32], strides = [1, 1]} : vector<16x32xf32> to vector<1x32xf32>
    %680 = tpu.concatenate %678, %679 in 0 : vector<1x32xf32>, vector<1x32xf32> -> vector<2x32xf32>
    %c5_310 = arith.constant 5 : index
    %c0_311 = arith.constant 0 : index
    %c0_312 = arith.constant 0 : index
    %681 = vector.load %arg16[%c5_310, %c0_311, %c0_312] : memref<8x32x128xf32, #tpu.memory_space<vmem>>, vector<1x32x128xf32>
    %682 = vector.shape_cast %681 : vector<1x32x128xf32> to vector<32x128xf32>
    %cst_313 = arith.constant dense<0.000000e+00> : vector<2x128xf32>
    %683 = tpu.matmul %680, %682, %cst_313 {dimension_numbers = #tpu.dot_dimension_numbers<[1], [0], [0], [1], [0, 0, 1, 1], [], []>} : vector<2x32xf32>, vector<32x128xf32>, vector<2x128xf32> -> vector<2x128xf32>
    %684 = arith.addf %677, %683 : vector<2x128xf32>
    %685 = vector.extract_strided_slice %641 {offsets = [6, 0], sizes = [1, 32], strides = [1, 1]} : vector<16x32xf32> to vector<1x32xf32>
    %686 = vector.extract_strided_slice %641 {offsets = [14, 0], sizes = [1, 32], strides = [1, 1]} : vector<16x32xf32> to vector<1x32xf32>
    %687 = tpu.concatenate %685, %686 in 0 : vector<1x32xf32>, vector<1x32xf32> -> vector<2x32xf32>
    %c6_314 = arith.constant 6 : index
    %c0_315 = arith.constant 0 : index
    %c0_316 = arith.constant 0 : index
    %688 = vector.load %arg16[%c6_314, %c0_315, %c0_316] : memref<8x32x128xf32, #tpu.memory_space<vmem>>, vector<1x32x128xf32>
    %689 = vector.shape_cast %688 : vector<1x32x128xf32> to vector<32x128xf32>
    %cst_317 = arith.constant dense<0.000000e+00> : vector<2x128xf32>
    %690 = tpu.matmul %687, %689, %cst_317 {dimension_numbers = #tpu.dot_dimension_numbers<[1], [0], [0], [1], [0, 0, 1, 1], [], []>} : vector<2x32xf32>, vector<32x128xf32>, vector<2x128xf32> -> vector<2x128xf32>
    %691 = arith.addf %684, %690 : vector<2x128xf32>
    %692 = vector.extract_strided_slice %641 {offsets = [7, 0], sizes = [1, 32], strides = [1, 1]} : vector<16x32xf32> to vector<1x32xf32>
    %693 = vector.extract_strided_slice %641 {offsets = [15, 0], sizes = [1, 32], strides = [1, 1]} : vector<16x32xf32> to vector<1x32xf32>
    %694 = tpu.concatenate %692, %693 in 0 : vector<1x32xf32>, vector<1x32xf32> -> vector<2x32xf32>
    %c7_318 = arith.constant 7 : index
    %c0_319 = arith.constant 0 : index
    %c0_320 = arith.constant 0 : index
    %695 = vector.load %arg16[%c7_318, %c0_319, %c0_320] : memref<8x32x128xf32, #tpu.memory_space<vmem>>, vector<1x32x128xf32>
    %696 = vector.shape_cast %695 : vector<1x32x128xf32> to vector<32x128xf32>
    %cst_321 = arith.constant dense<0.000000e+00> : vector<2x128xf32>
    %697 = tpu.matmul %694, %696, %cst_321 {dimension_numbers = #tpu.dot_dimension_numbers<[1], [0], [0], [1], [0, 0, 1, 1], [], []>} : vector<2x32xf32>, vector<32x128xf32>, vector<2x128xf32> -> vector<2x128xf32>
    %698 = arith.addf %691, %697 : vector<2x128xf32>
    %c0_322 = arith.constant 0 : index
    %c0_323 = arith.constant 0 : index
    %699 = vector.load %arg17[%c0_322, %c0_323] : memref<1x128xf32, #tpu.memory_space<vmem>>, vector<1x128xf32>
    %700 = vector.broadcast %699 : vector<1x128xf32> to vector<2x128xf32>
    %701 = arith.addf %698, %700 : vector<2x128xf32>
    %cst_324 = arith.constant 0.000000e+00 : f32
    %702 = vector.broadcast %cst_324 : f32 to vector<2x128xf32>
    %703 = arith.cmpf oge, %701, %702 : vector<2x128xf32>
    %cst_325 = arith.constant 0.00999999977 : f32
    %704 = vector.broadcast %cst_325 : f32 to vector<2x128xf32>
    %705 = arith.mulf %704, %701 : vector<2x128xf32>
    %706 = arith.select %703, %701, %705 : vector<2x128xi1>, vector<2x128xf32>
    %c0_326 = arith.constant 0 : index
    %c0_327 = arith.constant 0 : index
    %707 = vector.load %arg18[%c0_326, %c0_327] : memref<128x1xf32, #tpu.memory_space<vmem>>, vector<128x1xf32>
    %cst_328 = arith.constant dense<0.000000e+00> : vector<2x1xf32>
    %708 = tpu.matmul %706, %707, %cst_328 {dimension_numbers = #tpu.dot_dimension_numbers<[1], [0], [0], [1], [0, 0, 1, 1], [], []>} : vector<2x128xf32>, vector<128x1xf32>, vector<2x1xf32> -> vector<2x1xf32>
    %c0_329 = arith.constant 0 : index
    %c0_330 = arith.constant 0 : index
    %709 = vector.load %arg19[%c0_329, %c0_330] : memref<1x1xf32, #tpu.memory_space<vmem>>, vector<1x1xf32>
    %710 = vector.broadcast %709 : vector<1x1xf32> to vector<2x1xf32>
    %711 = arith.addf %708, %710 : vector<2x1xf32>
    %c0_331 = arith.constant 0 : index
    %c0_332 = arith.constant 0 : index
    %712 = vector.load %arg20[%c0_331, %c0_332] : memref<2x1xf32, #tpu.memory_space<vmem>>, vector<2x1xf32>
    tpu.vector_store %arg20[%c0_331, %c0_332], %711 {strides = array<i32>} : memref<2x1xf32, #tpu.memory_space<vmem>>, vector<2x1xf32>,
    return
  }
}

</mosaic_0001>

<llo_original>
// kernel: transformer_forward.1
$region0: #{transformer_forward.1}
  #allocation0 [shape = 'u32[]', space=smem, size = 0x4, offset = 0x4, fixed_abs, tag = 'smem constant byte address 0x4 - core index']
  #allocation1 [shape = 'u32[144,128]{1,0:T(1,128)}', space=vmem, size = 0x12000, scoped, tag = 'internal scratch']
  #allocation2 [shape = 'f32[16,32]{1,0:T(8,128)}', space=vmem, size = 0x2000, scoped, tag = 'scratch operand']
  #allocation3 [shape = 'f32[1,1]{1,0:T(1,128)S(1)}', space=vmem, size = 0x200, scoped, tag = 'scoped memory for transformer_forward.1']
  %s0 = inlined_call_operand.vmem [shape: s32[2,8], index: 0, kind: input, shape index: {}]
  %s1 = inlined_call_operand.vmem [shape: s32[16,1], index: 1, kind: input, shape index: {}]
  %s2 = inlined_call_operand.vmem [shape: f32[11,32], index: 2, kind: input, shape index: {}]
  %s3 = inlined_call_operand.vmem [shape: f32[8,32], index: 3, kind: input, shape index: {}]
  %s4 = inlined_call_operand.hbm [shape: f32[2,32,96], index: 4, kind: input, shape index: {}]
  %s5 = inlined_call_operand.vmem [shape: f32[2,1,96], index: 5, kind: input, shape index: {}]
  %s6 = inlined_call_operand.hbm [shape: f32[2,32,32], index: 6, kind: input, shape index: {}]
  %s7 = inlined_call_operand.vmem [shape: f32[2,1,32], index: 7, kind: input, shape index: {}]
  %s8 = inlined_call_operand.vmem [shape: f32[2,1,32], index: 8, kind: input, shape index: {}]
  %s9 = inlined_call_operand.hbm [shape: f32[2,1,32], index: 9, kind: input, shape index: {}]
  %s10 = inlined_call_operand.vmem [shape: f32[2,1,32], index: 10, kind: input, shape index: {}]
  %s11 = inlined_call_operand.vmem [shape: f32[2,1,32], index: 11, kind: input, shape index: {}]
  %s12 = inlined_call_operand.hbm [shape: f32[2,32,64], index: 12, kind: input, shape index: {}]
  %s13 = inlined_call_operand.hbm [shape: f32[2,1,64], index: 13, kind: input, shape index: {}]
  %s14 = inlined_call_operand.vmem [shape: f32[2,64,32], index: 14, kind: input, shape index: {}]
  %s15 = inlined_call_operand.hbm [shape: f32[2,1,32], index: 15, kind: input, shape index: {}]
  %s16 = inlined_call_operand.vmem [shape: f32[8,32,128], index: 16, kind: input, shape index: {}]
  %s17 = inlined_call_operand.vmem [shape: f32[1,128], index: 17, kind: input, shape index: {}]
  %s18 = inlined_call_operand.vmem [shape: f32[128,1], index: 18, kind: input, shape index: {}]
  %s19 = inlined_call_operand.<no memory space> [shape: f32[1,1], index: 19, kind: input, shape index: {}]
  %s20 = inlined_call_operand.vmem [shape: f32[2,1], index: 20, kind: output, shape index: {0}]
  %s21 = inlined_call_operand.vmem [shape: f32[16,8,8], index: 21, kind: output, shape index: {1}]
  %22 = xla_tuple %s20, %s21
  %s23 = sld [smem:[#allocation0]]
  $region122: #{transformer_forward.1} parent=0
    _
  %s25 = ssub.s32 1, %s23
  %s26 = scalar_select 0, %s25, %s23
  %v27 = vstv %s19
  %28 = vst [vmem:[#allocation3] sm:$0x1] %v27
  $region1: #{transformer_forward.1} parent=0
    #allocation4 [shape = 'u8[32768]{0}', space=vmem, size = 0x8000, scoped, tag = 'input window, operand 4, single buffered']
    #allocation5 [shape = 's32[1]{0}', space=sflag, size = 0x4, scoped, tag = 'scoped memory for transformer_forward.1']
    #allocation6 [shape = 'u8[32768]{0}', space=vmem, size = 0x8000, scoped, tag = 'input window, operand 6, single buffered']
    #allocation7 [shape = 's32[1]{0}', space=sflag, size = 0x4, scoped, tag = 'scoped memory for transformer_forward.1']
    #allocation8 [shape = 'u8[1024]{0}', space=vmem, size = 0x400, scoped, tag = 'input window, operand 9, single buffered']
    #allocation9 [shape = 'u8[32768]{0}', space=vmem, size = 0x8000, scoped, tag = 'input window, operand 12, single buffered']
    #allocation10 [shape = 's32[1]{0}', space=sflag, size = 0x4, scoped, tag = 'scoped memory for transformer_forward.1']
    #allocation11 [shape = 'u8[1024]{0}', space=vmem, size = 0x400, scoped, tag = 'input window, operand 13, single buffered']
    #allocation12 [shape = 'u8[1024]{0}', space=vmem, size = 0x400, scoped, tag = 'input window, operand 15, single buffered']
    #allocation13 [shape = 's32[1]{0}', space=sflag, size = 0x4, scoped, tag = 'scoped memory for transformer_forward.1']
    %29 = vsyncpa [#allocation5], 0
    %30 = vsyncpa [#allocation7], 0
    %31 = vsyncpa [#allocation10], 0
    %32 = vsyncpa [#allocation13], 0
    // Predicated region
    $region2: #{transformer_forward.1} parent=1 // pred_check
      _
    $region3: #{transformer_forward.1} parent=1 // pred_check_branch
      %34 = sbr.rel (0) target = $region5
    $region4: #{transformer_forward.1} parent=1 // pred_region
      _
    $region5: #{transformer_forward.1} parent=1 // pred_fallthru
      _
    // Predicated region
    $region6: #{transformer_forward.1} parent=1 // pred_check
      _
    $region7: #{transformer_forward.1} parent=1 // pred_check_branch
      %36 = sbr.rel (0) target = $region9
    $region8: #{transformer_forward.1} parent=1 // pred_region
      _
    $region9: #{transformer_forward.1} parent=1 // pred_fallthru
      _
    // Predicated region
    $region10: #{transformer_forward.1} parent=1 // pred_check
      _
    $region11: #{transformer_forward.1} parent=1 // pred_check_branch
      %38 = sbr.rel (0) target = $region13
    $region12: #{transformer_forward.1} parent=1 // pred_region
      _
    $region13: #{transformer_forward.1} parent=1 // pred_fallthru
      _
    // Predicated region
    $region14: #{transformer_forward.1} parent=1 // pred_check
      _
    $region15: #{transformer_forward.1} parent=1 // pred_check_branch
      %40 = sbr.rel (0) target = $region17
    $region16: #{transformer_forward.1} parent=1 // pred_region
      _
    $region17: #{transformer_forward.1} parent=1 // pred_fallthru
      _
    // Predicated region
    $region18: #{transformer_forward.1} parent=1 // pred_check
      _
    $region19: #{transformer_forward.1} parent=1 // pred_check_branch
      %42 = sbr.rel (0) target = $region21
    $region20: #{transformer_forward.1} parent=1 // pred_region
      %s44 = ssub.s32 1024, 1024
      %45 = vsyncadd [#allocation5], %s44
      %s46 = sshll.u32 [#allocation4], 4
      %s47 = int_to_ptr.vmem [resolvable:$true] %s46
      %52 = dma.hbm_to_vmem [thread:$0]  %s4, 1024, %s47, [#allocation5], 128, 128, 8
    $region21: #{transformer_forward.1} parent=1 // pred_fallthru
      _
    // Predicated region
    $region22: #{transformer_forward.1} parent=1 // pred_check
      _
    $region23: #{transformer_forward.1} parent=1 // pred_check_branch
      %54 = sbr.rel (0) target = $region25
    $region24: #{transformer_forward.1} parent=1 // pred_region
      _
    $region25: #{transformer_forward.1} parent=1 // pred_fallthru
      _
    // Predicated region
    $region26: #{transformer_forward.1} parent=1 // pred_check
      _
    $region27: #{transformer_forward.1} parent=1 // pred_check_branch
      %56 = sbr.rel (0) target = $region29
    $region28: #{transformer_forward.1} parent=1 // pred_region
      %s58 = ssub.s32 1024, 1024
      %59 = vsyncadd [#allocation7], %s58
      %s60 = sshll.u32 [#allocation6], 4
      %s61 = int_to_ptr.vmem [resolvable:$true] %s60
      %66 = dma.hbm_to_vmem [thread:$0]  %s6, 1024, %s61, [#allocation7], 128, 128, 8
    $region29: #{transformer_forward.1} parent=1 // pred_fallthru
      _
    // Predicated region
    $region30: #{transformer_forward.1} parent=1 // pred_check
      _
    $region31: #{transformer_forward.1} parent=1 // pred_check_branch
      %68 = sbr.rel (0) target = $region33
    $region32: #{transformer_forward.1} parent=1 // pred_region
      _
    $region33: #{transformer_forward.1} parent=1 // pred_fallthru
      _
    // Predicated region
    $region34: #{transformer_forward.1} parent=1 // pred_check
      _
    $region35: #{transformer_forward.1} parent=1 // pred_check_branch
      %70 = sbr.rel (0) target = $region37
    $region36: #{transformer_forward.1} parent=1 // pred_region
      _
    $region37: #{transformer_forward.1} parent=1 // pred_fallthru
      _
    // Predicated region
    $region38: #{transformer_forward.1} parent=1 // pred_check
      _
    $region39: #{transformer_forward.1} parent=1 // pred_check_branch
      %72 = sbr.rel (0) target = $region41
    $region40: #{transformer_forward.1} parent=1 // pred_region
      %s74 = ssub.s32 32, 32
      %75 = vsyncadd [#allocation7], %s74
      %s76 = sshll.u32 [#allocation8], 4
      %s77 = int_to_ptr.vmem [resolvable:$true] %s76
      %82 = dma.hbm_to_vmem [thread:$0]  %s9, 32, %s77, [#allocation7], 16, 16, 1
    $region41: #{transformer_forward.1} parent=1 // pred_fallthru
      _
    // Predicated region
    $region42: #{transformer_forward.1} parent=1 // pred_check
      _
    $region43: #{transformer_forward.1} parent=1 // pred_check_branch
      %84 = sbr.rel (0) target = $region45
    $region44: #{transformer_forward.1} parent=1 // pred_region
      _
    $region45: #{transformer_forward.1} parent=1 // pred_fallthru
      _
    // Predicated region
    $region46: #{transformer_forward.1} parent=1 // pred_check
      _
    $region47: #{transformer_forward.1} parent=1 // pred_check_branch
      %86 = sbr.rel (0) target = $region49
    $region48: #{transformer_forward.1} parent=1 // pred_region
      _
    $region49: #{transformer_forward.1} parent=1 // pred_fallthru
      _
    // Predicated region
    $region50: #{transformer_forward.1} parent=1 // pred_check
      _
    $region51: #{transformer_forward.1} parent=1 // pred_check_branch
      %88 = sbr.rel (0) target = $region53
    $region52: #{transformer_forward.1} parent=1 // pred_region
      %s90 = ssub.s32 1024, 1024
      %91 = vsyncadd [#allocation10], %s90
      %s92 = sshll.u32 [#allocation9], 4
      %s93 = int_to_ptr.vmem [resolvable:$true] %s92
      %98 = dma.hbm_to_vmem [thread:$0]  %s12, 1024, %s93, [#allocation10], 128, 128, 8
    $region53: #{transformer_forward.1} parent=1 // pred_fallthru
      _
    // Predicated region
    $region54: #{transformer_forward.1} parent=1 // pred_check
      _
    $region55: #{transformer_forward.1} parent=1 // pred_check_branch
      %100 = sbr.rel (0) target = $region57
    $region56: #{transformer_forward.1} parent=1 // pred_region
      %s102 = ssub.s32 32, 32
      %103 = vsyncadd [#allocation10], %s102
      %s104 = sshll.u32 [#allocation11], 4
      %s105 = int_to_ptr.vmem [resolvable:$true] %s104
      %110 = dma.hbm_to_vmem [thread:$0]  %s13, 32, %s105, [#allocation10], 16, 16, 1
    $region57: #{transformer_forward.1} parent=1 // pred_fallthru
      _
    // Predicated region
    $region58: #{transformer_forward.1} parent=1 // pred_check
      _
    $region59: #{transformer_forward.1} parent=1 // pred_check_branch
      %112 = sbr.rel (0) target = $region61
    $region60: #{transformer_forward.1} parent=1 // pred_region
      _
    $region61: #{transformer_forward.1} parent=1 // pred_fallthru
      _
    // Predicated region
    $region62: #{transformer_forward.1} parent=1 // pred_check
      _
    $region63: #{transformer_forward.1} parent=1 // pred_check_branch
      %114 = sbr.rel (0) target = $region65
    $region64: #{transformer_forward.1} parent=1 // pred_region
      %s116 = ssub.s32 32, 32
      %117 = vsyncadd [#allocation13], %s116
      %s118 = sshll.u32 [#allocation12], 4
      %s119 = int_to_ptr.vmem [resolvable:$true] %s118
      %124 = dma.hbm_to_vmem [thread:$0]  %s15, 32, %s119, [#allocation13], 16, 16, 1
    $region65: #{transformer_forward.1} parent=1 // pred_fallthru
      _
    // Predicated region
    $region66: #{transformer_forward.1} parent=1 // pred_check
      _
    $region67: #{transformer_forward.1} parent=1 // pred_check_branch
      %126 = sbr.rel (0) target = $region69
    $region68: #{transformer_forward.1} parent=1 // pred_region
      _
    $region69: #{transformer_forward.1} parent=1 // pred_fallthru
      _
    // Predicated region
    $region70: #{transformer_forward.1} parent=1 // pred_check
      _
    $region71: #{transformer_forward.1} parent=1 // pred_check_branch
      %128 = sbr.rel (0) target = $region73
    $region72: #{transformer_forward.1} parent=1 // pred_region
      _
    $region73: #{transformer_forward.1} parent=1 // pred_fallthru
      _
    // Predicated region
    $region74: #{transformer_forward.1} parent=1 // pred_check
      _
    $region75: #{transformer_forward.1} parent=1 // pred_check_branch
      %130 = sbr.rel (0) target = $region77
    $region76: #{transformer_forward.1} parent=1 // pred_region
      _
    $region77: #{transformer_forward.1} parent=1 // pred_fallthru
      _
    // Predicated region
    $region78: #{transformer_forward.1} parent=1 // pred_check
      _
    $region79: #{transformer_forward.1} parent=1 // pred_check_branch
      %132 = sbr.rel (0) target = $region81
    $region80: #{transformer_forward.1} parent=1 // pred_region
      _
    $region81: #{transformer_forward.1} parent=1 // pred_fallthru
      _
    // Predicated region
    $region82: #{transformer_forward.1} parent=1 // pred_check
      _
    $region83: #{transformer_forward.1} parent=1 // pred_check_branch
      %134 = sbr.rel (0) target = $region85
    $region84: #{transformer_forward.1} parent=1 // pred_region
      %135 = dma.done [#allocation5], 1024
    $region85: #{transformer_forward.1} parent=1 // pred_fallthru
      _
    // Predicated region
    $region86: #{transformer_forward.1} parent=1 // pred_check
      _
    $region87: #{transformer_forward.1} parent=1 // pred_check_branch
      %137 = sbr.rel (0) target = $region89
    $region88: #{transformer_forward.1} parent=1 // pred_region
      %138 = dma.done [#allocation7], 1024
    $region89: #{transformer_forward.1} parent=1 // pred_fallthru
      _
    // Predicated region
    $region90: #{transformer_forward.1} parent=1 // pred_check
      _
    $region91: #{transformer_forward.1} parent=1 // pred_check_branch
      %140 = sbr.rel (0) target = $region93
    $region92: #{transformer_forward.1} parent=1 // pred_region
      %141 = dma.done [#allocation7], 32
    $region93: #{transformer_forward.1} parent=1 // pred_fallthru
      _
    // Predicated region
    $region94: #{transformer_forward.1} parent=1 // pred_check
      _
    $region95: #{transformer_forward.1} parent=1 // pred_check_branch
      %143 = sbr.rel (0) target = $region97
    $region96: #{transformer_forward.1} parent=1 // pred_region
      %144 = dma.done [#allocation10], 1024
    $region97: #{transformer_forward.1} parent=1 // pred_fallthru
      _
    // Predicated region
    $region98: #{transformer_forward.1} parent=1 // pred_check
      _
    $region99: #{transformer_forward.1} parent=1 // pred_check_branch
      %146 = sbr.rel (0) target = $region101
    $region100: #{transformer_forward.1} parent=1 // pred_region
      %147 = dma.done [#allocation10], 32
    $region101: #{transformer_forward.1} parent=1 // pred_fallthru
      _
    // Predicated region
    $region102: #{transformer_forward.1} parent=1 // pred_check
      _
    $region103: #{transformer_forward.1} parent=1 // pred_check_branch
      %149 = sbr.rel (0) target = $region105
    $region104: #{transformer_forward.1} parent=1 // pred_region
      %150 = dma.done [#allocation13], 32
    $region105: #{transformer_forward.1} parent=1 // pred_fallthru
      _
    %v151 = vld [vmem:[%s0] sm:$0x3]
    %vm152 = vcmp.eq.s32.totalorder %v151, 0
    %v153 = vsel %vm152, 1, 0
    %v154 = vcvt.s32.f32 %v153
    %vm155 = vcmask 58368
    %v156 = vsel %vm155, %v154, -inf
    %157 = vmax.xlane.f32.xlu0 %v156
    %v158 = vpop.xlane.xlu0 %157
    %v159 = vmax.f32 %v154, %v158
    %v160 = vld [vmem:[%s1] sm:$0xff]
    %v161 = vld [vmem:[%s1 + $0x8] sm:$0xff]
    %v162 = vlaneseq
    %v163 = vand.u32 %v162, 127
    %164 = vset.pattern.permute.xlu0 0
    %165 = vperm.xlu0 %164, %v160
    %v166 = vpop.permute.xlu0 %165
    %167 = vset.pattern.permute.xlu0 0
    %168 = vperm.xlu0 %167, %v161
    %v169 = vpop.permute.xlu0 %168
    %vm170 = vcmp.eq.s32.totalorder %v163, %v166
    %vm171 = vcmp.eq.s32.totalorder %v163, %v169
    %v172 = vsel %vm170, 1, 0
    %v173 = vsel %vm171, 1, 0
    %v174 = vcvt.s32.f32 %v172
    %v175 = vcvt.s32.f32 %v173
    %v176 = vld [vmem:[%s3] sm:$0xff]
    %v177 = vld [vmem:[%s2] sm:$0xff]
    %v178 = vld [vmem:[%s2 + $0x8] sm:$0x7]
    %vm179 = vcmask 89088
    %v181 = vsel %vm179, %v174, 0
    %v184 = vsel %vm179, %v175, 0
    %vm186 = vcmask 1042432
    %v188 = vsel %vm186, %v178, 0
    %190 = vmatprep.subr.mxu0 0.0
    %191 = vmatpush1.msra.mxu0 0.0
    %192 = vmatprep.subr.mxu0 0.0
    %193 = vmatpush1.msra.mxu0 0.0
    %194 = vmatprep.subr.mxu0 0.0
    %195 = vmatpush1.msra.mxu0 0.0
    %196 = vmatprep.subr.mxu0 0.0
    %197 = vmatpush1.msra.mxu0 0.0
    %198 = vmatprep.subr.mxu0 0.0
    %199 = vmatpush1.msra.mxu0 0.0
    %200 = vmatprep.subr.mxu0 0.0
    %201 = vmatpush1.msra.mxu0 0.0
    %202 = vmatprep.subr.mxu0 0.0
    %203 = vmatpush1.msra.mxu0 0.0
    %204 = vmatprep.subr.mxu0 0.0
    %205 = vmatpush1.msra.mxu0 0.0
    %206 = vmatprep.subr.mxu0 0.0
    %207 = vmatpush1.msra.mxu0 0.0
    %208 = vmatprep.subr.mxu0 0.0
    %209 = vmatpush1.msra.mxu0 0.0
    %210 = vmatprep.subr.mxu0 0.0
    %211 = vmatpush1.msra.mxu0 0.0
    %212 = vmatprep.subr.mxu0 0.0
    %213 = vmatpush1.msra.mxu0 0.0
    %214 = vmatprep.subr.mxu0 0.0
    %215 = vmatpush1.msra.mxu0 0.0
    %216 = vmatprep.subr.mxu0 0.0
    %217 = vmatpush1.msra.mxu0 0.0
    %218 = vmatprep.subr.mxu0 0.0
    %219 = vmatpush1.msra.mxu0 %v188
    %220 = vmatprep.subr.mxu0 0.0
    %221 = vmatpush1.msra.mxu0 %v177
    %222 = vmatprep.subr.mxu0 0.0
    %223 = vmatpush2.msra.mxu0 0.0
    %224 = vmatprep.subr.mxu0 0.0
    %225 = vmatpush2.msra.mxu0 0.0
    %226 = vmatprep.subr.mxu0 0.0
    %227 = vmatpush2.msra.mxu0 0.0
    %228 = vmatprep.subr.mxu0 0.0
    %229 = vmatpush2.msra.mxu0 0.0
    %230 = vmatprep.subr.mxu0 0.0
    %231 = vmatpush2.msra.mxu0 0.0
    %232 = vmatprep.subr.mxu0 0.0
    %233 = vmatpush2.msra.mxu0 0.0
    %234 = vmatprep.subr.mxu0 0.0
    %235 = vmatpush2.msra.mxu0 0.0
    %236 = vmatprep.subr.mxu0 0.0
    %237 = vmatpush2.msra.mxu0 0.0
    %238 = vmatprep.subr.mxu0 0.0
    %239 = vmatpush2.msra.mxu0 0.0
    %240 = vmatprep.subr.mxu0 0.0
    %241 = vmatpush2.msra.mxu0 0.0
    %242 = vmatprep.subr.mxu0 0.0
    %243 = vmatpush2.msra.mxu0 0.0
    %244 = vmatprep.subr.mxu0 0.0
    %245 = vmatpush2.msra.mxu0 0.0
    %246 = vmatprep.subr.mxu0 0.0
    %247 = vmatpush2.msra.mxu0 0.0
    %248 = vmatprep.subr.mxu0 0.0
    %249 = vmatpush2.msra.mxu0 0.0
    %250 = vmatprep.subr.mxu0 0.0
    %251 = vmatpush2.msra.mxu0 0.0
    %252 = vmatprep.subr.mxu0 0.0
    %253 = vmatpush2.msra.mxu0 0.0
    %254 = vmatprep.mubr.f32.mxu0 0.0
    %255 = vmatmul.mubr.f32.gmra.mxu0 %v181
    %v256 = vpop.f32.mrf.mxu0
    %v257 = vadd.f32 %v176, %v256
    %v258 = vpop.f32.mrf.mxu0
    %259 = vmatprep.mubr.f32.mxu0 0.0
    %260 = vmatmul.mubr.f32.gmra.mxu0 %v184
    %v261 = vpop.f32.mrf.mxu0
    %v262 = vadd.f32 %v176, %v261
    %v263 = vpop.f32.mrf.mxu0
    %264 = vdwg.mxu0
    %v265 = vld [vmem:[#allocation4] sm:$0xff]
    %v266 = vld [vmem:[#allocation4 + $0x8] sm:$0xff]
    %v267 = vld [vmem:[#allocation4 + $0x10] sm:$0xff]
    %v268 = vld [vmem:[#allocation4 + $0x18] sm:$0xff]
    %v269 = vld [vmem:[%s5] sm:$0x1]
    %v271 = vlaneseq
    %v272 = vshrl.u32 %v271, 7
    %v273 = vsub.s32 0, %v272
    %v274 = vrot.slane %v269, %v273
    %vm276 = vcmask 261120
    %v278 = vsel %vm276, %v257, 0
    %v281 = vsel %vm276, %v262, 0
    %283 = vmatprep.subr.mxu0 0.0
    %284 = vmatpush1.msra.mxu0 0.0
    %285 = vmatprep.subr.mxu0 0.0
    %286 = vmatpush1.msra.mxu0 0.0
    %287 = vmatprep.subr.mxu0 0.0
    %288 = vmatpush1.msra.mxu0 0.0
    %289 = vmatprep.subr.mxu0 0.0
    %290 = vmatpush1.msra.mxu0 0.0
    %291 = vmatprep.subr.mxu0 0.0
    %292 = vmatpush1.msra.mxu0 0.0
    %293 = vmatprep.subr.mxu0 0.0
    %294 = vmatpush1.msra.mxu0 0.0
    %295 = vmatprep.subr.mxu0 0.0
    %296 = vmatpush1.msra.mxu0 0.0
    %297 = vmatprep.subr.mxu0 0.0
    %298 = vmatpush1.msra.mxu0 0.0
    %299 = vmatprep.subr.mxu0 0.0
    %300 = vmatpush1.msra.mxu0 0.0
    %301 = vmatprep.subr.mxu0 0.0
    %302 = vmatpush1.msra.mxu0 0.0
    %303 = vmatprep.subr.mxu0 0.0
    %304 = vmatpush1.msra.mxu0 0.0
    %305 = vmatprep.subr.mxu0 0.0
    %306 = vmatpush1.msra.mxu0 0.0
    %307 = vmatprep.subr.mxu0 0.0
    %308 = vmatpush1.msra.mxu0 %v268
    %309 = vmatprep.subr.mxu0 0.0
    %310 = vmatpush1.msra.mxu0 %v267
    %311 = vmatprep.subr.mxu0 0.0
    %312 = vmatpush1.msra.mxu0 %v266
    %313 = vmatprep.subr.mxu0 0.0
    %314 = vmatpush1.msra.mxu0 %v265
    %315 = vmatprep.subr.mxu0 0.0
    %316 = vmatpush2.msra.mxu0 0.0
    %317 = vmatprep.subr.mxu0 0.0
    %318 = vmatpush2.msra.mxu0 0.0
    %319 = vmatprep.subr.mxu0 0.0
    %320 = vmatpush2.msra.mxu0 0.0
    %321 = vmatprep.subr.mxu0 0.0
    %322 = vmatpush2.msra.mxu0 0.0
    %323 = vmatprep.subr.mxu0 0.0
    %324 = vmatpush2.msra.mxu0 0.0
    %325 = vmatprep.subr.mxu0 0.0
    %326 = vmatpush2.msra.mxu0 0.0
    %327 = vmatprep.subr.mxu0 0.0
    %328 = vmatpush2.msra.mxu0 0.0
    %329 = vmatprep.subr.mxu0 0.0
    %330 = vmatpush2.msra.mxu0 0.0
    %331 = vmatprep.subr.mxu0 0.0
    %332 = vmatpush2.msra.mxu0 0.0
    %333 = vmatprep.subr.mxu0 0.0
    %334 = vmatpush2.msra.mxu0 0.0
    %335 = vmatprep.subr.mxu0 0.0
    %336 = vmatpush2.msra.mxu0 0.0
    %337 = vmatprep.subr.mxu0 0.0
    %338 = vmatpush2.msra.mxu0 0.0
    %339 = vmatprep.subr.mxu0 0.0
    %340 = vmatpush2.msra.mxu0 0.0
    %341 = vmatprep.subr.mxu0 0.0
    %342 = vmatpush2.msra.mxu0 0.0
    %343 = vmatprep.subr.mxu0 0.0
    %344 = vmatpush2.msra.mxu0 0.0
    %345 = vmatprep.subr.mxu0 0.0
    %346 = vmatpush2.msra.mxu0 0.0
    %347 = vmatprep.mubr.f32.mxu0 0.0
    %348 = vmatmul.mubr.f32.gmra.mxu0 %v278
    %v349 = vpop.f32.mrf.mxu0
    %v350 = vadd.f32 %v274, %v349
    %v351 = vpop.f32.mrf.mxu0
    %352 = vmatprep.mubr.f32.mxu0 0.0
    %353 = vmatmul.mubr.f32.gmra.mxu0 %v281
    %v354 = vpop.f32.mrf.mxu0
    %v355 = vadd.f32 %v274, %v354
    %v356 = vpop.f32.mrf.mxu0
    %357 = vdwg.mxu0
    %359 = vrot.lane.b32.xlu0 %v350, 96
    %v360 = vpop.permute.xlu0 %359
    %vm361 = vcmask 64512
    %v362 = vsel %vm361, %v350, 0
    %v364 = vsel %vm361, %v360, 0
    %366 = vmatprep.subr.mxu0 0.0
    %367 = vmatpush1.xpose.msra.mxu0 0.0
    %368 = vmatprep.subr.mxu0 0.0
    %369 = vmatpush1.xpose.msra.mxu0 0.0
    %370 = vmatprep.subr.mxu0 0.0
    %371 = vmatpush1.xpose.msra.mxu0 0.0
    %372 = vmatprep.subr.mxu0 0.0
    %373 = vmatpush1.xpose.msra.mxu0 0.0
    %374 = vmatprep.subr.mxu0 0.0
    %375 = vmatpush1.xpose.msra.mxu0 0.0
    %376 = vmatprep.subr.mxu0 0.0
    %377 = vmatpush1.xpose.msra.mxu0 0.0
    %378 = vmatprep.subr.mxu0 0.0
    %379 = vmatpush1.xpose.msra.mxu0 0.0
    %380 = vmatprep.subr.mxu0 0.0
    %381 = vmatpush1.xpose.msra.mxu0 0.0
    %382 = vmatprep.subr.mxu0 0.0
    %383 = vmatpush1.xpose.msra.mxu0 0.0
    %384 = vmatprep.subr.mxu0 0.0
    %385 = vmatpush1.xpose.msra.mxu0 0.0
    %386 = vmatprep.subr.mxu0 0.0
    %387 = vmatpush1.xpose.msra.mxu0 0.0
    %388 = vmatprep.subr.mxu0 0.0
    %389 = vmatpush1.xpose.msra.mxu0 0.0
    %390 = vmatprep.subr.mxu0 0.0
    %391 = vmatpush1.xpose.msra.mxu0 0.0
    %392 = vmatprep.subr.mxu0 0.0
    %393 = vmatpush1.xpose.msra.mxu0 0.0
    %394 = vmatprep.subr.mxu0 0.0
    %395 = vmatpush1.xpose.msra.mxu0 0.0
    %396 = vmatprep.subr.mxu0 0.0
    %397 = vmatpush1.xpose.msra.mxu0 %v364
    %398 = vmatprep.subr.mxu0 0.0
    %399 = vmatpush2.xpose.msra.mxu0 0.0
    %400 = vmatprep.subr.mxu0 0.0
    %401 = vmatpush2.xpose.msra.mxu0 0.0
    %402 = vmatprep.subr.mxu0 0.0
    %403 = vmatpush2.xpose.msra.mxu0 0.0
    %404 = vmatprep.subr.mxu0 0.0
    %405 = vmatpush2.xpose.msra.mxu0 0.0
    %406 = vmatprep.subr.mxu0 0.0
    %407 = vmatpush2.xpose.msra.mxu0 0.0
    %408 = vmatprep.subr.mxu0 0.0
    %409 = vmatpush2.xpose.msra.mxu0 0.0
    %410 = vmatprep.subr.mxu0 0.0
    %411 = vmatpush2.xpose.msra.mxu0 0.0
    %412 = vmatprep.subr.mxu0 0.0
    %413 = vmatpush2.xpose.msra.mxu0 0.0
    %414 = vmatprep.subr.mxu0 0.0
    %415 = vmatpush2.xpose.msra.mxu0 0.0
    %416 = vmatprep.subr.mxu0 0.0
    %417 = vmatpush2.xpose.msra.mxu0 0.0
    %418 = vmatprep.subr.mxu0 0.0
    %419 = vmatpush2.xpose.msra.mxu0 0.0
    %420 = vmatprep.subr.mxu0 0.0
    %421 = vmatpush2.xpose.msra.mxu0 0.0
    %422 = vmatprep.subr.mxu0 0.0
    %423 = vmatpush2.xpose.msra.mxu0 0.0
    %424 = vmatprep.subr.mxu0 0.0
    %425 = vmatpush2.xpose.msra.mxu0 0.0
    %426 = vmatprep.subr.mxu0 0.0
    %427 = vmatpush2.xpose.msra.mxu0 0.0
    %428 = vmatprep.subr.mxu0 0.0
    %429 = vmatpush2.xpose.msra.mxu0 0.0
    %430 = vmatprep.mubr.f32.mxu0 0.0
    %431 = vmatmul.mubr.f32.gmra.mxu0 %v362
    %v432 = vpop.f32.mrf.mxu0
    %v433 = vadd.f32 0.0, %v432
    %v434 = vpop.f32.mrf.mxu0
    %435 = vdwg.mxu0
    %v436 = vmul.f32 %v433, 0.35355338
    %vm437 = vcmp.gt.f32.partialorder %v159, 0.5
    %v438 = vsel %vm437, 1, 0
    %v439 = vlaneseq
    %v440 = vshrl.u32 %v439, 7
    %v441 = vsub.s32 0, %v440
    %v442 = vrot.slane %v438, %v441
    %vm443 = vcmp.eq.s32.totalorder %v442, 1
    %v444 = vsel %vm443, -1e+09, %v436
    %v445 = vsel %vm361, %v444, -inf
    %446 = vmax.xlane.f32.xlu0 %v445
    %v447 = vpop.xlane.xlu0 %446
    %v448 = vsub.f32 %v444, %v447
    %v449 = vmul.f32 %v448, 1.442695
    %v450 = vpow.pop %v449
    %v451 = vsel %vm361, %v450, 0.0
    %452 = vadd.xlane.f32.xlu0 %v451
    %v453 = vpop.xlane.xlu0 %452
    %v454 = vrcp.pop %v453
    %v455 = vmul.f32 %v450, %v454
    %456 = vst.msk [vmem:[%s21] sm:$0xff] %vm361, %v455
    %457 = vrot.lane.b32.xlu0 %v350, 64
    %v458 = vpop.permute.xlu0 %457
    %v461 = vsel %vm361, %v455, 0
    %463 = vmatprep.subr.mxu0 0.0
    %464 = vmatpush1.msra.mxu0 0.0
    %465 = vmatprep.subr.mxu0 0.0
    %466 = vmatpush1.msra.mxu0 0.0
    %467 = vmatprep.subr.mxu0 0.0
    %468 = vmatpush1.msra.mxu0 0.0
    %469 = vmatprep.subr.mxu0 0.0
    %470 = vmatpush1.msra.mxu0 0.0
    %471 = vmatprep.subr.mxu0 0.0
    %472 = vmatpush1.msra.mxu0 0.0
    %473 = vmatprep.subr.mxu0 0.0
    %474 = vmatpush1.msra.mxu0 0.0
    %475 = vmatprep.subr.mxu0 0.0
    %476 = vmatpush1.msra.mxu0 0.0
    %477 = vmatprep.subr.mxu0 0.0
    %478 = vmatpush1.msra.mxu0 0.0
    %479 = vmatprep.subr.mxu0 0.0
    %480 = vmatpush1.msra.mxu0 0.0
    %481 = vmatprep.subr.mxu0 0.0
    %482 = vmatpush1.msra.mxu0 0.0
    %483 = vmatprep.subr.mxu0 0.0
    %484 = vmatpush1.msra.mxu0 0.0
    %485 = vmatprep.subr.mxu0 0.0
    %486 = vmatpush1.msra.mxu0 0.0
    %487 = vmatprep.subr.mxu0 0.0
    %488 = vmatpush1.msra.mxu0 0.0
    %489 = vmatprep.subr.mxu0 0.0
    %490 = vmatpush1.msra.mxu0 0.0
    %491 = vmatprep.subr.mxu0 0.0
    %492 = vmatpush1.msra.mxu0 0.0
    %493 = vmatprep.subr.mxu0 0.0
    %494 = vmatpush1.msra.mxu0 %v458
    %495 = vmatprep.subr.mxu0 0.0
    %496 = vmatpush2.msra.mxu0 0.0
    %497 = vmatprep.subr.mxu0 0.0
    %498 = vmatpush2.msra.mxu0 0.0
    %499 = vmatprep.subr.mxu0 0.0
    %500 = vmatpush2.msra.mxu0 0.0
    %501 = vmatprep.subr.mxu0 0.0
    %502 = vmatpush2.msra.mxu0 0.0
    %503 = vmatprep.subr.mxu0 0.0
    %504 = vmatpush2.msra.mxu0 0.0
    %505 = vmatprep.subr.mxu0 0.0
    %506 = vmatpush2.msra.mxu0 0.0
    %507 = vmatprep.subr.mxu0 0.0
    %508 = vmatpush2.msra.mxu0 0.0
    %509 = vmatprep.subr.mxu0 0.0
    %510 = vmatpush2.msra.mxu0 0.0
    %511 = vmatprep.subr.mxu0 0.0
    %512 = vmatpush2.msra.mxu0 0.0
    %513 = vmatprep.subr.mxu0 0.0
    %514 = vmatpush2.msra.mxu0 0.0
    %515 = vmatprep.subr.mxu0 0.0
    %516 = vmatpush2.msra.mxu0 0.0
    %517 = vmatprep.subr.mxu0 0.0
    %518 = vmatpush2.msra.mxu0 0.0
    %519 = vmatprep.subr.mxu0 0.0
    %520 = vmatpush2.msra.mxu0 0.0
    %521 = vmatprep.subr.mxu0 0.0
    %522 = vmatpush2.msra.mxu0 0.0
    %523 = vmatprep.subr.mxu0 0.0
    %524 = vmatpush2.msra.mxu0 0.0
    %525 = vmatprep.subr.mxu0 0.0
    %526 = vmatpush2.msra.mxu0 0.0
    %527 = vmatprep.mubr.f32.mxu0 0.0
    %528 = vmatmul.mubr.f32.gmra.mxu0 %v461
    %v529 = vpop.f32.mrf.mxu0
    %v530 = vadd.f32 0.0, %v529
    %v531 = vpop.f32.mrf.mxu0
    %532 = vdwg.mxu0
    %533 = vst.msk [vmem:[#allocation2] sm:$0xff] %vm361, %v530
    %534 = vrot.lane.b32.xlu0 %v350, 120
    %v535 = vpop.permute.xlu0 %534
    %536 = vrot.lane.b32.xlu0 %v350, 88
    %v537 = vpop.permute.xlu0 %536
    %v538 = vsel %vm361, %v535, 0
    %v540 = vsel %vm361, %v537, 0
    %542 = vmatprep.subr.mxu0 0.0
    %543 = vmatpush1.xpose.msra.mxu0 0.0
    %544 = vmatprep.subr.mxu0 0.0
    %545 = vmatpush1.xpose.msra.mxu0 0.0
    %546 = vmatprep.subr.mxu0 0.0
    %547 = vmatpush1.xpose.msra.mxu0 0.0
    %548 = vmatprep.subr.mxu0 0.0
    %549 = vmatpush1.xpose.msra.mxu0 0.0
    %550 = vmatprep.subr.mxu0 0.0
    %551 = vmatpush1.xpose.msra.mxu0 0.0
    %552 = vmatprep.subr.mxu0 0.0
    %553 = vmatpush1.xpose.msra.mxu0 0.0
    %554 = vmatprep.subr.mxu0 0.0
    %555 = vmatpush1.xpose.msra.mxu0 0.0
    %556 = vmatprep.subr.mxu0 0.0
    %557 = vmatpush1.xpose.msra.mxu0 0.0
    %558 = vmatprep.subr.mxu0 0.0
    %559 = vmatpush1.xpose.msra.mxu0 0.0
    %560 = vmatprep.subr.mxu0 0.0
    %561 = vmatpush1.xpose.msra.mxu0 0.0
    %562 = vmatprep.subr.mxu0 0.0
    %563 = vmatpush1.xpose.msra.mxu0 0.0
    %564 = vmatprep.subr.mxu0 0.0
    %565 = vmatpush1.xpose.msra.mxu0 0.0
    %566 = vmatprep.subr.mxu0 0.0
    %567 = vmatpush1.xpose.msra.mxu0 0.0
    %568 = vmatprep.subr.mxu0 0.0
    %569 = vmatpush1.xpose.msra.mxu0 0.0
    %570 = vmatprep.subr.mxu0 0.0
    %571 = vmatpush1.xpose.msra.mxu0 0.0
    %572 = vmatprep.subr.mxu0 0.0
    %573 = vmatpush1.xpose.msra.mxu0 %v540
    %574 = vmatprep.subr.mxu0 0.0
    %575 = vmatpush2.xpose.msra.mxu0 0.0
    %576 = vmatprep.subr.mxu0 0.0
    %577 = vmatpush2.xpose.msra.mxu0 0.0
    %578 = vmatprep.subr.mxu0 0.0
    %579 = vmatpush2.xpose.msra.mxu0 0.0
    %580 = vmatprep.subr.mxu0 0.0
    %581 = vmatpush2.xpose.msra.mxu0 0.0
    %582 = vmatprep.subr.mxu0 0.0
    %583 = vmatpush2.xpose.msra.mxu0 0.0
    %584 = vmatprep.subr.mxu0 0.0
    %585 = vmatpush2.xpose.msra.mxu0 0.0
    %586 = vmatprep.subr.mxu0 0.0
    %587 = vmatpush2.xpose.msra.mxu0 0.0
    %588 = vmatprep.subr.mxu0 0.0
    %589 = vmatpush2.xpose.msra.mxu0 0.0
    %590 = vmatprep.subr.mxu0 0.0
    %591 = vmatpush2.xpose.msra.mxu0 0.0
    %592 = vmatprep.subr.mxu0 0.0
    %593 = vmatpush2.xpose.msra.mxu0 0.0
    %594 = vmatprep.subr.mxu0 0.0
    %595 = vmatpush2.xpose.msra.mxu0 0.0
    %596 = vmatprep.subr.mxu0 0.0
    %597 = vmatpush2.xpose.msra.mxu0 0.0
    %598 = vmatprep.subr.mxu0 0.0
    %599 = vmatpush2.xpose.msra.mxu0 0.0
    %600 = vmatprep.subr.mxu0 0.0
    %601 = vmatpush2.xpose.msra.mxu0 0.0
    %602 = vmatprep.subr.mxu0 0.0
    %603 = vmatpush2.xpose.msra.mxu0 0.0
    %604 = vmatprep.subr.mxu0 0.0
    %605 = vmatpush2.xpose.msra.mxu0 0.0
    %606 = vmatprep.mubr.f32.mxu0 0.0
    %607 = vmatmul.mubr.f32.gmra.mxu0 %v538
    %v608 = vpop.f32.mrf.mxu0
    %v609 = vadd.f32 0.0, %v608
    %v610 = vpop.f32.mrf.mxu0
    %611 = vdwg.mxu0
    %v612 = vmul.f32 %v609, 0.35355338
    %v613 = vsel %vm443, -1e+09, %v612
    %v614 = vsel %vm361, %v613, -inf
    %615 = vmax.xlane.f32.xlu0 %v614
    %v616 = vpop.xlane.xlu0 %615
    %v617 = vsub.f32 %v613, %v616
    %v618 = vmul.f32 %v617, 1.442695
    %v619 = vpow.pop %v618
    %v620 = vsel %vm361, %v619, 0.0
    %621 = vadd.xlane.f32.xlu0 %v620
    %v622 = vpop.xlane.xlu0 %621
    %v623 = vrcp.pop %v622
    %v624 = vmul.f32 %v619, %v623
    %s625 = scalar_lea.vmem %s21, 8
    %626 = vst.msk [vmem:[%s625] sm:$0xff] %vm361, %v624
    %627 = vrot.lane.b32.xlu0 %v350, 56
    %v628 = vpop.permute.xlu0 %627
    %v631 = vsel %vm361, %v624, 0
    %633 = vmatprep.subr.mxu0 0.0
    %634 = vmatpush1.msra.mxu0 0.0
    %635 = vmatprep.subr.mxu0 0.0
    %636 = vmatpush1.msra.mxu0 0.0
    %637 = vmatprep.subr.mxu0 0.0
    %638 = vmatpush1.msra.mxu0 0.0
    %639 = vmatprep.subr.mxu0 0.0
    %640 = vmatpush1.msra.mxu0 0.0
    %641 = vmatprep.subr.mxu0 0.0
    %642 = vmatpush1.msra.mxu0 0.0
    %643 = vmatprep.subr.mxu0 0.0
    %644 = vmatpush1.msra.mxu0 0.0
    %645 = vmatprep.subr.mxu0 0.0
    %646 = vmatpush1.msra.mxu0 0.0
    %647 = vmatprep.subr.mxu0 0.0
    %648 = vmatpush1.msra.mxu0 0.0
    %649 = vmatprep.subr.mxu0 0.0
    %650 = vmatpush1.msra.mxu0 0.0
    %651 = vmatprep.subr.mxu0 0.0
    %652 = vmatpush1.msra.mxu0 0.0
    %653 = vmatprep.subr.mxu0 0.0
    %654 = vmatpush1.msra.mxu0 0.0
    %655 = vmatprep.subr.mxu0 0.0
    %656 = vmatpush1.msra.mxu0 0.0
    %657 = vmatprep.subr.mxu0 0.0
    %658 = vmatpush1.msra.mxu0 0.0
    %659 = vmatprep.subr.mxu0 0.0
    %660 = vmatpush1.msra.mxu0 0.0
    %661 = vmatprep.subr.mxu0 0.0
    %662 = vmatpush1.msra.mxu0 0.0
    %663 = vmatprep.subr.mxu0 0.0
    %664 = vmatpush1.msra.mxu0 %v628
    %665 = vmatprep.subr.mxu0 0.0
    %666 = vmatpush2.msra.mxu0 0.0
    %667 = vmatprep.subr.mxu0 0.0
    %668 = vmatpush2.msra.mxu0 0.0
    %669 = vmatprep.subr.mxu0 0.0
    %670 = vmatpush2.msra.mxu0 0.0
    %671 = vmatprep.subr.mxu0 0.0
    %672 = vmatpush2.msra.mxu0 0.0
    %673 = vmatprep.subr.mxu0 0.0
    %674 = vmatpush2.msra.mxu0 0.0
    %675 = vmatprep.subr.mxu0 0.0
    %676 = vmatpush2.msra.mxu0 0.0
    %677 = vmatprep.subr.mxu0 0.0
    %678 = vmatpush2.msra.mxu0 0.0
    %679 = vmatprep.subr.mxu0 0.0
    %680 = vmatpush2.msra.mxu0 0.0
    %681 = vmatprep.subr.mxu0 0.0
    %682 = vmatpush2.msra.mxu0 0.0
    %683 = vmatprep.subr.mxu0 0.0
    %684 = vmatpush2.msra.mxu0 0.0
    %685 = vmatprep.subr.mxu0 0.0
    %686 = vmatpush2.msra.mxu0 0.0
    %687 = vmatprep.subr.mxu0 0.0
    %688 = vmatpush2.msra.mxu0 0.0
    %689 = vmatprep.subr.mxu0 0.0
    %690 = vmatpush2.msra.mxu0 0.0
    %691 = vmatprep.subr.mxu0 0.0
    %692 = vmatpush2.msra.mxu0 0.0
    %693 = vmatprep.subr.mxu0 0.0
    %694 = vmatpush2.msra.mxu0 0.0
    %695 = vmatprep.subr.mxu0 0.0
    %696 = vmatpush2.msra.mxu0 0.0
    %697 = vmatprep.mubr.f32.mxu0 0.0
    %698 = vmatmul.mubr.f32.gmra.mxu0 %v631
    %v699 = vpop.f32.mrf.mxu0
    %v700 = vadd.f32 0.0, %v699
    %v701 = vpop.f32.mrf.mxu0
    %702 = vdwg.mxu0
    %704 = vrot.lane.b32.xlu0 %v700, 8
    %v705 = vpop.permute.xlu0 %704
    %vm707 = vcmask 130112
    %708 = vst.msk [vmem:[#allocation2] sm:$0xff] %vm707, %v705
    %709 = vrot.lane.b32.xlu0 %v350, 112
    %v710 = vpop.permute.xlu0 %709
    %711 = vrot.lane.b32.xlu0 %v350, 80
    %v712 = vpop.permute.xlu0 %711
    %v713 = vsel %vm361, %v710, 0
    %v715 = vsel %vm361, %v712, 0
    %717 = vmatprep.subr.mxu0 0.0
    %718 = vmatpush1.xpose.msra.mxu0 0.0
    %719 = vmatprep.subr.mxu0 0.0
    %720 = vmatpush1.xpose.msra.mxu0 0.0
    %721 = vmatprep.subr.mxu0 0.0
    %722 = vmatpush1.xpose.msra.mxu0 0.0
    %723 = vmatprep.subr.mxu0 0.0
    %724 = vmatpush1.xpose.msra.mxu0 0.0
    %725 = vmatprep.subr.mxu0 0.0
    %726 = vmatpush1.xpose.msra.mxu0 0.0
    %727 = vmatprep.subr.mxu0 0.0
    %728 = vmatpush1.xpose.msra.mxu0 0.0
    %729 = vmatprep.subr.mxu0 0.0
    %730 = vmatpush1.xpose.msra.mxu0 0.0
    %731 = vmatprep.subr.mxu0 0.0
    %732 = vmatpush1.xpose.msra.mxu0 0.0
    %733 = vmatprep.subr.mxu0 0.0
    %734 = vmatpush1.xpose.msra.mxu0 0.0
    %735 = vmatprep.subr.mxu0 0.0
    %736 = vmatpush1.xpose.msra.mxu0 0.0
    %737 = vmatprep.subr.mxu0 0.0
    %738 = vmatpush1.xpose.msra.mxu0 0.0
    %739 = vmatprep.subr.mxu0 0.0
    %740 = vmatpush1.xpose.msra.mxu0 0.0
    %741 = vmatprep.subr.mxu0 0.0
    %742 = vmatpush1.xpose.msra.mxu0 0.0
    %743 = vmatprep.subr.mxu0 0.0
    %744 = vmatpush1.xpose.msra.mxu0 0.0
    %745 = vmatprep.subr.mxu0 0.0
    %746 = vmatpush1.xpose.msra.mxu0 0.0
    %747 = vmatprep.subr.mxu0 0.0
    %748 = vmatpush1.xpose.msra.mxu0 %v715
    %749 = vmatprep.subr.mxu0 0.0
    %750 = vmatpush2.xpose.msra.mxu0 0.0
    %751 = vmatprep.subr.mxu0 0.0
    %752 = vmatpush2.xpose.msra.mxu0 0.0
    %753 = vmatprep.subr.mxu0 0.0
    %754 = vmatpush2.xpose.msra.mxu0 0.0
    %755 = vmatprep.subr.mxu0 0.0
    %756 = vmatpush2.xpose.msra.mxu0 0.0
    %757 = vmatprep.subr.mxu0 0.0
    %758 = vmatpush2.xpose.msra.mxu0 0.0
    %759 = vmatprep.subr.mxu0 0.0
    %760 = vmatpush2.xpose.msra.mxu0 0.0
    %761 = vmatprep.subr.mxu0 0.0
    %762 = vmatpush2.xpose.msra.mxu0 0.0
    %763 = vmatprep.subr.mxu0 0.0
    %764 = vmatpush2.xpose.msra.mxu0 0.0
    %765 = vmatprep.subr.mxu0 0.0
    %766 = vmatpush2.xpose.msra.mxu0 0.0
    %767 = vmatprep.subr.mxu0 0.0
    %768 = vmatpush2.xpose.msra.mxu0 0.0
    %769 = vmatprep.subr.mxu0 0.0
    %770 = vmatpush2.xpose.msra.mxu0 0.0
    %771 = vmatprep.subr.mxu0 0.0
    %772 = vmatpush2.xpose.msra.mxu0 0.0
    %773 = vmatprep.subr.mxu0 0.0
    %774 = vmatpush2.xpose.msra.mxu0 0.0
    %775 = vmatprep.subr.mxu0 0.0
    %776 = vmatpush2.xpose.msra.mxu0 0.0
    %777 = vmatprep.subr.mxu0 0.0
    %778 = vmatpush2.xpose.msra.mxu0 0.0
    %779 = vmatprep.subr.mxu0 0.0
    %780 = vmatpush2.xpose.msra.mxu0 0.0
    %781 = vmatprep.mubr.f32.mxu0 0.0
    %782 = vmatmul.mubr.f32.gmra.mxu0 %v713
    %v783 = vpop.f32.mrf.mxu0
    %v784 = vadd.f32 0.0, %v783
    %v785 = vpop.f32.mrf.mxu0
    %786 = vdwg.mxu0
    %v787 = vmul.f32 %v784, 0.35355338
    %v788 = vsel %vm443, -1e+09, %v787
    %v789 = vsel %vm361, %v788, -inf
    %790 = vmax.xlane.f32.xlu0 %v789
    %v791 = vpop.xlane.xlu0 %790
    %v792 = vsub.f32 %v788, %v791
    %v793 = vmul.f32 %v792, 1.442695
    %v794 = vpow.pop %v793
    %v795 = vsel %vm361, %v794, 0.0
    %796 = vadd.xlane.f32.xlu0 %v795
    %v797 = vpop.xlane.xlu0 %796
    %v798 = vrcp.pop %v797
    %v799 = vmul.f32 %v794, %v798
    %s800 = scalar_lea.vmem %s21, 16
    %801 = vst.msk [vmem:[%s800] sm:$0xff] %vm361, %v799
    %802 = vrot.lane.b32.xlu0 %v350, 48
    %v803 = vpop.permute.xlu0 %802
    %v806 = vsel %vm361, %v799, 0
    %808 = vmatprep.subr.mxu0 0.0
    %809 = vmatpush1.msra.mxu0 0.0
    %810 = vmatprep.subr.mxu0 0.0
    %811 = vmatpush1.msra.mxu0 0.0
    %812 = vmatprep.subr.mxu0 0.0
    %813 = vmatpush1.msra.mxu0 0.0
    %814 = vmatprep.subr.mxu0 0.0
    %815 = vmatpush1.msra.mxu0 0.0
    %816 = vmatprep.subr.mxu0 0.0
    %817 = vmatpush1.msra.mxu0 0.0
    %818 = vmatprep.subr.mxu0 0.0
    %819 = vmatpush1.msra.mxu0 0.0
    %820 = vmatprep.subr.mxu0 0.0
    %821 = vmatpush1.msra.mxu0 0.0
    %822 = vmatprep.subr.mxu0 0.0
    %823 = vmatpush1.msra.mxu0 0.0
    %824 = vmatprep.subr.mxu0 0.0
    %825 = vmatpush1.msra.mxu0 0.0
    %826 = vmatprep.subr.mxu0 0.0
    %827 = vmatpush1.msra.mxu0 0.0
    %828 = vmatprep.subr.mxu0 0.0
    %829 = vmatpush1.msra.mxu0 0.0
    %830 = vmatprep.subr.mxu0 0.0
    %831 = vmatpush1.msra.mxu0 0.0
    %832 = vmatprep.subr.mxu0 0.0
    %833 = vmatpush1.msra.mxu0 0.0
    %834 = vmatprep.subr.mxu0 0.0
    %835 = vmatpush1.msra.mxu0 0.0
    %836 = vmatprep.subr.mxu0 0.0
    %837 = vmatpush1.msra.mxu0 0.0
    %838 = vmatprep.subr.mxu0 0.0
    %839 = vmatpush1.msra.mxu0 %v803
    %840 = vmatprep.subr.mxu0 0.0
    %841 = vmatpush2.msra.mxu0 0.0
    %842 = vmatprep.subr.mxu0 0.0
    %843 = vmatpush2.msra.mxu0 0.0
    %844 = vmatprep.subr.mxu0 0.0
    %845 = vmatpush2.msra.mxu0 0.0
    %846 = vmatprep.subr.mxu0 0.0
    %847 = vmatpush2.msra.mxu0 0.0
    %848 = vmatprep.subr.mxu0 0.0
    %849 = vmatpush2.msra.mxu0 0.0
    %850 = vmatprep.subr.mxu0 0.0
    %851 = vmatpush2.msra.mxu0 0.0
    %852 = vmatprep.subr.mxu0 0.0
    %853 = vmatpush2.msra.mxu0 0.0
    %854 = vmatprep.subr.mxu0 0.0
    %855 = vmatpush2.msra.mxu0 0.0
    %856 = vmatprep.subr.mxu0 0.0
    %857 = vmatpush2.msra.mxu0 0.0
    %858 = vmatprep.subr.mxu0 0.0
    %859 = vmatpush2.msra.mxu0 0.0
    %860 = vmatprep.subr.mxu0 0.0
    %861 = vmatpush2.msra.mxu0 0.0
    %862 = vmatprep.subr.mxu0 0.0
    %863 = vmatpush2.msra.mxu0 0.0
    %864 = vmatprep.subr.mxu0 0.0
    %865 = vmatpush2.msra.mxu0 0.0
    %866 = vmatprep.subr.mxu0 0.0
    %867 = vmatpush2.msra.mxu0 0.0
    %868 = vmatprep.subr.mxu0 0.0
    %869 = vmatpush2.msra.mxu0 0.0
    %870 = vmatprep.subr.mxu0 0.0
    %871 = vmatpush2.msra.mxu0 0.0
    %872 = vmatprep.mubr.f32.mxu0 0.0
    %873 = vmatmul.mubr.f32.gmra.mxu0 %v806
    %v874 = vpop.f32.mrf.mxu0
    %v875 = vadd.f32 0.0, %v874
    %v876 = vpop.f32.mrf.mxu0
    %877 = vdwg.mxu0
    %879 = vrot.lane.b32.xlu0 %v875, 16
    %v880 = vpop.permute.xlu0 %879
    %vm882 = vcmask 195712
    %883 = vst.msk [vmem:[#allocation2] sm:$0xff] %vm882, %v880
    %884 = vrot.lane.b32.xlu0 %v350, 104
    %v885 = vpop.permute.xlu0 %884
    %886 = vrot.lane.b32.xlu0 %v350, 72
    %v887 = vpop.permute.xlu0 %886
    %v888 = vsel %vm361, %v885, 0
    %v890 = vsel %vm361, %v887, 0
    %892 = vmatprep.subr.mxu0 0.0
    %893 = vmatpush1.xpose.msra.mxu0 0.0
    %894 = vmatprep.subr.mxu0 0.0
    %895 = vmatpush1.xpose.msra.mxu0 0.0
    %896 = vmatprep.subr.mxu0 0.0
    %897 = vmatpush1.xpose.msra.mxu0 0.0
    %898 = vmatprep.subr.mxu0 0.0
    %899 = vmatpush1.xpose.msra.mxu0 0.0
    %900 = vmatprep.subr.mxu0 0.0
    %901 = vmatpush1.xpose.msra.mxu0 0.0
    %902 = vmatprep.subr.mxu0 0.0
    %903 = vmatpush1.xpose.msra.mxu0 0.0
    %904 = vmatprep.subr.mxu0 0.0
    %905 = vmatpush1.xpose.msra.mxu0 0.0
    %906 = vmatprep.subr.mxu0 0.0
    %907 = vmatpush1.xpose.msra.mxu0 0.0
    %908 = vmatprep.subr.mxu0 0.0
    %909 = vmatpush1.xpose.msra.mxu0 0.0
    %910 = vmatprep.subr.mxu0 0.0
    %911 = vmatpush1.xpose.msra.mxu0 0.0
    %912 = vmatprep.subr.mxu0 0.0
    %913 = vmatpush1.xpose.msra.mxu0 0.0
    %914 = vmatprep.subr.mxu0 0.0
    %915 = vmatpush1.xpose.msra.mxu0 0.0
    %916 = vmatprep.subr.mxu0 0.0
    %917 = vmatpush1.xpose.msra.mxu0 0.0
    %918 = vmatprep.subr.mxu0 0.0
    %919 = vmatpush1.xpose.msra.mxu0 0.0
    %920 = vmatprep.subr.mxu0 0.0
    %921 = vmatpush1.xpose.msra.mxu0 0.0
    %922 = vmatprep.subr.mxu0 0.0
    %923 = vmatpush1.xpose.msra.mxu0 %v890
    %924 = vmatprep.subr.mxu0 0.0
    %925 = vmatpush2.xpose.msra.mxu0 0.0
    %926 = vmatprep.subr.mxu0 0.0
    %927 = vmatpush2.xpose.msra.mxu0 0.0
    %928 = vmatprep.subr.mxu0 0.0
    %929 = vmatpush2.xpose.msra.mxu0 0.0
    %930 = vmatprep.subr.mxu0 0.0
    %931 = vmatpush2.xpose.msra.mxu0 0.0
    %932 = vmatprep.subr.mxu0 0.0
    %933 = vmatpush2.xpose.msra.mxu0 0.0
    %934 = vmatprep.subr.mxu0 0.0
    %935 = vmatpush2.xpose.msra.mxu0 0.0
    %936 = vmatprep.subr.mxu0 0.0
    %937 = vmatpush2.xpose.msra.mxu0 0.0
    %938 = vmatprep.subr.mxu0 0.0
    %939 = vmatpush2.xpose.msra.mxu0 0.0
    %940 = vmatprep.subr.mxu0 0.0
    %941 = vmatpush2.xpose.msra.mxu0 0.0
    %942 = vmatprep.subr.mxu0 0.0
    %943 = vmatpush2.xpose.msra.mxu0 0.0
    %944 = vmatprep.subr.mxu0 0.0
    %945 = vmatpush2.xpose.msra.mxu0 0.0
    %946 = vmatprep.subr.mxu0 0.0
    %947 = vmatpush2.xpose.msra.mxu0 0.0
    %948 = vmatprep.subr.mxu0 0.0
    %949 = vmatpush2.xpose.msra.mxu0 0.0
    %950 = vmatprep.subr.mxu0 0.0
    %951 = vmatpush2.xpose.msra.mxu0 0.0
    %952 = vmatprep.subr.mxu0 0.0
    %953 = vmatpush2.xpose.msra.mxu0 0.0
    %954 = vmatprep.subr.mxu0 0.0
    %955 = vmatpush2.xpose.msra.mxu0 0.0
    %956 = vmatprep.mubr.f32.mxu0 0.0
    %957 = vmatmul.mubr.f32.gmra.mxu0 %v888
    %v958 = vpop.f32.mrf.mxu0
    %v959 = vadd.f32 0.0, %v958
    %v960 = vpop.f32.mrf.mxu0
    %961 = vdwg.mxu0
    %v962 = vmul.f32 %v959, 0.35355338
    %v963 = vsel %vm443, -1e+09, %v962
    %v964 = vsel %vm361, %v963, -inf
    %965 = vmax.xlane.f32.xlu0 %v964
    %v966 = vpop.xlane.xlu0 %965
    %v967 = vsub.f32 %v963, %v966
    %v968 = vmul.f32 %v967, 1.442695
    %v969 = vpow.pop %v968
    %v970 = vsel %vm361, %v969, 0.0
    %971 = vadd.xlane.f32.xlu0 %v970
    %v972 = vpop.xlane.xlu0 %971
    %v973 = vrcp.pop %v972
    %v974 = vmul.f32 %v969, %v973
    %s975 = scalar_lea.vmem %s21, 24
    %976 = vst.msk [vmem:[%s975] sm:$0xff] %vm361, %v974
    %977 = vrot.lane.b32.xlu0 %v350, 40
    %v978 = vpop.permute.xlu0 %977
    %v981 = vsel %vm361, %v974, 0
    %983 = vmatprep.subr.mxu0 0.0
    %984 = vmatpush1.msra.mxu0 0.0
    %985 = vmatprep.subr.mxu0 0.0
    %986 = vmatpush1.msra.mxu0 0.0
    %987 = vmatprep.subr.mxu0 0.0
    %988 = vmatpush1.msra.mxu0 0.0
    %989 = vmatprep.subr.mxu0 0.0
    %990 = vmatpush1.msra.mxu0 0.0
    %991 = vmatprep.subr.mxu0 0.0
    %992 = vmatpush1.msra.mxu0 0.0
    %993 = vmatprep.subr.mxu0 0.0
    %994 = vmatpush1.msra.mxu0 0.0
    %995 = vmatprep.subr.mxu0 0.0
    %996 = vmatpush1.msra.mxu0 0.0
    %997 = vmatprep.subr.mxu0 0.0
    %998 = vmatpush1.msra.mxu0 0.0
    %999 = vmatprep.subr.mxu0 0.0
    %1000 = vmatpush1.msra.mxu0 0.0
    %1001 = vmatprep.subr.mxu0 0.0
    %1002 = vmatpush1.msra.mxu0 0.0
    %1003 = vmatprep.subr.mxu0 0.0
    %1004 = vmatpush1.msra.mxu0 0.0
    %1005 = vmatprep.subr.mxu0 0.0
    %1006 = vmatpush1.msra.mxu0 0.0
    %1007 = vmatprep.subr.mxu0 0.0
    %1008 = vmatpush1.msra.mxu0 0.0
    %1009 = vmatprep.subr.mxu0 0.0
    %1010 = vmatpush1.msra.mxu0 0.0
    %1011 = vmatprep.subr.mxu0 0.0
    %1012 = vmatpush1.msra.mxu0 0.0
    %1013 = vmatprep.subr.mxu0 0.0
    %1014 = vmatpush1.msra.mxu0 %v978
    %1015 = vmatprep.subr.mxu0 0.0
    %1016 = vmatpush2.msra.mxu0 0.0
    %1017 = vmatprep.subr.mxu0 0.0
    %1018 = vmatpush2.msra.mxu0 0.0
    %1019 = vmatprep.subr.mxu0 0.0
    %1020 = vmatpush2.msra.mxu0 0.0
    %1021 = vmatprep.subr.mxu0 0.0
    %1022 = vmatpush2.msra.mxu0 0.0
    %1023 = vmatprep.subr.mxu0 0.0
    %1024 = vmatpush2.msra.mxu0 0.0
    %1025 = vmatprep.subr.mxu0 0.0
    %1026 = vmatpush2.msra.mxu0 0.0
    %1027 = vmatprep.subr.mxu0 0.0
    %1028 = vmatpush2.msra.mxu0 0.0
    %1029 = vmatprep.subr.mxu0 0.0
    %1030 = vmatpush2.msra.mxu0 0.0
    %1031 = vmatprep.subr.mxu0 0.0
    %1032 = vmatpush2.msra.mxu0 0.0
    %1033 = vmatprep.subr.mxu0 0.0
    %1034 = vmatpush2.msra.mxu0 0.0
    %1035 = vmatprep.subr.mxu0 0.0
    %1036 = vmatpush2.msra.mxu0 0.0
    %1037 = vmatprep.subr.mxu0 0.0
    %1038 = vmatpush2.msra.mxu0 0.0
    %1039 = vmatprep.subr.mxu0 0.0
    %1040 = vmatpush2.msra.mxu0 0.0
    %1041 = vmatprep.subr.mxu0 0.0
    %1042 = vmatpush2.msra.mxu0 0.0
    %1043 = vmatprep.subr.mxu0 0.0
    %1044 = vmatpush2.msra.mxu0 0.0
    %1045 = vmatprep.subr.mxu0 0.0
    %1046 = vmatpush2.msra.mxu0 0.0
    %1047 = vmatprep.mubr.f32.mxu0 0.0
    %1048 = vmatmul.mubr.f32.gmra.mxu0 %v981
    %v1049 = vpop.f32.mrf.mxu0
    %v1050 = vadd.f32 0.0, %v1049
    %v1051 = vpop.f32.mrf.mxu0
    %1052 = vdwg.mxu0
    %1054 = vrot.lane.b32.xlu0 %v1050, 24
    %v1055 = vpop.permute.xlu0 %1054
    %vm1057 = vcmask 261312
    %1058 = vst.msk [vmem:[#allocation2] sm:$0xff] %vm1057, %v1055
    %1060 = vrot.lane.b32.xlu0 %v355, 96
    %v1061 = vpop.permute.xlu0 %1060
    %v1062 = vsel %vm361, %v355, 0
    %v1064 = vsel %vm361, %v1061, 0
    %1066 = vmatprep.subr.mxu0 0.0
    %1067 = vmatpush1.xpose.msra.mxu0 0.0
    %1068 = vmatprep.subr.mxu0 0.0
    %1069 = vmatpush1.xpose.msra.mxu0 0.0
    %1070 = vmatprep.subr.mxu0 0.0
    %1071 = vmatpush1.xpose.msra.mxu0 0.0
    %1072 = vmatprep.subr.mxu0 0.0
    %1073 = vmatpush1.xpose.msra.mxu0 0.0
    %1074 = vmatprep.subr.mxu0 0.0
    %1075 = vmatpush1.xpose.msra.mxu0 0.0
    %1076 = vmatprep.subr.mxu0 0.0
    %1077 = vmatpush1.xpose.msra.mxu0 0.0
    %1078 = vmatprep.subr.mxu0 0.0
    %1079 = vmatpush1.xpose.msra.mxu0 0.0
    %1080 = vmatprep.subr.mxu0 0.0
    %1081 = vmatpush1.xpose.msra.mxu0 0.0
    %1082 = vmatprep.subr.mxu0 0.0
    %1083 = vmatpush1.xpose.msra.mxu0 0.0
    %1084 = vmatprep.subr.mxu0 0.0
    %1085 = vmatpush1.xpose.msra.mxu0 0.0
    %1086 = vmatprep.subr.mxu0 0.0
    %1087 = vmatpush1.xpose.msra.mxu0 0.0
    %1088 = vmatprep.subr.mxu0 0.0
    %1089 = vmatpush1.xpose.msra.mxu0 0.0
    %1090 = vmatprep.subr.mxu0 0.0
    %1091 = vmatpush1.xpose.msra.mxu0 0.0
    %1092 = vmatprep.subr.mxu0 0.0
    %1093 = vmatpush1.xpose.msra.mxu0 0.0
    %1094 = vmatprep.subr.mxu0 0.0
    %1095 = vmatpush1.xpose.msra.mxu0 0.0
    %1096 = vmatprep.subr.mxu0 0.0
    %1097 = vmatpush1.xpose.msra.mxu0 %v1064
    %1098 = vmatprep.subr.mxu0 0.0
    %1099 = vmatpush2.xpose.msra.mxu0 0.0
    %1100 = vmatprep.subr.mxu0 0.0
    %1101 = vmatpush2.xpose.msra.mxu0 0.0
    %1102 = vmatprep.subr.mxu0 0.0
    %1103 = vmatpush2.xpose.msra.mxu0 0.0
    %1104 = vmatprep.subr.mxu0 0.0
    %1105 = vmatpush2.xpose.msra.mxu0 0.0
    %1106 = vmatprep.subr.mxu0 0.0
    %1107 = vmatpush2.xpose.msra.mxu0 0.0
    %1108 = vmatprep.subr.mxu0 0.0
    %1109 = vmatpush2.xpose.msra.mxu0 0.0
    %1110 = vmatprep.subr.mxu0 0.0
    %1111 = vmatpush2.xpose.msra.mxu0 0.0
    %1112 = vmatprep.subr.mxu0 0.0
    %1113 = vmatpush2.xpose.msra.mxu0 0.0
    %1114 = vmatprep.subr.mxu0 0.0
    %1115 = vmatpush2.xpose.msra.mxu0 0.0
    %1116 = vmatprep.subr.mxu0 0.0
    %1117 = vmatpush2.xpose.msra.mxu0 0.0
    %1118 = vmatprep.subr.mxu0 0.0
    %1119 = vmatpush2.xpose.msra.mxu0 0.0
    %1120 = vmatprep.subr.mxu0 0.0
    %1121 = vmatpush2.xpose.msra.mxu0 0.0
    %1122 = vmatprep.subr.mxu0 0.0
    %1123 = vmatpush2.xpose.msra.mxu0 0.0
    %1124 = vmatprep.subr.mxu0 0.0
    %1125 = vmatpush2.xpose.msra.mxu0 0.0
    %1126 = vmatprep.subr.mxu0 0.0
    %1127 = vmatpush2.xpose.msra.mxu0 0.0
    %1128 = vmatprep.subr.mxu0 0.0
    %1129 = vmatpush2.xpose.msra.mxu0 0.0
    %1130 = vmatprep.mubr.f32.mxu0 0.0
    %1131 = vmatmul.mubr.f32.gmra.mxu0 %v1062
    %v1132 = vpop.f32.mrf.mxu0
    %v1133 = vadd.f32 0.0, %v1132
    %v1134 = vpop.f32.mrf.mxu0
    %1135 = vdwg.mxu0
    %v1136 = vmul.f32 %v1133, 0.35355338
    %v1137 = vlaneseq
    %v1138 = vshrl.u32 %v1137, 7
    %v1139 = vsub.s32 1, %v1138
    %v1140 = vrot.slane %v438, %v1139
    %vm1141 = vcmp.eq.s32.totalorder %v1140, 1
    %v1142 = vsel %vm1141, -1e+09, %v1136
    %v1143 = vsel %vm361, %v1142, -inf
    %1144 = vmax.xlane.f32.xlu0 %v1143
    %v1145 = vpop.xlane.xlu0 %1144
    %v1146 = vsub.f32 %v1142, %v1145
    %v1147 = vmul.f32 %v1146, 1.442695
    %v1148 = vpow.pop %v1147
    %v1149 = vsel %vm361, %v1148, 0.0
    %1150 = vadd.xlane.f32.xlu0 %v1149
    %v1151 = vpop.xlane.xlu0 %1150
    %v1152 = vrcp.pop %v1151
    %v1153 = vmul.f32 %v1148, %v1152
    %s1154 = scalar_lea.vmem %s21, 32
    %1155 = vst.msk [vmem:[%s1154] sm:$0xff] %vm361, %v1153
    %1156 = vrot.lane.b32.xlu0 %v355, 64
    %v1157 = vpop.permute.xlu0 %1156
    %v1160 = vsel %vm361, %v1153, 0
    %1162 = vmatprep.subr.mxu0 0.0
    %1163 = vmatpush1.msra.mxu0 0.0
    %1164 = vmatprep.subr.mxu0 0.0
    %1165 = vmatpush1.msra.mxu0 0.0
    %1166 = vmatprep.subr.mxu0 0.0
    %1167 = vmatpush1.msra.mxu0 0.0
    %1168 = vmatprep.subr.mxu0 0.0
    %1169 = vmatpush1.msra.mxu0 0.0
    %1170 = vmatprep.subr.mxu0 0.0
    %1171 = vmatpush1.msra.mxu0 0.0
    %1172 = vmatprep.subr.mxu0 0.0
    %1173 = vmatpush1.msra.mxu0 0.0
    %1174 = vmatprep.subr.mxu0 0.0
    %1175 = vmatpush1.msra.mxu0 0.0
    %1176 = vmatprep.subr.mxu0 0.0
    %1177 = vmatpush1.msra.mxu0 0.0
    %1178 = vmatprep.subr.mxu0 0.0
    %1179 = vmatpush1.msra.mxu0 0.0
    %1180 = vmatprep.subr.mxu0 0.0
    %1181 = vmatpush1.msra.mxu0 0.0
    %1182 = vmatprep.subr.mxu0 0.0
    %1183 = vmatpush1.msra.mxu0 0.0
    %1184 = vmatprep.subr.mxu0 0.0
    %1185 = vmatpush1.msra.mxu0 0.0
    %1186 = vmatprep.subr.mxu0 0.0
    %1187 = vmatpush1.msra.mxu0 0.0
    %1188 = vmatprep.subr.mxu0 0.0
    %1189 = vmatpush1.msra.mxu0 0.0
    %1190 = vmatprep.subr.mxu0 0.0
    %1191 = vmatpush1.msra.mxu0 0.0
    %1192 = vmatprep.subr.mxu0 0.0
    %1193 = vmatpush1.msra.mxu0 %v1157
    %1194 = vmatprep.subr.mxu0 0.0
    %1195 = vmatpush2.msra.mxu0 0.0
    %1196 = vmatprep.subr.mxu0 0.0
    %1197 = vmatpush2.msra.mxu0 0.0
    %1198 = vmatprep.subr.mxu0 0.0
    %1199 = vmatpush2.msra.mxu0 0.0
    %1200 = vmatprep.subr.mxu0 0.0
    %1201 = vmatpush2.msra.mxu0 0.0
    %1202 = vmatprep.subr.mxu0 0.0
    %1203 = vmatpush2.msra.mxu0 0.0
    %1204 = vmatprep.subr.mxu0 0.0
    %1205 = vmatpush2.msra.mxu0 0.0
    %1206 = vmatprep.subr.mxu0 0.0
    %1207 = vmatpush2.msra.mxu0 0.0
    %1208 = vmatprep.subr.mxu0 0.0
    %1209 = vmatpush2.msra.mxu0 0.0
    %1210 = vmatprep.subr.mxu0 0.0
    %1211 = vmatpush2.msra.mxu0 0.0
    %1212 = vmatprep.subr.mxu0 0.0
    %1213 = vmatpush2.msra.mxu0 0.0
    %1214 = vmatprep.subr.mxu0 0.0
    %1215 = vmatpush2.msra.mxu0 0.0
    %1216 = vmatprep.subr.mxu0 0.0
    %1217 = vmatpush2.msra.mxu0 0.0
    %1218 = vmatprep.subr.mxu0 0.0
    %1219 = vmatpush2.msra.mxu0 0.0
    %1220 = vmatprep.subr.mxu0 0.0
    %1221 = vmatpush2.msra.mxu0 0.0
    %1222 = vmatprep.subr.mxu0 0.0
    %1223 = vmatpush2.msra.mxu0 0.0
    %1224 = vmatprep.subr.mxu0 0.0
    %1225 = vmatpush2.msra.mxu0 0.0
    %1226 = vmatprep.mubr.f32.mxu0 0.0
    %1227 = vmatmul.mubr.f32.gmra.mxu0 %v1160
    %v1228 = vpop.f32.mrf.mxu0
    %v1229 = vadd.f32 0.0, %v1228
    %v1230 = vpop.f32.mrf.mxu0
    %1231 = vdwg.mxu0
    %1232 = vst.msk [vmem:[#allocation2 + $0x8] sm:$0xff] %vm361, %v1229
    %1233 = vrot.lane.b32.xlu0 %v355, 120
    %v1234 = vpop.permute.xlu0 %1233
    %1235 = vrot.lane.b32.xlu0 %v355, 88
    %v1236 = vpop.permute.xlu0 %1235
    %v1237 = vsel %vm361, %v1234, 0
    %v1239 = vsel %vm361, %v1236, 0
    %1241 = vmatprep.subr.mxu0 0.0
    %1242 = vmatpush1.xpose.msra.mxu0 0.0
    %1243 = vmatprep.subr.mxu0 0.0
    %1244 = vmatpush1.xpose.msra.mxu0 0.0
    %1245 = vmatprep.subr.mxu0 0.0
    %1246 = vmatpush1.xpose.msra.mxu0 0.0
    %1247 = vmatprep.subr.mxu0 0.0
    %1248 = vmatpush1.xpose.msra.mxu0 0.0
    %1249 = vmatprep.subr.mxu0 0.0
    %1250 = vmatpush1.xpose.msra.mxu0 0.0
    %1251 = vmatprep.subr.mxu0 0.0
    %1252 = vmatpush1.xpose.msra.mxu0 0.0
    %1253 = vmatprep.subr.mxu0 0.0
    %1254 = vmatpush1.xpose.msra.mxu0 0.0
    %1255 = vmatprep.subr.mxu0 0.0
    %1256 = vmatpush1.xpose.msra.mxu0 0.0
    %1257 = vmatprep.subr.mxu0 0.0
    %1258 = vmatpush1.xpose.msra.mxu0 0.0
    %1259 = vmatprep.subr.mxu0 0.0
    %1260 = vmatpush1.xpose.msra.mxu0 0.0
    %1261 = vmatprep.subr.mxu0 0.0
    %1262 = vmatpush1.xpose.msra.mxu0 0.0
    %1263 = vmatprep.subr.mxu0 0.0
    %1264 = vmatpush1.xpose.msra.mxu0 0.0
    %1265 = vmatprep.subr.mxu0 0.0
    %1266 = vmatpush1.xpose.msra.mxu0 0.0
    %1267 = vmatprep.subr.mxu0 0.0
    %1268 = vmatpush1.xpose.msra.mxu0 0.0
    %1269 = vmatprep.subr.mxu0 0.0
    %1270 = vmatpush1.xpose.msra.mxu0 0.0
    %1271 = vmatprep.subr.mxu0 0.0
    %1272 = vmatpush1.xpose.msra.mxu0 %v1239
    %1273 = vmatprep.subr.mxu0 0.0
    %1274 = vmatpush2.xpose.msra.mxu0 0.0
    %1275 = vmatprep.subr.mxu0 0.0
    %1276 = vmatpush2.xpose.msra.mxu0 0.0
    %1277 = vmatprep.subr.mxu0 0.0
    %1278 = vmatpush2.xpose.msra.mxu0 0.0
    %1279 = vmatprep.subr.mxu0 0.0
    %1280 = vmatpush2.xpose.msra.mxu0 0.0
    %1281 = vmatprep.subr.mxu0 0.0
    %1282 = vmatpush2.xpose.msra.mxu0 0.0
    %1283 = vmatprep.subr.mxu0 0.0
    %1284 = vmatpush2.xpose.msra.mxu0 0.0
    %1285 = vmatprep.subr.mxu0 0.0
    %1286 = vmatpush2.xpose.msra.mxu0 0.0
    %1287 = vmatprep.subr.mxu0 0.0
    %1288 = vmatpush2.xpose.msra.mxu0 0.0
    %1289 = vmatprep.subr.mxu0 0.0
    %1290 = vmatpush2.xpose.msra.mxu0 0.0
    %1291 = vmatprep.subr.mxu0 0.0
    %1292 = vmatpush2.xpose.msra.mxu0 0.0
    %1293 = vmatprep.subr.mxu0 0.0
    %1294 = vmatpush2.xpose.msra.mxu0 0.0
    %1295 = vmatprep.subr.mxu0 0.0
    %1296 = vmatpush2.xpose.msra.mxu0 0.0
    %1297 = vmatprep.subr.mxu0 0.0
    %1298 = vmatpush2.xpose.msra.mxu0 0.0
    %1299 = vmatprep.subr.mxu0 0.0
    %1300 = vmatpush2.xpose.msra.mxu0 0.0
    %1301 = vmatprep.subr.mxu0 0.0
    %1302 = vmatpush2.xpose.msra.mxu0 0.0
    %1303 = vmatprep.subr.mxu0 0.0
    %1304 = vmatpush2.xpose.msra.mxu0 0.0
    %1305 = vmatprep.mubr.f32.mxu0 0.0
    %1306 = vmatmul.mubr.f32.gmra.mxu0 %v1237
    %v1307 = vpop.f32.mrf.mxu0
    %v1308 = vadd.f32 0.0, %v1307
    %v1309 = vpop.f32.mrf.mxu0
    %1310 = vdwg.mxu0
    %v1311 = vmul.f32 %v1308, 0.35355338
    %v1312 = vsel %vm1141, -1e+09, %v1311
    %v1313 = vsel %vm361, %v1312, -inf
    %1314 = vmax.xlane.f32.xlu0 %v1313
    %v1315 = vpop.xlane.xlu0 %1314
    %v1316 = vsub.f32 %v1312, %v1315
    %v1317 = vmul.f32 %v1316, 1.442695
    %v1318 = vpow.pop %v1317
    %v1319 = vsel %vm361, %v1318, 0.0
    %1320 = vadd.xlane.f32.xlu0 %v1319
    %v1321 = vpop.xlane.xlu0 %1320
    %v1322 = vrcp.pop %v1321
    %v1323 = vmul.f32 %v1318, %v1322
    %s1324 = scalar_lea.vmem %s21, 40
    %1325 = vst.msk [vmem:[%s1324] sm:$0xff] %vm361, %v1323
    %1326 = vrot.lane.b32.xlu0 %v355, 56
    %v1327 = vpop.permute.xlu0 %1326
    %v1330 = vsel %vm361, %v1323, 0
    %1332 = vmatprep.subr.mxu0 0.0
    %1333 = vmatpush1.msra.mxu0 0.0
    %1334 = vmatprep.subr.mxu0 0.0
    %1335 = vmatpush1.msra.mxu0 0.0
    %1336 = vmatprep.subr.mxu0 0.0
    %1337 = vmatpush1.msra.mxu0 0.0
    %1338 = vmatprep.subr.mxu0 0.0
    %1339 = vmatpush1.msra.mxu0 0.0
    %1340 = vmatprep.subr.mxu0 0.0
    %1341 = vmatpush1.msra.mxu0 0.0
    %1342 = vmatprep.subr.mxu0 0.0
    %1343 = vmatpush1.msra.mxu0 0.0
    %1344 = vmatprep.subr.mxu0 0.0
    %1345 = vmatpush1.msra.mxu0 0.0
    %1346 = vmatprep.subr.mxu0 0.0
    %1347 = vmatpush1.msra.mxu0 0.0
    %1348 = vmatprep.subr.mxu0 0.0
    %1349 = vmatpush1.msra.mxu0 0.0
    %1350 = vmatprep.subr.mxu0 0.0
    %1351 = vmatpush1.msra.mxu0 0.0
    %1352 = vmatprep.subr.mxu0 0.0
    %1353 = vmatpush1.msra.mxu0 0.0
    %1354 = vmatprep.subr.mxu0 0.0
    %1355 = vmatpush1.msra.mxu0 0.0
    %1356 = vmatprep.subr.mxu0 0.0
    %1357 = vmatpush1.msra.mxu0 0.0
    %1358 = vmatprep.subr.mxu0 0.0
    %1359 = vmatpush1.msra.mxu0 0.0
    %1360 = vmatprep.subr.mxu0 0.0
    %1361 = vmatpush1.msra.mxu0 0.0
    %1362 = vmatprep.subr.mxu0 0.0
    %1363 = vmatpush1.msra.mxu0 %v1327
    %1364 = vmatprep.subr.mxu0 0.0
    %1365 = vmatpush2.msra.mxu0 0.0
    %1366 = vmatprep.subr.mxu0 0.0
    %1367 = vmatpush2.msra.mxu0 0.0
    %1368 = vmatprep.subr.mxu0 0.0
    %1369 = vmatpush2.msra.mxu0 0.0
    %1370 = vmatprep.subr.mxu0 0.0
    %1371 = vmatpush2.msra.mxu0 0.0
    %1372 = vmatprep.subr.mxu0 0.0
    %1373 = vmatpush2.msra.mxu0 0.0
    %1374 = vmatprep.subr.mxu0 0.0
    %1375 = vmatpush2.msra.mxu0 0.0
    %1376 = vmatprep.subr.mxu0 0.0
    %1377 = vmatpush2.msra.mxu0 0.0
    %1378 = vmatprep.subr.mxu0 0.0
    %1379 = vmatpush2.msra.mxu0 0.0
    %1380 = vmatprep.subr.mxu0 0.0
    %1381 = vmatpush2.msra.mxu0 0.0
    %1382 = vmatprep.subr.mxu0 0.0
    %1383 = vmatpush2.msra.mxu0 0.0
    %1384 = vmatprep.subr.mxu0 0.0
    %1385 = vmatpush2.msra.mxu0 0.0
    %1386 = vmatprep.subr.mxu0 0.0
    %1387 = vmatpush2.msra.mxu0 0.0
    %1388 = vmatprep.subr.mxu0 0.0
    %1389 = vmatpush2.msra.mxu0 0.0
    %1390 = vmatprep.subr.mxu0 0.0
    %1391 = vmatpush2.msra.mxu0 0.0
    %1392 = vmatprep.subr.mxu0 0.0
    %1393 = vmatpush2.msra.mxu0 0.0
    %1394 = vmatprep.subr.mxu0 0.0
    %1395 = vmatpush2.msra.mxu0 0.0
    %1396 = vmatprep.mubr.f32.mxu0 0.0
    %1397 = vmatmul.mubr.f32.gmra.mxu0 %v1330
    %v1398 = vpop.f32.mrf.mxu0
    %v1399 = vadd.f32 0.0, %v1398
    %v1400 = vpop.f32.mrf.mxu0
    %1401 = vdwg.mxu0
    %1403 = vrot.lane.b32.xlu0 %v1399, 8
    %v1404 = vpop.permute.xlu0 %1403
    %1406 = vst.msk [vmem:[#allocation2 + $0x8] sm:$0xff] %vm707, %v1404
    %1407 = vrot.lane.b32.xlu0 %v355, 112
    %v1408 = vpop.permute.xlu0 %1407
    %1409 = vrot.lane.b32.xlu0 %v355, 80
    %v1410 = vpop.permute.xlu0 %1409
    %v1411 = vsel %vm361, %v1408, 0
    %v1413 = vsel %vm361, %v1410, 0
    %1415 = vmatprep.subr.mxu0 0.0
    %1416 = vmatpush1.xpose.msra.mxu0 0.0
    %1417 = vmatprep.subr.mxu0 0.0
    %1418 = vmatpush1.xpose.msra.mxu0 0.0
    %1419 = vmatprep.subr.mxu0 0.0
    %1420 = vmatpush1.xpose.msra.mxu0 0.0
    %1421 = vmatprep.subr.mxu0 0.0
    %1422 = vmatpush1.xpose.msra.mxu0 0.0
    %1423 = vmatprep.subr.mxu0 0.0
    %1424 = vmatpush1.xpose.msra.mxu0 0.0
    %1425 = vmatprep.subr.mxu0 0.0
    %1426 = vmatpush1.xpose.msra.mxu0 0.0
    %1427 = vmatprep.subr.mxu0 0.0
    %1428 = vmatpush1.xpose.msra.mxu0 0.0
    %1429 = vmatprep.subr.mxu0 0.0
    %1430 = vmatpush1.xpose.msra.mxu0 0.0
    %1431 = vmatprep.subr.mxu0 0.0
    %1432 = vmatpush1.xpose.msra.mxu0 0.0
    %1433 = vmatprep.subr.mxu0 0.0
    %1434 = vmatpush1.xpose.msra.mxu0 0.0
    %1435 = vmatprep.subr.mxu0 0.0
    %1436 = vmatpush1.xpose.msra.mxu0 0.0
    %1437 = vmatprep.subr.mxu0 0.0
    %1438 = vmatpush1.xpose.msra.mxu0 0.0
    %1439 = vmatprep.subr.mxu0 0.0
    %1440 = vmatpush1.xpose.msra.mxu0 0.0
    %1441 = vmatprep.subr.mxu0 0.0
    %1442 = vmatpush1.xpose.msra.mxu0 0.0
    %1443 = vmatprep.subr.mxu0 0.0
    %1444 = vmatpush1.xpose.msra.mxu0 0.0
    %1445 = vmatprep.subr.mxu0 0.0
    %1446 = vmatpush1.xpose.msra.mxu0 %v1413
    %1447 = vmatprep.subr.mxu0 0.0
    %1448 = vmatpush2.xpose.msra.mxu0 0.0
    %1449 = vmatprep.subr.mxu0 0.0
    %1450 = vmatpush2.xpose.msra.mxu0 0.0
    %1451 = vmatprep.subr.mxu0 0.0
    %1452 = vmatpush2.xpose.msra.mxu0 0.0
    %1453 = vmatprep.subr.mxu0 0.0
    %1454 = vmatpush2.xpose.msra.mxu0 0.0
    %1455 = vmatprep.subr.mxu0 0.0
    %1456 = vmatpush2.xpose.msra.mxu0 0.0
    %1457 = vmatprep.subr.mxu0 0.0
    %1458 = vmatpush2.xpose.msra.mxu0 0.0
    %1459 = vmatprep.subr.mxu0 0.0
    %1460 = vmatpush2.xpose.msra.mxu0 0.0
    %1461 = vmatprep.subr.mxu0 0.0
    %1462 = vmatpush2.xpose.msra.mxu0 0.0
    %1463 = vmatprep.subr.mxu0 0.0
    %1464 = vmatpush2.xpose.msra.mxu0 0.0
    %1465 = vmatprep.subr.mxu0 0.0
    %1466 = vmatpush2.xpose.msra.mxu0 0.0
    %1467 = vmatprep.subr.mxu0 0.0
    %1468 = vmatpush2.xpose.msra.mxu0 0.0
    %1469 = vmatprep.subr.mxu0 0.0
    %1470 = vmatpush2.xpose.msra.mxu0 0.0
    %1471 = vmatprep.subr.mxu0 0.0
    %1472 = vmatpush2.xpose.msra.mxu0 0.0
    %1473 = vmatprep.subr.mxu0 0.0
    %1474 = vmatpush2.xpose.msra.mxu0 0.0
    %1475 = vmatprep.subr.mxu0 0.0
    %1476 = vmatpush2.xpose.msra.mxu0 0.0
    %1477 = vmatprep.subr.mxu0 0.0
    %1478 = vmatpush2.xpose.msra.mxu0 0.0
    %1479 = vmatprep.mubr.f32.mxu0 0.0
    %1480 = vmatmul.mubr.f32.gmra.mxu0 %v1411
    %v1481 = vpop.f32.mrf.mxu0
    %v1482 = vadd.f32 0.0, %v1481
    %v1483 = vpop.f32.mrf.mxu0
    %1484 = vdwg.mxu0
    %v1485 = vmul.f32 %v1482, 0.35355338
    %v1486 = vsel %vm1141, -1e+09, %v1485
    %v1487 = vsel %vm361, %v1486, -inf
    %1488 = vmax.xlane.f32.xlu0 %v1487
    %v1489 = vpop.xlane.xlu0 %1488
    %v1490 = vsub.f32 %v1486, %v1489
    %v1491 = vmul.f32 %v1490, 1.442695
    %v1492 = vpow.pop %v1491
    %v1493 = vsel %vm361, %v1492, 0.0
    %1494 = vadd.xlane.f32.xlu0 %v1493
    %v1495 = vpop.xlane.xlu0 %1494
    %v1496 = vrcp.pop %v1495
    %v1497 = vmul.f32 %v1492, %v1496
    %s1498 = scalar_lea.vmem %s21, 48
    %1499 = vst.msk [vmem:[%s1498] sm:$0xff] %vm361, %v1497
    %1500 = vrot.lane.b32.xlu0 %v355, 48
    %v1501 = vpop.permute.xlu0 %1500
    %v1504 = vsel %vm361, %v1497, 0
    %1506 = vmatprep.subr.mxu0 0.0
    %1507 = vmatpush1.msra.mxu0 0.0
    %1508 = vmatprep.subr.mxu0 0.0
    %1509 = vmatpush1.msra.mxu0 0.0
    %1510 = vmatprep.subr.mxu0 0.0
    %1511 = vmatpush1.msra.mxu0 0.0
    %1512 = vmatprep.subr.mxu0 0.0
    %1513 = vmatpush1.msra.mxu0 0.0
    %1514 = vmatprep.subr.mxu0 0.0
    %1515 = vmatpush1.msra.mxu0 0.0
    %1516 = vmatprep.subr.mxu0 0.0
    %1517 = vmatpush1.msra.mxu0 0.0
    %1518 = vmatprep.subr.mxu0 0.0
    %1519 = vmatpush1.msra.mxu0 0.0
    %1520 = vmatprep.subr.mxu0 0.0
    %1521 = vmatpush1.msra.mxu0 0.0
    %1522 = vmatprep.subr.mxu0 0.0
    %1523 = vmatpush1.msra.mxu0 0.0
    %1524 = vmatprep.subr.mxu0 0.0
    %1525 = vmatpush1.msra.mxu0 0.0
    %1526 = vmatprep.subr.mxu0 0.0
    %1527 = vmatpush1.msra.mxu0 0.0
    %1528 = vmatprep.subr.mxu0 0.0
    %1529 = vmatpush1.msra.mxu0 0.0
    %1530 = vmatprep.subr.mxu0 0.0
    %1531 = vmatpush1.msra.mxu0 0.0
    %1532 = vmatprep.subr.mxu0 0.0
    %1533 = vmatpush1.msra.mxu0 0.0
    %1534 = vmatprep.subr.mxu0 0.0
    %1535 = vmatpush1.msra.mxu0 0.0
    %1536 = vmatprep.subr.mxu0 0.0
    %1537 = vmatpush1.msra.mxu0 %v1501
    %1538 = vmatprep.subr.mxu0 0.0
    %1539 = vmatpush2.msra.mxu0 0.0
    %1540 = vmatprep.subr.mxu0 0.0
    %1541 = vmatpush2.msra.mxu0 0.0
    %1542 = vmatprep.subr.mxu0 0.0
    %1543 = vmatpush2.msra.mxu0 0.0
    %1544 = vmatprep.subr.mxu0 0.0
    %1545 = vmatpush2.msra.mxu0 0.0
    %1546 = vmatprep.subr.mxu0 0.0
    %1547 = vmatpush2.msra.mxu0 0.0
    %1548 = vmatprep.subr.mxu0 0.0
    %1549 = vmatpush2.msra.mxu0 0.0
    %1550 = vmatprep.subr.mxu0 0.0
    %1551 = vmatpush2.msra.mxu0 0.0
    %1552 = vmatprep.subr.mxu0 0.0
    %1553 = vmatpush2.msra.mxu0 0.0
    %1554 = vmatprep.subr.mxu0 0.0
    %1555 = vmatpush2.msra.mxu0 0.0
    %1556 = vmatprep.subr.mxu0 0.0
    %1557 = vmatpush2.msra.mxu0 0.0
    %1558 = vmatprep.subr.mxu0 0.0
    %1559 = vmatpush2.msra.mxu0 0.0
    %1560 = vmatprep.subr.mxu0 0.0
    %1561 = vmatpush2.msra.mxu0 0.0
    %1562 = vmatprep.subr.mxu0 0.0
    %1563 = vmatpush2.msra.mxu0 0.0
    %1564 = vmatprep.subr.mxu0 0.0
    %1565 = vmatpush2.msra.mxu0 0.0
    %1566 = vmatprep.subr.mxu0 0.0
    %1567 = vmatpush2.msra.mxu0 0.0
    %1568 = vmatprep.subr.mxu0 0.0
    %1569 = vmatpush2.msra.mxu0 0.0
    %1570 = vmatprep.mubr.f32.mxu0 0.0
    %1571 = vmatmul.mubr.f32.gmra.mxu0 %v1504
    %v1572 = vpop.f32.mrf.mxu0
    %v1573 = vadd.f32 0.0, %v1572
    %v1574 = vpop.f32.mrf.mxu0
    %1575 = vdwg.mxu0
    %1577 = vrot.lane.b32.xlu0 %v1573, 16
    %v1578 = vpop.permute.xlu0 %1577
    %1580 = vst.msk [vmem:[#allocation2 + $0x8] sm:$0xff] %vm882, %v1578
    %1581 = vrot.lane.b32.xlu0 %v355, 104
    %v1582 = vpop.permute.xlu0 %1581
    %1583 = vrot.lane.b32.xlu0 %v355, 72
    %v1584 = vpop.permute.xlu0 %1583
    %v1585 = vsel %vm361, %v1582, 0
    %v1587 = vsel %vm361, %v1584, 0
    %1589 = vmatprep.subr.mxu0 0.0
    %1590 = vmatpush1.xpose.msra.mxu0 0.0
    %1591 = vmatprep.subr.mxu0 0.0
    %1592 = vmatpush1.xpose.msra.mxu0 0.0
    %1593 = vmatprep.subr.mxu0 0.0
    %1594 = vmatpush1.xpose.msra.mxu0 0.0
    %1595 = vmatprep.subr.mxu0 0.0
    %1596 = vmatpush1.xpose.msra.mxu0 0.0
    %1597 = vmatprep.subr.mxu0 0.0
    %1598 = vmatpush1.xpose.msra.mxu0 0.0
    %1599 = vmatprep.subr.mxu0 0.0
    %1600 = vmatpush1.xpose.msra.mxu0 0.0
    %1601 = vmatprep.subr.mxu0 0.0
    %1602 = vmatpush1.xpose.msra.mxu0 0.0
    %1603 = vmatprep.subr.mxu0 0.0
    %1604 = vmatpush1.xpose.msra.mxu0 0.0
    %1605 = vmatprep.subr.mxu0 0.0
    %1606 = vmatpush1.xpose.msra.mxu0 0.0
    %1607 = vmatprep.subr.mxu0 0.0
    %1608 = vmatpush1.xpose.msra.mxu0 0.0
    %1609 = vmatprep.subr.mxu0 0.0
    %1610 = vmatpush1.xpose.msra.mxu0 0.0
    %1611 = vmatprep.subr.mxu0 0.0
    %1612 = vmatpush1.xpose.msra.mxu0 0.0
    %1613 = vmatprep.subr.mxu0 0.0
    %1614 = vmatpush1.xpose.msra.mxu0 0.0
    %1615 = vmatprep.subr.mxu0 0.0
    %1616 = vmatpush1.xpose.msra.mxu0 0.0
    %1617 = vmatprep.subr.mxu0 0.0
    %1618 = vmatpush1.xpose.msra.mxu0 0.0
    %1619 = vmatprep.subr.mxu0 0.0
    %1620 = vmatpush1.xpose.msra.mxu0 %v1587
    %1621 = vmatprep.subr.mxu0 0.0
    %1622 = vmatpush2.xpose.msra.mxu0 0.0
    %1623 = vmatprep.subr.mxu0 0.0
    %1624 = vmatpush2.xpose.msra.mxu0 0.0
    %1625 = vmatprep.subr.mxu0 0.0
    %1626 = vmatpush2.xpose.msra.mxu0 0.0
    %1627 = vmatprep.subr.mxu0 0.0
    %1628 = vmatpush2.xpose.msra.mxu0 0.0
    %1629 = vmatprep.subr.mxu0 0.0
    %1630 = vmatpush2.xpose.msra.mxu0 0.0
    %1631 = vmatprep.subr.mxu0 0.0
    %1632 = vmatpush2.xpose.msra.mxu0 0.0
    %1633 = vmatprep.subr.mxu0 0.0
    %1634 = vmatpush2.xpose.msra.mxu0 0.0
    %1635 = vmatprep.subr.mxu0 0.0
    %1636 = vmatpush2.xpose.msra.mxu0 0.0
    %1637 = vmatprep.subr.mxu0 0.0
    %1638 = vmatpush2.xpose.msra.mxu0 0.0
    %1639 = vmatprep.subr.mxu0 0.0
    %1640 = vmatpush2.xpose.msra.mxu0 0.0
    %1641 = vmatprep.subr.mxu0 0.0
    %1642 = vmatpush2.xpose.msra.mxu0 0.0
    %1643 = vmatprep.subr.mxu0 0.0
    %1644 = vmatpush2.xpose.msra.mxu0 0.0
    %1645 = vmatprep.subr.mxu0 0.0
    %1646 = vmatpush2.xpose.msra.mxu0 0.0
    %1647 = vmatprep.subr.mxu0 0.0
    %1648 = vmatpush2.xpose.msra.mxu0 0.0
    %1649 = vmatprep.subr.mxu0 0.0
    %1650 = vmatpush2.xpose.msra.mxu0 0.0
    %1651 = vmatprep.subr.mxu0 0.0
    %1652 = vmatpush2.xpose.msra.mxu0 0.0
    %1653 = vmatprep.mubr.f32.mxu0 0.0
    %1654 = vmatmul.mubr.f32.gmra.mxu0 %v1585
    %v1655 = vpop.f32.mrf.mxu0
    %v1656 = vadd.f32 0.0, %v1655
    %v1657 = vpop.f32.mrf.mxu0
    %1658 = vdwg.mxu0
    %v1659 = vmul.f32 %v1656, 0.35355338
    %v1660 = vsel %vm1141, -1e+09, %v1659
    %v1661 = vsel %vm361, %v1660, -inf
    %1662 = vmax.xlane.f32.xlu0 %v1661
    %v1663 = vpop.xlane.xlu0 %1662
    %v1664 = vsub.f32 %v1660, %v1663
    %v1665 = vmul.f32 %v1664, 1.442695
    %v1666 = vpow.pop %v1665
    %v1667 = vsel %vm361, %v1666, 0.0
    %1668 = vadd.xlane.f32.xlu0 %v1667
    %v1669 = vpop.xlane.xlu0 %1668
    %v1670 = vrcp.pop %v1669
    %v1671 = vmul.f32 %v1666, %v1670
    %s1672 = scalar_lea.vmem %s21, 56
    %1673 = vst.msk [vmem:[%s1672] sm:$0xff] %vm361, %v1671
    %1674 = vrot.lane.b32.xlu0 %v355, 40
    %v1675 = vpop.permute.xlu0 %1674
    %v1678 = vsel %vm361, %v1671, 0
    %1680 = vmatprep.subr.mxu0 0.0
    %1681 = vmatpush1.msra.mxu0 0.0
    %1682 = vmatprep.subr.mxu0 0.0
    %1683 = vmatpush1.msra.mxu0 0.0
    %1684 = vmatprep.subr.mxu0 0.0
    %1685 = vmatpush1.msra.mxu0 0.0
    %1686 = vmatprep.subr.mxu0 0.0
    %1687 = vmatpush1.msra.mxu0 0.0
    %1688 = vmatprep.subr.mxu0 0.0
    %1689 = vmatpush1.msra.mxu0 0.0
    %1690 = vmatprep.subr.mxu0 0.0
    %1691 = vmatpush1.msra.mxu0 0.0
    %1692 = vmatprep.subr.mxu0 0.0
    %1693 = vmatpush1.msra.mxu0 0.0
    %1694 = vmatprep.subr.mxu0 0.0
    %1695 = vmatpush1.msra.mxu0 0.0
    %1696 = vmatprep.subr.mxu0 0.0
    %1697 = vmatpush1.msra.mxu0 0.0
    %1698 = vmatprep.subr.mxu0 0.0
    %1699 = vmatpush1.msra.mxu0 0.0
    %1700 = vmatprep.subr.mxu0 0.0
    %1701 = vmatpush1.msra.mxu0 0.0
    %1702 = vmatprep.subr.mxu0 0.0
    %1703 = vmatpush1.msra.mxu0 0.0
    %1704 = vmatprep.subr.mxu0 0.0
    %1705 = vmatpush1.msra.mxu0 0.0
    %1706 = vmatprep.subr.mxu0 0.0
    %1707 = vmatpush1.msra.mxu0 0.0
    %1708 = vmatprep.subr.mxu0 0.0
    %1709 = vmatpush1.msra.mxu0 0.0
    %1710 = vmatprep.subr.mxu0 0.0
    %1711 = vmatpush1.msra.mxu0 %v1675
    %1712 = vmatprep.subr.mxu0 0.0
    %1713 = vmatpush2.msra.mxu0 0.0
    %1714 = vmatprep.subr.mxu0 0.0
    %1715 = vmatpush2.msra.mxu0 0.0
    %1716 = vmatprep.subr.mxu0 0.0
    %1717 = vmatpush2.msra.mxu0 0.0
    %1718 = vmatprep.subr.mxu0 0.0
    %1719 = vmatpush2.msra.mxu0 0.0
    %1720 = vmatprep.subr.mxu0 0.0
    %1721 = vmatpush2.msra.mxu0 0.0
    %1722 = vmatprep.subr.mxu0 0.0
    %1723 = vmatpush2.msra.mxu0 0.0
    %1724 = vmatprep.subr.mxu0 0.0
    %1725 = vmatpush2.msra.mxu0 0.0
    %1726 = vmatprep.subr.mxu0 0.0
    %1727 = vmatpush2.msra.mxu0 0.0
    %1728 = vmatprep.subr.mxu0 0.0
    %1729 = vmatpush2.msra.mxu0 0.0
    %1730 = vmatprep.subr.mxu0 0.0
    %1731 = vmatpush2.msra.mxu0 0.0
    %1732 = vmatprep.subr.mxu0 0.0
    %1733 = vmatpush2.msra.mxu0 0.0
    %1734 = vmatprep.subr.mxu0 0.0
    %1735 = vmatpush2.msra.mxu0 0.0
    %1736 = vmatprep.subr.mxu0 0.0
    %1737 = vmatpush2.msra.mxu0 0.0
    %1738 = vmatprep.subr.mxu0 0.0
    %1739 = vmatpush2.msra.mxu0 0.0
    %1740 = vmatprep.subr.mxu0 0.0
    %1741 = vmatpush2.msra.mxu0 0.0
    %1742 = vmatprep.subr.mxu0 0.0
    %1743 = vmatpush2.msra.mxu0 0.0
    %1744 = vmatprep.mubr.f32.mxu0 0.0
    %1745 = vmatmul.mubr.f32.gmra.mxu0 %v1678
    %v1746 = vpop.f32.mrf.mxu0
    %v1747 = vadd.f32 0.0, %v1746
    %v1748 = vpop.f32.mrf.mxu0
    %1749 = vdwg.mxu0
    %1751 = vrot.lane.b32.xlu0 %v1747, 24
    %v1752 = vpop.permute.xlu0 %1751
    %1754 = vst.msk [vmem:[#allocation2 + $0x8] sm:$0xff] %vm1057, %v1752
    %v1755 = vld [vmem:[#allocation2] sm:$0xff]
    %v1756 = vld [vmem:[#allocation2 + $0x8] sm:$0xff]
    %v1757 = vld [vmem:[#allocation6] sm:$0xff]
    %v1758 = vld [vmem:[#allocation6 + $0x8] sm:$0xff]
    %v1759 = vld [vmem:[#allocation6 + $0x10] sm:$0xff]
    %v1760 = vld [vmem:[#allocation6 + $0x18] sm:$0xff]
    %v1761 = vld [vmem:[%s7] sm:$0x1]
    %v1763 = vlaneseq
    %v1764 = vshrl.u32 %v1763, 7
    %v1765 = vsub.s32 0, %v1764
    %v1766 = vrot.slane %v1761, %v1765
    %v1769 = vsel %vm276, %v1755, 0
    %v1772 = vsel %vm276, %v1756, 0
    %1774 = vmatprep.subr.mxu0 0.0
    %1775 = vmatpush1.msra.mxu0 0.0
    %1776 = vmatprep.subr.mxu0 0.0
    %1777 = vmatpush1.msra.mxu0 0.0
    %1778 = vmatprep.subr.mxu0 0.0
    %1779 = vmatpush1.msra.mxu0 0.0
    %1780 = vmatprep.subr.mxu0 0.0
    %1781 = vmatpush1.msra.mxu0 0.0
    %1782 = vmatprep.subr.mxu0 0.0
    %1783 = vmatpush1.msra.mxu0 0.0
    %1784 = vmatprep.subr.mxu0 0.0
    %1785 = vmatpush1.msra.mxu0 0.0
    %1786 = vmatprep.subr.mxu0 0.0
    %1787 = vmatpush1.msra.mxu0 0.0
    %1788 = vmatprep.subr.mxu0 0.0
    %1789 = vmatpush1.msra.mxu0 0.0
    %1790 = vmatprep.subr.mxu0 0.0
    %1791 = vmatpush1.msra.mxu0 0.0
    %1792 = vmatprep.subr.mxu0 0.0
    %1793 = vmatpush1.msra.mxu0 0.0
    %1794 = vmatprep.subr.mxu0 0.0
    %1795 = vmatpush1.msra.mxu0 0.0
    %1796 = vmatprep.subr.mxu0 0.0
    %1797 = vmatpush1.msra.mxu0 0.0
    %1798 = vmatprep.subr.mxu0 0.0
    %1799 = vmatpush1.msra.mxu0 %v1760
    %1800 = vmatprep.subr.mxu0 0.0
    %1801 = vmatpush1.msra.mxu0 %v1759
    %1802 = vmatprep.subr.mxu0 0.0
    %1803 = vmatpush1.msra.mxu0 %v1758
    %1804 = vmatprep.subr.mxu0 0.0
    %1805 = vmatpush1.msra.mxu0 %v1757
    %1806 = vmatprep.subr.mxu0 0.0
    %1807 = vmatpush2.msra.mxu0 0.0
    %1808 = vmatprep.subr.mxu0 0.0
    %1809 = vmatpush2.msra.mxu0 0.0
    %1810 = vmatprep.subr.mxu0 0.0
    %1811 = vmatpush2.msra.mxu0 0.0
    %1812 = vmatprep.subr.mxu0 0.0
    %1813 = vmatpush2.msra.mxu0 0.0
    %1814 = vmatprep.subr.mxu0 0.0
    %1815 = vmatpush2.msra.mxu0 0.0
    %1816 = vmatprep.subr.mxu0 0.0
    %1817 = vmatpush2.msra.mxu0 0.0
    %1818 = vmatprep.subr.mxu0 0.0
    %1819 = vmatpush2.msra.mxu0 0.0
    %1820 = vmatprep.subr.mxu0 0.0
    %1821 = vmatpush2.msra.mxu0 0.0
    %1822 = vmatprep.subr.mxu0 0.0
    %1823 = vmatpush2.msra.mxu0 0.0
    %1824 = vmatprep.subr.mxu0 0.0
    %1825 = vmatpush2.msra.mxu0 0.0
    %1826 = vmatprep.subr.mxu0 0.0
    %1827 = vmatpush2.msra.mxu0 0.0
    %1828 = vmatprep.subr.mxu0 0.0
    %1829 = vmatpush2.msra.mxu0 0.0
    %1830 = vmatprep.subr.mxu0 0.0
    %1831 = vmatpush2.msra.mxu0 0.0
    %1832 = vmatprep.subr.mxu0 0.0
    %1833 = vmatpush2.msra.mxu0 0.0
    %1834 = vmatprep.subr.mxu0 0.0
    %1835 = vmatpush2.msra.mxu0 0.0
    %1836 = vmatprep.subr.mxu0 0.0
    %1837 = vmatpush2.msra.mxu0 0.0
    %1838 = vmatprep.mubr.f32.mxu0 0.0
    %1839 = vmatmul.mubr.f32.gmra.mxu0 %v1769
    %v1840 = vpop.f32.mrf.mxu0
    %v1841 = vadd.f32 %v1766, %v1840
    %v1842 = vpop.f32.mrf.mxu0
    %1843 = vmatprep.mubr.f32.mxu0 0.0
    %1844 = vmatmul.mubr.f32.gmra.mxu0 %v1772
    %v1845 = vpop.f32.mrf.mxu0
    %v1846 = vadd.f32 %v1766, %v1845
    %v1847 = vpop.f32.mrf.mxu0
    %1848 = vdwg.mxu0
    %v1849 = vadd.f32 %v257, %v1841
    %v1850 = vadd.f32 %v262, %v1846
    %v1851 = vld [vmem:[%s8] sm:$0x1]
    %v1852 = vld [vmem:[#allocation8] sm:$0x1]
    %v1853 = vsel %vm276, %v1849, 0.0
    %1854 = vadd.xlane.f32.xlu0 %v1853
    %v1855 = vpop.xlane.xlu0 %1854
    %v1856 = vsel %vm276, %v1850, 0.0
    %1857 = vadd.xlane.f32.xlu0 %v1856
    %v1858 = vpop.xlane.xlu0 %1857
    %v1859 = vrcp.pop 32.0
    %v1860 = vmul.f32 %v1855, %v1859
    %v1861 = vmul.f32 %v1858, %v1859
    %v1862 = vsub.f32 %v1849, %v1860
    %v1863 = vsub.f32 %v1850, %v1861
    %v1864 = vmul.f32 %v1862, %v1862
    %v1865 = vmul.f32 %v1863, %v1863
    %v1866 = vsel %vm276, %v1864, 0.0
    %1867 = vadd.xlane.f32.xlu0 %v1866
    %v1868 = vpop.xlane.xlu0 %1867
    %v1869 = vsel %vm276, %v1865, 0.0
    %1870 = vadd.xlane.f32.xlu0 %v1869
    %v1871 = vpop.xlane.xlu0 %1870
    %v1872 = vmul.f32 %v1868, %v1859
    %v1873 = vmul.f32 %v1871, %v1859
    %v1874 = vadd.f32 %v1872, 1e-05
    %v1875 = vadd.f32 %v1873, 1e-05
    %v1876 = vrsqrt.pop %v1874
    %v1877 = vrsqrt.pop %v1875
    %v1878 = vmul.f32 %v1862, %v1876
    %v1879 = vmul.f32 %v1863, %v1877
    %v1881 = vlaneseq
    %v1882 = vshrl.u32 %v1881, 7
    %v1883 = vsub.s32 0, %v1882
    %v1884 = vrot.slane %v1851, %v1883
    %v1886 = vmul.f32 %v1878, %v1884
    %v1887 = vmul.f32 %v1879, %v1884
    %v1889 = vlaneseq
    %v1890 = vshrl.u32 %v1889, 7
    %v1891 = vsub.s32 0, %v1890
    %v1892 = vrot.slane %v1852, %v1891
    %v1894 = vadd.f32 %v1886, %v1892
    %v1895 = vadd.f32 %v1887, %v1892
    %v1896 = vld [vmem:[#allocation9] sm:$0xff]
    %v1897 = vld [vmem:[#allocation9 + $0x8] sm:$0xff]
    %v1898 = vld [vmem:[#allocation9 + $0x10] sm:$0xff]
    %v1899 = vld [vmem:[#allocation9 + $0x18] sm:$0xff]
    %v1900 = vld [vmem:[#allocation11] sm:$0x1]
    %v1902 = vlaneseq
    %v1903 = vshrl.u32 %v1902, 7
    %v1904 = vsub.s32 0, %v1903
    %v1905 = vrot.slane %v1900, %v1904
    %v1908 = vsel %vm276, %v1894, 0
    %v1911 = vsel %vm276, %v1895, 0
    %1913 = vmatprep.subr.mxu0 0.0
    %1914 = vmatpush1.msra.mxu0 0.0
    %1915 = vmatprep.subr.mxu0 0.0
    %1916 = vmatpush1.msra.mxu0 0.0
    %1917 = vmatprep.subr.mxu0 0.0
    %1918 = vmatpush1.msra.mxu0 0.0
    %1919 = vmatprep.subr.mxu0 0.0
    %1920 = vmatpush1.msra.mxu0 0.0
    %1921 = vmatprep.subr.mxu0 0.0
    %1922 = vmatpush1.msra.mxu0 0.0
    %1923 = vmatprep.subr.mxu0 0.0
    %1924 = vmatpush1.msra.mxu0 0.0
    %1925 = vmatprep.subr.mxu0 0.0
    %1926 = vmatpush1.msra.mxu0 0.0
    %1927 = vmatprep.subr.mxu0 0.0
    %1928 = vmatpush1.msra.mxu0 0.0
    %1929 = vmatprep.subr.mxu0 0.0
    %1930 = vmatpush1.msra.mxu0 0.0
    %1931 = vmatprep.subr.mxu0 0.0
    %1932 = vmatpush1.msra.mxu0 0.0
    %1933 = vmatprep.subr.mxu0 0.0
    %1934 = vmatpush1.msra.mxu0 0.0
    %1935 = vmatprep.subr.mxu0 0.0
    %1936 = vmatpush1.msra.mxu0 0.0
    %1937 = vmatprep.subr.mxu0 0.0
    %1938 = vmatpush1.msra.mxu0 %v1899
    %1939 = vmatprep.subr.mxu0 0.0
    %1940 = vmatpush1.msra.mxu0 %v1898
    %1941 = vmatprep.subr.mxu0 0.0
    %1942 = vmatpush1.msra.mxu0 %v1897
    %1943 = vmatprep.subr.mxu0 0.0
    %1944 = vmatpush1.msra.mxu0 %v1896
    %1945 = vmatprep.subr.mxu0 0.0
    %1946 = vmatpush2.msra.mxu0 0.0
    %1947 = vmatprep.subr.mxu0 0.0
    %1948 = vmatpush2.msra.mxu0 0.0
    %1949 = vmatprep.subr.mxu0 0.0
    %1950 = vmatpush2.msra.mxu0 0.0
    %1951 = vmatprep.subr.mxu0 0.0
    %1952 = vmatpush2.msra.mxu0 0.0
    %1953 = vmatprep.subr.mxu0 0.0
    %1954 = vmatpush2.msra.mxu0 0.0
    %1955 = vmatprep.subr.mxu0 0.0
    %1956 = vmatpush2.msra.mxu0 0.0
    %1957 = vmatprep.subr.mxu0 0.0
    %1958 = vmatpush2.msra.mxu0 0.0
    %1959 = vmatprep.subr.mxu0 0.0
    %1960 = vmatpush2.msra.mxu0 0.0
    %1961 = vmatprep.subr.mxu0 0.0
    %1962 = vmatpush2.msra.mxu0 0.0
    %1963 = vmatprep.subr.mxu0 0.0
    %1964 = vmatpush2.msra.mxu0 0.0
    %1965 = vmatprep.subr.mxu0 0.0
    %1966 = vmatpush2.msra.mxu0 0.0
    %1967 = vmatprep.subr.mxu0 0.0
    %1968 = vmatpush2.msra.mxu0 0.0
    %1969 = vmatprep.subr.mxu0 0.0
    %1970 = vmatpush2.msra.mxu0 0.0
    %1971 = vmatprep.subr.mxu0 0.0
    %1972 = vmatpush2.msra.mxu0 0.0
    %1973 = vmatprep.subr.mxu0 0.0
    %1974 = vmatpush2.msra.mxu0 0.0
    %1975 = vmatprep.subr.mxu0 0.0
    %1976 = vmatpush2.msra.mxu0 0.0
    %1977 = vmatprep.mubr.f32.mxu0 0.0
    %1978 = vmatmul.mubr.f32.gmra.mxu0 %v1908
    %v1979 = vpop.f32.mrf.mxu0
    %v1980 = vadd.f32 %v1905, %v1979
    %v1981 = vpop.f32.mrf.mxu0
    %1982 = vmatprep.mubr.f32.mxu0 0.0
    %1983 = vmatmul.mubr.f32.gmra.mxu0 %v1911
    %v1984 = vpop.f32.mrf.mxu0
    %v1985 = vadd.f32 %v1905, %v1984
    %v1986 = vpop.f32.mrf.mxu0
    %1987 = vdwg.mxu0
    %v1988 = vmax.f32 %v1980, 0.0
    %v1989 = vmax.f32 %v1985, 0.0
    %v1990 = vld [vmem:[%s14] sm:$0xff]
    %v1991 = vld [vmem:[%s14 + $0x8] sm:$0xff]
    %v1992 = vld [vmem:[%s14 + $0x10] sm:$0xff]
    %v1993 = vld [vmem:[%s14 + $0x18] sm:$0xff]
    %v1994 = vld [vmem:[%s14 + $0x20] sm:$0xff]
    %v1995 = vld [vmem:[%s14 + $0x28] sm:$0xff]
    %v1996 = vld [vmem:[%s14 + $0x30] sm:$0xff]
    %v1997 = vld [vmem:[%s14 + $0x38] sm:$0xff]
    %v1998 = vld [vmem:[#allocation12] sm:$0x1]
    %v2000 = vlaneseq
    %v2001 = vshrl.u32 %v2000, 7
    %v2002 = vsub.s32 0, %v2001
    %v2003 = vrot.slane %v1998, %v2002
    %vm2005 = vcmask 523264
    %v2007 = vsel %vm2005, %v1988, 0
    %v2010 = vsel %vm2005, %v1989, 0
    %2012 = vmatprep.subr.mxu0 0.0
    %2013 = vmatpush1.msra.mxu0 0.0
    %2014 = vmatprep.subr.mxu0 0.0
    %2015 = vmatpush1.msra.mxu0 0.0
    %2016 = vmatprep.subr.mxu0 0.0
    %2017 = vmatpush1.msra.mxu0 0.0
    %2018 = vmatprep.subr.mxu0 0.0
    %2019 = vmatpush1.msra.mxu0 0.0
    %2020 = vmatprep.subr.mxu0 0.0
    %2021 = vmatpush1.msra.mxu0 0.0
    %2022 = vmatprep.subr.mxu0 0.0
    %2023 = vmatpush1.msra.mxu0 0.0
    %2024 = vmatprep.subr.mxu0 0.0
    %2025 = vmatpush1.msra.mxu0 0.0
    %2026 = vmatprep.subr.mxu0 0.0
    %2027 = vmatpush1.msra.mxu0 0.0
    %2028 = vmatprep.subr.mxu0 0.0
    %2029 = vmatpush1.msra.mxu0 %v1997
    %2030 = vmatprep.subr.mxu0 0.0
    %2031 = vmatpush1.msra.mxu0 %v1996
    %2032 = vmatprep.subr.mxu0 0.0
    %2033 = vmatpush1.msra.mxu0 %v1995
    %2034 = vmatprep.subr.mxu0 0.0
    %2035 = vmatpush1.msra.mxu0 %v1994
    %2036 = vmatprep.subr.mxu0 0.0
    %2037 = vmatpush1.msra.mxu0 %v1993
    %2038 = vmatprep.subr.mxu0 0.0
    %2039 = vmatpush1.msra.mxu0 %v1992
    %2040 = vmatprep.subr.mxu0 0.0
    %2041 = vmatpush1.msra.mxu0 %v1991
    %2042 = vmatprep.subr.mxu0 0.0
    %2043 = vmatpush1.msra.mxu0 %v1990
    %2044 = vmatprep.subr.mxu0 0.0
    %2045 = vmatpush2.msra.mxu0 0.0
    %2046 = vmatprep.subr.mxu0 0.0
    %2047 = vmatpush2.msra.mxu0 0.0
    %2048 = vmatprep.subr.mxu0 0.0
    %2049 = vmatpush2.msra.mxu0 0.0
    %2050 = vmatprep.subr.mxu0 0.0
    %2051 = vmatpush2.msra.mxu0 0.0
    %2052 = vmatprep.subr.mxu0 0.0
    %2053 = vmatpush2.msra.mxu0 0.0
    %2054 = vmatprep.subr.mxu0 0.0
    %2055 = vmatpush2.msra.mxu0 0.0
    %2056 = vmatprep.subr.mxu0 0.0
    %2057 = vmatpush2.msra.mxu0 0.0
    %2058 = vmatprep.subr.mxu0 0.0
    %2059 = vmatpush2.msra.mxu0 0.0
    %2060 = vmatprep.subr.mxu0 0.0
    %2061 = vmatpush2.msra.mxu0 0.0
    %2062 = vmatprep.subr.mxu0 0.0
    %2063 = vmatpush2.msra.mxu0 0.0
    %2064 = vmatprep.subr.mxu0 0.0
    %2065 = vmatpush2.msra.mxu0 0.0
    %2066 = vmatprep.subr.mxu0 0.0
    %2067 = vmatpush2.msra.mxu0 0.0
    %2068 = vmatprep.subr.mxu0 0.0
    %2069 = vmatpush2.msra.mxu0 0.0
    %2070 = vmatprep.subr.mxu0 0.0
    %2071 = vmatpush2.msra.mxu0 0.0
    %2072 = vmatprep.subr.mxu0 0.0
    %2073 = vmatpush2.msra.mxu0 0.0
    %2074 = vmatprep.subr.mxu0 0.0
    %2075 = vmatpush2.msra.mxu0 0.0
    %2076 = vmatprep.mubr.f32.mxu0 0.0
    %2077 = vmatmul.mubr.f32.gmra.mxu0 %v2007
    %v2078 = vpop.f32.mrf.mxu0
    %v2079 = vadd.f32 %v2003, %v2078
    %v2080 = vpop.f32.mrf.mxu0
    %2081 = vmatprep.mubr.f32.mxu0 0.0
    %2082 = vmatmul.mubr.f32.gmra.mxu0 %v2010
    %v2083 = vpop.f32.mrf.mxu0
    %v2084 = vadd.f32 %v2003, %v2083
    %v2085 = vpop.f32.mrf.mxu0
    %2086 = vdwg.mxu0
    %v2087 = vadd.f32 %v1894, %v2079
    %v2088 = vadd.f32 %v1895, %v2084
    %v2089 = vld [vmem:[%s10] sm:$0x1]
    %v2090 = vld [vmem:[%s11] sm:$0x1]
    %v2091 = vsel %vm276, %v2087, 0.0
    %2092 = vadd.xlane.f32.xlu0 %v2091
    %v2093 = vpop.xlane.xlu0 %2092
    %v2094 = vsel %vm276, %v2088, 0.0
    %2095 = vadd.xlane.f32.xlu0 %v2094
    %v2096 = vpop.xlane.xlu0 %2095
    %v2097 = vmul.f32 %v2093, %v1859
    %v2098 = vmul.f32 %v2096, %v1859
    %v2099 = vsub.f32 %v2087, %v2097
    %v2100 = vsub.f32 %v2088, %v2098
    %v2101 = vmul.f32 %v2099, %v2099
    %v2102 = vmul.f32 %v2100, %v2100
    %v2103 = vsel %vm276, %v2101, 0.0
    %2104 = vadd.xlane.f32.xlu0 %v2103
    %v2105 = vpop.xlane.xlu0 %2104
    %v2106 = vsel %vm276, %v2102, 0.0
    %2107 = vadd.xlane.f32.xlu0 %v2106
    %v2108 = vpop.xlane.xlu0 %2107
    %v2109 = vmul.f32 %v2105, %v1859
    %v2110 = vmul.f32 %v2108, %v1859
    %v2111 = vadd.f32 %v2109, 1e-05
    %v2112 = vadd.f32 %v2110, 1e-05
    %v2113 = vrsqrt.pop %v2111
    %v2114 = vrsqrt.pop %v2112
    %v2115 = vmul.f32 %v2099, %v2113
    %v2116 = vmul.f32 %v2100, %v2114
    %v2118 = vlaneseq
    %v2119 = vshrl.u32 %v2118, 7
    %v2120 = vsub.s32 0, %v2119
    %v2121 = vrot.slane %v2089, %v2120
    %v2123 = vmul.f32 %v2115, %v2121
    %v2124 = vmul.f32 %v2116, %v2121
    %v2126 = vlaneseq
    %v2127 = vshrl.u32 %v2126, 7
    %v2128 = vsub.s32 0, %v2127
    %v2129 = vrot.slane %v2090, %v2128
    %v2131 = vadd.f32 %v2123, %v2129
    %v2132 = vadd.f32 %v2124, %v2129
    %s2133 = scalar_lea.vmem [#allocation4], 32
    %v2134 = vld [vmem:[%s2133] sm:$0xff]
    %v2135 = vld [vmem:[%s2133 + $0x8] sm:$0xff]
    %v2136 = vld [vmem:[%s2133 + $0x10] sm:$0xff]
    %v2137 = vld [vmem:[%s2133 + $0x18] sm:$0xff]
    %s2138 = scalar_lea.vmem %s5, 1
    %v2139 = vld [vmem:[%s2138] sm:$0x1]
    %v2141 = vlaneseq
    %v2142 = vshrl.u32 %v2141, 7
    %v2143 = vsub.s32 0, %v2142
    %v2144 = vrot.slane %v2139, %v2143
    %v2147 = vsel %vm276, %v2131, 0
    %v2150 = vsel %vm276, %v2132, 0
    %2152 = vmatprep.subr.mxu0 0.0
    %2153 = vmatpush1.msra.mxu0 0.0
    %2154 = vmatprep.subr.mxu0 0.0
    %2155 = vmatpush1.msra.mxu0 0.0
    %2156 = vmatprep.subr.mxu0 0.0
    %2157 = vmatpush1.msra.mxu0 0.0
    %2158 = vmatprep.subr.mxu0 0.0
    %2159 = vmatpush1.msra.mxu0 0.0
    %2160 = vmatprep.subr.mxu0 0.0
    %2161 = vmatpush1.msra.mxu0 0.0
    %2162 = vmatprep.subr.mxu0 0.0
    %2163 = vmatpush1.msra.mxu0 0.0
    %2164 = vmatprep.subr.mxu0 0.0
    %2165 = vmatpush1.msra.mxu0 0.0
    %2166 = vmatprep.subr.mxu0 0.0
    %2167 = vmatpush1.msra.mxu0 0.0
    %2168 = vmatprep.subr.mxu0 0.0
    %2169 = vmatpush1.msra.mxu0 0.0
    %2170 = vmatprep.subr.mxu0 0.0
    %2171 = vmatpush1.msra.mxu0 0.0
    %2172 = vmatprep.subr.mxu0 0.0
    %2173 = vmatpush1.msra.mxu0 0.0
    %2174 = vmatprep.subr.mxu0 0.0
    %2175 = vmatpush1.msra.mxu0 0.0
    %2176 = vmatprep.subr.mxu0 0.0
    %2177 = vmatpush1.msra.mxu0 %v2137
    %2178 = vmatprep.subr.mxu0 0.0
    %2179 = vmatpush1.msra.mxu0 %v2136
    %2180 = vmatprep.subr.mxu0 0.0
    %2181 = vmatpush1.msra.mxu0 %v2135
    %2182 = vmatprep.subr.mxu0 0.0
    %2183 = vmatpush1.msra.mxu0 %v2134
    %2184 = vmatprep.subr.mxu0 0.0
    %2185 = vmatpush2.msra.mxu0 0.0
    %2186 = vmatprep.subr.mxu0 0.0
    %2187 = vmatpush2.msra.mxu0 0.0
    %2188 = vmatprep.subr.mxu0 0.0
    %2189 = vmatpush2.msra.mxu0 0.0
    %2190 = vmatprep.subr.mxu0 0.0
    %2191 = vmatpush2.msra.mxu0 0.0
    %2192 = vmatprep.subr.mxu0 0.0
    %2193 = vmatpush2.msra.mxu0 0.0
    %2194 = vmatprep.subr.mxu0 0.0
    %2195 = vmatpush2.msra.mxu0 0.0
    %2196 = vmatprep.subr.mxu0 0.0
    %2197 = vmatpush2.msra.mxu0 0.0
    %2198 = vmatprep.subr.mxu0 0.0
    %2199 = vmatpush2.msra.mxu0 0.0
    %2200 = vmatprep.subr.mxu0 0.0
    %2201 = vmatpush2.msra.mxu0 0.0
    %2202 = vmatprep.subr.mxu0 0.0
    %2203 = vmatpush2.msra.mxu0 0.0
    %2204 = vmatprep.subr.mxu0 0.0
    %2205 = vmatpush2.msra.mxu0 0.0
    %2206 = vmatprep.subr.mxu0 0.0
    %2207 = vmatpush2.msra.mxu0 0.0
    %2208 = vmatprep.subr.mxu0 0.0
    %2209 = vmatpush2.msra.mxu0 0.0
    %2210 = vmatprep.subr.mxu0 0.0
    %2211 = vmatpush2.msra.mxu0 0.0
    %2212 = vmatprep.subr.mxu0 0.0
    %2213 = vmatpush2.msra.mxu0 0.0
    %2214 = vmatprep.subr.mxu0 0.0
    %2215 = vmatpush2.msra.mxu0 0.0
    %2216 = vmatprep.mubr.f32.mxu0 0.0
    %2217 = vmatmul.mubr.f32.gmra.mxu0 %v2147
    %v2218 = vpop.f32.mrf.mxu0
    %v2219 = vadd.f32 %v2144, %v2218
    %v2220 = vpop.f32.mrf.mxu0
    %2221 = vmatprep.mubr.f32.mxu0 0.0
    %2222 = vmatmul.mubr.f32.gmra.mxu0 %v2150
    %v2223 = vpop.f32.mrf.mxu0
    %v2224 = vadd.f32 %v2144, %v2223
    %v2225 = vpop.f32.mrf.mxu0
    %2226 = vdwg.mxu0
    %2228 = vrot.lane.b32.xlu0 %v2219, 96
    %v2229 = vpop.permute.xlu0 %2228
    %v2230 = vsel %vm361, %v2219, 0
    %v2232 = vsel %vm361, %v2229, 0
    %2234 = vmatprep.subr.mxu0 0.0
    %2235 = vmatpush1.xpose.msra.mxu0 0.0
    %2236 = vmatprep.subr.mxu0 0.0
    %2237 = vmatpush1.xpose.msra.mxu0 0.0
    %2238 = vmatprep.subr.mxu0 0.0
    %2239 = vmatpush1.xpose.msra.mxu0 0.0
    %2240 = vmatprep.subr.mxu0 0.0
    %2241 = vmatpush1.xpose.msra.mxu0 0.0
    %2242 = vmatprep.subr.mxu0 0.0
    %2243 = vmatpush1.xpose.msra.mxu0 0.0
    %2244 = vmatprep.subr.mxu0 0.0
    %2245 = vmatpush1.xpose.msra.mxu0 0.0
    %2246 = vmatprep.subr.mxu0 0.0
    %2247 = vmatpush1.xpose.msra.mxu0 0.0
    %2248 = vmatprep.subr.mxu0 0.0
    %2249 = vmatpush1.xpose.msra.mxu0 0.0
    %2250 = vmatprep.subr.mxu0 0.0
    %2251 = vmatpush1.xpose.msra.mxu0 0.0
    %2252 = vmatprep.subr.mxu0 0.0
    %2253 = vmatpush1.xpose.msra.mxu0 0.0
    %2254 = vmatprep.subr.mxu0 0.0
    %2255 = vmatpush1.xpose.msra.mxu0 0.0
    %2256 = vmatprep.subr.mxu0 0.0
    %2257 = vmatpush1.xpose.msra.mxu0 0.0
    %2258 = vmatprep.subr.mxu0 0.0
    %2259 = vmatpush1.xpose.msra.mxu0 0.0
    %2260 = vmatprep.subr.mxu0 0.0
    %2261 = vmatpush1.xpose.msra.mxu0 0.0
    %2262 = vmatprep.subr.mxu0 0.0
    %2263 = vmatpush1.xpose.msra.mxu0 0.0
    %2264 = vmatprep.subr.mxu0 0.0
    %2265 = vmatpush1.xpose.msra.mxu0 %v2232
    %2266 = vmatprep.subr.mxu0 0.0
    %2267 = vmatpush2.xpose.msra.mxu0 0.0
    %2268 = vmatprep.subr.mxu0 0.0
    %2269 = vmatpush2.xpose.msra.mxu0 0.0
    %2270 = vmatprep.subr.mxu0 0.0
    %2271 = vmatpush2.xpose.msra.mxu0 0.0
    %2272 = vmatprep.subr.mxu0 0.0
    %2273 = vmatpush2.xpose.msra.mxu0 0.0
    %2274 = vmatprep.subr.mxu0 0.0
    %2275 = vmatpush2.xpose.msra.mxu0 0.0
    %2276 = vmatprep.subr.mxu0 0.0
    %2277 = vmatpush2.xpose.msra.mxu0 0.0
    %2278 = vmatprep.subr.mxu0 0.0
    %2279 = vmatpush2.xpose.msra.mxu0 0.0
    %2280 = vmatprep.subr.mxu0 0.0
    %2281 = vmatpush2.xpose.msra.mxu0 0.0
    %2282 = vmatprep.subr.mxu0 0.0
    %2283 = vmatpush2.xpose.msra.mxu0 0.0
    %2284 = vmatprep.subr.mxu0 0.0
    %2285 = vmatpush2.xpose.msra.mxu0 0.0
    %2286 = vmatprep.subr.mxu0 0.0
    %2287 = vmatpush2.xpose.msra.mxu0 0.0
    %2288 = vmatprep.subr.mxu0 0.0
    %2289 = vmatpush2.xpose.msra.mxu0 0.0
    %2290 = vmatprep.subr.mxu0 0.0
    %2291 = vmatpush2.xpose.msra.mxu0 0.0
    %2292 = vmatprep.subr.mxu0 0.0
    %2293 = vmatpush2.xpose.msra.mxu0 0.0
    %2294 = vmatprep.subr.mxu0 0.0
    %2295 = vmatpush2.xpose.msra.mxu0 0.0
    %2296 = vmatprep.subr.mxu0 0.0
    %2297 = vmatpush2.xpose.msra.mxu0 0.0
    %2298 = vmatprep.mubr.f32.mxu0 0.0
    %2299 = vmatmul.mubr.f32.gmra.mxu0 %v2230
    %v2300 = vpop.f32.mrf.mxu0
    %v2301 = vadd.f32 0.0, %v2300
    %v2302 = vpop.f32.mrf.mxu0
    %2303 = vdwg.mxu0
    %v2304 = vmul.f32 %v2301, 0.35355338
    %v2305 = vsel %vm443, -1e+09, %v2304
    %v2306 = vsel %vm361, %v2305, -inf
    %2307 = vmax.xlane.f32.xlu0 %v2306
    %v2308 = vpop.xlane.xlu0 %2307
    %v2309 = vsub.f32 %v2305, %v2308
    %v2310 = vmul.f32 %v2309, 1.442695
    %v2311 = vpow.pop %v2310
    %v2312 = vsel %vm361, %v2311, 0.0
    %2313 = vadd.xlane.f32.xlu0 %v2312
    %v2314 = vpop.xlane.xlu0 %2313
    %v2315 = vrcp.pop %v2314
    %v2316 = vmul.f32 %v2311, %v2315
    %s2317 = scalar_lea.vmem %s21, 64
    %2318 = vst.msk [vmem:[%s2317] sm:$0xff] %vm361, %v2316
    %2319 = vrot.lane.b32.xlu0 %v2219, 64
    %v2320 = vpop.permute.xlu0 %2319
    %v2323 = vsel %vm361, %v2316, 0
    %2325 = vmatprep.subr.mxu0 0.0
    %2326 = vmatpush1.msra.mxu0 0.0
    %2327 = vmatprep.subr.mxu0 0.0
    %2328 = vmatpush1.msra.mxu0 0.0
    %2329 = vmatprep.subr.mxu0 0.0
    %2330 = vmatpush1.msra.mxu0 0.0
    %2331 = vmatprep.subr.mxu0 0.0
    %2332 = vmatpush1.msra.mxu0 0.0
    %2333 = vmatprep.subr.mxu0 0.0
    %2334 = vmatpush1.msra.mxu0 0.0
    %2335 = vmatprep.subr.mxu0 0.0
    %2336 = vmatpush1.msra.mxu0 0.0
    %2337 = vmatprep.subr.mxu0 0.0
    %2338 = vmatpush1.msra.mxu0 0.0
    %2339 = vmatprep.subr.mxu0 0.0
    %2340 = vmatpush1.msra.mxu0 0.0
    %2341 = vmatprep.subr.mxu0 0.0
    %2342 = vmatpush1.msra.mxu0 0.0
    %2343 = vmatprep.subr.mxu0 0.0
    %2344 = vmatpush1.msra.mxu0 0.0
    %2345 = vmatprep.subr.mxu0 0.0
    %2346 = vmatpush1.msra.mxu0 0.0
    %2347 = vmatprep.subr.mxu0 0.0
    %2348 = vmatpush1.msra.mxu0 0.0
    %2349 = vmatprep.subr.mxu0 0.0
    %2350 = vmatpush1.msra.mxu0 0.0
    %2351 = vmatprep.subr.mxu0 0.0
    %2352 = vmatpush1.msra.mxu0 0.0
    %2353 = vmatprep.subr.mxu0 0.0
    %2354 = vmatpush1.msra.mxu0 0.0
    %2355 = vmatprep.subr.mxu0 0.0
    %2356 = vmatpush1.msra.mxu0 %v2320
    %2357 = vmatprep.subr.mxu0 0.0
    %2358 = vmatpush2.msra.mxu0 0.0
    %2359 = vmatprep.subr.mxu0 0.0
    %2360 = vmatpush2.msra.mxu0 0.0
    %2361 = vmatprep.subr.mxu0 0.0
    %2362 = vmatpush2.msra.mxu0 0.0
    %2363 = vmatprep.subr.mxu0 0.0
    %2364 = vmatpush2.msra.mxu0 0.0
    %2365 = vmatprep.subr.mxu0 0.0
    %2366 = vmatpush2.msra.mxu0 0.0
    %2367 = vmatprep.subr.mxu0 0.0
    %2368 = vmatpush2.msra.mxu0 0.0
    %2369 = vmatprep.subr.mxu0 0.0
    %2370 = vmatpush2.msra.mxu0 0.0
    %2371 = vmatprep.subr.mxu0 0.0
    %2372 = vmatpush2.msra.mxu0 0.0
    %2373 = vmatprep.subr.mxu0 0.0
    %2374 = vmatpush2.msra.mxu0 0.0
    %2375 = vmatprep.subr.mxu0 0.0
    %2376 = vmatpush2.msra.mxu0 0.0
    %2377 = vmatprep.subr.mxu0 0.0
    %2378 = vmatpush2.msra.mxu0 0.0
    %2379 = vmatprep.subr.mxu0 0.0
    %2380 = vmatpush2.msra.mxu0 0.0
    %2381 = vmatprep.subr.mxu0 0.0
    %2382 = vmatpush2.msra.mxu0 0.0
    %2383 = vmatprep.subr.mxu0 0.0
    %2384 = vmatpush2.msra.mxu0 0.0
    %2385 = vmatprep.subr.mxu0 0.0
    %2386 = vmatpush2.msra.mxu0 0.0
    %2387 = vmatprep.subr.mxu0 0.0
    %2388 = vmatpush2.msra.mxu0 0.0
    %2389 = vmatprep.mubr.f32.mxu0 0.0
    %2390 = vmatmul.mubr.f32.gmra.mxu0 %v2323
    %v2391 = vpop.f32.mrf.mxu0
    %v2392 = vadd.f32 0.0, %v2391
    %v2393 = vpop.f32.mrf.mxu0
    %2394 = vdwg.mxu0
    %2395 = vst.msk [vmem:[#allocation2] sm:$0xff] %vm361, %v2392
    %2396 = vrot.lane.b32.xlu0 %v2219, 120
    %v2397 = vpop.permute.xlu0 %2396
    %2398 = vrot.lane.b32.xlu0 %v2219, 88
    %v2399 = vpop.permute.xlu0 %2398
    %v2400 = vsel %vm361, %v2397, 0
    %v2402 = vsel %vm361, %v2399, 0
    %2404 = vmatprep.subr.mxu0 0.0
    %2405 = vmatpush1.xpose.msra.mxu0 0.0
    %2406 = vmatprep.subr.mxu0 0.0
    %2407 = vmatpush1.xpose.msra.mxu0 0.0
    %2408 = vmatprep.subr.mxu0 0.0
    %2409 = vmatpush1.xpose.msra.mxu0 0.0
    %2410 = vmatprep.subr.mxu0 0.0
    %2411 = vmatpush1.xpose.msra.mxu0 0.0
    %2412 = vmatprep.subr.mxu0 0.0
    %2413 = vmatpush1.xpose.msra.mxu0 0.0
    %2414 = vmatprep.subr.mxu0 0.0
    %2415 = vmatpush1.xpose.msra.mxu0 0.0
    %2416 = vmatprep.subr.mxu0 0.0
    %2417 = vmatpush1.xpose.msra.mxu0 0.0
    %2418 = vmatprep.subr.mxu0 0.0
    %2419 = vmatpush1.xpose.msra.mxu0 0.0
    %2420 = vmatprep.subr.mxu0 0.0
    %2421 = vmatpush1.xpose.msra.mxu0 0.0
    %2422 = vmatprep.subr.mxu0 0.0
    %2423 = vmatpush1.xpose.msra.mxu0 0.0
    %2424 = vmatprep.subr.mxu0 0.0
    %2425 = vmatpush1.xpose.msra.mxu0 0.0
    %2426 = vmatprep.subr.mxu0 0.0
    %2427 = vmatpush1.xpose.msra.mxu0 0.0
    %2428 = vmatprep.subr.mxu0 0.0
    %2429 = vmatpush1.xpose.msra.mxu0 0.0
    %2430 = vmatprep.subr.mxu0 0.0
    %2431 = vmatpush1.xpose.msra.mxu0 0.0
    %2432 = vmatprep.subr.mxu0 0.0
    %2433 = vmatpush1.xpose.msra.mxu0 0.0
    %2434 = vmatprep.subr.mxu0 0.0
    %2435 = vmatpush1.xpose.msra.mxu0 %v2402
    %2436 = vmatprep.subr.mxu0 0.0
    %2437 = vmatpush2.xpose.msra.mxu0 0.0
    %2438 = vmatprep.subr.mxu0 0.0
    %2439 = vmatpush2.xpose.msra.mxu0 0.0
    %2440 = vmatprep.subr.mxu0 0.0
    %2441 = vmatpush2.xpose.msra.mxu0 0.0
    %2442 = vmatprep.subr.mxu0 0.0
    %2443 = vmatpush2.xpose.msra.mxu0 0.0
    %2444 = vmatprep.subr.mxu0 0.0
    %2445 = vmatpush2.xpose.msra.mxu0 0.0
    %2446 = vmatprep.subr.mxu0 0.0
    %2447 = vmatpush2.xpose.msra.mxu0 0.0
    %2448 = vmatprep.subr.mxu0 0.0
    %2449 = vmatpush2.xpose.msra.mxu0 0.0
    %2450 = vmatprep.subr.mxu0 0.0
    %2451 = vmatpush2.xpose.msra.mxu0 0.0
    %2452 = vmatprep.subr.mxu0 0.0
    %2453 = vmatpush2.xpose.msra.mxu0 0.0
    %2454 = vmatprep.subr.mxu0 0.0
    %2455 = vmatpush2.xpose.msra.mxu0 0.0
    %2456 = vmatprep.subr.mxu0 0.0
    %2457 = vmatpush2.xpose.msra.mxu0 0.0
    %2458 = vmatprep.subr.mxu0 0.0
    %2459 = vmatpush2.xpose.msra.mxu0 0.0
    %2460 = vmatprep.subr.mxu0 0.0
    %2461 = vmatpush2.xpose.msra.mxu0 0.0
    %2462 = vmatprep.subr.mxu0 0.0
    %2463 = vmatpush2.xpose.msra.mxu0 0.0
    %2464 = vmatprep.subr.mxu0 0.0
    %2465 = vmatpush2.xpose.msra.mxu0 0.0
    %2466 = vmatprep.subr.mxu0 0.0
    %2467 = vmatpush2.xpose.msra.mxu0 0.0
    %2468 = vmatprep.mubr.f32.mxu0 0.0
    %2469 = vmatmul.mubr.f32.gmra.mxu0 %v2400
    %v2470 = vpop.f32.mrf.mxu0
    %v2471 = vadd.f32 0.0, %v2470
    %v2472 = vpop.f32.mrf.mxu0
    %2473 = vdwg.mxu0
    %v2474 = vmul.f32 %v2471, 0.35355338
    %v2475 = vsel %vm443, -1e+09, %v2474
    %v2476 = vsel %vm361, %v2475, -inf
    %2477 = vmax.xlane.f32.xlu0 %v2476
    %v2478 = vpop.xlane.xlu0 %2477
    %v2479 = vsub.f32 %v2475, %v2478
    %v2480 = vmul.f32 %v2479, 1.442695
    %v2481 = vpow.pop %v2480
    %v2482 = vsel %vm361, %v2481, 0.0
    %2483 = vadd.xlane.f32.xlu0 %v2482
    %v2484 = vpop.xlane.xlu0 %2483
    %v2485 = vrcp.pop %v2484
    %v2486 = vmul.f32 %v2481, %v2485
    %s2487 = scalar_lea.vmem %s21, 72
    %2488 = vst.msk [vmem:[%s2487] sm:$0xff] %vm361, %v2486
    %2489 = vrot.lane.b32.xlu0 %v2219, 56
    %v2490 = vpop.permute.xlu0 %2489
    %v2493 = vsel %vm361, %v2486, 0
    %2495 = vmatprep.subr.mxu0 0.0
    %2496 = vmatpush1.msra.mxu0 0.0
    %2497 = vmatprep.subr.mxu0 0.0
    %2498 = vmatpush1.msra.mxu0 0.0
    %2499 = vmatprep.subr.mxu0 0.0
    %2500 = vmatpush1.msra.mxu0 0.0
    %2501 = vmatprep.subr.mxu0 0.0
    %2502 = vmatpush1.msra.mxu0 0.0
    %2503 = vmatprep.subr.mxu0 0.0
    %2504 = vmatpush1.msra.mxu0 0.0
    %2505 = vmatprep.subr.mxu0 0.0
    %2506 = vmatpush1.msra.mxu0 0.0
    %2507 = vmatprep.subr.mxu0 0.0
    %2508 = vmatpush1.msra.mxu0 0.0
    %2509 = vmatprep.subr.mxu0 0.0
    %2510 = vmatpush1.msra.mxu0 0.0
    %2511 = vmatprep.subr.mxu0 0.0
    %2512 = vmatpush1.msra.mxu0 0.0
    %2513 = vmatprep.subr.mxu0 0.0
    %2514 = vmatpush1.msra.mxu0 0.0
    %2515 = vmatprep.subr.mxu0 0.0
    %2516 = vmatpush1.msra.mxu0 0.0
    %2517 = vmatprep.subr.mxu0 0.0
    %2518 = vmatpush1.msra.mxu0 0.0
    %2519 = vmatprep.subr.mxu0 0.0
    %2520 = vmatpush1.msra.mxu0 0.0
    %2521 = vmatprep.subr.mxu0 0.0
    %2522 = vmatpush1.msra.mxu0 0.0
    %2523 = vmatprep.subr.mxu0 0.0
    %2524 = vmatpush1.msra.mxu0 0.0
    %2525 = vmatprep.subr.mxu0 0.0
    %2526 = vmatpush1.msra.mxu0 %v2490
    %2527 = vmatprep.subr.mxu0 0.0
    %2528 = vmatpush2.msra.mxu0 0.0
    %2529 = vmatprep.subr.mxu0 0.0
    %2530 = vmatpush2.msra.mxu0 0.0
    %2531 = vmatprep.subr.mxu0 0.0
    %2532 = vmatpush2.msra.mxu0 0.0
    %2533 = vmatprep.subr.mxu0 0.0
    %2534 = vmatpush2.msra.mxu0 0.0
    %2535 = vmatprep.subr.mxu0 0.0
    %2536 = vmatpush2.msra.mxu0 0.0
    %2537 = vmatprep.subr.mxu0 0.0
    %2538 = vmatpush2.msra.mxu0 0.0
    %2539 = vmatprep.subr.mxu0 0.0
    %2540 = vmatpush2.msra.mxu0 0.0
    %2541 = vmatprep.subr.mxu0 0.0
    %2542 = vmatpush2.msra.mxu0 0.0
    %2543 = vmatprep.subr.mxu0 0.0
    %2544 = vmatpush2.msra.mxu0 0.0
    %2545 = vmatprep.subr.mxu0 0.0
    %2546 = vmatpush2.msra.mxu0 0.0
    %2547 = vmatprep.subr.mxu0 0.0
    %2548 = vmatpush2.msra.mxu0 0.0
    %2549 = vmatprep.subr.mxu0 0.0
    %2550 = vmatpush2.msra.mxu0 0.0
    %2551 = vmatprep.subr.mxu0 0.0
    %2552 = vmatpush2.msra.mxu0 0.0
    %2553 = vmatprep.subr.mxu0 0.0
    %2554 = vmatpush2.msra.mxu0 0.0
    %2555 = vmatprep.subr.mxu0 0.0
    %2556 = vmatpush2.msra.mxu0 0.0
    %2557 = vmatprep.subr.mxu0 0.0
    %2558 = vmatpush2.msra.mxu0 0.0
    %2559 = vmatprep.mubr.f32.mxu0 0.0
    %2560 = vmatmul.mubr.f32.gmra.mxu0 %v2493
    %v2561 = vpop.f32.mrf.mxu0
    %v2562 = vadd.f32 0.0, %v2561
    %v2563 = vpop.f32.mrf.mxu0
    %2564 = vdwg.mxu0
    %2566 = vrot.lane.b32.xlu0 %v2562, 8
    %v2567 = vpop.permute.xlu0 %2566
    %2569 = vst.msk [vmem:[#allocation2] sm:$0xff] %vm707, %v2567
    %2570 = vrot.lane.b32.xlu0 %v2219, 112
    %v2571 = vpop.permute.xlu0 %2570
    %2572 = vrot.lane.b32.xlu0 %v2219, 80
    %v2573 = vpop.permute.xlu0 %2572
    %v2574 = vsel %vm361, %v2571, 0
    %v2576 = vsel %vm361, %v2573, 0
    %2578 = vmatprep.subr.mxu0 0.0
    %2579 = vmatpush1.xpose.msra.mxu0 0.0
    %2580 = vmatprep.subr.mxu0 0.0
    %2581 = vmatpush1.xpose.msra.mxu0 0.0
    %2582 = vmatprep.subr.mxu0 0.0
    %2583 = vmatpush1.xpose.msra.mxu0 0.0
    %2584 = vmatprep.subr.mxu0 0.0
    %2585 = vmatpush1.xpose.msra.mxu0 0.0
    %2586 = vmatprep.subr.mxu0 0.0
    %2587 = vmatpush1.xpose.msra.mxu0 0.0
    %2588 = vmatprep.subr.mxu0 0.0
    %2589 = vmatpush1.xpose.msra.mxu0 0.0
    %2590 = vmatprep.subr.mxu0 0.0
    %2591 = vmatpush1.xpose.msra.mxu0 0.0
    %2592 = vmatprep.subr.mxu0 0.0
    %2593 = vmatpush1.xpose.msra.mxu0 0.0
    %2594 = vmatprep.subr.mxu0 0.0
    %2595 = vmatpush1.xpose.msra.mxu0 0.0
    %2596 = vmatprep.subr.mxu0 0.0
    %2597 = vmatpush1.xpose.msra.mxu0 0.0
    %2598 = vmatprep.subr.mxu0 0.0
    %2599 = vmatpush1.xpose.msra.mxu0 0.0
    %2600 = vmatprep.subr.mxu0 0.0
    %2601 = vmatpush1.xpose.msra.mxu0 0.0
    %2602 = vmatprep.subr.mxu0 0.0
    %2603 = vmatpush1.xpose.msra.mxu0 0.0
    %2604 = vmatprep.subr.mxu0 0.0
    %2605 = vmatpush1.xpose.msra.mxu0 0.0
    %2606 = vmatprep.subr.mxu0 0.0
    %2607 = vmatpush1.xpose.msra.mxu0 0.0
    %2608 = vmatprep.subr.mxu0 0.0
    %2609 = vmatpush1.xpose.msra.mxu0 %v2576
    %2610 = vmatprep.subr.mxu0 0.0
    %2611 = vmatpush2.xpose.msra.mxu0 0.0
    %2612 = vmatprep.subr.mxu0 0.0
    %2613 = vmatpush2.xpose.msra.mxu0 0.0
    %2614 = vmatprep.subr.mxu0 0.0
    %2615 = vmatpush2.xpose.msra.mxu0 0.0
    %2616 = vmatprep.subr.mxu0 0.0
    %2617 = vmatpush2.xpose.msra.mxu0 0.0
    %2618 = vmatprep.subr.mxu0 0.0
    %2619 = vmatpush2.xpose.msra.mxu0 0.0
    %2620 = vmatprep.subr.mxu0 0.0
    %2621 = vmatpush2.xpose.msra.mxu0 0.0
    %2622 = vmatprep.subr.mxu0 0.0
    %2623 = vmatpush2.xpose.msra.mxu0 0.0
    %2624 = vmatprep.subr.mxu0 0.0
    %2625 = vmatpush2.xpose.msra.mxu0 0.0
    %2626 = vmatprep.subr.mxu0 0.0
    %2627 = vmatpush2.xpose.msra.mxu0 0.0
    %2628 = vmatprep.subr.mxu0 0.0
    %2629 = vmatpush2.xpose.msra.mxu0 0.0
    %2630 = vmatprep.subr.mxu0 0.0
    %2631 = vmatpush2.xpose.msra.mxu0 0.0
    %2632 = vmatprep.subr.mxu0 0.0
    %2633 = vmatpush2.xpose.msra.mxu0 0.0
    %2634 = vmatprep.subr.mxu0 0.0
    %2635 = vmatpush2.xpose.msra.mxu0 0.0
    %2636 = vmatprep.subr.mxu0 0.0
    %2637 = vmatpush2.xpose.msra.mxu0 0.0
    %2638 = vmatprep.subr.mxu0 0.0
    %2639 = vmatpush2.xpose.msra.mxu0 0.0
    %2640 = vmatprep.subr.mxu0 0.0
    %2641 = vmatpush2.xpose.msra.mxu0 0.0
    %2642 = vmatprep.mubr.f32.mxu0 0.0
    %2643 = vmatmul.mubr.f32.gmra.mxu0 %v2574
    %v2644 = vpop.f32.mrf.mxu0
    %v2645 = vadd.f32 0.0, %v2644
    %v2646 = vpop.f32.mrf.mxu0
    %2647 = vdwg.mxu0
    %v2648 = vmul.f32 %v2645, 0.35355338
    %v2649 = vsel %vm443, -1e+09, %v2648
    %v2650 = vsel %vm361, %v2649, -inf
    %2651 = vmax.xlane.f32.xlu0 %v2650
    %v2652 = vpop.xlane.xlu0 %2651
    %v2653 = vsub.f32 %v2649, %v2652
    %v2654 = vmul.f32 %v2653, 1.442695
    %v2655 = vpow.pop %v2654
    %v2656 = vsel %vm361, %v2655, 0.0
    %2657 = vadd.xlane.f32.xlu0 %v2656
    %v2658 = vpop.xlane.xlu0 %2657
    %v2659 = vrcp.pop %v2658
    %v2660 = vmul.f32 %v2655, %v2659
    %s2661 = scalar_lea.vmem %s21, 80
    %2662 = vst.msk [vmem:[%s2661] sm:$0xff] %vm361, %v2660
    %2663 = vrot.lane.b32.xlu0 %v2219, 48
    %v2664 = vpop.permute.xlu0 %2663
    %v2667 = vsel %vm361, %v2660, 0
    %2669 = vmatprep.subr.mxu0 0.0
    %2670 = vmatpush1.msra.mxu0 0.0
    %2671 = vmatprep.subr.mxu0 0.0
    %2672 = vmatpush1.msra.mxu0 0.0
    %2673 = vmatprep.subr.mxu0 0.0
    %2674 = vmatpush1.msra.mxu0 0.0
    %2675 = vmatprep.subr.mxu0 0.0
    %2676 = vmatpush1.msra.mxu0 0.0
    %2677 = vmatprep.subr.mxu0 0.0
    %2678 = vmatpush1.msra.mxu0 0.0
    %2679 = vmatprep.subr.mxu0 0.0
    %2680 = vmatpush1.msra.mxu0 0.0
    %2681 = vmatprep.subr.mxu0 0.0
    %2682 = vmatpush1.msra.mxu0 0.0
    %2683 = vmatprep.subr.mxu0 0.0
    %2684 = vmatpush1.msra.mxu0 0.0
    %2685 = vmatprep.subr.mxu0 0.0
    %2686 = vmatpush1.msra.mxu0 0.0
    %2687 = vmatprep.subr.mxu0 0.0
    %2688 = vmatpush1.msra.mxu0 0.0
    %2689 = vmatprep.subr.mxu0 0.0
    %2690 = vmatpush1.msra.mxu0 0.0
    %2691 = vmatprep.subr.mxu0 0.0
    %2692 = vmatpush1.msra.mxu0 0.0
    %2693 = vmatprep.subr.mxu0 0.0
    %2694 = vmatpush1.msra.mxu0 0.0
    %2695 = vmatprep.subr.mxu0 0.0
    %2696 = vmatpush1.msra.mxu0 0.0
    %2697 = vmatprep.subr.mxu0 0.0
    %2698 = vmatpush1.msra.mxu0 0.0
    %2699 = vmatprep.subr.mxu0 0.0
    %2700 = vmatpush1.msra.mxu0 %v2664
    %2701 = vmatprep.subr.mxu0 0.0
    %2702 = vmatpush2.msra.mxu0 0.0
    %2703 = vmatprep.subr.mxu0 0.0
    %2704 = vmatpush2.msra.mxu0 0.0
    %2705 = vmatprep.subr.mxu0 0.0
    %2706 = vmatpush2.msra.mxu0 0.0
    %2707 = vmatprep.subr.mxu0 0.0
    %2708 = vmatpush2.msra.mxu0 0.0
    %2709 = vmatprep.subr.mxu0 0.0
    %2710 = vmatpush2.msra.mxu0 0.0
    %2711 = vmatprep.subr.mxu0 0.0
    %2712 = vmatpush2.msra.mxu0 0.0
    %2713 = vmatprep.subr.mxu0 0.0
    %2714 = vmatpush2.msra.mxu0 0.0
    %2715 = vmatprep.subr.mxu0 0.0
    %2716 = vmatpush2.msra.mxu0 0.0
    %2717 = vmatprep.subr.mxu0 0.0
    %2718 = vmatpush2.msra.mxu0 0.0
    %2719 = vmatprep.subr.mxu0 0.0
    %2720 = vmatpush2.msra.mxu0 0.0
    %2721 = vmatprep.subr.mxu0 0.0
    %2722 = vmatpush2.msra.mxu0 0.0
    %2723 = vmatprep.subr.mxu0 0.0
    %2724 = vmatpush2.msra.mxu0 0.0
    %2725 = vmatprep.subr.mxu0 0.0
    %2726 = vmatpush2.msra.mxu0 0.0
    %2727 = vmatprep.subr.mxu0 0.0
    %2728 = vmatpush2.msra.mxu0 0.0
    %2729 = vmatprep.subr.mxu0 0.0
    %2730 = vmatpush2.msra.mxu0 0.0
    %2731 = vmatprep.subr.mxu0 0.0
    %2732 = vmatpush2.msra.mxu0 0.0
    %2733 = vmatprep.mubr.f32.mxu0 0.0
    %2734 = vmatmul.mubr.f32.gmra.mxu0 %v2667
    %v2735 = vpop.f32.mrf.mxu0
    %v2736 = vadd.f32 0.0, %v2735
    %v2737 = vpop.f32.mrf.mxu0
    %2738 = vdwg.mxu0
    %2740 = vrot.lane.b32.xlu0 %v2736, 16
    %v2741 = vpop.permute.xlu0 %2740
    %2743 = vst.msk [vmem:[#allocation2] sm:$0xff] %vm882, %v2741
    %2744 = vrot.lane.b32.xlu0 %v2219, 104
    %v2745 = vpop.permute.xlu0 %2744
    %2746 = vrot.lane.b32.xlu0 %v2219, 72
    %v2747 = vpop.permute.xlu0 %2746
    %v2748 = vsel %vm361, %v2745, 0
    %v2750 = vsel %vm361, %v2747, 0
    %2752 = vmatprep.subr.mxu0 0.0
    %2753 = vmatpush1.xpose.msra.mxu0 0.0
    %2754 = vmatprep.subr.mxu0 0.0
    %2755 = vmatpush1.xpose.msra.mxu0 0.0
    %2756 = vmatprep.subr.mxu0 0.0
    %2757 = vmatpush1.xpose.msra.mxu0 0.0
    %2758 = vmatprep.subr.mxu0 0.0
    %2759 = vmatpush1.xpose.msra.mxu0 0.0
    %2760 = vmatprep.subr.mxu0 0.0
    %2761 = vmatpush1.xpose.msra.mxu0 0.0
    %2762 = vmatprep.subr.mxu0 0.0
    %2763 = vmatpush1.xpose.msra.mxu0 0.0
    %2764 = vmatprep.subr.mxu0 0.0
    %2765 = vmatpush1.xpose.msra.mxu0 0.0
    %2766 = vmatprep.subr.mxu0 0.0
    %2767 = vmatpush1.xpose.msra.mxu0 0.0
    %2768 = vmatprep.subr.mxu0 0.0
    %2769 = vmatpush1.xpose.msra.mxu0 0.0
    %2770 = vmatprep.subr.mxu0 0.0
    %2771 = vmatpush1.xpose.msra.mxu0 0.0
    %2772 = vmatprep.subr.mxu0 0.0
    %2773 = vmatpush1.xpose.msra.mxu0 0.0
    %2774 = vmatprep.subr.mxu0 0.0
    %2775 = vmatpush1.xpose.msra.mxu0 0.0
    %2776 = vmatprep.subr.mxu0 0.0
    %2777 = vmatpush1.xpose.msra.mxu0 0.0
    %2778 = vmatprep.subr.mxu0 0.0
    %2779 = vmatpush1.xpose.msra.mxu0 0.0
    %2780 = vmatprep.subr.mxu0 0.0
    %2781 = vmatpush1.xpose.msra.mxu0 0.0
    %2782 = vmatprep.subr.mxu0 0.0
    %2783 = vmatpush1.xpose.msra.mxu0 %v2750
    %2784 = vmatprep.subr.mxu0 0.0
    %2785 = vmatpush2.xpose.msra.mxu0 0.0
    %2786 = vmatprep.subr.mxu0 0.0
    %2787 = vmatpush2.xpose.msra.mxu0 0.0
    %2788 = vmatprep.subr.mxu0 0.0
    %2789 = vmatpush2.xpose.msra.mxu0 0.0
    %2790 = vmatprep.subr.mxu0 0.0
    %2791 = vmatpush2.xpose.msra.mxu0 0.0
    %2792 = vmatprep.subr.mxu0 0.0
    %2793 = vmatpush2.xpose.msra.mxu0 0.0
    %2794 = vmatprep.subr.mxu0 0.0
    %2795 = vmatpush2.xpose.msra.mxu0 0.0
    %2796 = vmatprep.subr.mxu0 0.0
    %2797 = vmatpush2.xpose.msra.mxu0 0.0
    %2798 = vmatprep.subr.mxu0 0.0
    %2799 = vmatpush2.xpose.msra.mxu0 0.0
    %2800 = vmatprep.subr.mxu0 0.0
    %2801 = vmatpush2.xpose.msra.mxu0 0.0
    %2802 = vmatprep.subr.mxu0 0.0
    %2803 = vmatpush2.xpose.msra.mxu0 0.0
    %2804 = vmatprep.subr.mxu0 0.0
    %2805 = vmatpush2.xpose.msra.mxu0 0.0
    %2806 = vmatprep.subr.mxu0 0.0
    %2807 = vmatpush2.xpose.msra.mxu0 0.0
    %2808 = vmatprep.subr.mxu0 0.0
    %2809 = vmatpush2.xpose.msra.mxu0 0.0
    %2810 = vmatprep.subr.mxu0 0.0
    %2811 = vmatpush2.xpose.msra.mxu0 0.0
    %2812 = vmatprep.subr.mxu0 0.0
    %2813 = vmatpush2.xpose.msra.mxu0 0.0
    %2814 = vmatprep.subr.mxu0 0.0
    %2815 = vmatpush2.xpose.msra.mxu0 0.0
    %2816 = vmatprep.mubr.f32.mxu0 0.0
    %2817 = vmatmul.mubr.f32.gmra.mxu0 %v2748
    %v2818 = vpop.f32.mrf.mxu0
    %v2819 = vadd.f32 0.0, %v2818
    %v2820 = vpop.f32.mrf.mxu0
    %2821 = vdwg.mxu0
    %v2822 = vmul.f32 %v2819, 0.35355338
    %v2823 = vsel %vm443, -1e+09, %v2822
    %v2824 = vsel %vm361, %v2823, -inf
    %2825 = vmax.xlane.f32.xlu0 %v2824
    %v2826 = vpop.xlane.xlu0 %2825
    %v2827 = vsub.f32 %v2823, %v2826
    %v2828 = vmul.f32 %v2827, 1.442695
    %v2829 = vpow.pop %v2828
    %v2830 = vsel %vm361, %v2829, 0.0
    %2831 = vadd.xlane.f32.xlu0 %v2830
    %v2832 = vpop.xlane.xlu0 %2831
    %v2833 = vrcp.pop %v2832
    %v2834 = vmul.f32 %v2829, %v2833
    %s2835 = scalar_lea.vmem %s21, 88
    %2836 = vst.msk [vmem:[%s2835] sm:$0xff] %vm361, %v2834
    %2837 = vrot.lane.b32.xlu0 %v2219, 40
    %v2838 = vpop.permute.xlu0 %2837
    %v2841 = vsel %vm361, %v2834, 0
    %2843 = vmatprep.subr.mxu0 0.0
    %2844 = vmatpush1.msra.mxu0 0.0
    %2845 = vmatprep.subr.mxu0 0.0
    %2846 = vmatpush1.msra.mxu0 0.0
    %2847 = vmatprep.subr.mxu0 0.0
    %2848 = vmatpush1.msra.mxu0 0.0
    %2849 = vmatprep.subr.mxu0 0.0
    %2850 = vmatpush1.msra.mxu0 0.0
    %2851 = vmatprep.subr.mxu0 0.0
    %2852 = vmatpush1.msra.mxu0 0.0
    %2853 = vmatprep.subr.mxu0 0.0
    %2854 = vmatpush1.msra.mxu0 0.0
    %2855 = vmatprep.subr.mxu0 0.0
    %2856 = vmatpush1.msra.mxu0 0.0
    %2857 = vmatprep.subr.mxu0 0.0
    %2858 = vmatpush1.msra.mxu0 0.0
    %2859 = vmatprep.subr.mxu0 0.0
    %2860 = vmatpush1.msra.mxu0 0.0
    %2861 = vmatprep.subr.mxu0 0.0
    %2862 = vmatpush1.msra.mxu0 0.0
    %2863 = vmatprep.subr.mxu0 0.0
    %2864 = vmatpush1.msra.mxu0 0.0
    %2865 = vmatprep.subr.mxu0 0.0
    %2866 = vmatpush1.msra.mxu0 0.0
    %2867 = vmatprep.subr.mxu0 0.0
    %2868 = vmatpush1.msra.mxu0 0.0
    %2869 = vmatprep.subr.mxu0 0.0
    %2870 = vmatpush1.msra.mxu0 0.0
    %2871 = vmatprep.subr.mxu0 0.0
    %2872 = vmatpush1.msra.mxu0 0.0
    %2873 = vmatprep.subr.mxu0 0.0
    %2874 = vmatpush1.msra.mxu0 %v2838
    %2875 = vmatprep.subr.mxu0 0.0
    %2876 = vmatpush2.msra.mxu0 0.0
    %2877 = vmatprep.subr.mxu0 0.0
    %2878 = vmatpush2.msra.mxu0 0.0
    %2879 = vmatprep.subr.mxu0 0.0
    %2880 = vmatpush2.msra.mxu0 0.0
    %2881 = vmatprep.subr.mxu0 0.0
    %2882 = vmatpush2.msra.mxu0 0.0
    %2883 = vmatprep.subr.mxu0 0.0
    %2884 = vmatpush2.msra.mxu0 0.0
    %2885 = vmatprep.subr.mxu0 0.0
    %2886 = vmatpush2.msra.mxu0 0.0
    %2887 = vmatprep.subr.mxu0 0.0
    %2888 = vmatpush2.msra.mxu0 0.0
    %2889 = vmatprep.subr.mxu0 0.0
    %2890 = vmatpush2.msra.mxu0 0.0
    %2891 = vmatprep.subr.mxu0 0.0
    %2892 = vmatpush2.msra.mxu0 0.0
    %2893 = vmatprep.subr.mxu0 0.0
    %2894 = vmatpush2.msra.mxu0 0.0
    %2895 = vmatprep.subr.mxu0 0.0
    %2896 = vmatpush2.msra.mxu0 0.0
    %2897 = vmatprep.subr.mxu0 0.0
    %2898 = vmatpush2.msra.mxu0 0.0
    %2899 = vmatprep.subr.mxu0 0.0
    %2900 = vmatpush2.msra.mxu0 0.0
    %2901 = vmatprep.subr.mxu0 0.0
    %2902 = vmatpush2.msra.mxu0 0.0
    %2903 = vmatprep.subr.mxu0 0.0
    %2904 = vmatpush2.msra.mxu0 0.0
    %2905 = vmatprep.subr.mxu0 0.0
    %2906 = vmatpush2.msra.mxu0 0.0
    %2907 = vmatprep.mubr.f32.mxu0 0.0
    %2908 = vmatmul.mubr.f32.gmra.mxu0 %v2841
    %v2909 = vpop.f32.mrf.mxu0
    %v2910 = vadd.f32 0.0, %v2909
    %v2911 = vpop.f32.mrf.mxu0
    %2912 = vdwg.mxu0
    %2914 = vrot.lane.b32.xlu0 %v2910, 24
    %v2915 = vpop.permute.xlu0 %2914
    %2917 = vst.msk [vmem:[#allocation2] sm:$0xff] %vm1057, %v2915
    %2919 = vrot.lane.b32.xlu0 %v2224, 96
    %v2920 = vpop.permute.xlu0 %2919
    %v2921 = vsel %vm361, %v2224, 0
    %v2923 = vsel %vm361, %v2920, 0
    %2925 = vmatprep.subr.mxu0 0.0
    %2926 = vmatpush1.xpose.msra.mxu0 0.0
    %2927 = vmatprep.subr.mxu0 0.0
    %2928 = vmatpush1.xpose.msra.mxu0 0.0
    %2929 = vmatprep.subr.mxu0 0.0
    %2930 = vmatpush1.xpose.msra.mxu0 0.0
    %2931 = vmatprep.subr.mxu0 0.0
    %2932 = vmatpush1.xpose.msra.mxu0 0.0
    %2933 = vmatprep.subr.mxu0 0.0
    %2934 = vmatpush1.xpose.msra.mxu0 0.0
    %2935 = vmatprep.subr.mxu0 0.0
    %2936 = vmatpush1.xpose.msra.mxu0 0.0
    %2937 = vmatprep.subr.mxu0 0.0
    %2938 = vmatpush1.xpose.msra.mxu0 0.0
    %2939 = vmatprep.subr.mxu0 0.0
    %2940 = vmatpush1.xpose.msra.mxu0 0.0
    %2941 = vmatprep.subr.mxu0 0.0
    %2942 = vmatpush1.xpose.msra.mxu0 0.0
    %2943 = vmatprep.subr.mxu0 0.0
    %2944 = vmatpush1.xpose.msra.mxu0 0.0
    %2945 = vmatprep.subr.mxu0 0.0
    %2946 = vmatpush1.xpose.msra.mxu0 0.0
    %2947 = vmatprep.subr.mxu0 0.0
    %2948 = vmatpush1.xpose.msra.mxu0 0.0
    %2949 = vmatprep.subr.mxu0 0.0
    %2950 = vmatpush1.xpose.msra.mxu0 0.0
    %2951 = vmatprep.subr.mxu0 0.0
    %2952 = vmatpush1.xpose.msra.mxu0 0.0
    %2953 = vmatprep.subr.mxu0 0.0
    %2954 = vmatpush1.xpose.msra.mxu0 0.0
    %2955 = vmatprep.subr.mxu0 0.0
    %2956 = vmatpush1.xpose.msra.mxu0 %v2923
    %2957 = vmatprep.subr.mxu0 0.0
    %2958 = vmatpush2.xpose.msra.mxu0 0.0
    %2959 = vmatprep.subr.mxu0 0.0
    %2960 = vmatpush2.xpose.msra.mxu0 0.0
    %2961 = vmatprep.subr.mxu0 0.0
    %2962 = vmatpush2.xpose.msra.mxu0 0.0
    %2963 = vmatprep.subr.mxu0 0.0
    %2964 = vmatpush2.xpose.msra.mxu0 0.0
    %2965 = vmatprep.subr.mxu0 0.0
    %2966 = vmatpush2.xpose.msra.mxu0 0.0
    %2967 = vmatprep.subr.mxu0 0.0
    %2968 = vmatpush2.xpose.msra.mxu0 0.0
    %2969 = vmatprep.subr.mxu0 0.0
    %2970 = vmatpush2.xpose.msra.mxu0 0.0
    %2971 = vmatprep.subr.mxu0 0.0
    %2972 = vmatpush2.xpose.msra.mxu0 0.0
    %2973 = vmatprep.subr.mxu0 0.0
    %2974 = vmatpush2.xpose.msra.mxu0 0.0
    %2975 = vmatprep.subr.mxu0 0.0
    %2976 = vmatpush2.xpose.msra.mxu0 0.0
    %2977 = vmatprep.subr.mxu0 0.0
    %2978 = vmatpush2.xpose.msra.mxu0 0.0
    %2979 = vmatprep.subr.mxu0 0.0
    %2980 = vmatpush2.xpose.msra.mxu0 0.0
    %2981 = vmatprep.subr.mxu0 0.0
    %2982 = vmatpush2.xpose.msra.mxu0 0.0
    %2983 = vmatprep.subr.mxu0 0.0
    %2984 = vmatpush2.xpose.msra.mxu0 0.0
    %2985 = vmatprep.subr.mxu0 0.0
    %2986 = vmatpush2.xpose.msra.mxu0 0.0
    %2987 = vmatprep.subr.mxu0 0.0
    %2988 = vmatpush2.xpose.msra.mxu0 0.0
    %2989 = vmatprep.mubr.f32.mxu0 0.0
    %2990 = vmatmul.mubr.f32.gmra.mxu0 %v2921
    %v2991 = vpop.f32.mrf.mxu0
    %v2992 = vadd.f32 0.0, %v2991
    %v2993 = vpop.f32.mrf.mxu0
    %2994 = vdwg.mxu0
    %v2995 = vmul.f32 %v2992, 0.35355338
    %v2996 = vsel %vm1141, -1e+09, %v2995
    %v2997 = vsel %vm361, %v2996, -inf
    %2998 = vmax.xlane.f32.xlu0 %v2997
    %v2999 = vpop.xlane.xlu0 %2998
    %v3000 = vsub.f32 %v2996, %v2999
    %v3001 = vmul.f32 %v3000, 1.442695
    %v3002 = vpow.pop %v3001
    %v3003 = vsel %vm361, %v3002, 0.0
    %3004 = vadd.xlane.f32.xlu0 %v3003
    %v3005 = vpop.xlane.xlu0 %3004
    %v3006 = vrcp.pop %v3005
    %v3007 = vmul.f32 %v3002, %v3006
    %s3008 = scalar_lea.vmem %s21, 96
    %3009 = vst.msk [vmem:[%s3008] sm:$0xff] %vm361, %v3007
    %3010 = vrot.lane.b32.xlu0 %v2224, 64
    %v3011 = vpop.permute.xlu0 %3010
    %v3014 = vsel %vm361, %v3007, 0
    %3016 = vmatprep.subr.mxu0 0.0
    %3017 = vmatpush1.msra.mxu0 0.0
    %3018 = vmatprep.subr.mxu0 0.0
    %3019 = vmatpush1.msra.mxu0 0.0
    %3020 = vmatprep.subr.mxu0 0.0
    %3021 = vmatpush1.msra.mxu0 0.0
    %3022 = vmatprep.subr.mxu0 0.0
    %3023 = vmatpush1.msra.mxu0 0.0
    %3024 = vmatprep.subr.mxu0 0.0
    %3025 = vmatpush1.msra.mxu0 0.0
    %3026 = vmatprep.subr.mxu0 0.0
    %3027 = vmatpush1.msra.mxu0 0.0
    %3028 = vmatprep.subr.mxu0 0.0
    %3029 = vmatpush1.msra.mxu0 0.0
    %3030 = vmatprep.subr.mxu0 0.0
    %3031 = vmatpush1.msra.mxu0 0.0
    %3032 = vmatprep.subr.mxu0 0.0
    %3033 = vmatpush1.msra.mxu0 0.0
    %3034 = vmatprep.subr.mxu0 0.0
    %3035 = vmatpush1.msra.mxu0 0.0
    %3036 = vmatprep.subr.mxu0 0.0
    %3037 = vmatpush1.msra.mxu0 0.0
    %3038 = vmatprep.subr.mxu0 0.0
    %3039 = vmatpush1.msra.mxu0 0.0
    %3040 = vmatprep.subr.mxu0 0.0
    %3041 = vmatpush1.msra.mxu0 0.0
    %3042 = vmatprep.subr.mxu0 0.0
    %3043 = vmatpush1.msra.mxu0 0.0
    %3044 = vmatprep.subr.mxu0 0.0
    %3045 = vmatpush1.msra.mxu0 0.0
    %3046 = vmatprep.subr.mxu0 0.0
    %3047 = vmatpush1.msra.mxu0 %v3011
    %3048 = vmatprep.subr.mxu0 0.0
    %3049 = vmatpush2.msra.mxu0 0.0
    %3050 = vmatprep.subr.mxu0 0.0
    %3051 = vmatpush2.msra.mxu0 0.0
    %3052 = vmatprep.subr.mxu0 0.0
    %3053 = vmatpush2.msra.mxu0 0.0
    %3054 = vmatprep.subr.mxu0 0.0
    %3055 = vmatpush2.msra.mxu0 0.0
    %3056 = vmatprep.subr.mxu0 0.0
    %3057 = vmatpush2.msra.mxu0 0.0
    %3058 = vmatprep.subr.mxu0 0.0
    %3059 = vmatpush2.msra.mxu0 0.0
    %3060 = vmatprep.subr.mxu0 0.0
    %3061 = vmatpush2.msra.mxu0 0.0
    %3062 = vmatprep.subr.mxu0 0.0
    %3063 = vmatpush2.msra.mxu0 0.0
    %3064 = vmatprep.subr.mxu0 0.0
    %3065 = vmatpush2.msra.mxu0 0.0
    %3066 = vmatprep.subr.mxu0 0.0
    %3067 = vmatpush2.msra.mxu0 0.0
    %3068 = vmatprep.subr.mxu0 0.0
    %3069 = vmatpush2.msra.mxu0 0.0
    %3070 = vmatprep.subr.mxu0 0.0
    %3071 = vmatpush2.msra.mxu0 0.0
    %3072 = vmatprep.subr.mxu0 0.0
    %3073 = vmatpush2.msra.mxu0 0.0
    %3074 = vmatprep.subr.mxu0 0.0
    %3075 = vmatpush2.msra.mxu0 0.0
    %3076 = vmatprep.subr.mxu0 0.0
    %3077 = vmatpush2.msra.mxu0 0.0
    %3078 = vmatprep.subr.mxu0 0.0
    %3079 = vmatpush2.msra.mxu0 0.0
    %3080 = vmatprep.mubr.f32.mxu0 0.0
    %3081 = vmatmul.mubr.f32.gmra.mxu0 %v3014
    %v3082 = vpop.f32.mrf.mxu0
    %v3083 = vadd.f32 0.0, %v3082
    %v3084 = vpop.f32.mrf.mxu0
    %3085 = vdwg.mxu0
    %3086 = vst.msk [vmem:[#allocation2 + $0x8] sm:$0xff] %vm361, %v3083
    %3087 = vrot.lane.b32.xlu0 %v2224, 120
    %v3088 = vpop.permute.xlu0 %3087
    %3089 = vrot.lane.b32.xlu0 %v2224, 88
    %v3090 = vpop.permute.xlu0 %3089
    %v3091 = vsel %vm361, %v3088, 0
    %v3093 = vsel %vm361, %v3090, 0
    %3095 = vmatprep.subr.mxu0 0.0
    %3096 = vmatpush1.xpose.msra.mxu0 0.0
    %3097 = vmatprep.subr.mxu0 0.0
    %3098 = vmatpush1.xpose.msra.mxu0 0.0
    %3099 = vmatprep.subr.mxu0 0.0
    %3100 = vmatpush1.xpose.msra.mxu0 0.0
    %3101 = vmatprep.subr.mxu0 0.0
    %3102 = vmatpush1.xpose.msra.mxu0 0.0
    %3103 = vmatprep.subr.mxu0 0.0
    %3104 = vmatpush1.xpose.msra.mxu0 0.0
    %3105 = vmatprep.subr.mxu0 0.0
    %3106 = vmatpush1.xpose.msra.mxu0 0.0
    %3107 = vmatprep.subr.mxu0 0.0
    %3108 = vmatpush1.xpose.msra.mxu0 0.0
    %3109 = vmatprep.subr.mxu0 0.0
    %3110 = vmatpush1.xpose.msra.mxu0 0.0
    %3111 = vmatprep.subr.mxu0 0.0
    %3112 = vmatpush1.xpose.msra.mxu0 0.0
    %3113 = vmatprep.subr.mxu0 0.0
    %3114 = vmatpush1.xpose.msra.mxu0 0.0
    %3115 = vmatprep.subr.mxu0 0.0
    %3116 = vmatpush1.xpose.msra.mxu0 0.0
    %3117 = vmatprep.subr.mxu0 0.0
    %3118 = vmatpush1.xpose.msra.mxu0 0.0
    %3119 = vmatprep.subr.mxu0 0.0
    %3120 = vmatpush1.xpose.msra.mxu0 0.0
    %3121 = vmatprep.subr.mxu0 0.0
    %3122 = vmatpush1.xpose.msra.mxu0 0.0
    %3123 = vmatprep.subr.mxu0 0.0
    %3124 = vmatpush1.xpose.msra.mxu0 0.0
    %3125 = vmatprep.subr.mxu0 0.0
    %3126 = vmatpush1.xpose.msra.mxu0 %v3093
    %3127 = vmatprep.subr.mxu0 0.0
    %3128 = vmatpush2.xpose.msra.mxu0 0.0
    %3129 = vmatprep.subr.mxu0 0.0
    %3130 = vmatpush2.xpose.msra.mxu0 0.0
    %3131 = vmatprep.subr.mxu0 0.0
    %3132 = vmatpush2.xpose.msra.mxu0 0.0
    %3133 = vmatprep.subr.mxu0 0.0
    %3134 = vmatpush2.xpose.msra.mxu0 0.0
    %3135 = vmatprep.subr.mxu0 0.0
    %3136 = vmatpush2.xpose.msra.mxu0 0.0
    %3137 = vmatprep.subr.mxu0 0.0
    %3138 = vmatpush2.xpose.msra.mxu0 0.0
    %3139 = vmatprep.subr.mxu0 0.0
    %3140 = vmatpush2.xpose.msra.mxu0 0.0
    %3141 = vmatprep.subr.mxu0 0.0
    %3142 = vmatpush2.xpose.msra.mxu0 0.0
    %3143 = vmatprep.subr.mxu0 0.0
    %3144 = vmatpush2.xpose.msra.mxu0 0.0
    %3145 = vmatprep.subr.mxu0 0.0
    %3146 = vmatpush2.xpose.msra.mxu0 0.0
    %3147 = vmatprep.subr.mxu0 0.0
    %3148 = vmatpush2.xpose.msra.mxu0 0.0
    %3149 = vmatprep.subr.mxu0 0.0
    %3150 = vmatpush2.xpose.msra.mxu0 0.0
    %3151 = vmatprep.subr.mxu0 0.0
    %3152 = vmatpush2.xpose.msra.mxu0 0.0
    %3153 = vmatprep.subr.mxu0 0.0
    %3154 = vmatpush2.xpose.msra.mxu0 0.0
    %3155 = vmatprep.subr.mxu0 0.0
    %3156 = vmatpush2.xpose.msra.mxu0 0.0
    %3157 = vmatprep.subr.mxu0 0.0
    %3158 = vmatpush2.xpose.msra.mxu0 0.0
    %3159 = vmatprep.mubr.f32.mxu0 0.0
    %3160 = vmatmul.mubr.f32.gmra.mxu0 %v3091
    %v3161 = vpop.f32.mrf.mxu0
    %v3162 = vadd.f32 0.0, %v3161
    %v3163 = vpop.f32.mrf.mxu0
    %3164 = vdwg.mxu0
    %v3165 = vmul.f32 %v3162, 0.35355338
    %v3166 = vsel %vm1141, -1e+09, %v3165
    %v3167 = vsel %vm361, %v3166, -inf
    %3168 = vmax.xlane.f32.xlu0 %v3167
    %v3169 = vpop.xlane.xlu0 %3168
    %v3170 = vsub.f32 %v3166, %v3169
    %v3171 = vmul.f32 %v3170, 1.442695
    %v3172 = vpow.pop %v3171
    %v3173 = vsel %vm361, %v3172, 0.0
    %3174 = vadd.xlane.f32.xlu0 %v3173
    %v3175 = vpop.xlane.xlu0 %3174
    %v3176 = vrcp.pop %v3175
    %v3177 = vmul.f32 %v3172, %v3176
    %s3178 = scalar_lea.vmem %s21, 104
    %3179 = vst.msk [vmem:[%s3178] sm:$0xff] %vm361, %v3177
    %3180 = vrot.lane.b32.xlu0 %v2224, 56
    %v3181 = vpop.permute.xlu0 %3180
    %v3184 = vsel %vm361, %v3177, 0
    %3186 = vmatprep.subr.mxu0 0.0
    %3187 = vmatpush1.msra.mxu0 0.0
    %3188 = vmatprep.subr.mxu0 0.0
    %3189 = vmatpush1.msra.mxu0 0.0
    %3190 = vmatprep.subr.mxu0 0.0
    %3191 = vmatpush1.msra.mxu0 0.0
    %3192 = vmatprep.subr.mxu0 0.0
    %3193 = vmatpush1.msra.mxu0 0.0
    %3194 = vmatprep.subr.mxu0 0.0
    %3195 = vmatpush1.msra.mxu0 0.0
    %3196 = vmatprep.subr.mxu0 0.0
    %3197 = vmatpush1.msra.mxu0 0.0
    %3198 = vmatprep.subr.mxu0 0.0
    %3199 = vmatpush1.msra.mxu0 0.0
    %3200 = vmatprep.subr.mxu0 0.0
    %3201 = vmatpush1.msra.mxu0 0.0
    %3202 = vmatprep.subr.mxu0 0.0
    %3203 = vmatpush1.msra.mxu0 0.0
    %3204 = vmatprep.subr.mxu0 0.0
    %3205 = vmatpush1.msra.mxu0 0.0
    %3206 = vmatprep.subr.mxu0 0.0
    %3207 = vmatpush1.msra.mxu0 0.0
    %3208 = vmatprep.subr.mxu0 0.0
    %3209 = vmatpush1.msra.mxu0 0.0
    %3210 = vmatprep.subr.mxu0 0.0
    %3211 = vmatpush1.msra.mxu0 0.0
    %3212 = vmatprep.subr.mxu0 0.0
    %3213 = vmatpush1.msra.mxu0 0.0
    %3214 = vmatprep.subr.mxu0 0.0
    %3215 = vmatpush1.msra.mxu0 0.0
    %3216 = vmatprep.subr.mxu0 0.0
    %3217 = vmatpush1.msra.mxu0 %v3181
    %3218 = vmatprep.subr.mxu0 0.0
    %3219 = vmatpush2.msra.mxu0 0.0
    %3220 = vmatprep.subr.mxu0 0.0
    %3221 = vmatpush2.msra.mxu0 0.0
    %3222 = vmatprep.subr.mxu0 0.0
    %3223 = vmatpush2.msra.mxu0 0.0
    %3224 = vmatprep.subr.mxu0 0.0
    %3225 = vmatpush2.msra.mxu0 0.0
    %3226 = vmatprep.subr.mxu0 0.0
    %3227 = vmatpush2.msra.mxu0 0.0
    %3228 = vmatprep.subr.mxu0 0.0
    %3229 = vmatpush2.msra.mxu0 0.0
    %3230 = vmatprep.subr.mxu0 0.0
    %3231 = vmatpush2.msra.mxu0 0.0
    %3232 = vmatprep.subr.mxu0 0.0
    %3233 = vmatpush2.msra.mxu0 0.0
    %3234 = vmatprep.subr.mxu0 0.0
    %3235 = vmatpush2.msra.mxu0 0.0
    %3236 = vmatprep.subr.mxu0 0.0
    %3237 = vmatpush2.msra.mxu0 0.0
    %3238 = vmatprep.subr.mxu0 0.0
    %3239 = vmatpush2.msra.mxu0 0.0
    %3240 = vmatprep.subr.mxu0 0.0
    %3241 = vmatpush2.msra.mxu0 0.0
    %3242 = vmatprep.subr.mxu0 0.0
    %3243 = vmatpush2.msra.mxu0 0.0
    %3244 = vmatprep.subr.mxu0 0.0
    %3245 = vmatpush2.msra.mxu0 0.0
    %3246 = vmatprep.subr.mxu0 0.0
    %3247 = vmatpush2.msra.mxu0 0.0
    %3248 = vmatprep.subr.mxu0 0.0
    %3249 = vmatpush2.msra.mxu0 0.0
    %3250 = vmatprep.mubr.f32.mxu0 0.0
    %3251 = vmatmul.mubr.f32.gmra.mxu0 %v3184
    %v3252 = vpop.f32.mrf.mxu0
    %v3253 = vadd.f32 0.0, %v3252
    %v3254 = vpop.f32.mrf.mxu0
    %3255 = vdwg.mxu0
    %3257 = vrot.lane.b32.xlu0 %v3253, 8
    %v3258 = vpop.permute.xlu0 %3257
    %3260 = vst.msk [vmem:[#allocation2 + $0x8] sm:$0xff] %vm707, %v3258
    %3261 = vrot.lane.b32.xlu0 %v2224, 112
    %v3262 = vpop.permute.xlu0 %3261
    %3263 = vrot.lane.b32.xlu0 %v2224, 80
    %v3264 = vpop.permute.xlu0 %3263
    %v3265 = vsel %vm361, %v3262, 0
    %v3267 = vsel %vm361, %v3264, 0
    %3269 = vmatprep.subr.mxu0 0.0
    %3270 = vmatpush1.xpose.msra.mxu0 0.0
    %3271 = vmatprep.subr.mxu0 0.0
    %3272 = vmatpush1.xpose.msra.mxu0 0.0
    %3273 = vmatprep.subr.mxu0 0.0
    %3274 = vmatpush1.xpose.msra.mxu0 0.0
    %3275 = vmatprep.subr.mxu0 0.0
    %3276 = vmatpush1.xpose.msra.mxu0 0.0
    %3277 = vmatprep.subr.mxu0 0.0
    %3278 = vmatpush1.xpose.msra.mxu0 0.0
    %3279 = vmatprep.subr.mxu0 0.0
    %3280 = vmatpush1.xpose.msra.mxu0 0.0
    %3281 = vmatprep.subr.mxu0 0.0
    %3282 = vmatpush1.xpose.msra.mxu0 0.0
    %3283 = vmatprep.subr.mxu0 0.0
    %3284 = vmatpush1.xpose.msra.mxu0 0.0
    %3285 = vmatprep.subr.mxu0 0.0
    %3286 = vmatpush1.xpose.msra.mxu0 0.0
    %3287 = vmatprep.subr.mxu0 0.0
    %3288 = vmatpush1.xpose.msra.mxu0 0.0
    %3289 = vmatprep.subr.mxu0 0.0
    %3290 = vmatpush1.xpose.msra.mxu0 0.0
    %3291 = vmatprep.subr.mxu0 0.0
    %3292 = vmatpush1.xpose.msra.mxu0 0.0
    %3293 = vmatprep.subr.mxu0 0.0
    %3294 = vmatpush1.xpose.msra.mxu0 0.0
    %3295 = vmatprep.subr.mxu0 0.0
    %3296 = vmatpush1.xpose.msra.mxu0 0.0
    %3297 = vmatprep.subr.mxu0 0.0
    %3298 = vmatpush1.xpose.msra.mxu0 0.0
    %3299 = vmatprep.subr.mxu0 0.0
    %3300 = vmatpush1.xpose.msra.mxu0 %v3267
    %3301 = vmatprep.subr.mxu0 0.0
    %3302 = vmatpush2.xpose.msra.mxu0 0.0
    %3303 = vmatprep.subr.mxu0 0.0
    %3304 = vmatpush2.xpose.msra.mxu0 0.0
    %3305 = vmatprep.subr.mxu0 0.0
    %3306 = vmatpush2.xpose.msra.mxu0 0.0
    %3307 = vmatprep.subr.mxu0 0.0
    %3308 = vmatpush2.xpose.msra.mxu0 0.0
    %3309 = vmatprep.subr.mxu0 0.0
    %3310 = vmatpush2.xpose.msra.mxu0 0.0
    %3311 = vmatprep.subr.mxu0 0.0
    %3312 = vmatpush2.xpose.msra.mxu0 0.0
    %3313 = vmatprep.subr.mxu0 0.0
    %3314 = vmatpush2.xpose.msra.mxu0 0.0
    %3315 = vmatprep.subr.mxu0 0.0
    %3316 = vmatpush2.xpose.msra.mxu0 0.0
    %3317 = vmatprep.subr.mxu0 0.0
    %3318 = vmatpush2.xpose.msra.mxu0 0.0
    %3319 = vmatprep.subr.mxu0 0.0
    %3320 = vmatpush2.xpose.msra.mxu0 0.0
    %3321 = vmatprep.subr.mxu0 0.0
    %3322 = vmatpush2.xpose.msra.mxu0 0.0
    %3323 = vmatprep.subr.mxu0 0.0
    %3324 = vmatpush2.xpose.msra.mxu0 0.0
    %3325 = vmatprep.subr.mxu0 0.0
    %3326 = vmatpush2.xpose.msra.mxu0 0.0
    %3327 = vmatprep.subr.mxu0 0.0
    %3328 = vmatpush2.xpose.msra.mxu0 0.0
    %3329 = vmatprep.subr.mxu0 0.0
    %3330 = vmatpush2.xpose.msra.mxu0 0.0
    %3331 = vmatprep.subr.mxu0 0.0
    %3332 = vmatpush2.xpose.msra.mxu0 0.0
    %3333 = vmatprep.mubr.f32.mxu0 0.0
    %3334 = vmatmul.mubr.f32.gmra.mxu0 %v3265
    %v3335 = vpop.f32.mrf.mxu0
    %v3336 = vadd.f32 0.0, %v3335
    %v3337 = vpop.f32.mrf.mxu0
    %3338 = vdwg.mxu0
    %v3339 = vmul.f32 %v3336, 0.35355338
    %v3340 = vsel %vm1141, -1e+09, %v3339
    %v3341 = vsel %vm361, %v3340, -inf
    %3342 = vmax.xlane.f32.xlu0 %v3341
    %v3343 = vpop.xlane.xlu0 %3342
    %v3344 = vsub.f32 %v3340, %v3343
    %v3345 = vmul.f32 %v3344, 1.442695
    %v3346 = vpow.pop %v3345
    %v3347 = vsel %vm361, %v3346, 0.0
    %3348 = vadd.xlane.f32.xlu0 %v3347
    %v3349 = vpop.xlane.xlu0 %3348
    %v3350 = vrcp.pop %v3349
    %v3351 = vmul.f32 %v3346, %v3350
    %s3352 = scalar_lea.vmem %s21, 112
    %3353 = vst.msk [vmem:[%s3352] sm:$0xff] %vm361, %v3351
    %3354 = vrot.lane.b32.xlu0 %v2224, 48
    %v3355 = vpop.permute.xlu0 %3354
    %v3358 = vsel %vm361, %v3351, 0
    %3360 = vmatprep.subr.mxu0 0.0
    %3361 = vmatpush1.msra.mxu0 0.0
    %3362 = vmatprep.subr.mxu0 0.0
    %3363 = vmatpush1.msra.mxu0 0.0
    %3364 = vmatprep.subr.mxu0 0.0
    %3365 = vmatpush1.msra.mxu0 0.0
    %3366 = vmatprep.subr.mxu0 0.0
    %3367 = vmatpush1.msra.mxu0 0.0
    %3368 = vmatprep.subr.mxu0 0.0
    %3369 = vmatpush1.msra.mxu0 0.0
    %3370 = vmatprep.subr.mxu0 0.0
    %3371 = vmatpush1.msra.mxu0 0.0
    %3372 = vmatprep.subr.mxu0 0.0
    %3373 = vmatpush1.msra.mxu0 0.0
    %3374 = vmatprep.subr.mxu0 0.0
    %3375 = vmatpush1.msra.mxu0 0.0
    %3376 = vmatprep.subr.mxu0 0.0
    %3377 = vmatpush1.msra.mxu0 0.0
    %3378 = vmatprep.subr.mxu0 0.0
    %3379 = vmatpush1.msra.mxu0 0.0
    %3380 = vmatprep.subr.mxu0 0.0
    %3381 = vmatpush1.msra.mxu0 0.0
    %3382 = vmatprep.subr.mxu0 0.0
    %3383 = vmatpush1.msra.mxu0 0.0
    %3384 = vmatprep.subr.mxu0 0.0
    %3385 = vmatpush1.msra.mxu0 0.0
    %3386 = vmatprep.subr.mxu0 0.0
    %3387 = vmatpush1.msra.mxu0 0.0
    %3388 = vmatprep.subr.mxu0 0.0
    %3389 = vmatpush1.msra.mxu0 0.0
    %3390 = vmatprep.subr.mxu0 0.0
    %3391 = vmatpush1.msra.mxu0 %v3355
    %3392 = vmatprep.subr.mxu0 0.0
    %3393 = vmatpush2.msra.mxu0 0.0
    %3394 = vmatprep.subr.mxu0 0.0
    %3395 = vmatpush2.msra.mxu0 0.0
    %3396 = vmatprep.subr.mxu0 0.0
    %3397 = vmatpush2.msra.mxu0 0.0
    %3398 = vmatprep.subr.mxu0 0.0
    %3399 = vmatpush2.msra.mxu0 0.0
    %3400 = vmatprep.subr.mxu0 0.0
    %3401 = vmatpush2.msra.mxu0 0.0
    %3402 = vmatprep.subr.mxu0 0.0
    %3403 = vmatpush2.msra.mxu0 0.0
    %3404 = vmatprep.subr.mxu0 0.0
    %3405 = vmatpush2.msra.mxu0 0.0
    %3406 = vmatprep.subr.mxu0 0.0
    %3407 = vmatpush2.msra.mxu0 0.0
    %3408 = vmatprep.subr.mxu0 0.0
    %3409 = vmatpush2.msra.mxu0 0.0
    %3410 = vmatprep.subr.mxu0 0.0
    %3411 = vmatpush2.msra.mxu0 0.0
    %3412 = vmatprep.subr.mxu0 0.0
    %3413 = vmatpush2.msra.mxu0 0.0
    %3414 = vmatprep.subr.mxu0 0.0
    %3415 = vmatpush2.msra.mxu0 0.0
    %3416 = vmatprep.subr.mxu0 0.0
    %3417 = vmatpush2.msra.mxu0 0.0
    %3418 = vmatprep.subr.mxu0 0.0
    %3419 = vmatpush2.msra.mxu0 0.0
    %3420 = vmatprep.subr.mxu0 0.0
    %3421 = vmatpush2.msra.mxu0 0.0
    %3422 = vmatprep.subr.mxu0 0.0
    %3423 = vmatpush2.msra.mxu0 0.0
    %3424 = vmatprep.mubr.f32.mxu0 0.0
    %3425 = vmatmul.mubr.f32.gmra.mxu0 %v3358
    %v3426 = vpop.f32.mrf.mxu0
    %v3427 = vadd.f32 0.0, %v3426
    %v3428 = vpop.f32.mrf.mxu0
    %3429 = vdwg.mxu0
    %3431 = vrot.lane.b32.xlu0 %v3427, 16
    %v3432 = vpop.permute.xlu0 %3431
    %3434 = vst.msk [vmem:[#allocation2 + $0x8] sm:$0xff] %vm882, %v3432
    %3435 = vrot.lane.b32.xlu0 %v2224, 104
    %v3436 = vpop.permute.xlu0 %3435
    %3437 = vrot.lane.b32.xlu0 %v2224, 72
    %v3438 = vpop.permute.xlu0 %3437
    %v3439 = vsel %vm361, %v3436, 0
    %v3441 = vsel %vm361, %v3438, 0
    %3443 = vmatprep.subr.mxu0 0.0
    %3444 = vmatpush1.xpose.msra.mxu0 0.0
    %3445 = vmatprep.subr.mxu0 0.0
    %3446 = vmatpush1.xpose.msra.mxu0 0.0
    %3447 = vmatprep.subr.mxu0 0.0
    %3448 = vmatpush1.xpose.msra.mxu0 0.0
    %3449 = vmatprep.subr.mxu0 0.0
    %3450 = vmatpush1.xpose.msra.mxu0 0.0
    %3451 = vmatprep.subr.mxu0 0.0
    %3452 = vmatpush1.xpose.msra.mxu0 0.0
    %3453 = vmatprep.subr.mxu0 0.0
    %3454 = vmatpush1.xpose.msra.mxu0 0.0
    %3455 = vmatprep.subr.mxu0 0.0
    %3456 = vmatpush1.xpose.msra.mxu0 0.0
    %3457 = vmatprep.subr.mxu0 0.0
    %3458 = vmatpush1.xpose.msra.mxu0 0.0
    %3459 = vmatprep.subr.mxu0 0.0
    %3460 = vmatpush1.xpose.msra.mxu0 0.0
    %3461 = vmatprep.subr.mxu0 0.0
    %3462 = vmatpush1.xpose.msra.mxu0 0.0
    %3463 = vmatprep.subr.mxu0 0.0
    %3464 = vmatpush1.xpose.msra.mxu0 0.0
    %3465 = vmatprep.subr.mxu0 0.0
    %3466 = vmatpush1.xpose.msra.mxu0 0.0
    %3467 = vmatprep.subr.mxu0 0.0
    %3468 = vmatpush1.xpose.msra.mxu0 0.0
    %3469 = vmatprep.subr.mxu0 0.0
    %3470 = vmatpush1.xpose.msra.mxu0 0.0
    %3471 = vmatprep.subr.mxu0 0.0
    %3472 = vmatpush1.xpose.msra.mxu0 0.0
    %3473 = vmatprep.subr.mxu0 0.0
    %3474 = vmatpush1.xpose.msra.mxu0 %v3441
    %3475 = vmatprep.subr.mxu0 0.0
    %3476 = vmatpush2.xpose.msra.mxu0 0.0
    %3477 = vmatprep.subr.mxu0 0.0
    %3478 = vmatpush2.xpose.msra.mxu0 0.0
    %3479 = vmatprep.subr.mxu0 0.0
    %3480 = vmatpush2.xpose.msra.mxu0 0.0
    %3481 = vmatprep.subr.mxu0 0.0
    %3482 = vmatpush2.xpose.msra.mxu0 0.0
    %3483 = vmatprep.subr.mxu0 0.0
    %3484 = vmatpush2.xpose.msra.mxu0 0.0
    %3485 = vmatprep.subr.mxu0 0.0
    %3486 = vmatpush2.xpose.msra.mxu0 0.0
    %3487 = vmatprep.subr.mxu0 0.0
    %3488 = vmatpush2.xpose.msra.mxu0 0.0
    %3489 = vmatprep.subr.mxu0 0.0
    %3490 = vmatpush2.xpose.msra.mxu0 0.0
    %3491 = vmatprep.subr.mxu0 0.0
    %3492 = vmatpush2.xpose.msra.mxu0 0.0
    %3493 = vmatprep.subr.mxu0 0.0
    %3494 = vmatpush2.xpose.msra.mxu0 0.0
    %3495 = vmatprep.subr.mxu0 0.0
    %3496 = vmatpush2.xpose.msra.mxu0 0.0
    %3497 = vmatprep.subr.mxu0 0.0
    %3498 = vmatpush2.xpose.msra.mxu0 0.0
    %3499 = vmatprep.subr.mxu0 0.0
    %3500 = vmatpush2.xpose.msra.mxu0 0.0
    %3501 = vmatprep.subr.mxu0 0.0
    %3502 = vmatpush2.xpose.msra.mxu0 0.0
    %3503 = vmatprep.subr.mxu0 0.0
    %3504 = vmatpush2.xpose.msra.mxu0 0.0
    %3505 = vmatprep.subr.mxu0 0.0
    %3506 = vmatpush2.xpose.msra.mxu0 0.0
    %3507 = vmatprep.mubr.f32.mxu0 0.0
    %3508 = vmatmul.mubr.f32.gmra.mxu0 %v3439
    %v3509 = vpop.f32.mrf.mxu0
    %v3510 = vadd.f32 0.0, %v3509
    %v3511 = vpop.f32.mrf.mxu0
    %3512 = vdwg.mxu0
    %v3513 = vmul.f32 %v3510, 0.35355338
    %v3514 = vsel %vm1141, -1e+09, %v3513
    %v3515 = vsel %vm361, %v3514, -inf
    %3516 = vmax.xlane.f32.xlu0 %v3515
    %v3517 = vpop.xlane.xlu0 %3516
    %v3518 = vsub.f32 %v3514, %v3517
    %v3519 = vmul.f32 %v3518, 1.442695
    %v3520 = vpow.pop %v3519
    %v3521 = vsel %vm361, %v3520, 0.0
    %3522 = vadd.xlane.f32.xlu0 %v3521
    %v3523 = vpop.xlane.xlu0 %3522
    %v3524 = vrcp.pop %v3523
    %v3525 = vmul.f32 %v3520, %v3524
    %s3526 = scalar_lea.vmem %s21, 120
    %3527 = vst.msk [vmem:[%s3526] sm:$0xff] %vm361, %v3525
    %3528 = vrot.lane.b32.xlu0 %v2224, 40
    %v3529 = vpop.permute.xlu0 %3528
    %v3532 = vsel %vm361, %v3525, 0
    %3534 = vmatprep.subr.mxu0 0.0
    %3535 = vmatpush1.msra.mxu0 0.0
    %3536 = vmatprep.subr.mxu0 0.0
    %3537 = vmatpush1.msra.mxu0 0.0
    %3538 = vmatprep.subr.mxu0 0.0
    %3539 = vmatpush1.msra.mxu0 0.0
    %3540 = vmatprep.subr.mxu0 0.0
    %3541 = vmatpush1.msra.mxu0 0.0
    %3542 = vmatprep.subr.mxu0 0.0
    %3543 = vmatpush1.msra.mxu0 0.0
    %3544 = vmatprep.subr.mxu0 0.0
    %3545 = vmatpush1.msra.mxu0 0.0
    %3546 = vmatprep.subr.mxu0 0.0
    %3547 = vmatpush1.msra.mxu0 0.0
    %3548 = vmatprep.subr.mxu0 0.0
    %3549 = vmatpush1.msra.mxu0 0.0
    %3550 = vmatprep.subr.mxu0 0.0
    %3551 = vmatpush1.msra.mxu0 0.0
    %3552 = vmatprep.subr.mxu0 0.0
    %3553 = vmatpush1.msra.mxu0 0.0
    %3554 = vmatprep.subr.mxu0 0.0
    %3555 = vmatpush1.msra.mxu0 0.0
    %3556 = vmatprep.subr.mxu0 0.0
    %3557 = vmatpush1.msra.mxu0 0.0
    %3558 = vmatprep.subr.mxu0 0.0
    %3559 = vmatpush1.msra.mxu0 0.0
    %3560 = vmatprep.subr.mxu0 0.0
    %3561 = vmatpush1.msra.mxu0 0.0
    %3562 = vmatprep.subr.mxu0 0.0
    %3563 = vmatpush1.msra.mxu0 0.0
    %3564 = vmatprep.subr.mxu0 0.0
    %3565 = vmatpush1.msra.mxu0 %v3529
    %3566 = vmatprep.subr.mxu0 0.0
    %3567 = vmatpush2.msra.mxu0 0.0
    %3568 = vmatprep.subr.mxu0 0.0
    %3569 = vmatpush2.msra.mxu0 0.0
    %3570 = vmatprep.subr.mxu0 0.0
    %3571 = vmatpush2.msra.mxu0 0.0
    %3572 = vmatprep.subr.mxu0 0.0
    %3573 = vmatpush2.msra.mxu0 0.0
    %3574 = vmatprep.subr.mxu0 0.0
    %3575 = vmatpush2.msra.mxu0 0.0
    %3576 = vmatprep.subr.mxu0 0.0
    %3577 = vmatpush2.msra.mxu0 0.0
    %3578 = vmatprep.subr.mxu0 0.0
    %3579 = vmatpush2.msra.mxu0 0.0
    %3580 = vmatprep.subr.mxu0 0.0
    %3581 = vmatpush2.msra.mxu0 0.0
    %3582 = vmatprep.subr.mxu0 0.0
    %3583 = vmatpush2.msra.mxu0 0.0
    %3584 = vmatprep.subr.mxu0 0.0
    %3585 = vmatpush2.msra.mxu0 0.0
    %3586 = vmatprep.subr.mxu0 0.0
    %3587 = vmatpush2.msra.mxu0 0.0
    %3588 = vmatprep.subr.mxu0 0.0
    %3589 = vmatpush2.msra.mxu0 0.0
    %3590 = vmatprep.subr.mxu0 0.0
    %3591 = vmatpush2.msra.mxu0 0.0
    %3592 = vmatprep.subr.mxu0 0.0
    %3593 = vmatpush2.msra.mxu0 0.0
    %3594 = vmatprep.subr.mxu0 0.0
    %3595 = vmatpush2.msra.mxu0 0.0
    %3596 = vmatprep.subr.mxu0 0.0
    %3597 = vmatpush2.msra.mxu0 0.0
    %3598 = vmatprep.mubr.f32.mxu0 0.0
    %3599 = vmatmul.mubr.f32.gmra.mxu0 %v3532
    %v3600 = vpop.f32.mrf.mxu0
    %v3601 = vadd.f32 0.0, %v3600
    %v3602 = vpop.f32.mrf.mxu0
    %3603 = vdwg.mxu0
    %3605 = vrot.lane.b32.xlu0 %v3601, 24
    %v3606 = vpop.permute.xlu0 %3605
    %3608 = vst.msk [vmem:[#allocation2 + $0x8] sm:$0xff] %vm1057, %v3606
    %v3609 = vld [vmem:[#allocation2] sm:$0xff]
    %v3610 = vld [vmem:[#allocation2 + $0x8] sm:$0xff]
    %s3611 = scalar_lea.vmem [#allocation6], 32
    %v3612 = vld [vmem:[%s3611] sm:$0xff]
    %v3613 = vld [vmem:[%s3611 + $0x8] sm:$0xff]
    %v3614 = vld [vmem:[%s3611 + $0x10] sm:$0xff]
    %v3615 = vld [vmem:[%s3611 + $0x18] sm:$0xff]
    %s3616 = scalar_lea.vmem %s7, 1
    %v3617 = vld [vmem:[%s3616] sm:$0x1]
    %v3619 = vlaneseq
    %v3620 = vshrl.u32 %v3619, 7
    %v3621 = vsub.s32 0, %v3620
    %v3622 = vrot.slane %v3617, %v3621
    %v3625 = vsel %vm276, %v3609, 0
    %v3628 = vsel %vm276, %v3610, 0
    %3630 = vmatprep.subr.mxu0 0.0
    %3631 = vmatpush1.msra.mxu0 0.0
    %3632 = vmatprep.subr.mxu0 0.0
    %3633 = vmatpush1.msra.mxu0 0.0
    %3634 = vmatprep.subr.mxu0 0.0
    %3635 = vmatpush1.msra.mxu0 0.0
    %3636 = vmatprep.subr.mxu0 0.0
    %3637 = vmatpush1.msra.mxu0 0.0
    %3638 = vmatprep.subr.mxu0 0.0
    %3639 = vmatpush1.msra.mxu0 0.0
    %3640 = vmatprep.subr.mxu0 0.0
    %3641 = vmatpush1.msra.mxu0 0.0
    %3642 = vmatprep.subr.mxu0 0.0
    %3643 = vmatpush1.msra.mxu0 0.0
    %3644 = vmatprep.subr.mxu0 0.0
    %3645 = vmatpush1.msra.mxu0 0.0
    %3646 = vmatprep.subr.mxu0 0.0
    %3647 = vmatpush1.msra.mxu0 0.0
    %3648 = vmatprep.subr.mxu0 0.0
    %3649 = vmatpush1.msra.mxu0 0.0
    %3650 = vmatprep.subr.mxu0 0.0
    %3651 = vmatpush1.msra.mxu0 0.0
    %3652 = vmatprep.subr.mxu0 0.0
    %3653 = vmatpush1.msra.mxu0 0.0
    %3654 = vmatprep.subr.mxu0 0.0
    %3655 = vmatpush1.msra.mxu0 %v3615
    %3656 = vmatprep.subr.mxu0 0.0
    %3657 = vmatpush1.msra.mxu0 %v3614
    %3658 = vmatprep.subr.mxu0 0.0
    %3659 = vmatpush1.msra.mxu0 %v3613
    %3660 = vmatprep.subr.mxu0 0.0
    %3661 = vmatpush1.msra.mxu0 %v3612
    %3662 = vmatprep.subr.mxu0 0.0
    %3663 = vmatpush2.msra.mxu0 0.0
    %3664 = vmatprep.subr.mxu0 0.0
    %3665 = vmatpush2.msra.mxu0 0.0
    %3666 = vmatprep.subr.mxu0 0.0
    %3667 = vmatpush2.msra.mxu0 0.0
    %3668 = vmatprep.subr.mxu0 0.0
    %3669 = vmatpush2.msra.mxu0 0.0
    %3670 = vmatprep.subr.mxu0 0.0
    %3671 = vmatpush2.msra.mxu0 0.0
    %3672 = vmatprep.subr.mxu0 0.0
    %3673 = vmatpush2.msra.mxu0 0.0
    %3674 = vmatprep.subr.mxu0 0.0
    %3675 = vmatpush2.msra.mxu0 0.0
    %3676 = vmatprep.subr.mxu0 0.0
    %3677 = vmatpush2.msra.mxu0 0.0
    %3678 = vmatprep.subr.mxu0 0.0
    %3679 = vmatpush2.msra.mxu0 0.0
    %3680 = vmatprep.subr.mxu0 0.0
    %3681 = vmatpush2.msra.mxu0 0.0
    %3682 = vmatprep.subr.mxu0 0.0
    %3683 = vmatpush2.msra.mxu0 0.0
    %3684 = vmatprep.subr.mxu0 0.0
    %3685 = vmatpush2.msra.mxu0 0.0
    %3686 = vmatprep.subr.mxu0 0.0
    %3687 = vmatpush2.msra.mxu0 0.0
    %3688 = vmatprep.subr.mxu0 0.0
    %3689 = vmatpush2.msra.mxu0 0.0
    %3690 = vmatprep.subr.mxu0 0.0
    %3691 = vmatpush2.msra.mxu0 0.0
    %3692 = vmatprep.subr.mxu0 0.0
    %3693 = vmatpush2.msra.mxu0 0.0
    %3694 = vmatprep.mubr.f32.mxu0 0.0
    %3695 = vmatmul.mubr.f32.gmra.mxu0 %v3625
    %v3696 = vpop.f32.mrf.mxu0
    %v3697 = vadd.f32 %v3622, %v3696
    %v3698 = vpop.f32.mrf.mxu0
    %3699 = vmatprep.mubr.f32.mxu0 0.0
    %3700 = vmatmul.mubr.f32.gmra.mxu0 %v3628
    %v3701 = vpop.f32.mrf.mxu0
    %v3702 = vadd.f32 %v3622, %v3701
    %v3703 = vpop.f32.mrf.mxu0
    %3704 = vdwg.mxu0
    %v3705 = vadd.f32 %v2131, %v3697
    %v3706 = vadd.f32 %v2132, %v3702
    %s3707 = scalar_lea.vmem %s8, 1
    %v3708 = vld [vmem:[%s3707] sm:$0x1]
    %s3709 = scalar_lea.vmem [#allocation8], 1
    %v3710 = vld [vmem:[%s3709] sm:$0x1]
    %v3711 = vsel %vm276, %v3705, 0.0
    %3712 = vadd.xlane.f32.xlu0 %v3711
    %v3713 = vpop.xlane.xlu0 %3712
    %v3714 = vsel %vm276, %v3706, 0.0
    %3715 = vadd.xlane.f32.xlu0 %v3714
    %v3716 = vpop.xlane.xlu0 %3715
    %v3717 = vmul.f32 %v3713, %v1859
    %v3718 = vmul.f32 %v3716, %v1859
    %v3719 = vsub.f32 %v3705, %v3717
    %v3720 = vsub.f32 %v3706, %v3718
    %v3721 = vmul.f32 %v3719, %v3719
    %v3722 = vmul.f32 %v3720, %v3720
    %v3723 = vsel %vm276, %v3721, 0.0
    %3724 = vadd.xlane.f32.xlu0 %v3723
    %v3725 = vpop.xlane.xlu0 %3724
    %v3726 = vsel %vm276, %v3722, 0.0
    %3727 = vadd.xlane.f32.xlu0 %v3726
    %v3728 = vpop.xlane.xlu0 %3727
    %v3729 = vmul.f32 %v3725, %v1859
    %v3730 = vmul.f32 %v3728, %v1859
    %v3731 = vadd.f32 %v3729, 1e-05
    %v3732 = vadd.f32 %v3730, 1e-05
    %v3733 = vrsqrt.pop %v3731
    %v3734 = vrsqrt.pop %v3732
    %v3735 = vmul.f32 %v3719, %v3733
    %v3736 = vmul.f32 %v3720, %v3734
    %v3738 = vlaneseq
    %v3739 = vshrl.u32 %v3738, 7
    %v3740 = vsub.s32 0, %v3739
    %v3741 = vrot.slane %v3708, %v3740
    %v3743 = vmul.f32 %v3735, %v3741
    %v3744 = vmul.f32 %v3736, %v3741
    %v3746 = vlaneseq
    %v3747 = vshrl.u32 %v3746, 7
    %v3748 = vsub.s32 0, %v3747
    %v3749 = vrot.slane %v3710, %v3748
    %v3751 = vadd.f32 %v3743, %v3749
    %v3752 = vadd.f32 %v3744, %v3749
    %s3753 = scalar_lea.vmem [#allocation9], 32
    %v3754 = vld [vmem:[%s3753] sm:$0xff]
    %v3755 = vld [vmem:[%s3753 + $0x8] sm:$0xff]
    %v3756 = vld [vmem:[%s3753 + $0x10] sm:$0xff]
    %v3757 = vld [vmem:[%s3753 + $0x18] sm:$0xff]
    %s3758 = scalar_lea.vmem [#allocation11], 1
    %v3759 = vld [vmem:[%s3758] sm:$0x1]
    %v3761 = vlaneseq
    %v3762 = vshrl.u32 %v3761, 7
    %v3763 = vsub.s32 0, %v3762
    %v3764 = vrot.slane %v3759, %v3763
    %v3767 = vsel %vm276, %v3751, 0
    %v3770 = vsel %vm276, %v3752, 0
    %3772 = vmatprep.subr.mxu0 0.0
    %3773 = vmatpush1.msra.mxu0 0.0
    %3774 = vmatprep.subr.mxu0 0.0
    %3775 = vmatpush1.msra.mxu0 0.0
    %3776 = vmatprep.subr.mxu0 0.0
    %3777 = vmatpush1.msra.mxu0 0.0
    %3778 = vmatprep.subr.mxu0 0.0
    %3779 = vmatpush1.msra.mxu0 0.0
    %3780 = vmatprep.subr.mxu0 0.0
    %3781 = vmatpush1.msra.mxu0 0.0
    %3782 = vmatprep.subr.mxu0 0.0
    %3783 = vmatpush1.msra.mxu0 0.0
    %3784 = vmatprep.subr.mxu0 0.0
    %3785 = vmatpush1.msra.mxu0 0.0
    %3786 = vmatprep.subr.mxu0 0.0
    %3787 = vmatpush1.msra.mxu0 0.0
    %3788 = vmatprep.subr.mxu0 0.0
    %3789 = vmatpush1.msra.mxu0 0.0
    %3790 = vmatprep.subr.mxu0 0.0
    %3791 = vmatpush1.msra.mxu0 0.0
    %3792 = vmatprep.subr.mxu0 0.0
    %3793 = vmatpush1.msra.mxu0 0.0
    %3794 = vmatprep.subr.mxu0 0.0
    %3795 = vmatpush1.msra.mxu0 0.0
    %3796 = vmatprep.subr.mxu0 0.0
    %3797 = vmatpush1.msra.mxu0 %v3757
    %3798 = vmatprep.subr.mxu0 0.0
    %3799 = vmatpush1.msra.mxu0 %v3756
    %3800 = vmatprep.subr.mxu0 0.0
    %3801 = vmatpush1.msra.mxu0 %v3755
    %3802 = vmatprep.subr.mxu0 0.0
    %3803 = vmatpush1.msra.mxu0 %v3754
    %3804 = vmatprep.subr.mxu0 0.0
    %3805 = vmatpush2.msra.mxu0 0.0
    %3806 = vmatprep.subr.mxu0 0.0
    %3807 = vmatpush2.msra.mxu0 0.0
    %3808 = vmatprep.subr.mxu0 0.0
    %3809 = vmatpush2.msra.mxu0 0.0
    %3810 = vmatprep.subr.mxu0 0.0
    %3811 = vmatpush2.msra.mxu0 0.0
    %3812 = vmatprep.subr.mxu0 0.0
    %3813 = vmatpush2.msra.mxu0 0.0
    %3814 = vmatprep.subr.mxu0 0.0
    %3815 = vmatpush2.msra.mxu0 0.0
    %3816 = vmatprep.subr.mxu0 0.0
    %3817 = vmatpush2.msra.mxu0 0.0
    %3818 = vmatprep.subr.mxu0 0.0
    %3819 = vmatpush2.msra.mxu0 0.0
    %3820 = vmatprep.subr.mxu0 0.0
    %3821 = vmatpush2.msra.mxu0 0.0
    %3822 = vmatprep.subr.mxu0 0.0
    %3823 = vmatpush2.msra.mxu0 0.0
    %3824 = vmatprep.subr.mxu0 0.0
    %3825 = vmatpush2.msra.mxu0 0.0
    %3826 = vmatprep.subr.mxu0 0.0
    %3827 = vmatpush2.msra.mxu0 0.0
    %3828 = vmatprep.subr.mxu0 0.0
    %3829 = vmatpush2.msra.mxu0 0.0
    %3830 = vmatprep.subr.mxu0 0.0
    %3831 = vmatpush2.msra.mxu0 0.0
    %3832 = vmatprep.subr.mxu0 0.0
    %3833 = vmatpush2.msra.mxu0 0.0
    %3834 = vmatprep.subr.mxu0 0.0
    %3835 = vmatpush2.msra.mxu0 0.0
    %3836 = vmatprep.mubr.f32.mxu0 0.0
    %3837 = vmatmul.mubr.f32.gmra.mxu0 %v3767
    %v3838 = vpop.f32.mrf.mxu0
    %v3839 = vadd.f32 %v3764, %v3838
    %v3840 = vpop.f32.mrf.mxu0
    %3841 = vmatprep.mubr.f32.mxu0 0.0
    %3842 = vmatmul.mubr.f32.gmra.mxu0 %v3770
    %v3843 = vpop.f32.mrf.mxu0
    %v3844 = vadd.f32 %v3764, %v3843
    %v3845 = vpop.f32.mrf.mxu0
    %3846 = vdwg.mxu0
    %v3847 = vmax.f32 %v3839, 0.0
    %v3848 = vmax.f32 %v3844, 0.0
    %s3849 = scalar_lea.vmem %s14, 64
    %v3850 = vld [vmem:[%s3849] sm:$0xff]
    %v3851 = vld [vmem:[%s3849 + $0x8] sm:$0xff]
    %v3852 = vld [vmem:[%s3849 + $0x10] sm:$0xff]
    %v3853 = vld [vmem:[%s3849 + $0x18] sm:$0xff]
    %v3854 = vld [vmem:[%s3849 + $0x20] sm:$0xff]
    %v3855 = vld [vmem:[%s3849 + $0x28] sm:$0xff]
    %v3856 = vld [vmem:[%s3849 + $0x30] sm:$0xff]
    %v3857 = vld [vmem:[%s3849 + $0x38] sm:$0xff]
    %s3858 = scalar_lea.vmem [#allocation12], 1
    %v3859 = vld [vmem:[%s3858] sm:$0x1]
    %v3861 = vlaneseq
    %v3862 = vshrl.u32 %v3861, 7
    %v3863 = vsub.s32 0, %v3862
    %v3864 = vrot.slane %v3859, %v3863
    %v3867 = vsel %vm2005, %v3847, 0
    %v3870 = vsel %vm2005, %v3848, 0
    %3872 = vmatprep.subr.mxu0 0.0
    %3873 = vmatpush1.msra.mxu0 0.0
    %3874 = vmatprep.subr.mxu0 0.0
    %3875 = vmatpush1.msra.mxu0 0.0
    %3876 = vmatprep.subr.mxu0 0.0
    %3877 = vmatpush1.msra.mxu0 0.0
    %3878 = vmatprep.subr.mxu0 0.0
    %3879 = vmatpush1.msra.mxu0 0.0
    %3880 = vmatprep.subr.mxu0 0.0
    %3881 = vmatpush1.msra.mxu0 0.0
    %3882 = vmatprep.subr.mxu0 0.0
    %3883 = vmatpush1.msra.mxu0 0.0
    %3884 = vmatprep.subr.mxu0 0.0
    %3885 = vmatpush1.msra.mxu0 0.0
    %3886 = vmatprep.subr.mxu0 0.0
    %3887 = vmatpush1.msra.mxu0 0.0
    %3888 = vmatprep.subr.mxu0 0.0
    %3889 = vmatpush1.msra.mxu0 %v3857
    %3890 = vmatprep.subr.mxu0 0.0
    %3891 = vmatpush1.msra.mxu0 %v3856
    %3892 = vmatprep.subr.mxu0 0.0
    %3893 = vmatpush1.msra.mxu0 %v3855
    %3894 = vmatprep.subr.mxu0 0.0
    %3895 = vmatpush1.msra.mxu0 %v3854
    %3896 = vmatprep.subr.mxu0 0.0
    %3897 = vmatpush1.msra.mxu0 %v3853
    %3898 = vmatprep.subr.mxu0 0.0
    %3899 = vmatpush1.msra.mxu0 %v3852
    %3900 = vmatprep.subr.mxu0 0.0
    %3901 = vmatpush1.msra.mxu0 %v3851
    %3902 = vmatprep.subr.mxu0 0.0
    %3903 = vmatpush1.msra.mxu0 %v3850
    %3904 = vmatprep.subr.mxu0 0.0
    %3905 = vmatpush2.msra.mxu0 0.0
    %3906 = vmatprep.subr.mxu0 0.0
    %3907 = vmatpush2.msra.mxu0 0.0
    %3908 = vmatprep.subr.mxu0 0.0
    %3909 = vmatpush2.msra.mxu0 0.0
    %3910 = vmatprep.subr.mxu0 0.0
    %3911 = vmatpush2.msra.mxu0 0.0
    %3912 = vmatprep.subr.mxu0 0.0
    %3913 = vmatpush2.msra.mxu0 0.0
    %3914 = vmatprep.subr.mxu0 0.0
    %3915 = vmatpush2.msra.mxu0 0.0
    %3916 = vmatprep.subr.mxu0 0.0
    %3917 = vmatpush2.msra.mxu0 0.0
    %3918 = vmatprep.subr.mxu0 0.0
    %3919 = vmatpush2.msra.mxu0 0.0
    %3920 = vmatprep.subr.mxu0 0.0
    %3921 = vmatpush2.msra.mxu0 0.0
    %3922 = vmatprep.subr.mxu0 0.0
    %3923 = vmatpush2.msra.mxu0 0.0
    %3924 = vmatprep.subr.mxu0 0.0
    %3925 = vmatpush2.msra.mxu0 0.0
    %3926 = vmatprep.subr.mxu0 0.0
    %3927 = vmatpush2.msra.mxu0 0.0
    %3928 = vmatprep.subr.mxu0 0.0
    %3929 = vmatpush2.msra.mxu0 0.0
    %3930 = vmatprep.subr.mxu0 0.0
    %3931 = vmatpush2.msra.mxu0 0.0
    %3932 = vmatprep.subr.mxu0 0.0
    %3933 = vmatpush2.msra.mxu0 0.0
    %3934 = vmatprep.subr.mxu0 0.0
    %3935 = vmatpush2.msra.mxu0 0.0
    %3936 = vmatprep.mubr.f32.mxu0 0.0
    %3937 = vmatmul.mubr.f32.gmra.mxu0 %v3867
    %v3938 = vpop.f32.mrf.mxu0
    %v3939 = vadd.f32 %v3864, %v3938
    %v3940 = vpop.f32.mrf.mxu0
    %3941 = vmatprep.mubr.f32.mxu0 0.0
    %3942 = vmatmul.mubr.f32.gmra.mxu0 %v3870
    %v3943 = vpop.f32.mrf.mxu0
    %v3944 = vadd.f32 %v3864, %v3943
    %v3945 = vpop.f32.mrf.mxu0
    %3946 = vdwg.mxu0
    %v3947 = vadd.f32 %v3751, %v3939
    %v3948 = vadd.f32 %v3752, %v3944
    %s3949 = scalar_lea.vmem %s10, 1
    %v3950 = vld [vmem:[%s3949] sm:$0x1]
    %s3951 = scalar_lea.vmem %s11, 1
    %v3952 = vld [vmem:[%s3951] sm:$0x1]
    %v3953 = vsel %vm276, %v3947, 0.0
    %3954 = vadd.xlane.f32.xlu0 %v3953
    %v3955 = vpop.xlane.xlu0 %3954
    %v3956 = vsel %vm276, %v3948, 0.0
    %3957 = vadd.xlane.f32.xlu0 %v3956
    %v3958 = vpop.xlane.xlu0 %3957
    %v3959 = vmul.f32 %v3955, %v1859
    %v3960 = vmul.f32 %v3958, %v1859
    %v3961 = vsub.f32 %v3947, %v3959
    %v3962 = vsub.f32 %v3948, %v3960
    %v3963 = vmul.f32 %v3961, %v3961
    %v3964 = vmul.f32 %v3962, %v3962
    %v3965 = vsel %vm276, %v3963, 0.0
    %3966 = vadd.xlane.f32.xlu0 %v3965
    %v3967 = vpop.xlane.xlu0 %3966
    %v3968 = vsel %vm276, %v3964, 0.0
    %3969 = vadd.xlane.f32.xlu0 %v3968
    %v3970 = vpop.xlane.xlu0 %3969
    %v3971 = vmul.f32 %v3967, %v1859
    %v3972 = vmul.f32 %v3970, %v1859
    %v3973 = vadd.f32 %v3971, 1e-05
    %v3974 = vadd.f32 %v3972, 1e-05
    %v3975 = vrsqrt.pop %v3973
    %v3976 = vrsqrt.pop %v3974
    %v3977 = vmul.f32 %v3961, %v3975
    %v3978 = vmul.f32 %v3962, %v3976
    %v3980 = vlaneseq
    %v3981 = vshrl.u32 %v3980, 7
    %v3982 = vsub.s32 0, %v3981
    %v3983 = vrot.slane %v3950, %v3982
    %v3985 = vmul.f32 %v3977, %v3983
    %v3986 = vmul.f32 %v3978, %v3983
    %v3988 = vlaneseq
    %v3989 = vshrl.u32 %v3988, 7
    %v3990 = vsub.s32 0, %v3989
    %v3991 = vrot.slane %v3952, %v3990
    %v3993 = vadd.f32 %v3985, %v3991
    %v3994 = vadd.f32 %v3986, %v3991
    %v3996 = vrot.slane %v3994, 7
    %vm3998 = vcmask 1040384
    %v3999 = vsel %vm3998, %v3993, %v3996
    %v4000 = vld [vmem:[%s16] sm:$0xff]
    %v4001 = vld [vmem:[%s16 + $0x8] sm:$0xff]
    %v4002 = vld [vmem:[%s16 + $0x10] sm:$0xff]
    %v4003 = vld [vmem:[%s16 + $0x18] sm:$0xff]
    %v4005 = vrot.slane %v3993, 1
    %v4007 = vsel %vm3998, %v4005, %v3994
    %s4008 = scalar_lea.vmem %s16, 32
    %v4009 = vld [vmem:[%s4008] sm:$0xff]
    %v4010 = vld [vmem:[%s4008 + $0x8] sm:$0xff]
    %v4011 = vld [vmem:[%s4008 + $0x10] sm:$0xff]
    %v4012 = vld [vmem:[%s4008 + $0x18] sm:$0xff]
    %v4014 = vsel %vm276, %v4007, 0
    %4016 = vmatprep.subr.mxu0 0.0
    %4017 = vmatpush1.msra.mxu0 0.0
    %4018 = vmatprep.subr.mxu0 0.0
    %4019 = vmatpush1.msra.mxu0 0.0
    %4020 = vmatprep.subr.mxu0 0.0
    %4021 = vmatpush1.msra.mxu0 0.0
    %4022 = vmatprep.subr.mxu0 0.0
    %4023 = vmatpush1.msra.mxu0 0.0
    %4024 = vmatprep.subr.mxu0 0.0
    %4025 = vmatpush1.msra.mxu0 0.0
    %4026 = vmatprep.subr.mxu0 0.0
    %4027 = vmatpush1.msra.mxu0 0.0
    %4028 = vmatprep.subr.mxu0 0.0
    %4029 = vmatpush1.msra.mxu0 0.0
    %4030 = vmatprep.subr.mxu0 0.0
    %4031 = vmatpush1.msra.mxu0 0.0
    %4032 = vmatprep.subr.mxu0 0.0
    %4033 = vmatpush1.msra.mxu0 0.0
    %4034 = vmatprep.subr.mxu0 0.0
    %4035 = vmatpush1.msra.mxu0 0.0
    %4036 = vmatprep.subr.mxu0 0.0
    %4037 = vmatpush1.msra.mxu0 0.0
    %4038 = vmatprep.subr.mxu0 0.0
    %4039 = vmatpush1.msra.mxu0 0.0
    %4040 = vmatprep.subr.mxu0 0.0
    %4041 = vmatpush1.msra.mxu0 %v4012
    %4042 = vmatprep.subr.mxu0 0.0
    %4043 = vmatpush1.msra.mxu0 %v4011
    %4044 = vmatprep.subr.mxu0 0.0
    %4045 = vmatpush1.msra.mxu0 %v4010
    %4046 = vmatprep.subr.mxu0 0.0
    %4047 = vmatpush1.msra.mxu0 %v4009
    %4048 = vmatprep.subr.mxu0 0.0
    %4049 = vmatpush2.msra.mxu0 0.0
    %4050 = vmatprep.subr.mxu0 0.0
    %4051 = vmatpush2.msra.mxu0 0.0
    %4052 = vmatprep.subr.mxu0 0.0
    %4053 = vmatpush2.msra.mxu0 0.0
    %4054 = vmatprep.subr.mxu0 0.0
    %4055 = vmatpush2.msra.mxu0 0.0
    %4056 = vmatprep.subr.mxu0 0.0
    %4057 = vmatpush2.msra.mxu0 0.0
    %4058 = vmatprep.subr.mxu0 0.0
    %4059 = vmatpush2.msra.mxu0 0.0
    %4060 = vmatprep.subr.mxu0 0.0
    %4061 = vmatpush2.msra.mxu0 0.0
    %4062 = vmatprep.subr.mxu0 0.0
    %4063 = vmatpush2.msra.mxu0 0.0
    %4064 = vmatprep.subr.mxu0 0.0
    %4065 = vmatpush2.msra.mxu0 0.0
    %4066 = vmatprep.subr.mxu0 0.0
    %4067 = vmatpush2.msra.mxu0 0.0
    %4068 = vmatprep.subr.mxu0 0.0
    %4069 = vmatpush2.msra.mxu0 0.0
    %4070 = vmatprep.subr.mxu0 0.0
    %4071 = vmatpush2.msra.mxu0 0.0
    %4072 = vmatprep.subr.mxu0 0.0
    %4073 = vmatpush2.msra.mxu0 0.0
    %4074 = vmatprep.subr.mxu0 0.0
    %4075 = vmatpush2.msra.mxu0 0.0
    %4076 = vmatprep.subr.mxu0 0.0
    %4077 = vmatpush2.msra.mxu0 0.0
    %4078 = vmatprep.subr.mxu0 0.0
    %4079 = vmatpush2.msra.mxu0 0.0
    %4080 = vmatprep.mubr.f32.mxu0 0.0
    %4081 = vmatmul.mubr.f32.gmra.mxu0 %v4014
    %v4082 = vpop.f32.mrf.mxu0
    %v4083 = vadd.f32 0.0, %v4082
    %v4084 = vpop.f32.mrf.mxu0
    %4085 = vdwg.mxu0
    %v4087 = vsel %vm276, %v3999, 0
    %4089 = vmatprep.subr.mxu0 0.0
    %4090 = vmatpush1.msra.mxu0 0.0
    %4091 = vmatprep.subr.mxu0 0.0
    %4092 = vmatpush1.msra.mxu0 0.0
    %4093 = vmatprep.subr.mxu0 0.0
    %4094 = vmatpush1.msra.mxu0 0.0
    %4095 = vmatprep.subr.mxu0 0.0
    %4096 = vmatpush1.msra.mxu0 0.0
    %4097 = vmatprep.subr.mxu0 0.0
    %4098 = vmatpush1.msra.mxu0 0.0
    %4099 = vmatprep.subr.mxu0 0.0
    %4100 = vmatpush1.msra.mxu0 0.0
    %4101 = vmatprep.subr.mxu0 0.0
    %4102 = vmatpush1.msra.mxu0 0.0
    %4103 = vmatprep.subr.mxu0 0.0
    %4104 = vmatpush1.msra.mxu0 0.0
    %4105 = vmatprep.subr.mxu0 0.0
    %4106 = vmatpush1.msra.mxu0 0.0
    %4107 = vmatprep.subr.mxu0 0.0
    %4108 = vmatpush1.msra.mxu0 0.0
    %4109 = vmatprep.subr.mxu0 0.0
    %4110 = vmatpush1.msra.mxu0 0.0
    %4111 = vmatprep.subr.mxu0 0.0
    %4112 = vmatpush1.msra.mxu0 0.0
    %4113 = vmatprep.subr.mxu0 0.0
    %4114 = vmatpush1.msra.mxu0 %v4003
    %4115 = vmatprep.subr.mxu0 0.0
    %4116 = vmatpush1.msra.mxu0 %v4002
    %4117 = vmatprep.subr.mxu0 0.0
    %4118 = vmatpush1.msra.mxu0 %v4001
    %4119 = vmatprep.subr.mxu0 0.0
    %4120 = vmatpush1.msra.mxu0 %v4000
    %4121 = vmatprep.subr.mxu0 0.0
    %4122 = vmatpush2.msra.mxu0 0.0
    %4123 = vmatprep.subr.mxu0 0.0
    %4124 = vmatpush2.msra.mxu0 0.0
    %4125 = vmatprep.subr.mxu0 0.0
    %4126 = vmatpush2.msra.mxu0 0.0
    %4127 = vmatprep.subr.mxu0 0.0
    %4128 = vmatpush2.msra.mxu0 0.0
    %4129 = vmatprep.subr.mxu0 0.0
    %4130 = vmatpush2.msra.mxu0 0.0
    %4131 = vmatprep.subr.mxu0 0.0
    %4132 = vmatpush2.msra.mxu0 0.0
    %4133 = vmatprep.subr.mxu0 0.0
    %4134 = vmatpush2.msra.mxu0 0.0
    %4135 = vmatprep.subr.mxu0 0.0
    %4136 = vmatpush2.msra.mxu0 0.0
    %4137 = vmatprep.subr.mxu0 0.0
    %4138 = vmatpush2.msra.mxu0 0.0
    %4139 = vmatprep.subr.mxu0 0.0
    %4140 = vmatpush2.msra.mxu0 0.0
    %4141 = vmatprep.subr.mxu0 0.0
    %4142 = vmatpush2.msra.mxu0 0.0
    %4143 = vmatprep.subr.mxu0 0.0
    %4144 = vmatpush2.msra.mxu0 0.0
    %4145 = vmatprep.subr.mxu0 0.0
    %4146 = vmatpush2.msra.mxu0 0.0
    %4147 = vmatprep.subr.mxu0 0.0
    %4148 = vmatpush2.msra.mxu0 0.0
    %4149 = vmatprep.subr.mxu0 0.0
    %4150 = vmatpush2.msra.mxu0 0.0
    %4151 = vmatprep.subr.mxu0 0.0
    %4152 = vmatpush2.msra.mxu0 0.0
    %4153 = vmatprep.mubr.f32.mxu0 0.0
    %4154 = vmatmul.mubr.f32.gmra.mxu0 %v4087
    %v4155 = vpop.f32.mrf.mxu0
    %v4156 = vadd.f32 %v4083, %v4155
    %v4157 = vpop.f32.mrf.mxu0
    %4158 = vdwg.mxu0
    %v4159 = vrot.slane %v3993, 2
    %v4161 = vrot.slane %v3994, 1
    %v4163 = vsel %vm3998, %v4159, %v4161
    %s4164 = scalar_lea.vmem %s16, 64
    %v4165 = vld [vmem:[%s4164] sm:$0xff]
    %v4166 = vld [vmem:[%s4164 + $0x8] sm:$0xff]
    %v4167 = vld [vmem:[%s4164 + $0x10] sm:$0xff]
    %v4168 = vld [vmem:[%s4164 + $0x18] sm:$0xff]
    %v4170 = vsel %vm276, %v4163, 0
    %4172 = vmatprep.subr.mxu0 0.0
    %4173 = vmatpush1.msra.mxu0 0.0
    %4174 = vmatprep.subr.mxu0 0.0
    %4175 = vmatpush1.msra.mxu0 0.0
    %4176 = vmatprep.subr.mxu0 0.0
    %4177 = vmatpush1.msra.mxu0 0.0
    %4178 = vmatprep.subr.mxu0 0.0
    %4179 = vmatpush1.msra.mxu0 0.0
    %4180 = vmatprep.subr.mxu0 0.0
    %4181 = vmatpush1.msra.mxu0 0.0
    %4182 = vmatprep.subr.mxu0 0.0
    %4183 = vmatpush1.msra.mxu0 0.0
    %4184 = vmatprep.subr.mxu0 0.0
    %4185 = vmatpush1.msra.mxu0 0.0
    %4186 = vmatprep.subr.mxu0 0.0
    %4187 = vmatpush1.msra.mxu0 0.0
    %4188 = vmatprep.subr.mxu0 0.0
    %4189 = vmatpush1.msra.mxu0 0.0
    %4190 = vmatprep.subr.mxu0 0.0
    %4191 = vmatpush1.msra.mxu0 0.0
    %4192 = vmatprep.subr.mxu0 0.0
    %4193 = vmatpush1.msra.mxu0 0.0
    %4194 = vmatprep.subr.mxu0 0.0
    %4195 = vmatpush1.msra.mxu0 0.0
    %4196 = vmatprep.subr.mxu0 0.0
    %4197 = vmatpush1.msra.mxu0 %v4168
    %4198 = vmatprep.subr.mxu0 0.0
    %4199 = vmatpush1.msra.mxu0 %v4167
    %4200 = vmatprep.subr.mxu0 0.0
    %4201 = vmatpush1.msra.mxu0 %v4166
    %4202 = vmatprep.subr.mxu0 0.0
    %4203 = vmatpush1.msra.mxu0 %v4165
    %4204 = vmatprep.subr.mxu0 0.0
    %4205 = vmatpush2.msra.mxu0 0.0
    %4206 = vmatprep.subr.mxu0 0.0
    %4207 = vmatpush2.msra.mxu0 0.0
    %4208 = vmatprep.subr.mxu0 0.0
    %4209 = vmatpush2.msra.mxu0 0.0
    %4210 = vmatprep.subr.mxu0 0.0
    %4211 = vmatpush2.msra.mxu0 0.0
    %4212 = vmatprep.subr.mxu0 0.0
    %4213 = vmatpush2.msra.mxu0 0.0
    %4214 = vmatprep.subr.mxu0 0.0
    %4215 = vmatpush2.msra.mxu0 0.0
    %4216 = vmatprep.subr.mxu0 0.0
    %4217 = vmatpush2.msra.mxu0 0.0
    %4218 = vmatprep.subr.mxu0 0.0
    %4219 = vmatpush2.msra.mxu0 0.0
    %4220 = vmatprep.subr.mxu0 0.0
    %4221 = vmatpush2.msra.mxu0 0.0
    %4222 = vmatprep.subr.mxu0 0.0
    %4223 = vmatpush2.msra.mxu0 0.0
    %4224 = vmatprep.subr.mxu0 0.0
    %4225 = vmatpush2.msra.mxu0 0.0
    %4226 = vmatprep.subr.mxu0 0.0
    %4227 = vmatpush2.msra.mxu0 0.0
    %4228 = vmatprep.subr.mxu0 0.0
    %4229 = vmatpush2.msra.mxu0 0.0
    %4230 = vmatprep.subr.mxu0 0.0
    %4231 = vmatpush2.msra.mxu0 0.0
    %4232 = vmatprep.subr.mxu0 0.0
    %4233 = vmatpush2.msra.mxu0 0.0
    %4234 = vmatprep.subr.mxu0 0.0
    %4235 = vmatpush2.msra.mxu0 0.0
    %4236 = vmatprep.mubr.f32.mxu0 0.0
    %4237 = vmatmul.mubr.f32.gmra.mxu0 %v4170
    %v4238 = vpop.f32.mrf.mxu0
    %v4239 = vadd.f32 0.0, %v4238
    %v4240 = vpop.f32.mrf.mxu0
    %4241 = vdwg.mxu0
    %v4242 = vadd.f32 %v4156, %v4239
    %v4243 = vrot.slane %v3993, 3
    %v4245 = vrot.slane %v3994, 2
    %v4247 = vsel %vm3998, %v4243, %v4245
    %s4248 = scalar_lea.vmem %s16, 96
    %v4249 = vld [vmem:[%s4248] sm:$0xff]
    %v4250 = vld [vmem:[%s4248 + $0x8] sm:$0xff]
    %v4251 = vld [vmem:[%s4248 + $0x10] sm:$0xff]
    %v4252 = vld [vmem:[%s4248 + $0x18] sm:$0xff]
    %v4254 = vsel %vm276, %v4247, 0
    %4256 = vmatprep.subr.mxu0 0.0
    %4257 = vmatpush1.msra.mxu0 0.0
    %4258 = vmatprep.subr.mxu0 0.0
    %4259 = vmatpush1.msra.mxu0 0.0
    %4260 = vmatprep.subr.mxu0 0.0
    %4261 = vmatpush1.msra.mxu0 0.0
    %4262 = vmatprep.subr.mxu0 0.0
    %4263 = vmatpush1.msra.mxu0 0.0
    %4264 = vmatprep.subr.mxu0 0.0
    %4265 = vmatpush1.msra.mxu0 0.0
    %4266 = vmatprep.subr.mxu0 0.0
    %4267 = vmatpush1.msra.mxu0 0.0
    %4268 = vmatprep.subr.mxu0 0.0
    %4269 = vmatpush1.msra.mxu0 0.0
    %4270 = vmatprep.subr.mxu0 0.0
    %4271 = vmatpush1.msra.mxu0 0.0
    %4272 = vmatprep.subr.mxu0 0.0
    %4273 = vmatpush1.msra.mxu0 0.0
    %4274 = vmatprep.subr.mxu0 0.0
    %4275 = vmatpush1.msra.mxu0 0.0
    %4276 = vmatprep.subr.mxu0 0.0
    %4277 = vmatpush1.msra.mxu0 0.0
    %4278 = vmatprep.subr.mxu0 0.0
    %4279 = vmatpush1.msra.mxu0 0.0
    %4280 = vmatprep.subr.mxu0 0.0
    %4281 = vmatpush1.msra.mxu0 %v4252
    %4282 = vmatprep.subr.mxu0 0.0
    %4283 = vmatpush1.msra.mxu0 %v4251
    %4284 = vmatprep.subr.mxu0 0.0
    %4285 = vmatpush1.msra.mxu0 %v4250
    %4286 = vmatprep.subr.mxu0 0.0
    %4287 = vmatpush1.msra.mxu0 %v4249
    %4288 = vmatprep.subr.mxu0 0.0
    %4289 = vmatpush2.msra.mxu0 0.0
    %4290 = vmatprep.subr.mxu0 0.0
    %4291 = vmatpush2.msra.mxu0 0.0
    %4292 = vmatprep.subr.mxu0 0.0
    %4293 = vmatpush2.msra.mxu0 0.0
    %4294 = vmatprep.subr.mxu0 0.0
    %4295 = vmatpush2.msra.mxu0 0.0
    %4296 = vmatprep.subr.mxu0 0.0
    %4297 = vmatpush2.msra.mxu0 0.0
    %4298 = vmatprep.subr.mxu0 0.0
    %4299 = vmatpush2.msra.mxu0 0.0
    %4300 = vmatprep.subr.mxu0 0.0
    %4301 = vmatpush2.msra.mxu0 0.0
    %4302 = vmatprep.subr.mxu0 0.0
    %4303 = vmatpush2.msra.mxu0 0.0
    %4304 = vmatprep.subr.mxu0 0.0
    %4305 = vmatpush2.msra.mxu0 0.0
    %4306 = vmatprep.subr.mxu0 0.0
    %4307 = vmatpush2.msra.mxu0 0.0
    %4308 = vmatprep.subr.mxu0 0.0
    %4309 = vmatpush2.msra.mxu0 0.0
    %4310 = vmatprep.subr.mxu0 0.0
    %4311 = vmatpush2.msra.mxu0 0.0
    %4312 = vmatprep.subr.mxu0 0.0
    %4313 = vmatpush2.msra.mxu0 0.0
    %4314 = vmatprep.subr.mxu0 0.0
    %4315 = vmatpush2.msra.mxu0 0.0
    %4316 = vmatprep.subr.mxu0 0.0
    %4317 = vmatpush2.msra.mxu0 0.0
    %4318 = vmatprep.subr.mxu0 0.0
    %4319 = vmatpush2.msra.mxu0 0.0
    %4320 = vmatprep.mubr.f32.mxu0 0.0
    %4321 = vmatmul.mubr.f32.gmra.mxu0 %v4254
    %v4322 = vpop.f32.mrf.mxu0
    %v4323 = vadd.f32 0.0, %v4322
    %v4324 = vpop.f32.mrf.mxu0
    %4325 = vdwg.mxu0
    %v4326 = vadd.f32 %v4242, %v4323
    %v4327 = vrot.slane %v3993, 4
    %v4329 = vrot.slane %v3994, 3
    %v4331 = vsel %vm3998, %v4327, %v4329
    %s4332 = scalar_lea.vmem %s16, 128
    %v4333 = vld [vmem:[%s4332] sm:$0xff]
    %v4334 = vld [vmem:[%s4332 + $0x8] sm:$0xff]
    %v4335 = vld [vmem:[%s4332 + $0x10] sm:$0xff]
    %v4336 = vld [vmem:[%s4332 + $0x18] sm:$0xff]
    %v4338 = vsel %vm276, %v4331, 0
    %4340 = vmatprep.subr.mxu0 0.0
    %4341 = vmatpush1.msra.mxu0 0.0
    %4342 = vmatprep.subr.mxu0 0.0
    %4343 = vmatpush1.msra.mxu0 0.0
    %4344 = vmatprep.subr.mxu0 0.0
    %4345 = vmatpush1.msra.mxu0 0.0
    %4346 = vmatprep.subr.mxu0 0.0
    %4347 = vmatpush1.msra.mxu0 0.0
    %4348 = vmatprep.subr.mxu0 0.0
    %4349 = vmatpush1.msra.mxu0 0.0
    %4350 = vmatprep.subr.mxu0 0.0
    %4351 = vmatpush1.msra.mxu0 0.0
    %4352 = vmatprep.subr.mxu0 0.0
    %4353 = vmatpush1.msra.mxu0 0.0
    %4354 = vmatprep.subr.mxu0 0.0
    %4355 = vmatpush1.msra.mxu0 0.0
    %4356 = vmatprep.subr.mxu0 0.0
    %4357 = vmatpush1.msra.mxu0 0.0
    %4358 = vmatprep.subr.mxu0 0.0
    %4359 = vmatpush1.msra.mxu0 0.0
    %4360 = vmatprep.subr.mxu0 0.0
    %4361 = vmatpush1.msra.mxu0 0.0
    %4362 = vmatprep.subr.mxu0 0.0
    %4363 = vmatpush1.msra.mxu0 0.0
    %4364 = vmatprep.subr.mxu0 0.0
    %4365 = vmatpush1.msra.mxu0 %v4336
    %4366 = vmatprep.subr.mxu0 0.0
    %4367 = vmatpush1.msra.mxu0 %v4335
    %4368 = vmatprep.subr.mxu0 0.0
    %4369 = vmatpush1.msra.mxu0 %v4334
    %4370 = vmatprep.subr.mxu0 0.0
    %4371 = vmatpush1.msra.mxu0 %v4333
    %4372 = vmatprep.subr.mxu0 0.0
    %4373 = vmatpush2.msra.mxu0 0.0
    %4374 = vmatprep.subr.mxu0 0.0
    %4375 = vmatpush2.msra.mxu0 0.0
    %4376 = vmatprep.subr.mxu0 0.0
    %4377 = vmatpush2.msra.mxu0 0.0
    %4378 = vmatprep.subr.mxu0 0.0
    %4379 = vmatpush2.msra.mxu0 0.0
    %4380 = vmatprep.subr.mxu0 0.0
    %4381 = vmatpush2.msra.mxu0 0.0
    %4382 = vmatprep.subr.mxu0 0.0
    %4383 = vmatpush2.msra.mxu0 0.0
    %4384 = vmatprep.subr.mxu0 0.0
    %4385 = vmatpush2.msra.mxu0 0.0
    %4386 = vmatprep.subr.mxu0 0.0
    %4387 = vmatpush2.msra.mxu0 0.0
    %4388 = vmatprep.subr.mxu0 0.0
    %4389 = vmatpush2.msra.mxu0 0.0
    %4390 = vmatprep.subr.mxu0 0.0
    %4391 = vmatpush2.msra.mxu0 0.0
    %4392 = vmatprep.subr.mxu0 0.0
    %4393 = vmatpush2.msra.mxu0 0.0
    %4394 = vmatprep.subr.mxu0 0.0
    %4395 = vmatpush2.msra.mxu0 0.0
    %4396 = vmatprep.subr.mxu0 0.0
    %4397 = vmatpush2.msra.mxu0 0.0
    %4398 = vmatprep.subr.mxu0 0.0
    %4399 = vmatpush2.msra.mxu0 0.0
    %4400 = vmatprep.subr.mxu0 0.0
    %4401 = vmatpush2.msra.mxu0 0.0
    %4402 = vmatprep.subr.mxu0 0.0
    %4403 = vmatpush2.msra.mxu0 0.0
    %4404 = vmatprep.mubr.f32.mxu0 0.0
    %4405 = vmatmul.mubr.f32.gmra.mxu0 %v4338
    %v4406 = vpop.f32.mrf.mxu0
    %v4407 = vadd.f32 0.0, %v4406
    %v4408 = vpop.f32.mrf.mxu0
    %4409 = vdwg.mxu0
    %v4410 = vadd.f32 %v4326, %v4407
    %v4411 = vrot.slane %v3993, 5
    %v4413 = vrot.slane %v3994, 4
    %v4415 = vsel %vm3998, %v4411, %v4413
    %s4416 = scalar_lea.vmem %s16, 160
    %v4417 = vld [vmem:[%s4416] sm:$0xff]
    %v4418 = vld [vmem:[%s4416 + $0x8] sm:$0xff]
    %v4419 = vld [vmem:[%s4416 + $0x10] sm:$0xff]
    %v4420 = vld [vmem:[%s4416 + $0x18] sm:$0xff]
    %v4422 = vsel %vm276, %v4415, 0
    %4424 = vmatprep.subr.mxu0 0.0
    %4425 = vmatpush1.msra.mxu0 0.0
    %4426 = vmatprep.subr.mxu0 0.0
    %4427 = vmatpush1.msra.mxu0 0.0
    %4428 = vmatprep.subr.mxu0 0.0
    %4429 = vmatpush1.msra.mxu0 0.0
    %4430 = vmatprep.subr.mxu0 0.0
    %4431 = vmatpush1.msra.mxu0 0.0
    %4432 = vmatprep.subr.mxu0 0.0
    %4433 = vmatpush1.msra.mxu0 0.0
    %4434 = vmatprep.subr.mxu0 0.0
    %4435 = vmatpush1.msra.mxu0 0.0
    %4436 = vmatprep.subr.mxu0 0.0
    %4437 = vmatpush1.msra.mxu0 0.0
    %4438 = vmatprep.subr.mxu0 0.0
    %4439 = vmatpush1.msra.mxu0 0.0
    %4440 = vmatprep.subr.mxu0 0.0
    %4441 = vmatpush1.msra.mxu0 0.0
    %4442 = vmatprep.subr.mxu0 0.0
    %4443 = vmatpush1.msra.mxu0 0.0
    %4444 = vmatprep.subr.mxu0 0.0
    %4445 = vmatpush1.msra.mxu0 0.0
    %4446 = vmatprep.subr.mxu0 0.0
    %4447 = vmatpush1.msra.mxu0 0.0
    %4448 = vmatprep.subr.mxu0 0.0
    %4449 = vmatpush1.msra.mxu0 %v4420
    %4450 = vmatprep.subr.mxu0 0.0
    %4451 = vmatpush1.msra.mxu0 %v4419
    %4452 = vmatprep.subr.mxu0 0.0
    %4453 = vmatpush1.msra.mxu0 %v4418
    %4454 = vmatprep.subr.mxu0 0.0
    %4455 = vmatpush1.msra.mxu0 %v4417
    %4456 = vmatprep.subr.mxu0 0.0
    %4457 = vmatpush2.msra.mxu0 0.0
    %4458 = vmatprep.subr.mxu0 0.0
    %4459 = vmatpush2.msra.mxu0 0.0
    %4460 = vmatprep.subr.mxu0 0.0
    %4461 = vmatpush2.msra.mxu0 0.0
    %4462 = vmatprep.subr.mxu0 0.0
    %4463 = vmatpush2.msra.mxu0 0.0
    %4464 = vmatprep.subr.mxu0 0.0
    %4465 = vmatpush2.msra.mxu0 0.0
    %4466 = vmatprep.subr.mxu0 0.0
    %4467 = vmatpush2.msra.mxu0 0.0
    %4468 = vmatprep.subr.mxu0 0.0
    %4469 = vmatpush2.msra.mxu0 0.0
    %4470 = vmatprep.subr.mxu0 0.0
    %4471 = vmatpush2.msra.mxu0 0.0
    %4472 = vmatprep.subr.mxu0 0.0
    %4473 = vmatpush2.msra.mxu0 0.0
    %4474 = vmatprep.subr.mxu0 0.0
    %4475 = vmatpush2.msra.mxu0 0.0
    %4476 = vmatprep.subr.mxu0 0.0
    %4477 = vmatpush2.msra.mxu0 0.0
    %4478 = vmatprep.subr.mxu0 0.0
    %4479 = vmatpush2.msra.mxu0 0.0
    %4480 = vmatprep.subr.mxu0 0.0
    %4481 = vmatpush2.msra.mxu0 0.0
    %4482 = vmatprep.subr.mxu0 0.0
    %4483 = vmatpush2.msra.mxu0 0.0
    %4484 = vmatprep.subr.mxu0 0.0
    %4485 = vmatpush2.msra.mxu0 0.0
    %4486 = vmatprep.subr.mxu0 0.0
    %4487 = vmatpush2.msra.mxu0 0.0
    %4488 = vmatprep.mubr.f32.mxu0 0.0
    %4489 = vmatmul.mubr.f32.gmra.mxu0 %v4422
    %v4490 = vpop.f32.mrf.mxu0
    %v4491 = vadd.f32 0.0, %v4490
    %v4492 = vpop.f32.mrf.mxu0
    %4493 = vdwg.mxu0
    %v4494 = vadd.f32 %v4410, %v4491
    %v4495 = vrot.slane %v3993, 6
    %v4497 = vrot.slane %v3994, 5
    %v4499 = vsel %vm3998, %v4495, %v4497
    %s4500 = scalar_lea.vmem %s16, 192
    %v4501 = vld [vmem:[%s4500] sm:$0xff]
    %v4502 = vld [vmem:[%s4500 + $0x8] sm:$0xff]
    %v4503 = vld [vmem:[%s4500 + $0x10] sm:$0xff]
    %v4504 = vld [vmem:[%s4500 + $0x18] sm:$0xff]
    %v4506 = vsel %vm276, %v4499, 0
    %4508 = vmatprep.subr.mxu0 0.0
    %4509 = vmatpush1.msra.mxu0 0.0
    %4510 = vmatprep.subr.mxu0 0.0
    %4511 = vmatpush1.msra.mxu0 0.0
    %4512 = vmatprep.subr.mxu0 0.0
    %4513 = vmatpush1.msra.mxu0 0.0
    %4514 = vmatprep.subr.mxu0 0.0
    %4515 = vmatpush1.msra.mxu0 0.0
    %4516 = vmatprep.subr.mxu0 0.0
    %4517 = vmatpush1.msra.mxu0 0.0
    %4518 = vmatprep.subr.mxu0 0.0
    %4519 = vmatpush1.msra.mxu0 0.0
    %4520 = vmatprep.subr.mxu0 0.0
    %4521 = vmatpush1.msra.mxu0 0.0
    %4522 = vmatprep.subr.mxu0 0.0
    %4523 = vmatpush1.msra.mxu0 0.0
    %4524 = vmatprep.subr.mxu0 0.0
    %4525 = vmatpush1.msra.mxu0 0.0
    %4526 = vmatprep.subr.mxu0 0.0
    %4527 = vmatpush1.msra.mxu0 0.0
    %4528 = vmatprep.subr.mxu0 0.0
    %4529 = vmatpush1.msra.mxu0 0.0
    %4530 = vmatprep.subr.mxu0 0.0
    %4531 = vmatpush1.msra.mxu0 0.0
    %4532 = vmatprep.subr.mxu0 0.0
    %4533 = vmatpush1.msra.mxu0 %v4504
    %4534 = vmatprep.subr.mxu0 0.0
    %4535 = vmatpush1.msra.mxu0 %v4503
    %4536 = vmatprep.subr.mxu0 0.0
    %4537 = vmatpush1.msra.mxu0 %v4502
    %4538 = vmatprep.subr.mxu0 0.0
    %4539 = vmatpush1.msra.mxu0 %v4501
    %4540 = vmatprep.subr.mxu0 0.0
    %4541 = vmatpush2.msra.mxu0 0.0
    %4542 = vmatprep.subr.mxu0 0.0
    %4543 = vmatpush2.msra.mxu0 0.0
    %4544 = vmatprep.subr.mxu0 0.0
    %4545 = vmatpush2.msra.mxu0 0.0
    %4546 = vmatprep.subr.mxu0 0.0
    %4547 = vmatpush2.msra.mxu0 0.0
    %4548 = vmatprep.subr.mxu0 0.0
    %4549 = vmatpush2.msra.mxu0 0.0
    %4550 = vmatprep.subr.mxu0 0.0
    %4551 = vmatpush2.msra.mxu0 0.0
    %4552 = vmatprep.subr.mxu0 0.0
    %4553 = vmatpush2.msra.mxu0 0.0
    %4554 = vmatprep.subr.mxu0 0.0
    %4555 = vmatpush2.msra.mxu0 0.0
    %4556 = vmatprep.subr.mxu0 0.0
    %4557 = vmatpush2.msra.mxu0 0.0
    %4558 = vmatprep.subr.mxu0 0.0
    %4559 = vmatpush2.msra.mxu0 0.0
    %4560 = vmatprep.subr.mxu0 0.0
    %4561 = vmatpush2.msra.mxu0 0.0
    %4562 = vmatprep.subr.mxu0 0.0
    %4563 = vmatpush2.msra.mxu0 0.0
    %4564 = vmatprep.subr.mxu0 0.0
    %4565 = vmatpush2.msra.mxu0 0.0
    %4566 = vmatprep.subr.mxu0 0.0
    %4567 = vmatpush2.msra.mxu0 0.0
    %4568 = vmatprep.subr.mxu0 0.0
    %4569 = vmatpush2.msra.mxu0 0.0
    %4570 = vmatprep.subr.mxu0 0.0
    %4571 = vmatpush2.msra.mxu0 0.0
    %4572 = vmatprep.mubr.f32.mxu0 0.0
    %4573 = vmatmul.mubr.f32.gmra.mxu0 %v4506
    %v4574 = vpop.f32.mrf.mxu0
    %v4575 = vadd.f32 0.0, %v4574
    %v4576 = vpop.f32.mrf.mxu0
    %4577 = vdwg.mxu0
    %v4578 = vadd.f32 %v4494, %v4575
    %v4579 = vrot.slane %v3993, 7
    %v4581 = vrot.slane %v3994, 6
    %v4583 = vsel %vm3998, %v4579, %v4581
    %s4584 = scalar_lea.vmem %s16, 224
    %v4585 = vld [vmem:[%s4584] sm:$0xff]
    %v4586 = vld [vmem:[%s4584 + $0x8] sm:$0xff]
    %v4587 = vld [vmem:[%s4584 + $0x10] sm:$0xff]
    %v4588 = vld [vmem:[%s4584 + $0x18] sm:$0xff]
    %v4590 = vsel %vm276, %v4583, 0
    %4592 = vmatprep.subr.mxu0 0.0
    %4593 = vmatpush1.msra.mxu0 0.0
    %4594 = vmatprep.subr.mxu0 0.0
    %4595 = vmatpush1.msra.mxu0 0.0
    %4596 = vmatprep.subr.mxu0 0.0
    %4597 = vmatpush1.msra.mxu0 0.0
    %4598 = vmatprep.subr.mxu0 0.0
    %4599 = vmatpush1.msra.mxu0 0.0
    %4600 = vmatprep.subr.mxu0 0.0
    %4601 = vmatpush1.msra.mxu0 0.0
    %4602 = vmatprep.subr.mxu0 0.0
    %4603 = vmatpush1.msra.mxu0 0.0
    %4604 = vmatprep.subr.mxu0 0.0
    %4605 = vmatpush1.msra.mxu0 0.0
    %4606 = vmatprep.subr.mxu0 0.0
    %4607 = vmatpush1.msra.mxu0 0.0
    %4608 = vmatprep.subr.mxu0 0.0
    %4609 = vmatpush1.msra.mxu0 0.0
    %4610 = vmatprep.subr.mxu0 0.0
    %4611 = vmatpush1.msra.mxu0 0.0
    %4612 = vmatprep.subr.mxu0 0.0
    %4613 = vmatpush1.msra.mxu0 0.0
    %4614 = vmatprep.subr.mxu0 0.0
    %4615 = vmatpush1.msra.mxu0 0.0
    %4616 = vmatprep.subr.mxu0 0.0
    %4617 = vmatpush1.msra.mxu0 %v4588
    %4618 = vmatprep.subr.mxu0 0.0
    %4619 = vmatpush1.msra.mxu0 %v4587
    %4620 = vmatprep.subr.mxu0 0.0
    %4621 = vmatpush1.msra.mxu0 %v4586
    %4622 = vmatprep.subr.mxu0 0.0
    %4623 = vmatpush1.msra.mxu0 %v4585
    %4624 = vmatprep.subr.mxu0 0.0
    %4625 = vmatpush2.msra.mxu0 0.0
    %4626 = vmatprep.subr.mxu0 0.0
    %4627 = vmatpush2.msra.mxu0 0.0
    %4628 = vmatprep.subr.mxu0 0.0
    %4629 = vmatpush2.msra.mxu0 0.0
    %4630 = vmatprep.subr.mxu0 0.0
    %4631 = vmatpush2.msra.mxu0 0.0
    %4632 = vmatprep.subr.mxu0 0.0
    %4633 = vmatpush2.msra.mxu0 0.0
    %4634 = vmatprep.subr.mxu0 0.0
    %4635 = vmatpush2.msra.mxu0 0.0
    %4636 = vmatprep.subr.mxu0 0.0
    %4637 = vmatpush2.msra.mxu0 0.0
    %4638 = vmatprep.subr.mxu0 0.0
    %4639 = vmatpush2.msra.mxu0 0.0
    %4640 = vmatprep.subr.mxu0 0.0
    %4641 = vmatpush2.msra.mxu0 0.0
    %4642 = vmatprep.subr.mxu0 0.0
    %4643 = vmatpush2.msra.mxu0 0.0
    %4644 = vmatprep.subr.mxu0 0.0
    %4645 = vmatpush2.msra.mxu0 0.0
    %4646 = vmatprep.subr.mxu0 0.0
    %4647 = vmatpush2.msra.mxu0 0.0
    %4648 = vmatprep.subr.mxu0 0.0
    %4649 = vmatpush2.msra.mxu0 0.0
    %4650 = vmatprep.subr.mxu0 0.0
    %4651 = vmatpush2.msra.mxu0 0.0
    %4652 = vmatprep.subr.mxu0 0.0
    %4653 = vmatpush2.msra.mxu0 0.0
    %4654 = vmatprep.subr.mxu0 0.0
    %4655 = vmatpush2.msra.mxu0 0.0
    %4656 = vmatprep.mubr.f32.mxu0 0.0
    %4657 = vmatmul.mubr.f32.gmra.mxu0 %v4590
    %v4658 = vpop.f32.mrf.mxu0
    %v4659 = vadd.f32 0.0, %v4658
    %v4660 = vpop.f32.mrf.mxu0
    %4661 = vdwg.mxu0
    %v4662 = vadd.f32 %v4578, %v4659
    %v4663 = vld [vmem:[%s17] sm:$0x1]
    %v4665 = vlaneseq
    %v4666 = vshrl.u32 %v4665, 7
    %v4667 = vsub.s32 0, %v4666
    %v4668 = vrot.slane %v4663, %v4667
    %v4670 = vadd.f32 %v4662, %v4668
    %vm4671 = vcmp.ge.f32.partialorder %v4670, 0.0
    %v4672 = vmul.f32 %v4670, 0.01
    %v4673 = vsel %vm4671, %v4670, %v4672
    %v4674 = vld [vmem:[%s18] sm:$0xff]
    %v4675 = vld [vmem:[%s18 + $0x8] sm:$0xff]
    %v4676 = vld [vmem:[%s18 + $0x10] sm:$0xff]
    %v4677 = vld [vmem:[%s18 + $0x18] sm:$0xff]
    %v4678 = vld [vmem:[%s18 + $0x20] sm:$0xff]
    %v4679 = vld [vmem:[%s18 + $0x28] sm:$0xff]
    %v4680 = vld [vmem:[%s18 + $0x30] sm:$0xff]
    %v4681 = vld [vmem:[%s18 + $0x38] sm:$0xff]
    %v4682 = vld [vmem:[%s18 + $0x40] sm:$0xff]
    %v4683 = vld [vmem:[%s18 + $0x48] sm:$0xff]
    %v4684 = vld [vmem:[%s18 + $0x50] sm:$0xff]
    %v4685 = vld [vmem:[%s18 + $0x58] sm:$0xff]
    %v4686 = vld [vmem:[%s18 + $0x60] sm:$0xff]
    %v4687 = vld [vmem:[%s18 + $0x68] sm:$0xff]
    %v4688 = vld [vmem:[%s18 + $0x70] sm:$0xff]
    %v4689 = vld [vmem:[%s18 + $0x78] sm:$0xff]
    %v4690 = vld [vmem:[#allocation3] sm:$0x1]
    %v4692 = vlaneseq
    %v4693 = vshrl.u32 %v4692, 7
    %v4694 = vsub.s32 0, %v4693
    %v4695 = vrot.slane %v4690, %v4694
    %4697 = vmatprep.subr.mxu0 0.0
    %4698 = vmatpush1.msra.mxu0 %v4689
    %4699 = vmatprep.subr.mxu0 0.0
    %4700 = vmatpush1.msra.mxu0 %v4688
    %4701 = vmatprep.subr.mxu0 0.0
    %4702 = vmatpush1.msra.mxu0 %v4687
    %4703 = vmatprep.subr.mxu0 0.0
    %4704 = vmatpush1.msra.mxu0 %v4686
    %4705 = vmatprep.subr.mxu0 0.0
    %4706 = vmatpush1.msra.mxu0 %v4685
    %4707 = vmatprep.subr.mxu0 0.0
    %4708 = vmatpush1.msra.mxu0 %v4684
    %4709 = vmatprep.subr.mxu0 0.0
    %4710 = vmatpush1.msra.mxu0 %v4683
    %4711 = vmatprep.subr.mxu0 0.0
    %4712 = vmatpush1.msra.mxu0 %v4682
    %4713 = vmatprep.subr.mxu0 0.0
    %4714 = vmatpush1.msra.mxu0 %v4681
    %4715 = vmatprep.subr.mxu0 0.0
    %4716 = vmatpush1.msra.mxu0 %v4680
    %4717 = vmatprep.subr.mxu0 0.0
    %4718 = vmatpush1.msra.mxu0 %v4679
    %4719 = vmatprep.subr.mxu0 0.0
    %4720 = vmatpush1.msra.mxu0 %v4678
    %4721 = vmatprep.subr.mxu0 0.0
    %4722 = vmatpush1.msra.mxu0 %v4677
    %4723 = vmatprep.subr.mxu0 0.0
    %4724 = vmatpush1.msra.mxu0 %v4676
    %4725 = vmatprep.subr.mxu0 0.0
    %4726 = vmatpush1.msra.mxu0 %v4675
    %4727 = vmatprep.subr.mxu0 0.0
    %4728 = vmatpush1.msra.mxu0 %v4674
    %4729 = vmatprep.subr.mxu0 0.0
    %4730 = vmatpush2.msra.mxu0 0.0
    %4731 = vmatprep.subr.mxu0 0.0
    %4732 = vmatpush2.msra.mxu0 0.0
    %4733 = vmatprep.subr.mxu0 0.0
    %4734 = vmatpush2.msra.mxu0 0.0
    %4735 = vmatprep.subr.mxu0 0.0
    %4736 = vmatpush2.msra.mxu0 0.0
    %4737 = vmatprep.subr.mxu0 0.0
    %4738 = vmatpush2.msra.mxu0 0.0
    %4739 = vmatprep.subr.mxu0 0.0
    %4740 = vmatpush2.msra.mxu0 0.0
    %4741 = vmatprep.subr.mxu0 0.0
    %4742 = vmatpush2.msra.mxu0 0.0
    %4743 = vmatprep.subr.mxu0 0.0
    %4744 = vmatpush2.msra.mxu0 0.0
    %4745 = vmatprep.subr.mxu0 0.0
    %4746 = vmatpush2.msra.mxu0 0.0
    %4747 = vmatprep.subr.mxu0 0.0
    %4748 = vmatpush2.msra.mxu0 0.0
    %4749 = vmatprep.subr.mxu0 0.0
    %4750 = vmatpush2.msra.mxu0 0.0
    %4751 = vmatprep.subr.mxu0 0.0
    %4752 = vmatpush2.msra.mxu0 0.0
    %4753 = vmatprep.subr.mxu0 0.0
    %4754 = vmatpush2.msra.mxu0 0.0
    %4755 = vmatprep.subr.mxu0 0.0
    %4756 = vmatpush2.msra.mxu0 0.0
    %4757 = vmatprep.subr.mxu0 0.0
    %4758 = vmatpush2.msra.mxu0 0.0
    %4759 = vmatprep.subr.mxu0 0.0
    %4760 = vmatpush2.msra.mxu0 0.0
    %4761 = vmatprep.mubr.f32.mxu0 0.0
    %4762 = vmatmul.mubr.f32.gmra.mxu0 %v4673
    %v4763 = vpop.f32.mrf.mxu0
    %v4764 = vadd.f32 %v4695, %v4763
    %v4765 = vpop.f32.mrf.mxu0
    %4766 = vdwg.mxu0
    %vm4767 = vcmask 1024
    %4768 = vst.msk [vmem:[%s20] sm:$0x3] %vm4767, %v4764
    // Predicated region
    $region106: #{transformer_forward.1} parent=1 // pred_check
      _
    $region107: #{transformer_forward.1} parent=1 // pred_check_branch
      %4770 = sbr.rel (0) target = $region109
    $region108: #{transformer_forward.1} parent=1 // pred_region
      _
    $region109: #{transformer_forward.1} parent=1 // pred_fallthru
      _
    // Predicated region
    $region110: #{transformer_forward.1} parent=1 // pred_check
      _
    $region111: #{transformer_forward.1} parent=1 // pred_check_branch
      %4772 = sbr.rel (0) target = $region113
    $region112: #{transformer_forward.1} parent=1 // pred_region
      _
    $region113: #{transformer_forward.1} parent=1 // pred_fallthru
      _
    // Predicated region
    $region114: #{transformer_forward.1} parent=1 // pred_check
      _
    $region115: #{transformer_forward.1} parent=1 // pred_check_branch
      %4774 = sbr.rel (0) target = $region117
    $region116: #{transformer_forward.1} parent=1 // pred_region
      _
    $region117: #{transformer_forward.1} parent=1 // pred_fallthru
      _
    // Predicated region
    $region118: #{transformer_forward.1} parent=1 // pred_check
      _
    $region119: #{transformer_forward.1} parent=1 // pred_check_branch
      %4776 = sbr.rel (0) target = $region121
    $region120: #{transformer_forward.1} parent=1 // pred_region
      _
    $region121: #{transformer_forward.1} parent=1 // pred_fallthru
      _
    %4777 = vsyncpa [#allocation5], 1
    %4778 = vsyncpa [#allocation7], 1
    %4779 = vsyncpa [#allocation10], 1
    %4780 = vsyncpa [#allocation13], 1

</llo_original>
